<compile_context>
chip_gen: v7x
topology: tpu7x:2x2x1
jax: 0.10.0
libtpu: 0.0.40
codegen_flags: <defaults>
</compile_context>

<pallas_src>
import functools

import jax
import jax.numpy as jnp
from jax.experimental import pallas as pl
from jax.experimental.pallas import tpu as pltpu


# ----------------------------- kernel helpers --------------------------------

def _vpu_matvec(a, w):
    """(B, K) x (K, N) contraction as K VPU broadcast-multiplies + a tree add
    of depth ceil(log2 K).  For the tiny contractions in this model (K <= 20)
    this keeps every recurrent dot off the MXU: no per-step systolic
    push->drain->pop latency on the serial chain, and the result is exact f32.
    For K == 1 it degenerates to a single broadcast multiply."""
    K = w.shape[0]
    terms = [a[:, k:k + 1] * w[k:k + 1, :] for k in range(K)]
    while len(terms) > 1:
        nxt = [terms[i] + terms[i + 1] for i in range(0, len(terms) - 1, 2)]
        if len(terms) % 2:
            nxt.append(terms[-1])
        terms = nxt
    return terms[0]


def _lstm_activations(gates, c_prev, hidden):
    """PyTorch LSTMCell gate math given pre-activation gates (B, 4*hidden).
    Two full-width EUP calls (sigmoid + tanh) instead of four sliced ones."""
    sig = jax.nn.sigmoid(gates)
    th = jnp.tanh(gates)
    i = sig[:, 0 * hidden:1 * hidden]
    f = sig[:, 1 * hidden:2 * hidden]
    g = th[:, 2 * hidden:3 * hidden]
    o = sig[:, 3 * hidden:4 * hidden]
    c_new = f * c_prev + i * g
    h_new = o * jnp.tanh(c_new)
    return h_new, c_new


# ----------------------------- Pallas kernel ----------------------------------

def lstm_rnn_gru_kernel(x_ref, wih1_ref, whh1_ref, b1_ref,
                        wih2_ref, whh2_ref, b2_ref, out_ref, *, future):
    B, S = x_ref.shape
    H = whh1_ref.shape[0]      # hidden_size   (whh1_t is (H, 4H))
    O = whh2_ref.shape[0]      # output_size   (whh2_t is (O, 4O))
    total = S + future

    x = x_ref[...]             # (B, S)
    wih1 = wih1_ref[...]       # (1, 4H)
    whh1 = whh1_ref[...]       # (H, 4H)
    wih2 = wih2_ref[...]       # (H, 4O)
    whh2 = whh2_ref[...]       # (O, 4O)

    # Hoisted broadcasts / constants (JAX does not CSE broadcast_in_dim).
    b1b = jnp.broadcast_to(b1_ref[...], (B, 4 * H))
    b2b = jnp.broadcast_to(b2_ref[...], (B, 4 * O))
    lane_idx = jax.lax.broadcasted_iota(jnp.int32, (B, total), 1)

    # Output accumulated in registers; written to VMEM once at the very end
    # (replaces S+future serialized one-lane masked vst.msk stores).
    out_acc = jnp.zeros((B, total), jnp.float32)

    h1 = jnp.zeros((B, H), jnp.float32)
    c1 = jnp.zeros((B, H), jnp.float32)
    h2 = jnp.zeros((B, O), jnp.float32)
    c2 = jnp.zeros((B, O), jnp.float32)

    # ---------------- Teacher-forced phase: two decoupled passes -------------
    # Pass 1: layer-1 recurrence.  Its inputs (x) never depend on layer-2, so
    # this chain is independent of layer-2's.  The layer-2 input projection for
    # step t depends only on this step's c1 (not on either recurrence going
    # forward), so it is computed here, off both chains, as scheduler filler.
    gx2 = []
    for t in range(S):
        gx1_t = _vpu_matvec(x[:, t:t + 1], wih1) + b1b      # input_size == 1
        gates1 = gx1_t + _vpu_matvec(h1, whh1)               # h-path on VPU
        h1, c1 = _lstm_activations(gates1, c1, H)
        gx2.append(_vpu_matvec(c1, wih2) + b2b)              # off-chain

    # Pass 2: layer-2 recurrence.  Per step only one (output_size == 1) VPU
    # multiply-add plus the activations -- a very short chain that overlaps
    # with / trails the layer-1 chain instead of serializing after it.
    for t in range(S):
        gates2 = gx2[t] + _vpu_matvec(h2, whh2)
        h2, c2 = _lstm_activations(gates2, c2, O)
        out_acc = jnp.where(lane_idx == t, c2, out_acc)      # lane-select, no store

    # ---------------- Free-running "future" steps ----------------------------
    # Here c2 feeds back into layer-1, so the two cells are genuinely serial.
    for s in range(future):
        gates1 = _vpu_matvec(c2, wih1) + b1b + _vpu_matvec(h1, whh1)
        h1, c1 = _lstm_activations(gates1, c1, H)
        gates2 = _vpu_matvec(c1, wih2) + b2b + _vpu_matvec(h2, whh2)
        h2, c2 = _lstm_activations(gates2, c2, O)
        out_acc = jnp.where(lane_idx == (S + s), c2, out_acc)

    out_ref[...] = out_acc                                    # single coalesced store

    # TODO(synk): if seq/future ever get large, switch to two lax.fori_loops
    # (layer-1 chain staging c1/gx2 history in VMEM scratch, then the layer-2
    # chain) with unroll=2-4; a single combined-body fori_loop would
    # re-serialize the two cells per iteration at a loop boundary the scheduler
    # cannot cross.


# ------------------------------ Wrapper ----------------------------------------

def lstm_rnn_gru_forward(x, params, future=0):
    B, S = x.shape
    out_shape = jax.ShapeDtypeStruct((B, S + future), jnp.float32)
    kernel = functools.partial(lstm_rnn_gru_kernel, future=future)
    # Everything (x, weights, output) is a few KB -> whole arrays resident in
    # VMEM, single grid point.  No tiling / vmem_limit tweaks needed on any
    # generation (v5e/v6e/v7x), and no batch grid axis at B=4.
    return pl.pallas_call(
        kernel,
        out_shape=out_shape,
        in_specs=[pl.BlockSpec(memory_space=pltpu.MemorySpace.VMEM)] * 7,
        out_specs=pl.BlockSpec(memory_space=pltpu.MemorySpace.VMEM),
    )(x, params["wih1_t"], params["whh1_t"], params["b1"],
      params["wih2_t"], params["whh2_t"], params["b2"])


# ------------------------- Deterministic parameter init -------------------------

def init_params(key, input_size=1, hidden_size=20, output_size=1):
    k = jax.random.split(key, 8)
    # weights ~ N(0, 0.1) (as in the module's __init__); biases keep PyTorch's
    # default uniform(-1/sqrt(hidden), 1/sqrt(hidden)) init.
    w_ih1 = 0.1 * jax.random.normal(k[0], (4 * hidden_size, input_size), jnp.float32)
    w_hh1 = 0.1 * jax.random.normal(k[1], (4 * hidden_size, hidden_size), jnp.float32)
    bnd1 = 1.0 / float(hidden_size) ** 0.5
    b_ih1 = jax.random.uniform(k[2], (4 * hidden_size,), jnp.float32, -bnd1, bnd1)
    b_hh1 = jax.random.uniform(k[3], (4 * hidden_size,), jnp.float32, -bnd1, bnd1)

    w_ih2 = 0.1 * jax.random.normal(k[4], (4 * output_size, hidden_size), jnp.float32)
    w_hh2 = 0.1 * jax.random.normal(k[5], (4 * output_size, output_size), jnp.float32)
    bnd2 = 1.0 / float(output_size) ** 0.5
    b_ih2 = jax.random.uniform(k[6], (4 * output_size,), jnp.float32, -bnd2, bnd2)
    b_hh2 = jax.random.uniform(k[7], (4 * output_size,), jnp.float32, -bnd2, bnd2)

    return {
        "wih1_t": w_ih1.T,                      # (input_size, 4H)
        "whh1_t": w_hh1.T,                      # (H, 4H)
        "b1": (b_ih1 + b_hh1)[None, :],         # (1, 4H)
        "wih2_t": w_ih2.T,                      # (H, 4O)
        "whh2_t": w_hh2.T,                      # (O, 4O)
        "b2": (b_ih2 + b_hh2)[None, :],         # (1, 4O)
    }


# ------------------------------ Pure-JAX reference ------------------------------
# The kernel's contractions are exact f32 (VPU); use HIGHEST matmul precision in
# the reference so its dots are ~f32 too.  (The TPU default precision is a
# bf16-pass MXU matmul, which over a 12-step recurrence would not match exact
# f32 at 1e-5 -- this is the correctness concern from the review.)

_HI = jax.lax.Precision.HIGHEST


def _lstm_cell_ref(x, h, c, w_ih_t, w_hh_t, b, hidden):
    gates = (jnp.dot(x, w_ih_t, precision=_HI)
             + jnp.dot(h, w_hh_t, precision=_HI) + b)
    i = jax.nn.sigmoid(gates[:, 0 * hidden:1 * hidden])
    f = jax.nn.sigmoid(gates[:, 1 * hidden:2 * hidden])
    g = jnp.tanh(gates[:, 2 * hidden:3 * hidden])
    o = jax.nn.sigmoid(gates[:, 3 * hidden:4 * hidden])
    c_new = f * c + i * g
    h_new = o * jnp.tanh(c_new)
    return h_new, c_new


def reference_forward(x, params, future=0):
    B, S = x.shape
    H = params["whh1_t"].shape[0]
    O = params["whh2_t"].shape[0]
    h1 = jnp.zeros((B, H)); c1 = jnp.zeros((B, H))
    h2 = jnp.zeros((B, O)); c2 = jnp.zeros((B, O))
    outs = []
    for t in range(S):
        h1, c1 = _lstm_cell_ref(x[:, t:t + 1], h1, c1,
                                params["wih1_t"], params["whh1_t"], params["b1"], H)
        h2, c2 = _lstm_cell_ref(c1, h2, c2,
                                params["wih2_t"], params["whh2_t"], params["b2"], O)
        outs.append(c2)
    for _ in range(future):
        h1, c1 = _lstm_cell_ref(c2, h1, c1,
                                params["wih1_t"], params["whh1_t"], params["b1"], H)
        h2, c2 = _lstm_cell_ref(c1, h2, c2,
                                params["wih2_t"], params["whh2_t"], params["b2"], O)
        outs.append(c2)
    return jnp.concatenate(outs, axis=1)


# ----------------------------------- Main ----------------------------------------

if __name__ == "__main__":
    key = jax.random.PRNGKey(0)
    k_param, k_x = jax.random.split(key)

    batch, seq = 4, 8
    hidden_size, input_size, output_size = 20, 1, 1
    future = 4      # exercise both the teacher-forced and free-running paths

    params = init_params(k_param, input_size, hidden_size, output_size)
    x = jax.random.normal(k_x, (batch, seq), jnp.float32)

    out = lstm_rnn_gru_forward(x, params, future=future)
    out = jax.block_until_ready(out)

    ref = reference_forward(x, params, future=future)
    assert out.shape == (batch, seq + future)
    assert jnp.allclose(out, ref, atol=1e-5, rtol=1e-5)

    print("KERNEL_OK")
</pallas_src>

<mosaic_0001>
module attributes {stable_mosaic.version = 11 : i64} {
  func.func @lstm_rnn_gru_kernel(%arg0: memref<4x8xf32, #tpu.memory_space<vmem>>, %arg1: memref<1x80xf32, #tpu.memory_space<vmem>>, %arg2: memref<20x80xf32, #tpu.memory_space<vmem>>, %arg3: memref<1x80xf32, #tpu.memory_space<vmem>>, %arg4: memref<20x4xf32, #tpu.memory_space<vmem>>, %arg5: memref<1x4xf32, #tpu.memory_space<vmem>>, %arg6: memref<1x4xf32, #tpu.memory_space<vmem>>, %arg7: memref<4x12xf32, #tpu.memory_space<vmem>>) attributes {dimension_semantics = [], scalar_prefetch = 0 : i64, scratch_operands = 0 : i64, tpu.core_type = #tpu.core_type<tc>} {
    %c0 = arith.constant 0 : index
    %c0_0 = arith.constant 0 : index
    %0 = vector.load %arg0[%c0, %c0_0] : memref<4x8xf32, #tpu.memory_space<vmem>>, vector<4x8xf32>
    %c0_1 = arith.constant 0 : index
    %c0_2 = arith.constant 0 : index
    %1 = vector.load %arg1[%c0_1, %c0_2] : memref<1x80xf32, #tpu.memory_space<vmem>>, vector<1x80xf32>
    %c0_3 = arith.constant 0 : index
    %c0_4 = arith.constant 0 : index
    %2 = vector.load %arg2[%c0_3, %c0_4] : memref<20x80xf32, #tpu.memory_space<vmem>>, vector<20x80xf32>
    %c0_5 = arith.constant 0 : index
    %c0_6 = arith.constant 0 : index
    %3 = vector.load %arg4[%c0_5, %c0_6] : memref<20x4xf32, #tpu.memory_space<vmem>>, vector<20x4xf32>
    %c0_7 = arith.constant 0 : index
    %c0_8 = arith.constant 0 : index
    %4 = vector.load %arg5[%c0_7, %c0_8] : memref<1x4xf32, #tpu.memory_space<vmem>>, vector<1x4xf32>
    %c0_9 = arith.constant 0 : index
    %c0_10 = arith.constant 0 : index
    %5 = vector.load %arg3[%c0_9, %c0_10] : memref<1x80xf32, #tpu.memory_space<vmem>>, vector<1x80xf32>
    %6 = vector.shape_cast %5 : vector<1x80xf32> to vector<1x80xf32>
    %7 = vector.broadcast %6 : vector<1x80xf32> to vector<4x80xf32>
    %c0_11 = arith.constant 0 : index
    %c0_12 = arith.constant 0 : index
    %8 = vector.load %arg6[%c0_11, %c0_12] : memref<1x4xf32, #tpu.memory_space<vmem>>, vector<1x4xf32>
    %9 = vector.shape_cast %8 : vector<1x4xf32> to vector<1x4xf32>
    %10 = vector.broadcast %9 : vector<1x4xf32> to vector<4x4xf32>
    %11 = tpu.iota {dimensions = array<i32: 1>} : vector<4x12xi32>
    %cst = arith.constant 0.000000e+00 : f32
    %12 = vector.broadcast %cst : f32 to vector<4x12xf32>
    %cst_13 = arith.constant 0.000000e+00 : f32
    %13 = vector.broadcast %cst_13 : f32 to vector<4x20xf32>
    %cst_14 = arith.constant 0.000000e+00 : f32
    %14 = vector.broadcast %cst_14 : f32 to vector<4x20xf32>
    %cst_15 = arith.constant 0.000000e+00 : f32
    %15 = vector.broadcast %cst_15 : f32 to vector<4x1xf32>
    %cst_16 = arith.constant 0.000000e+00 : f32
    %16 = vector.broadcast %cst_16 : f32 to vector<4x1xf32>
    %17 = vector.extract_strided_slice %0 {offsets = [0, 0], sizes = [4, 1], strides = [1, 1]} : vector<4x8xf32> to vector<4x1xf32>
    %18 = vector.broadcast %17 : vector<4x1xf32> to vector<4x80xf32>
    %19 = vector.broadcast %1 : vector<1x80xf32> to vector<4x80xf32>
    %20 = arith.mulf %18, %19 : vector<4x80xf32>
    %21 = arith.addf %20, %7 : vector<4x80xf32>
    %22 = vector.extract_strided_slice %13 {offsets = [0, 0], sizes = [4, 1], strides = [1, 1]} : vector<4x20xf32> to vector<4x1xf32>
    %23 = vector.extract_strided_slice %2 {offsets = [0, 0], sizes = [1, 80], strides = [1, 1]} : vector<20x80xf32> to vector<1x80xf32>
    %24 = vector.broadcast %22 : vector<4x1xf32> to vector<4x80xf32>
    %25 = vector.broadcast %23 : vector<1x80xf32> to vector<4x80xf32>
    %26 = arith.mulf %24, %25 : vector<4x80xf32>
    %27 = vector.extract_strided_slice %13 {offsets = [0, 1], sizes = [4, 1], strides = [1, 1]} : vector<4x20xf32> to vector<4x1xf32>
    %28 = vector.extract_strided_slice %2 {offsets = [1, 0], sizes = [1, 80], strides = [1, 1]} : vector<20x80xf32> to vector<1x80xf32>
    %29 = vector.broadcast %27 : vector<4x1xf32> to vector<4x80xf32>
    %30 = vector.broadcast %28 : vector<1x80xf32> to vector<4x80xf32>
    %31 = arith.mulf %29, %30 : vector<4x80xf32>
    %32 = vector.extract_strided_slice %13 {offsets = [0, 2], sizes = [4, 1], strides = [1, 1]} : vector<4x20xf32> to vector<4x1xf32>
    %33 = vector.extract_strided_slice %2 {offsets = [2, 0], sizes = [1, 80], strides = [1, 1]} : vector<20x80xf32> to vector<1x80xf32>
    %34 = vector.broadcast %32 : vector<4x1xf32> to vector<4x80xf32>
    %35 = vector.broadcast %33 : vector<1x80xf32> to vector<4x80xf32>
    %36 = arith.mulf %34, %35 : vector<4x80xf32>
    %37 = vector.extract_strided_slice %13 {offsets = [0, 3], sizes = [4, 1], strides = [1, 1]} : vector<4x20xf32> to vector<4x1xf32>
    %38 = vector.extract_strided_slice %2 {offsets = [3, 0], sizes = [1, 80], strides = [1, 1]} : vector<20x80xf32> to vector<1x80xf32>
    %39 = vector.broadcast %37 : vector<4x1xf32> to vector<4x80xf32>
    %40 = vector.broadcast %38 : vector<1x80xf32> to vector<4x80xf32>
    %41 = arith.mulf %39, %40 : vector<4x80xf32>
    %42 = vector.extract_strided_slice %13 {offsets = [0, 4], sizes = [4, 1], strides = [1, 1]} : vector<4x20xf32> to vector<4x1xf32>
    %43 = vector.extract_strided_slice %2 {offsets = [4, 0], sizes = [1, 80], strides = [1, 1]} : vector<20x80xf32> to vector<1x80xf32>
    %44 = vector.broadcast %42 : vector<4x1xf32> to vector<4x80xf32>
    %45 = vector.broadcast %43 : vector<1x80xf32> to vector<4x80xf32>
    %46 = arith.mulf %44, %45 : vector<4x80xf32>
    %47 = vector.extract_strided_slice %13 {offsets = [0, 5], sizes = [4, 1], strides = [1, 1]} : vector<4x20xf32> to vector<4x1xf32>
    %48 = vector.extract_strided_slice %2 {offsets = [5, 0], sizes = [1, 80], strides = [1, 1]} : vector<20x80xf32> to vector<1x80xf32>
    %49 = vector.broadcast %47 : vector<4x1xf32> to vector<4x80xf32>
    %50 = vector.broadcast %48 : vector<1x80xf32> to vector<4x80xf32>
    %51 = arith.mulf %49, %50 : vector<4x80xf32>
    %52 = vector.extract_strided_slice %13 {offsets = [0, 6], sizes = [4, 1], strides = [1, 1]} : vector<4x20xf32> to vector<4x1xf32>
    %53 = vector.extract_strided_slice %2 {offsets = [6, 0], sizes = [1, 80], strides = [1, 1]} : vector<20x80xf32> to vector<1x80xf32>
    %54 = vector.broadcast %52 : vector<4x1xf32> to vector<4x80xf32>
    %55 = vector.broadcast %53 : vector<1x80xf32> to vector<4x80xf32>
    %56 = arith.mulf %54, %55 : vector<4x80xf32>
    %57 = vector.extract_strided_slice %13 {offsets = [0, 7], sizes = [4, 1], strides = [1, 1]} : vector<4x20xf32> to vector<4x1xf32>
    %58 = vector.extract_strided_slice %2 {offsets = [7, 0], sizes = [1, 80], strides = [1, 1]} : vector<20x80xf32> to vector<1x80xf32>
    %59 = vector.broadcast %57 : vector<4x1xf32> to vector<4x80xf32>
    %60 = vector.broadcast %58 : vector<1x80xf32> to vector<4x80xf32>
    %61 = arith.mulf %59, %60 : vector<4x80xf32>
    %62 = vector.extract_strided_slice %13 {offsets = [0, 8], sizes = [4, 1], strides = [1, 1]} : vector<4x20xf32> to vector<4x1xf32>
    %63 = vector.extract_strided_slice %2 {offsets = [8, 0], sizes = [1, 80], strides = [1, 1]} : vector<20x80xf32> to vector<1x80xf32>
    %64 = vector.broadcast %62 : vector<4x1xf32> to vector<4x80xf32>
    %65 = vector.broadcast %63 : vector<1x80xf32> to vector<4x80xf32>
    %66 = arith.mulf %64, %65 : vector<4x80xf32>
    %67 = vector.extract_strided_slice %13 {offsets = [0, 9], sizes = [4, 1], strides = [1, 1]} : vector<4x20xf32> to vector<4x1xf32>
    %68 = vector.extract_strided_slice %2 {offsets = [9, 0], sizes = [1, 80], strides = [1, 1]} : vector<20x80xf32> to vector<1x80xf32>
    %69 = vector.broadcast %67 : vector<4x1xf32> to vector<4x80xf32>
    %70 = vector.broadcast %68 : vector<1x80xf32> to vector<4x80xf32>
    %71 = arith.mulf %69, %70 : vector<4x80xf32>
    %72 = vector.extract_strided_slice %13 {offsets = [0, 10], sizes = [4, 1], strides = [1, 1]} : vector<4x20xf32> to vector<4x1xf32>
    %73 = vector.extract_strided_slice %2 {offsets = [10, 0], sizes = [1, 80], strides = [1, 1]} : vector<20x80xf32> to vector<1x80xf32>
    %74 = vector.broadcast %72 : vector<4x1xf32> to vector<4x80xf32>
    %75 = vector.broadcast %73 : vector<1x80xf32> to vector<4x80xf32>
    %76 = arith.mulf %74, %75 : vector<4x80xf32>
    %77 = vector.extract_strided_slice %13 {offsets = [0, 11], sizes = [4, 1], strides = [1, 1]} : vector<4x20xf32> to vector<4x1xf32>
    %78 = vector.extract_strided_slice %2 {offsets = [11, 0], sizes = [1, 80], strides = [1, 1]} : vector<20x80xf32> to vector<1x80xf32>
    %79 = vector.broadcast %77 : vector<4x1xf32> to vector<4x80xf32>
    %80 = vector.broadcast %78 : vector<1x80xf32> to vector<4x80xf32>
    %81 = arith.mulf %79, %80 : vector<4x80xf32>
    %82 = vector.extract_strided_slice %13 {offsets = [0, 12], sizes = [4, 1], strides = [1, 1]} : vector<4x20xf32> to vector<4x1xf32>
    %83 = vector.extract_strided_slice %2 {offsets = [12, 0], sizes = [1, 80], strides = [1, 1]} : vector<20x80xf32> to vector<1x80xf32>
    %84 = vector.broadcast %82 : vector<4x1xf32> to vector<4x80xf32>
    %85 = vector.broadcast %83 : vector<1x80xf32> to vector<4x80xf32>
    %86 = arith.mulf %84, %85 : vector<4x80xf32>
    %87 = vector.extract_strided_slice %13 {offsets = [0, 13], sizes = [4, 1], strides = [1, 1]} : vector<4x20xf32> to vector<4x1xf32>
    %88 = vector.extract_strided_slice %2 {offsets = [13, 0], sizes = [1, 80], strides = [1, 1]} : vector<20x80xf32> to vector<1x80xf32>
    %89 = vector.broadcast %87 : vector<4x1xf32> to vector<4x80xf32>
    %90 = vector.broadcast %88 : vector<1x80xf32> to vector<4x80xf32>
    %91 = arith.mulf %89, %90 : vector<4x80xf32>
    %92 = vector.extract_strided_slice %13 {offsets = [0, 14], sizes = [4, 1], strides = [1, 1]} : vector<4x20xf32> to vector<4x1xf32>
    %93 = vector.extract_strided_slice %2 {offsets = [14, 0], sizes = [1, 80], strides = [1, 1]} : vector<20x80xf32> to vector<1x80xf32>
    %94 = vector.broadcast %92 : vector<4x1xf32> to vector<4x80xf32>
    %95 = vector.broadcast %93 : vector<1x80xf32> to vector<4x80xf32>
    %96 = arith.mulf %94, %95 : vector<4x80xf32>
    %97 = vector.extract_strided_slice %13 {offsets = [0, 15], sizes = [4, 1], strides = [1, 1]} : vector<4x20xf32> to vector<4x1xf32>
    %98 = vector.extract_strided_slice %2 {offsets = [15, 0], sizes = [1, 80], strides = [1, 1]} : vector<20x80xf32> to vector<1x80xf32>
    %99 = vector.broadcast %97 : vector<4x1xf32> to vector<4x80xf32>
    %100 = vector.broadcast %98 : vector<1x80xf32> to vector<4x80xf32>
    %101 = arith.mulf %99, %100 : vector<4x80xf32>
    %102 = vector.extract_strided_slice %13 {offsets = [0, 16], sizes = [4, 1], strides = [1, 1]} : vector<4x20xf32> to vector<4x1xf32>
    %103 = vector.extract_strided_slice %2 {offsets = [16, 0], sizes = [1, 80], strides = [1, 1]} : vector<20x80xf32> to vector<1x80xf32>
    %104 = vector.broadcast %102 : vector<4x1xf32> to vector<4x80xf32>
    %105 = vector.broadcast %103 : vector<1x80xf32> to vector<4x80xf32>
    %106 = arith.mulf %104, %105 : vector<4x80xf32>
    %107 = vector.extract_strided_slice %13 {offsets = [0, 17], sizes = [4, 1], strides = [1, 1]} : vector<4x20xf32> to vector<4x1xf32>
    %108 = vector.extract_strided_slice %2 {offsets = [17, 0], sizes = [1, 80], strides = [1, 1]} : vector<20x80xf32> to vector<1x80xf32>
    %109 = vector.broadcast %107 : vector<4x1xf32> to vector<4x80xf32>
    %110 = vector.broadcast %108 : vector<1x80xf32> to vector<4x80xf32>
    %111 = arith.mulf %109, %110 : vector<4x80xf32>
    %112 = vector.extract_strided_slice %13 {offsets = [0, 18], sizes = [4, 1], strides = [1, 1]} : vector<4x20xf32> to vector<4x1xf32>
    %113 = vector.extract_strided_slice %2 {offsets = [18, 0], sizes = [1, 80], strides = [1, 1]} : vector<20x80xf32> to vector<1x80xf32>
    %114 = vector.broadcast %112 : vector<4x1xf32> to vector<4x80xf32>
    %115 = vector.broadcast %113 : vector<1x80xf32> to vector<4x80xf32>
    %116 = arith.mulf %114, %115 : vector<4x80xf32>
    %117 = vector.extract_strided_slice %13 {offsets = [0, 19], sizes = [4, 1], strides = [1, 1]} : vector<4x20xf32> to vector<4x1xf32>
    %118 = vector.extract_strided_slice %2 {offsets = [19, 0], sizes = [1, 80], strides = [1, 1]} : vector<20x80xf32> to vector<1x80xf32>
    %119 = vector.broadcast %117 : vector<4x1xf32> to vector<4x80xf32>
    %120 = vector.broadcast %118 : vector<1x80xf32> to vector<4x80xf32>
    %121 = arith.mulf %119, %120 : vector<4x80xf32>
    %122 = arith.addf %26, %31 : vector<4x80xf32>
    %123 = arith.addf %36, %41 : vector<4x80xf32>
    %124 = arith.addf %46, %51 : vector<4x80xf32>
    %125 = arith.addf %56, %61 : vector<4x80xf32>
    %126 = arith.addf %66, %71 : vector<4x80xf32>
    %127 = arith.addf %76, %81 : vector<4x80xf32>
    %128 = arith.addf %86, %91 : vector<4x80xf32>
    %129 = arith.addf %96, %101 : vector<4x80xf32>
    %130 = arith.addf %106, %111 : vector<4x80xf32>
    %131 = arith.addf %116, %121 : vector<4x80xf32>
    %132 = arith.addf %122, %123 : vector<4x80xf32>
    %133 = arith.addf %124, %125 : vector<4x80xf32>
    %134 = arith.addf %126, %127 : vector<4x80xf32>
    %135 = arith.addf %128, %129 : vector<4x80xf32>
    %136 = arith.addf %130, %131 : vector<4x80xf32>
    %137 = arith.addf %132, %133 : vector<4x80xf32>
    %138 = arith.addf %134, %135 : vector<4x80xf32>
    %139 = arith.addf %137, %138 : vector<4x80xf32>
    %140 = arith.addf %139, %136 : vector<4x80xf32>
    %141 = arith.addf %21, %140 : vector<4x80xf32>
    %142 = arith.negf %141 : vector<4x80xf32>
    %143 = math.exp %142 : vector<4x80xf32>
    %cst_17 = arith.constant 1.000000e+00 : f32
    %144 = vector.broadcast %cst_17 : f32 to vector<4x80xf32>
    %145 = arith.addf %144, %143 : vector<4x80xf32>
    %146 = arith.divf %144, %145 : vector<4x80xf32>
    %147 = math.tanh %141 : vector<4x80xf32>
    %148 = vector.extract_strided_slice %146 {offsets = [0, 0], sizes = [4, 20], strides = [1, 1]} : vector<4x80xf32> to vector<4x20xf32>
    %149 = vector.extract_strided_slice %146 {offsets = [0, 20], sizes = [4, 20], strides = [1, 1]} : vector<4x80xf32> to vector<4x20xf32>
    %150 = vector.extract_strided_slice %147 {offsets = [0, 40], sizes = [4, 20], strides = [1, 1]} : vector<4x80xf32> to vector<4x20xf32>
    %151 = vector.extract_strided_slice %146 {offsets = [0, 60], sizes = [4, 20], strides = [1, 1]} : vector<4x80xf32> to vector<4x20xf32>
    %152 = arith.mulf %149, %14 : vector<4x20xf32>
    %153 = arith.mulf %148, %150 : vector<4x20xf32>
    %154 = arith.addf %152, %153 : vector<4x20xf32>
    %155 = math.tanh %154 : vector<4x20xf32>
    %156 = arith.mulf %151, %155 : vector<4x20xf32>
    %157 = vector.extract_strided_slice %154 {offsets = [0, 0], sizes = [4, 1], strides = [1, 1]} : vector<4x20xf32> to vector<4x1xf32>
    %158 = vector.extract_strided_slice %3 {offsets = [0, 0], sizes = [1, 4], strides = [1, 1]} : vector<20x4xf32> to vector<1x4xf32>
    %159 = vector.broadcast %157 : vector<4x1xf32> to vector<4x4xf32>
    %160 = vector.broadcast %158 : vector<1x4xf32> to vector<4x4xf32>
    %161 = arith.mulf %159, %160 : vector<4x4xf32>
    %162 = vector.extract_strided_slice %154 {offsets = [0, 1], sizes = [4, 1], strides = [1, 1]} : vector<4x20xf32> to vector<4x1xf32>
    %163 = vector.extract_strided_slice %3 {offsets = [1, 0], sizes = [1, 4], strides = [1, 1]} : vector<20x4xf32> to vector<1x4xf32>
    %164 = vector.broadcast %162 : vector<4x1xf32> to vector<4x4xf32>
    %165 = vector.broadcast %163 : vector<1x4xf32> to vector<4x4xf32>
    %166 = arith.mulf %164, %165 : vector<4x4xf32>
    %167 = vector.extract_strided_slice %154 {offsets = [0, 2], sizes = [4, 1], strides = [1, 1]} : vector<4x20xf32> to vector<4x1xf32>
    %168 = vector.extract_strided_slice %3 {offsets = [2, 0], sizes = [1, 4], strides = [1, 1]} : vector<20x4xf32> to vector<1x4xf32>
    %169 = vector.broadcast %167 : vector<4x1xf32> to vector<4x4xf32>
    %170 = vector.broadcast %168 : vector<1x4xf32> to vector<4x4xf32>
    %171 = arith.mulf %169, %170 : vector<4x4xf32>
    %172 = vector.extract_strided_slice %154 {offsets = [0, 3], sizes = [4, 1], strides = [1, 1]} : vector<4x20xf32> to vector<4x1xf32>
    %173 = vector.extract_strided_slice %3 {offsets = [3, 0], sizes = [1, 4], strides = [1, 1]} : vector<20x4xf32> to vector<1x4xf32>
    %174 = vector.broadcast %172 : vector<4x1xf32> to vector<4x4xf32>
    %175 = vector.broadcast %173 : vector<1x4xf32> to vector<4x4xf32>
    %176 = arith.mulf %174, %175 : vector<4x4xf32>
    %177 = vector.extract_strided_slice %154 {offsets = [0, 4], sizes = [4, 1], strides = [1, 1]} : vector<4x20xf32> to vector<4x1xf32>
    %178 = vector.extract_strided_slice %3 {offsets = [4, 0], sizes = [1, 4], strides = [1, 1]} : vector<20x4xf32> to vector<1x4xf32>
    %179 = vector.broadcast %177 : vector<4x1xf32> to vector<4x4xf32>
    %180 = vector.broadcast %178 : vector<1x4xf32> to vector<4x4xf32>
    %181 = arith.mulf %179, %180 : vector<4x4xf32>
    %182 = vector.extract_strided_slice %154 {offsets = [0, 5], sizes = [4, 1], strides = [1, 1]} : vector<4x20xf32> to vector<4x1xf32>
    %183 = vector.extract_strided_slice %3 {offsets = [5, 0], sizes = [1, 4], strides = [1, 1]} : vector<20x4xf32> to vector<1x4xf32>
    %184 = vector.broadcast %182 : vector<4x1xf32> to vector<4x4xf32>
    %185 = vector.broadcast %183 : vector<1x4xf32> to vector<4x4xf32>
    %186 = arith.mulf %184, %185 : vector<4x4xf32>
    %187 = vector.extract_strided_slice %154 {offsets = [0, 6], sizes = [4, 1], strides = [1, 1]} : vector<4x20xf32> to vector<4x1xf32>
    %188 = vector.extract_strided_slice %3 {offsets = [6, 0], sizes = [1, 4], strides = [1, 1]} : vector<20x4xf32> to vector<1x4xf32>
    %189 = vector.broadcast %187 : vector<4x1xf32> to vector<4x4xf32>
    %190 = vector.broadcast %188 : vector<1x4xf32> to vector<4x4xf32>
    %191 = arith.mulf %189, %190 : vector<4x4xf32>
    %192 = vector.extract_strided_slice %154 {offsets = [0, 7], sizes = [4, 1], strides = [1, 1]} : vector<4x20xf32> to vector<4x1xf32>
    %193 = vector.extract_strided_slice %3 {offsets = [7, 0], sizes = [1, 4], strides = [1, 1]} : vector<20x4xf32> to vector<1x4xf32>
    %194 = vector.broadcast %192 : vector<4x1xf32> to vector<4x4xf32>
    %195 = vector.broadcast %193 : vector<1x4xf32> to vector<4x4xf32>
    %196 = arith.mulf %194, %195 : vector<4x4xf32>
    %197 = vector.extract_strided_slice %154 {offsets = [0, 8], sizes = [4, 1], strides = [1, 1]} : vector<4x20xf32> to vector<4x1xf32>
    %198 = vector.extract_strided_slice %3 {offsets = [8, 0], sizes = [1, 4], strides = [1, 1]} : vector<20x4xf32> to vector<1x4xf32>
    %199 = vector.broadcast %197 : vector<4x1xf32> to vector<4x4xf32>
    %200 = vector.broadcast %198 : vector<1x4xf32> to vector<4x4xf32>
    %201 = arith.mulf %199, %200 : vector<4x4xf32>
    %202 = vector.extract_strided_slice %154 {offsets = [0, 9], sizes = [4, 1], strides = [1, 1]} : vector<4x20xf32> to vector<4x1xf32>
    %203 = vector.extract_strided_slice %3 {offsets = [9, 0], sizes = [1, 4], strides = [1, 1]} : vector<20x4xf32> to vector<1x4xf32>
    %204 = vector.broadcast %202 : vector<4x1xf32> to vector<4x4xf32>
    %205 = vector.broadcast %203 : vector<1x4xf32> to vector<4x4xf32>
    %206 = arith.mulf %204, %205 : vector<4x4xf32>
    %207 = vector.extract_strided_slice %154 {offsets = [0, 10], sizes = [4, 1], strides = [1, 1]} : vector<4x20xf32> to vector<4x1xf32>
    %208 = vector.extract_strided_slice %3 {offsets = [10, 0], sizes = [1, 4], strides = [1, 1]} : vector<20x4xf32> to vector<1x4xf32>
    %209 = vector.broadcast %207 : vector<4x1xf32> to vector<4x4xf32>
    %210 = vector.broadcast %208 : vector<1x4xf32> to vector<4x4xf32>
    %211 = arith.mulf %209, %210 : vector<4x4xf32>
    %212 = vector.extract_strided_slice %154 {offsets = [0, 11], sizes = [4, 1], strides = [1, 1]} : vector<4x20xf32> to vector<4x1xf32>
    %213 = vector.extract_strided_slice %3 {offsets = [11, 0], sizes = [1, 4], strides = [1, 1]} : vector<20x4xf32> to vector<1x4xf32>
    %214 = vector.broadcast %212 : vector<4x1xf32> to vector<4x4xf32>
    %215 = vector.broadcast %213 : vector<1x4xf32> to vector<4x4xf32>
    %216 = arith.mulf %214, %215 : vector<4x4xf32>
    %217 = vector.extract_strided_slice %154 {offsets = [0, 12], sizes = [4, 1], strides = [1, 1]} : vector<4x20xf32> to vector<4x1xf32>
    %218 = vector.extract_strided_slice %3 {offsets = [12, 0], sizes = [1, 4], strides = [1, 1]} : vector<20x4xf32> to vector<1x4xf32>
    %219 = vector.broadcast %217 : vector<4x1xf32> to vector<4x4xf32>
    %220 = vector.broadcast %218 : vector<1x4xf32> to vector<4x4xf32>
    %221 = arith.mulf %219, %220 : vector<4x4xf32>
    %222 = vector.extract_strided_slice %154 {offsets = [0, 13], sizes = [4, 1], strides = [1, 1]} : vector<4x20xf32> to vector<4x1xf32>
    %223 = vector.extract_strided_slice %3 {offsets = [13, 0], sizes = [1, 4], strides = [1, 1]} : vector<20x4xf32> to vector<1x4xf32>
    %224 = vector.broadcast %222 : vector<4x1xf32> to vector<4x4xf32>
    %225 = vector.broadcast %223 : vector<1x4xf32> to vector<4x4xf32>
    %226 = arith.mulf %224, %225 : vector<4x4xf32>
    %227 = vector.extract_strided_slice %154 {offsets = [0, 14], sizes = [4, 1], strides = [1, 1]} : vector<4x20xf32> to vector<4x1xf32>
    %228 = vector.extract_strided_slice %3 {offsets = [14, 0], sizes = [1, 4], strides = [1, 1]} : vector<20x4xf32> to vector<1x4xf32>
    %229 = vector.broadcast %227 : vector<4x1xf32> to vector<4x4xf32>
    %230 = vector.broadcast %228 : vector<1x4xf32> to vector<4x4xf32>
    %231 = arith.mulf %229, %230 : vector<4x4xf32>
    %232 = vector.extract_strided_slice %154 {offsets = [0, 15], sizes = [4, 1], strides = [1, 1]} : vector<4x20xf32> to vector<4x1xf32>
    %233 = vector.extract_strided_slice %3 {offsets = [15, 0], sizes = [1, 4], strides = [1, 1]} : vector<20x4xf32> to vector<1x4xf32>
    %234 = vector.broadcast %232 : vector<4x1xf32> to vector<4x4xf32>
    %235 = vector.broadcast %233 : vector<1x4xf32> to vector<4x4xf32>
    %236 = arith.mulf %234, %235 : vector<4x4xf32>
    %237 = vector.extract_strided_slice %154 {offsets = [0, 16], sizes = [4, 1], strides = [1, 1]} : vector<4x20xf32> to vector<4x1xf32>
    %238 = vector.extract_strided_slice %3 {offsets = [16, 0], sizes = [1, 4], strides = [1, 1]} : vector<20x4xf32> to vector<1x4xf32>
    %239 = vector.broadcast %237 : vector<4x1xf32> to vector<4x4xf32>
    %240 = vector.broadcast %238 : vector<1x4xf32> to vector<4x4xf32>
    %241 = arith.mulf %239, %240 : vector<4x4xf32>
    %242 = vector.extract_strided_slice %154 {offsets = [0, 17], sizes = [4, 1], strides = [1, 1]} : vector<4x20xf32> to vector<4x1xf32>
    %243 = vector.extract_strided_slice %3 {offsets = [17, 0], sizes = [1, 4], strides = [1, 1]} : vector<20x4xf32> to vector<1x4xf32>
    %244 = vector.broadcast %242 : vector<4x1xf32> to vector<4x4xf32>
    %245 = vector.broadcast %243 : vector<1x4xf32> to vector<4x4xf32>
    %246 = arith.mulf %244, %245 : vector<4x4xf32>
    %247 = vector.extract_strided_slice %154 {offsets = [0, 18], sizes = [4, 1], strides = [1, 1]} : vector<4x20xf32> to vector<4x1xf32>
    %248 = vector.extract_strided_slice %3 {offsets = [18, 0], sizes = [1, 4], strides = [1, 1]} : vector<20x4xf32> to vector<1x4xf32>
    %249 = vector.broadcast %247 : vector<4x1xf32> to vector<4x4xf32>
    %250 = vector.broadcast %248 : vector<1x4xf32> to vector<4x4xf32>
    %251 = arith.mulf %249, %250 : vector<4x4xf32>
    %252 = vector.extract_strided_slice %154 {offsets = [0, 19], sizes = [4, 1], strides = [1, 1]} : vector<4x20xf32> to vector<4x1xf32>
    %253 = vector.extract_strided_slice %3 {offsets = [19, 0], sizes = [1, 4], strides = [1, 1]} : vector<20x4xf32> to vector<1x4xf32>
    %254 = vector.broadcast %252 : vector<4x1xf32> to vector<4x4xf32>
    %255 = vector.broadcast %253 : vector<1x4xf32> to vector<4x4xf32>
    %256 = arith.mulf %254, %255 : vector<4x4xf32>
    %257 = arith.addf %161, %166 : vector<4x4xf32>
    %258 = arith.addf %171, %176 : vector<4x4xf32>
    %259 = arith.addf %181, %186 : vector<4x4xf32>
    %260 = arith.addf %191, %196 : vector<4x4xf32>
    %261 = arith.addf %201, %206 : vector<4x4xf32>
    %262 = arith.addf %211, %216 : vector<4x4xf32>
    %263 = arith.addf %221, %226 : vector<4x4xf32>
    %264 = arith.addf %231, %236 : vector<4x4xf32>
    %265 = arith.addf %241, %246 : vector<4x4xf32>
    %266 = arith.addf %251, %256 : vector<4x4xf32>
    %267 = arith.addf %257, %258 : vector<4x4xf32>
    %268 = arith.addf %259, %260 : vector<4x4xf32>
    %269 = arith.addf %261, %262 : vector<4x4xf32>
    %270 = arith.addf %263, %264 : vector<4x4xf32>
    %271 = arith.addf %265, %266 : vector<4x4xf32>
    %272 = arith.addf %267, %268 : vector<4x4xf32>
    %273 = arith.addf %269, %270 : vector<4x4xf32>
    %274 = arith.addf %272, %273 : vector<4x4xf32>
    %275 = arith.addf %274, %271 : vector<4x4xf32>
    %276 = arith.addf %275, %10 : vector<4x4xf32>
    %277 = vector.extract_strided_slice %0 {offsets = [0, 1], sizes = [4, 1], strides = [1, 1]} : vector<4x8xf32> to vector<4x1xf32>
    %278 = vector.broadcast %277 : vector<4x1xf32> to vector<4x80xf32>
    %279 = vector.broadcast %1 : vector<1x80xf32> to vector<4x80xf32>
    %280 = arith.mulf %278, %279 : vector<4x80xf32>
    %281 = arith.addf %280, %7 : vector<4x80xf32>
    %282 = vector.extract_strided_slice %156 {offsets = [0, 0], sizes = [4, 1], strides = [1, 1]} : vector<4x20xf32> to vector<4x1xf32>
    %283 = vector.extract_strided_slice %2 {offsets = [0, 0], sizes = [1, 80], strides = [1, 1]} : vector<20x80xf32> to vector<1x80xf32>
    %284 = vector.broadcast %282 : vector<4x1xf32> to vector<4x80xf32>
    %285 = vector.broadcast %283 : vector<1x80xf32> to vector<4x80xf32>
    %286 = arith.mulf %284, %285 : vector<4x80xf32>
    %287 = vector.extract_strided_slice %156 {offsets = [0, 1], sizes = [4, 1], strides = [1, 1]} : vector<4x20xf32> to vector<4x1xf32>
    %288 = vector.extract_strided_slice %2 {offsets = [1, 0], sizes = [1, 80], strides = [1, 1]} : vector<20x80xf32> to vector<1x80xf32>
    %289 = vector.broadcast %287 : vector<4x1xf32> to vector<4x80xf32>
    %290 = vector.broadcast %288 : vector<1x80xf32> to vector<4x80xf32>
    %291 = arith.mulf %289, %290 : vector<4x80xf32>
    %292 = vector.extract_strided_slice %156 {offsets = [0, 2], sizes = [4, 1], strides = [1, 1]} : vector<4x20xf32> to vector<4x1xf32>
    %293 = vector.extract_strided_slice %2 {offsets = [2, 0], sizes = [1, 80], strides = [1, 1]} : vector<20x80xf32> to vector<1x80xf32>
    %294 = vector.broadcast %292 : vector<4x1xf32> to vector<4x80xf32>
    %295 = vector.broadcast %293 : vector<1x80xf32> to vector<4x80xf32>
    %296 = arith.mulf %294, %295 : vector<4x80xf32>
    %297 = vector.extract_strided_slice %156 {offsets = [0, 3], sizes = [4, 1], strides = [1, 1]} : vector<4x20xf32> to vector<4x1xf32>
    %298 = vector.extract_strided_slice %2 {offsets = [3, 0], sizes = [1, 80], strides = [1, 1]} : vector<20x80xf32> to vector<1x80xf32>
    %299 = vector.broadcast %297 : vector<4x1xf32> to vector<4x80xf32>
    %300 = vector.broadcast %298 : vector<1x80xf32> to vector<4x80xf32>
    %301 = arith.mulf %299, %300 : vector<4x80xf32>
    %302 = vector.extract_strided_slice %156 {offsets = [0, 4], sizes = [4, 1], strides = [1, 1]} : vector<4x20xf32> to vector<4x1xf32>
    %303 = vector.extract_strided_slice %2 {offsets = [4, 0], sizes = [1, 80], strides = [1, 1]} : vector<20x80xf32> to vector<1x80xf32>
    %304 = vector.broadcast %302 : vector<4x1xf32> to vector<4x80xf32>
    %305 = vector.broadcast %303 : vector<1x80xf32> to vector<4x80xf32>
    %306 = arith.mulf %304, %305 : vector<4x80xf32>
    %307 = vector.extract_strided_slice %156 {offsets = [0, 5], sizes = [4, 1], strides = [1, 1]} : vector<4x20xf32> to vector<4x1xf32>
    %308 = vector.extract_strided_slice %2 {offsets = [5, 0], sizes = [1, 80], strides = [1, 1]} : vector<20x80xf32> to vector<1x80xf32>
    %309 = vector.broadcast %307 : vector<4x1xf32> to vector<4x80xf32>
    %310 = vector.broadcast %308 : vector<1x80xf32> to vector<4x80xf32>
    %311 = arith.mulf %309, %310 : vector<4x80xf32>
    %312 = vector.extract_strided_slice %156 {offsets = [0, 6], sizes = [4, 1], strides = [1, 1]} : vector<4x20xf32> to vector<4x1xf32>
    %313 = vector.extract_strided_slice %2 {offsets = [6, 0], sizes = [1, 80], strides = [1, 1]} : vector<20x80xf32> to vector<1x80xf32>
    %314 = vector.broadcast %312 : vector<4x1xf32> to vector<4x80xf32>
    %315 = vector.broadcast %313 : vector<1x80xf32> to vector<4x80xf32>
    %316 = arith.mulf %314, %315 : vector<4x80xf32>
    %317 = vector.extract_strided_slice %156 {offsets = [0, 7], sizes = [4, 1], strides = [1, 1]} : vector<4x20xf32> to vector<4x1xf32>
    %318 = vector.extract_strided_slice %2 {offsets = [7, 0], sizes = [1, 80], strides = [1, 1]} : vector<20x80xf32> to vector<1x80xf32>
    %319 = vector.broadcast %317 : vector<4x1xf32> to vector<4x80xf32>
    %320 = vector.broadcast %318 : vector<1x80xf32> to vector<4x80xf32>
    %321 = arith.mulf %319, %320 : vector<4x80xf32>
    %322 = vector.extract_strided_slice %156 {offsets = [0, 8], sizes = [4, 1], strides = [1, 1]} : vector<4x20xf32> to vector<4x1xf32>
    %323 = vector.extract_strided_slice %2 {offsets = [8, 0], sizes = [1, 80], strides = [1, 1]} : vector<20x80xf32> to vector<1x80xf32>
    %324 = vector.broadcast %322 : vector<4x1xf32> to vector<4x80xf32>
    %325 = vector.broadcast %323 : vector<1x80xf32> to vector<4x80xf32>
    %326 = arith.mulf %324, %325 : vector<4x80xf32>
    %327 = vector.extract_strided_slice %156 {offsets = [0, 9], sizes = [4, 1], strides = [1, 1]} : vector<4x20xf32> to vector<4x1xf32>
    %328 = vector.extract_strided_slice %2 {offsets = [9, 0], sizes = [1, 80], strides = [1, 1]} : vector<20x80xf32> to vector<1x80xf32>
    %329 = vector.broadcast %327 : vector<4x1xf32> to vector<4x80xf32>
    %330 = vector.broadcast %328 : vector<1x80xf32> to vector<4x80xf32>
    %331 = arith.mulf %329, %330 : vector<4x80xf32>
    %332 = vector.extract_strided_slice %156 {offsets = [0, 10], sizes = [4, 1], strides = [1, 1]} : vector<4x20xf32> to vector<4x1xf32>
    %333 = vector.extract_strided_slice %2 {offsets = [10, 0], sizes = [1, 80], strides = [1, 1]} : vector<20x80xf32> to vector<1x80xf32>
    %334 = vector.broadcast %332 : vector<4x1xf32> to vector<4x80xf32>
    %335 = vector.broadcast %333 : vector<1x80xf32> to vector<4x80xf32>
    %336 = arith.mulf %334, %335 : vector<4x80xf32>
    %337 = vector.extract_strided_slice %156 {offsets = [0, 11], sizes = [4, 1], strides = [1, 1]} : vector<4x20xf32> to vector<4x1xf32>
    %338 = vector.extract_strided_slice %2 {offsets = [11, 0], sizes = [1, 80], strides = [1, 1]} : vector<20x80xf32> to vector<1x80xf32>
    %339 = vector.broadcast %337 : vector<4x1xf32> to vector<4x80xf32>
    %340 = vector.broadcast %338 : vector<1x80xf32> to vector<4x80xf32>
    %341 = arith.mulf %339, %340 : vector<4x80xf32>
    %342 = vector.extract_strided_slice %156 {offsets = [0, 12], sizes = [4, 1], strides = [1, 1]} : vector<4x20xf32> to vector<4x1xf32>
    %343 = vector.extract_strided_slice %2 {offsets = [12, 0], sizes = [1, 80], strides = [1, 1]} : vector<20x80xf32> to vector<1x80xf32>
    %344 = vector.broadcast %342 : vector<4x1xf32> to vector<4x80xf32>
    %345 = vector.broadcast %343 : vector<1x80xf32> to vector<4x80xf32>
    %346 = arith.mulf %344, %345 : vector<4x80xf32>
    %347 = vector.extract_strided_slice %156 {offsets = [0, 13], sizes = [4, 1], strides = [1, 1]} : vector<4x20xf32> to vector<4x1xf32>
    %348 = vector.extract_strided_slice %2 {offsets = [13, 0], sizes = [1, 80], strides = [1, 1]} : vector<20x80xf32> to vector<1x80xf32>
    %349 = vector.broadcast %347 : vector<4x1xf32> to vector<4x80xf32>
    %350 = vector.broadcast %348 : vector<1x80xf32> to vector<4x80xf32>
    %351 = arith.mulf %349, %350 : vector<4x80xf32>
    %352 = vector.extract_strided_slice %156 {offsets = [0, 14], sizes = [4, 1], strides = [1, 1]} : vector<4x20xf32> to vector<4x1xf32>
    %353 = vector.extract_strided_slice %2 {offsets = [14, 0], sizes = [1, 80], strides = [1, 1]} : vector<20x80xf32> to vector<1x80xf32>
    %354 = vector.broadcast %352 : vector<4x1xf32> to vector<4x80xf32>
    %355 = vector.broadcast %353 : vector<1x80xf32> to vector<4x80xf32>
    %356 = arith.mulf %354, %355 : vector<4x80xf32>
    %357 = vector.extract_strided_slice %156 {offsets = [0, 15], sizes = [4, 1], strides = [1, 1]} : vector<4x20xf32> to vector<4x1xf32>
    %358 = vector.extract_strided_slice %2 {offsets = [15, 0], sizes = [1, 80], strides = [1, 1]} : vector<20x80xf32> to vector<1x80xf32>
    %359 = vector.broadcast %357 : vector<4x1xf32> to vector<4x80xf32>
    %360 = vector.broadcast %358 : vector<1x80xf32> to vector<4x80xf32>
    %361 = arith.mulf %359, %360 : vector<4x80xf32>
    %362 = vector.extract_strided_slice %156 {offsets = [0, 16], sizes = [4, 1], strides = [1, 1]} : vector<4x20xf32> to vector<4x1xf32>
    %363 = vector.extract_strided_slice %2 {offsets = [16, 0], sizes = [1, 80], strides = [1, 1]} : vector<20x80xf32> to vector<1x80xf32>
    %364 = vector.broadcast %362 : vector<4x1xf32> to vector<4x80xf32>
    %365 = vector.broadcast %363 : vector<1x80xf32> to vector<4x80xf32>
    %366 = arith.mulf %364, %365 : vector<4x80xf32>
    %367 = vector.extract_strided_slice %156 {offsets = [0, 17], sizes = [4, 1], strides = [1, 1]} : vector<4x20xf32> to vector<4x1xf32>
    %368 = vector.extract_strided_slice %2 {offsets = [17, 0], sizes = [1, 80], strides = [1, 1]} : vector<20x80xf32> to vector<1x80xf32>
    %369 = vector.broadcast %367 : vector<4x1xf32> to vector<4x80xf32>
    %370 = vector.broadcast %368 : vector<1x80xf32> to vector<4x80xf32>
    %371 = arith.mulf %369, %370 : vector<4x80xf32>
    %372 = vector.extract_strided_slice %156 {offsets = [0, 18], sizes = [4, 1], strides = [1, 1]} : vector<4x20xf32> to vector<4x1xf32>
    %373 = vector.extract_strided_slice %2 {offsets = [18, 0], sizes = [1, 80], strides = [1, 1]} : vector<20x80xf32> to vector<1x80xf32>
    %374 = vector.broadcast %372 : vector<4x1xf32> to vector<4x80xf32>
    %375 = vector.broadcast %373 : vector<1x80xf32> to vector<4x80xf32>
    %376 = arith.mulf %374, %375 : vector<4x80xf32>
    %377 = vector.extract_strided_slice %156 {offsets = [0, 19], sizes = [4, 1], strides = [1, 1]} : vector<4x20xf32> to vector<4x1xf32>
    %378 = vector.extract_strided_slice %2 {offsets = [19, 0], sizes = [1, 80], strides = [1, 1]} : vector<20x80xf32> to vector<1x80xf32>
    %379 = vector.broadcast %377 : vector<4x1xf32> to vector<4x80xf32>
    %380 = vector.broadcast %378 : vector<1x80xf32> to vector<4x80xf32>
    %381 = arith.mulf %379, %380 : vector<4x80xf32>
    %382 = arith.addf %286, %291 : vector<4x80xf32>
    %383 = arith.addf %296, %301 : vector<4x80xf32>
    %384 = arith.addf %306, %311 : vector<4x80xf32>
    %385 = arith.addf %316, %321 : vector<4x80xf32>
    %386 = arith.addf %326, %331 : vector<4x80xf32>
    %387 = arith.addf %336, %341 : vector<4x80xf32>
    %388 = arith.addf %346, %351 : vector<4x80xf32>
    %389 = arith.addf %356, %361 : vector<4x80xf32>
    %390 = arith.addf %366, %371 : vector<4x80xf32>
    %391 = arith.addf %376, %381 : vector<4x80xf32>
    %392 = arith.addf %382, %383 : vector<4x80xf32>
    %393 = arith.addf %384, %385 : vector<4x80xf32>
    %394 = arith.addf %386, %387 : vector<4x80xf32>
    %395 = arith.addf %388, %389 : vector<4x80xf32>
    %396 = arith.addf %390, %391 : vector<4x80xf32>
    %397 = arith.addf %392, %393 : vector<4x80xf32>
    %398 = arith.addf %394, %395 : vector<4x80xf32>
    %399 = arith.addf %397, %398 : vector<4x80xf32>
    %400 = arith.addf %399, %396 : vector<4x80xf32>
    %401 = arith.addf %281, %400 : vector<4x80xf32>
    %402 = arith.negf %401 : vector<4x80xf32>
    %403 = math.exp %402 : vector<4x80xf32>
    %cst_18 = arith.constant 1.000000e+00 : f32
    %404 = vector.broadcast %cst_18 : f32 to vector<4x80xf32>
    %405 = arith.addf %404, %403 : vector<4x80xf32>
    %406 = arith.divf %404, %405 : vector<4x80xf32>
    %407 = math.tanh %401 : vector<4x80xf32>
    %408 = vector.extract_strided_slice %406 {offsets = [0, 0], sizes = [4, 20], strides = [1, 1]} : vector<4x80xf32> to vector<4x20xf32>
    %409 = vector.extract_strided_slice %406 {offsets = [0, 20], sizes = [4, 20], strides = [1, 1]} : vector<4x80xf32> to vector<4x20xf32>
    %410 = vector.extract_strided_slice %407 {offsets = [0, 40], sizes = [4, 20], strides = [1, 1]} : vector<4x80xf32> to vector<4x20xf32>
    %411 = vector.extract_strided_slice %406 {offsets = [0, 60], sizes = [4, 20], strides = [1, 1]} : vector<4x80xf32> to vector<4x20xf32>
    %412 = arith.mulf %409, %154 : vector<4x20xf32>
    %413 = arith.mulf %408, %410 : vector<4x20xf32>
    %414 = arith.addf %412, %413 : vector<4x20xf32>
    %415 = math.tanh %414 : vector<4x20xf32>
    %416 = arith.mulf %411, %415 : vector<4x20xf32>
    %417 = vector.extract_strided_slice %414 {offsets = [0, 0], sizes = [4, 1], strides = [1, 1]} : vector<4x20xf32> to vector<4x1xf32>
    %418 = vector.extract_strided_slice %3 {offsets = [0, 0], sizes = [1, 4], strides = [1, 1]} : vector<20x4xf32> to vector<1x4xf32>
    %419 = vector.broadcast %417 : vector<4x1xf32> to vector<4x4xf32>
    %420 = vector.broadcast %418 : vector<1x4xf32> to vector<4x4xf32>
    %421 = arith.mulf %419, %420 : vector<4x4xf32>
    %422 = vector.extract_strided_slice %414 {offsets = [0, 1], sizes = [4, 1], strides = [1, 1]} : vector<4x20xf32> to vector<4x1xf32>
    %423 = vector.extract_strided_slice %3 {offsets = [1, 0], sizes = [1, 4], strides = [1, 1]} : vector<20x4xf32> to vector<1x4xf32>
    %424 = vector.broadcast %422 : vector<4x1xf32> to vector<4x4xf32>
    %425 = vector.broadcast %423 : vector<1x4xf32> to vector<4x4xf32>
    %426 = arith.mulf %424, %425 : vector<4x4xf32>
    %427 = vector.extract_strided_slice %414 {offsets = [0, 2], sizes = [4, 1], strides = [1, 1]} : vector<4x20xf32> to vector<4x1xf32>
    %428 = vector.extract_strided_slice %3 {offsets = [2, 0], sizes = [1, 4], strides = [1, 1]} : vector<20x4xf32> to vector<1x4xf32>
    %429 = vector.broadcast %427 : vector<4x1xf32> to vector<4x4xf32>
    %430 = vector.broadcast %428 : vector<1x4xf32> to vector<4x4xf32>
    %431 = arith.mulf %429, %430 : vector<4x4xf32>
    %432 = vector.extract_strided_slice %414 {offsets = [0, 3], sizes = [4, 1], strides = [1, 1]} : vector<4x20xf32> to vector<4x1xf32>
    %433 = vector.extract_strided_slice %3 {offsets = [3, 0], sizes = [1, 4], strides = [1, 1]} : vector<20x4xf32> to vector<1x4xf32>
    %434 = vector.broadcast %432 : vector<4x1xf32> to vector<4x4xf32>
    %435 = vector.broadcast %433 : vector<1x4xf32> to vector<4x4xf32>
    %436 = arith.mulf %434, %435 : vector<4x4xf32>
    %437 = vector.extract_strided_slice %414 {offsets = [0, 4], sizes = [4, 1], strides = [1, 1]} : vector<4x20xf32> to vector<4x1xf32>
    %438 = vector.extract_strided_slice %3 {offsets = [4, 0], sizes = [1, 4], strides = [1, 1]} : vector<20x4xf32> to vector<1x4xf32>
    %439 = vector.broadcast %437 : vector<4x1xf32> to vector<4x4xf32>
    %440 = vector.broadcast %438 : vector<1x4xf32> to vector<4x4xf32>
    %441 = arith.mulf %439, %440 : vector<4x4xf32>
    %442 = vector.extract_strided_slice %414 {offsets = [0, 5], sizes = [4, 1], strides = [1, 1]} : vector<4x20xf32> to vector<4x1xf32>
    %443 = vector.extract_strided_slice %3 {offsets = [5, 0], sizes = [1, 4], strides = [1, 1]} : vector<20x4xf32> to vector<1x4xf32>
    %444 = vector.broadcast %442 : vector<4x1xf32> to vector<4x4xf32>
    %445 = vector.broadcast %443 : vector<1x4xf32> to vector<4x4xf32>
    %446 = arith.mulf %444, %445 : vector<4x4xf32>
    %447 = vector.extract_strided_slice %414 {offsets = [0, 6], sizes = [4, 1], strides = [1, 1]} : vector<4x20xf32> to vector<4x1xf32>
    %448 = vector.extract_strided_slice %3 {offsets = [6, 0], sizes = [1, 4], strides = [1, 1]} : vector<20x4xf32> to vector<1x4xf32>
    %449 = vector.broadcast %447 : vector<4x1xf32> to vector<4x4xf32>
    %450 = vector.broadcast %448 : vector<1x4xf32> to vector<4x4xf32>
    %451 = arith.mulf %449, %450 : vector<4x4xf32>
    %452 = vector.extract_strided_slice %414 {offsets = [0, 7], sizes = [4, 1], strides = [1, 1]} : vector<4x20xf32> to vector<4x1xf32>
    %453 = vector.extract_strided_slice %3 {offsets = [7, 0], sizes = [1, 4], strides = [1, 1]} : vector<20x4xf32> to vector<1x4xf32>
    %454 = vector.broadcast %452 : vector<4x1xf32> to vector<4x4xf32>
    %455 = vector.broadcast %453 : vector<1x4xf32> to vector<4x4xf32>
    %456 = arith.mulf %454, %455 : vector<4x4xf32>
    %457 = vector.extract_strided_slice %414 {offsets = [0, 8], sizes = [4, 1], strides = [1, 1]} : vector<4x20xf32> to vector<4x1xf32>
    %458 = vector.extract_strided_slice %3 {offsets = [8, 0], sizes = [1, 4], strides = [1, 1]} : vector<20x4xf32> to vector<1x4xf32>
    %459 = vector.broadcast %457 : vector<4x1xf32> to vector<4x4xf32>
    %460 = vector.broadcast %458 : vector<1x4xf32> to vector<4x4xf32>
    %461 = arith.mulf %459, %460 : vector<4x4xf32>
    %462 = vector.extract_strided_slice %414 {offsets = [0, 9], sizes = [4, 1], strides = [1, 1]} : vector<4x20xf32> to vector<4x1xf32>
    %463 = vector.extract_strided_slice %3 {offsets = [9, 0], sizes = [1, 4], strides = [1, 1]} : vector<20x4xf32> to vector<1x4xf32>
    %464 = vector.broadcast %462 : vector<4x1xf32> to vector<4x4xf32>
    %465 = vector.broadcast %463 : vector<1x4xf32> to vector<4x4xf32>
    %466 = arith.mulf %464, %465 : vector<4x4xf32>
    %467 = vector.extract_strided_slice %414 {offsets = [0, 10], sizes = [4, 1], strides = [1, 1]} : vector<4x20xf32> to vector<4x1xf32>
    %468 = vector.extract_strided_slice %3 {offsets = [10, 0], sizes = [1, 4], strides = [1, 1]} : vector<20x4xf32> to vector<1x4xf32>
    %469 = vector.broadcast %467 : vector<4x1xf32> to vector<4x4xf32>
    %470 = vector.broadcast %468 : vector<1x4xf32> to vector<4x4xf32>
    %471 = arith.mulf %469, %470 : vector<4x4xf32>
    %472 = vector.extract_strided_slice %414 {offsets = [0, 11], sizes = [4, 1], strides = [1, 1]} : vector<4x20xf32> to vector<4x1xf32>
    %473 = vector.extract_strided_slice %3 {offsets = [11, 0], sizes = [1, 4], strides = [1, 1]} : vector<20x4xf32> to vector<1x4xf32>
    %474 = vector.broadcast %472 : vector<4x1xf32> to vector<4x4xf32>
    %475 = vector.broadcast %473 : vector<1x4xf32> to vector<4x4xf32>
    %476 = arith.mulf %474, %475 : vector<4x4xf32>
    %477 = vector.extract_strided_slice %414 {offsets = [0, 12], sizes = [4, 1], strides = [1, 1]} : vector<4x20xf32> to vector<4x1xf32>
    %478 = vector.extract_strided_slice %3 {offsets = [12, 0], sizes = [1, 4], strides = [1, 1]} : vector<20x4xf32> to vector<1x4xf32>
    %479 = vector.broadcast %477 : vector<4x1xf32> to vector<4x4xf32>
    %480 = vector.broadcast %478 : vector<1x4xf32> to vector<4x4xf32>
    %481 = arith.mulf %479, %480 : vector<4x4xf32>
    %482 = vector.extract_strided_slice %414 {offsets = [0, 13], sizes = [4, 1], strides = [1, 1]} : vector<4x20xf32> to vector<4x1xf32>
    %483 = vector.extract_strided_slice %3 {offsets = [13, 0], sizes = [1, 4], strides = [1, 1]} : vector<20x4xf32> to vector<1x4xf32>
    %484 = vector.broadcast %482 : vector<4x1xf32> to vector<4x4xf32>
    %485 = vector.broadcast %483 : vector<1x4xf32> to vector<4x4xf32>
    %486 = arith.mulf %484, %485 : vector<4x4xf32>
    %487 = vector.extract_strided_slice %414 {offsets = [0, 14], sizes = [4, 1], strides = [1, 1]} : vector<4x20xf32> to vector<4x1xf32>
    %488 = vector.extract_strided_slice %3 {offsets = [14, 0], sizes = [1, 4], strides = [1, 1]} : vector<20x4xf32> to vector<1x4xf32>
    %489 = vector.broadcast %487 : vector<4x1xf32> to vector<4x4xf32>
    %490 = vector.broadcast %488 : vector<1x4xf32> to vector<4x4xf32>
    %491 = arith.mulf %489, %490 : vector<4x4xf32>
    %492 = vector.extract_strided_slice %414 {offsets = [0, 15], sizes = [4, 1], strides = [1, 1]} : vector<4x20xf32> to vector<4x1xf32>
    %493 = vector.extract_strided_slice %3 {offsets = [15, 0], sizes = [1, 4], strides = [1, 1]} : vector<20x4xf32> to vector<1x4xf32>
    %494 = vector.broadcast %492 : vector<4x1xf32> to vector<4x4xf32>
    %495 = vector.broadcast %493 : vector<1x4xf32> to vector<4x4xf32>
    %496 = arith.mulf %494, %495 : vector<4x4xf32>
    %497 = vector.extract_strided_slice %414 {offsets = [0, 16], sizes = [4, 1], strides = [1, 1]} : vector<4x20xf32> to vector<4x1xf32>
    %498 = vector.extract_strided_slice %3 {offsets = [16, 0], sizes = [1, 4], strides = [1, 1]} : vector<20x4xf32> to vector<1x4xf32>
    %499 = vector.broadcast %497 : vector<4x1xf32> to vector<4x4xf32>
    %500 = vector.broadcast %498 : vector<1x4xf32> to vector<4x4xf32>
    %501 = arith.mulf %499, %500 : vector<4x4xf32>
    %502 = vector.extract_strided_slice %414 {offsets = [0, 17], sizes = [4, 1], strides = [1, 1]} : vector<4x20xf32> to vector<4x1xf32>
    %503 = vector.extract_strided_slice %3 {offsets = [17, 0], sizes = [1, 4], strides = [1, 1]} : vector<20x4xf32> to vector<1x4xf32>
    %504 = vector.broadcast %502 : vector<4x1xf32> to vector<4x4xf32>
    %505 = vector.broadcast %503 : vector<1x4xf32> to vector<4x4xf32>
    %506 = arith.mulf %504, %505 : vector<4x4xf32>
    %507 = vector.extract_strided_slice %414 {offsets = [0, 18], sizes = [4, 1], strides = [1, 1]} : vector<4x20xf32> to vector<4x1xf32>
    %508 = vector.extract_strided_slice %3 {offsets = [18, 0], sizes = [1, 4], strides = [1, 1]} : vector<20x4xf32> to vector<1x4xf32>
    %509 = vector.broadcast %507 : vector<4x1xf32> to vector<4x4xf32>
    %510 = vector.broadcast %508 : vector<1x4xf32> to vector<4x4xf32>
    %511 = arith.mulf %509, %510 : vector<4x4xf32>
    %512 = vector.extract_strided_slice %414 {offsets = [0, 19], sizes = [4, 1], strides = [1, 1]} : vector<4x20xf32> to vector<4x1xf32>
    %513 = vector.extract_strided_slice %3 {offsets = [19, 0], sizes = [1, 4], strides = [1, 1]} : vector<20x4xf32> to vector<1x4xf32>
    %514 = vector.broadcast %512 : vector<4x1xf32> to vector<4x4xf32>
    %515 = vector.broadcast %513 : vector<1x4xf32> to vector<4x4xf32>
    %516 = arith.mulf %514, %515 : vector<4x4xf32>
    %517 = arith.addf %421, %426 : vector<4x4xf32>
    %518 = arith.addf %431, %436 : vector<4x4xf32>
    %519 = arith.addf %441, %446 : vector<4x4xf32>
    %520 = arith.addf %451, %456 : vector<4x4xf32>
    %521 = arith.addf %461, %466 : vector<4x4xf32>
    %522 = arith.addf %471, %476 : vector<4x4xf32>
    %523 = arith.addf %481, %486 : vector<4x4xf32>
    %524 = arith.addf %491, %496 : vector<4x4xf32>
    %525 = arith.addf %501, %506 : vector<4x4xf32>
    %526 = arith.addf %511, %516 : vector<4x4xf32>
    %527 = arith.addf %517, %518 : vector<4x4xf32>
    %528 = arith.addf %519, %520 : vector<4x4xf32>
    %529 = arith.addf %521, %522 : vector<4x4xf32>
    %530 = arith.addf %523, %524 : vector<4x4xf32>
    %531 = arith.addf %525, %526 : vector<4x4xf32>
    %532 = arith.addf %527, %528 : vector<4x4xf32>
    %533 = arith.addf %529, %530 : vector<4x4xf32>
    %534 = arith.addf %532, %533 : vector<4x4xf32>
    %535 = arith.addf %534, %531 : vector<4x4xf32>
    %536 = arith.addf %535, %10 : vector<4x4xf32>
    %537 = vector.extract_strided_slice %0 {offsets = [0, 2], sizes = [4, 1], strides = [1, 1]} : vector<4x8xf32> to vector<4x1xf32>
    %538 = vector.broadcast %537 : vector<4x1xf32> to vector<4x80xf32>
    %539 = vector.broadcast %1 : vector<1x80xf32> to vector<4x80xf32>
    %540 = arith.mulf %538, %539 : vector<4x80xf32>
    %541 = arith.addf %540, %7 : vector<4x80xf32>
    %542 = vector.extract_strided_slice %416 {offsets = [0, 0], sizes = [4, 1], strides = [1, 1]} : vector<4x20xf32> to vector<4x1xf32>
    %543 = vector.extract_strided_slice %2 {offsets = [0, 0], sizes = [1, 80], strides = [1, 1]} : vector<20x80xf32> to vector<1x80xf32>
    %544 = vector.broadcast %542 : vector<4x1xf32> to vector<4x80xf32>
    %545 = vector.broadcast %543 : vector<1x80xf32> to vector<4x80xf32>
    %546 = arith.mulf %544, %545 : vector<4x80xf32>
    %547 = vector.extract_strided_slice %416 {offsets = [0, 1], sizes = [4, 1], strides = [1, 1]} : vector<4x20xf32> to vector<4x1xf32>
    %548 = vector.extract_strided_slice %2 {offsets = [1, 0], sizes = [1, 80], strides = [1, 1]} : vector<20x80xf32> to vector<1x80xf32>
    %549 = vector.broadcast %547 : vector<4x1xf32> to vector<4x80xf32>
    %550 = vector.broadcast %548 : vector<1x80xf32> to vector<4x80xf32>
    %551 = arith.mulf %549, %550 : vector<4x80xf32>
    %552 = vector.extract_strided_slice %416 {offsets = [0, 2], sizes = [4, 1], strides = [1, 1]} : vector<4x20xf32> to vector<4x1xf32>
    %553 = vector.extract_strided_slice %2 {offsets = [2, 0], sizes = [1, 80], strides = [1, 1]} : vector<20x80xf32> to vector<1x80xf32>
    %554 = vector.broadcast %552 : vector<4x1xf32> to vector<4x80xf32>
    %555 = vector.broadcast %553 : vector<1x80xf32> to vector<4x80xf32>
    %556 = arith.mulf %554, %555 : vector<4x80xf32>
    %557 = vector.extract_strided_slice %416 {offsets = [0, 3], sizes = [4, 1], strides = [1, 1]} : vector<4x20xf32> to vector<4x1xf32>
    %558 = vector.extract_strided_slice %2 {offsets = [3, 0], sizes = [1, 80], strides = [1, 1]} : vector<20x80xf32> to vector<1x80xf32>
    %559 = vector.broadcast %557 : vector<4x1xf32> to vector<4x80xf32>
    %560 = vector.broadcast %558 : vector<1x80xf32> to vector<4x80xf32>
    %561 = arith.mulf %559, %560 : vector<4x80xf32>
    %562 = vector.extract_strided_slice %416 {offsets = [0, 4], sizes = [4, 1], strides = [1, 1]} : vector<4x20xf32> to vector<4x1xf32>
    %563 = vector.extract_strided_slice %2 {offsets = [4, 0], sizes = [1, 80], strides = [1, 1]} : vector<20x80xf32> to vector<1x80xf32>
    %564 = vector.broadcast %562 : vector<4x1xf32> to vector<4x80xf32>
    %565 = vector.broadcast %563 : vector<1x80xf32> to vector<4x80xf32>
    %566 = arith.mulf %564, %565 : vector<4x80xf32>
    %567 = vector.extract_strided_slice %416 {offsets = [0, 5], sizes = [4, 1], strides = [1, 1]} : vector<4x20xf32> to vector<4x1xf32>
    %568 = vector.extract_strided_slice %2 {offsets = [5, 0], sizes = [1, 80], strides = [1, 1]} : vector<20x80xf32> to vector<1x80xf32>
    %569 = vector.broadcast %567 : vector<4x1xf32> to vector<4x80xf32>
    %570 = vector.broadcast %568 : vector<1x80xf32> to vector<4x80xf32>
    %571 = arith.mulf %569, %570 : vector<4x80xf32>
    %572 = vector.extract_strided_slice %416 {offsets = [0, 6], sizes = [4, 1], strides = [1, 1]} : vector<4x20xf32> to vector<4x1xf32>
    %573 = vector.extract_strided_slice %2 {offsets = [6, 0], sizes = [1, 80], strides = [1, 1]} : vector<20x80xf32> to vector<1x80xf32>
    %574 = vector.broadcast %572 : vector<4x1xf32> to vector<4x80xf32>
    %575 = vector.broadcast %573 : vector<1x80xf32> to vector<4x80xf32>
    %576 = arith.mulf %574, %575 : vector<4x80xf32>
    %577 = vector.extract_strided_slice %416 {offsets = [0, 7], sizes = [4, 1], strides = [1, 1]} : vector<4x20xf32> to vector<4x1xf32>
    %578 = vector.extract_strided_slice %2 {offsets = [7, 0], sizes = [1, 80], strides = [1, 1]} : vector<20x80xf32> to vector<1x80xf32>
    %579 = vector.broadcast %577 : vector<4x1xf32> to vector<4x80xf32>
    %580 = vector.broadcast %578 : vector<1x80xf32> to vector<4x80xf32>
    %581 = arith.mulf %579, %580 : vector<4x80xf32>
    %582 = vector.extract_strided_slice %416 {offsets = [0, 8], sizes = [4, 1], strides = [1, 1]} : vector<4x20xf32> to vector<4x1xf32>
    %583 = vector.extract_strided_slice %2 {offsets = [8, 0], sizes = [1, 80], strides = [1, 1]} : vector<20x80xf32> to vector<1x80xf32>
    %584 = vector.broadcast %582 : vector<4x1xf32> to vector<4x80xf32>
    %585 = vector.broadcast %583 : vector<1x80xf32> to vector<4x80xf32>
    %586 = arith.mulf %584, %585 : vector<4x80xf32>
    %587 = vector.extract_strided_slice %416 {offsets = [0, 9], sizes = [4, 1], strides = [1, 1]} : vector<4x20xf32> to vector<4x1xf32>
    %588 = vector.extract_strided_slice %2 {offsets = [9, 0], sizes = [1, 80], strides = [1, 1]} : vector<20x80xf32> to vector<1x80xf32>
    %589 = vector.broadcast %587 : vector<4x1xf32> to vector<4x80xf32>
    %590 = vector.broadcast %588 : vector<1x80xf32> to vector<4x80xf32>
    %591 = arith.mulf %589, %590 : vector<4x80xf32>
    %592 = vector.extract_strided_slice %416 {offsets = [0, 10], sizes = [4, 1], strides = [1, 1]} : vector<4x20xf32> to vector<4x1xf32>
    %593 = vector.extract_strided_slice %2 {offsets = [10, 0], sizes = [1, 80], strides = [1, 1]} : vector<20x80xf32> to vector<1x80xf32>
    %594 = vector.broadcast %592 : vector<4x1xf32> to vector<4x80xf32>
    %595 = vector.broadcast %593 : vector<1x80xf32> to vector<4x80xf32>
    %596 = arith.mulf %594, %595 : vector<4x80xf32>
    %597 = vector.extract_strided_slice %416 {offsets = [0, 11], sizes = [4, 1], strides = [1, 1]} : vector<4x20xf32> to vector<4x1xf32>
    %598 = vector.extract_strided_slice %2 {offsets = [11, 0], sizes = [1, 80], strides = [1, 1]} : vector<20x80xf32> to vector<1x80xf32>
    %599 = vector.broadcast %597 : vector<4x1xf32> to vector<4x80xf32>
    %600 = vector.broadcast %598 : vector<1x80xf32> to vector<4x80xf32>
    %601 = arith.mulf %599, %600 : vector<4x80xf32>
    %602 = vector.extract_strided_slice %416 {offsets = [0, 12], sizes = [4, 1], strides = [1, 1]} : vector<4x20xf32> to vector<4x1xf32>
    %603 = vector.extract_strided_slice %2 {offsets = [12, 0], sizes = [1, 80], strides = [1, 1]} : vector<20x80xf32> to vector<1x80xf32>
    %604 = vector.broadcast %602 : vector<4x1xf32> to vector<4x80xf32>
    %605 = vector.broadcast %603 : vector<1x80xf32> to vector<4x80xf32>
    %606 = arith.mulf %604, %605 : vector<4x80xf32>
    %607 = vector.extract_strided_slice %416 {offsets = [0, 13], sizes = [4, 1], strides = [1, 1]} : vector<4x20xf32> to vector<4x1xf32>
    %608 = vector.extract_strided_slice %2 {offsets = [13, 0], sizes = [1, 80], strides = [1, 1]} : vector<20x80xf32> to vector<1x80xf32>
    %609 = vector.broadcast %607 : vector<4x1xf32> to vector<4x80xf32>
    %610 = vector.broadcast %608 : vector<1x80xf32> to vector<4x80xf32>
    %611 = arith.mulf %609, %610 : vector<4x80xf32>
    %612 = vector.extract_strided_slice %416 {offsets = [0, 14], sizes = [4, 1], strides = [1, 1]} : vector<4x20xf32> to vector<4x1xf32>
    %613 = vector.extract_strided_slice %2 {offsets = [14, 0], sizes = [1, 80], strides = [1, 1]} : vector<20x80xf32> to vector<1x80xf32>
    %614 = vector.broadcast %612 : vector<4x1xf32> to vector<4x80xf32>
    %615 = vector.broadcast %613 : vector<1x80xf32> to vector<4x80xf32>
    %616 = arith.mulf %614, %615 : vector<4x80xf32>
    %617 = vector.extract_strided_slice %416 {offsets = [0, 15], sizes = [4, 1], strides = [1, 1]} : vector<4x20xf32> to vector<4x1xf32>
    %618 = vector.extract_strided_slice %2 {offsets = [15, 0], sizes = [1, 80], strides = [1, 1]} : vector<20x80xf32> to vector<1x80xf32>
    %619 = vector.broadcast %617 : vector<4x1xf32> to vector<4x80xf32>
    %620 = vector.broadcast %618 : vector<1x80xf32> to vector<4x80xf32>
    %621 = arith.mulf %619, %620 : vector<4x80xf32>
    %622 = vector.extract_strided_slice %416 {offsets = [0, 16], sizes = [4, 1], strides = [1, 1]} : vector<4x20xf32> to vector<4x1xf32>
    %623 = vector.extract_strided_slice %2 {offsets = [16, 0], sizes = [1, 80], strides = [1, 1]} : vector<20x80xf32> to vector<1x80xf32>
    %624 = vector.broadcast %622 : vector<4x1xf32> to vector<4x80xf32>
    %625 = vector.broadcast %623 : vector<1x80xf32> to vector<4x80xf32>
    %626 = arith.mulf %624, %625 : vector<4x80xf32>
    %627 = vector.extract_strided_slice %416 {offsets = [0, 17], sizes = [4, 1], strides = [1, 1]} : vector<4x20xf32> to vector<4x1xf32>
    %628 = vector.extract_strided_slice %2 {offsets = [17, 0], sizes = [1, 80], strides = [1, 1]} : vector<20x80xf32> to vector<1x80xf32>
    %629 = vector.broadcast %627 : vector<4x1xf32> to vector<4x80xf32>
    %630 = vector.broadcast %628 : vector<1x80xf32> to vector<4x80xf32>
    %631 = arith.mulf %629, %630 : vector<4x80xf32>
    %632 = vector.extract_strided_slice %416 {offsets = [0, 18], sizes = [4, 1], strides = [1, 1]} : vector<4x20xf32> to vector<4x1xf32>
    %633 = vector.extract_strided_slice %2 {offsets = [18, 0], sizes = [1, 80], strides = [1, 1]} : vector<20x80xf32> to vector<1x80xf32>
    %634 = vector.broadcast %632 : vector<4x1xf32> to vector<4x80xf32>
    %635 = vector.broadcast %633 : vector<1x80xf32> to vector<4x80xf32>
    %636 = arith.mulf %634, %635 : vector<4x80xf32>
    %637 = vector.extract_strided_slice %416 {offsets = [0, 19], sizes = [4, 1], strides = [1, 1]} : vector<4x20xf32> to vector<4x1xf32>
    %638 = vector.extract_strided_slice %2 {offsets = [19, 0], sizes = [1, 80], strides = [1, 1]} : vector<20x80xf32> to vector<1x80xf32>
    %639 = vector.broadcast %637 : vector<4x1xf32> to vector<4x80xf32>
    %640 = vector.broadcast %638 : vector<1x80xf32> to vector<4x80xf32>
    %641 = arith.mulf %639, %640 : vector<4x80xf32>
    %642 = arith.addf %546, %551 : vector<4x80xf32>
    %643 = arith.addf %556, %561 : vector<4x80xf32>
    %644 = arith.addf %566, %571 : vector<4x80xf32>
    %645 = arith.addf %576, %581 : vector<4x80xf32>
    %646 = arith.addf %586, %591 : vector<4x80xf32>
    %647 = arith.addf %596, %601 : vector<4x80xf32>
    %648 = arith.addf %606, %611 : vector<4x80xf32>
    %649 = arith.addf %616, %621 : vector<4x80xf32>
    %650 = arith.addf %626, %631 : vector<4x80xf32>
    %651 = arith.addf %636, %641 : vector<4x80xf32>
    %652 = arith.addf %642, %643 : vector<4x80xf32>
    %653 = arith.addf %644, %645 : vector<4x80xf32>
    %654 = arith.addf %646, %647 : vector<4x80xf32>
    %655 = arith.addf %648, %649 : vector<4x80xf32>
    %656 = arith.addf %650, %651 : vector<4x80xf32>
    %657 = arith.addf %652, %653 : vector<4x80xf32>
    %658 = arith.addf %654, %655 : vector<4x80xf32>
    %659 = arith.addf %657, %658 : vector<4x80xf32>
    %660 = arith.addf %659, %656 : vector<4x80xf32>
    %661 = arith.addf %541, %660 : vector<4x80xf32>
    %662 = arith.negf %661 : vector<4x80xf32>
    %663 = math.exp %662 : vector<4x80xf32>
    %cst_19 = arith.constant 1.000000e+00 : f32
    %664 = vector.broadcast %cst_19 : f32 to vector<4x80xf32>
    %665 = arith.addf %664, %663 : vector<4x80xf32>
    %666 = arith.divf %664, %665 : vector<4x80xf32>
    %667 = math.tanh %661 : vector<4x80xf32>
    %668 = vector.extract_strided_slice %666 {offsets = [0, 0], sizes = [4, 20], strides = [1, 1]} : vector<4x80xf32> to vector<4x20xf32>
    %669 = vector.extract_strided_slice %666 {offsets = [0, 20], sizes = [4, 20], strides = [1, 1]} : vector<4x80xf32> to vector<4x20xf32>
    %670 = vector.extract_strided_slice %667 {offsets = [0, 40], sizes = [4, 20], strides = [1, 1]} : vector<4x80xf32> to vector<4x20xf32>
    %671 = vector.extract_strided_slice %666 {offsets = [0, 60], sizes = [4, 20], strides = [1, 1]} : vector<4x80xf32> to vector<4x20xf32>
    %672 = arith.mulf %669, %414 : vector<4x20xf32>
    %673 = arith.mulf %668, %670 : vector<4x20xf32>
    %674 = arith.addf %672, %673 : vector<4x20xf32>
    %675 = math.tanh %674 : vector<4x20xf32>
    %676 = arith.mulf %671, %675 : vector<4x20xf32>
    %677 = vector.extract_strided_slice %674 {offsets = [0, 0], sizes = [4, 1], strides = [1, 1]} : vector<4x20xf32> to vector<4x1xf32>
    %678 = vector.extract_strided_slice %3 {offsets = [0, 0], sizes = [1, 4], strides = [1, 1]} : vector<20x4xf32> to vector<1x4xf32>
    %679 = vector.broadcast %677 : vector<4x1xf32> to vector<4x4xf32>
    %680 = vector.broadcast %678 : vector<1x4xf32> to vector<4x4xf32>
    %681 = arith.mulf %679, %680 : vector<4x4xf32>
    %682 = vector.extract_strided_slice %674 {offsets = [0, 1], sizes = [4, 1], strides = [1, 1]} : vector<4x20xf32> to vector<4x1xf32>
    %683 = vector.extract_strided_slice %3 {offsets = [1, 0], sizes = [1, 4], strides = [1, 1]} : vector<20x4xf32> to vector<1x4xf32>
    %684 = vector.broadcast %682 : vector<4x1xf32> to vector<4x4xf32>
    %685 = vector.broadcast %683 : vector<1x4xf32> to vector<4x4xf32>
    %686 = arith.mulf %684, %685 : vector<4x4xf32>
    %687 = vector.extract_strided_slice %674 {offsets = [0, 2], sizes = [4, 1], strides = [1, 1]} : vector<4x20xf32> to vector<4x1xf32>
    %688 = vector.extract_strided_slice %3 {offsets = [2, 0], sizes = [1, 4], strides = [1, 1]} : vector<20x4xf32> to vector<1x4xf32>
    %689 = vector.broadcast %687 : vector<4x1xf32> to vector<4x4xf32>
    %690 = vector.broadcast %688 : vector<1x4xf32> to vector<4x4xf32>
    %691 = arith.mulf %689, %690 : vector<4x4xf32>
    %692 = vector.extract_strided_slice %674 {offsets = [0, 3], sizes = [4, 1], strides = [1, 1]} : vector<4x20xf32> to vector<4x1xf32>
    %693 = vector.extract_strided_slice %3 {offsets = [3, 0], sizes = [1, 4], strides = [1, 1]} : vector<20x4xf32> to vector<1x4xf32>
    %694 = vector.broadcast %692 : vector<4x1xf32> to vector<4x4xf32>
    %695 = vector.broadcast %693 : vector<1x4xf32> to vector<4x4xf32>
    %696 = arith.mulf %694, %695 : vector<4x4xf32>
    %697 = vector.extract_strided_slice %674 {offsets = [0, 4], sizes = [4, 1], strides = [1, 1]} : vector<4x20xf32> to vector<4x1xf32>
    %698 = vector.extract_strided_slice %3 {offsets = [4, 0], sizes = [1, 4], strides = [1, 1]} : vector<20x4xf32> to vector<1x4xf32>
    %699 = vector.broadcast %697 : vector<4x1xf32> to vector<4x4xf32>
    %700 = vector.broadcast %698 : vector<1x4xf32> to vector<4x4xf32>
    %701 = arith.mulf %699, %700 : vector<4x4xf32>
    %702 = vector.extract_strided_slice %674 {offsets = [0, 5], sizes = [4, 1], strides = [1, 1]} : vector<4x20xf32> to vector<4x1xf32>
    %703 = vector.extract_strided_slice %3 {offsets = [5, 0], sizes = [1, 4], strides = [1, 1]} : vector<20x4xf32> to vector<1x4xf32>
    %704 = vector.broadcast %702 : vector<4x1xf32> to vector<4x4xf32>
    %705 = vector.broadcast %703 : vector<1x4xf32> to vector<4x4xf32>
    %706 = arith.mulf %704, %705 : vector<4x4xf32>
    %707 = vector.extract_strided_slice %674 {offsets = [0, 6], sizes = [4, 1], strides = [1, 1]} : vector<4x20xf32> to vector<4x1xf32>
    %708 = vector.extract_strided_slice %3 {offsets = [6, 0], sizes = [1, 4], strides = [1, 1]} : vector<20x4xf32> to vector<1x4xf32>
    %709 = vector.broadcast %707 : vector<4x1xf32> to vector<4x4xf32>
    %710 = vector.broadcast %708 : vector<1x4xf32> to vector<4x4xf32>
    %711 = arith.mulf %709, %710 : vector<4x4xf32>
    %712 = vector.extract_strided_slice %674 {offsets = [0, 7], sizes = [4, 1], strides = [1, 1]} : vector<4x20xf32> to vector<4x1xf32>
    %713 = vector.extract_strided_slice %3 {offsets = [7, 0], sizes = [1, 4], strides = [1, 1]} : vector<20x4xf32> to vector<1x4xf32>
    %714 = vector.broadcast %712 : vector<4x1xf32> to vector<4x4xf32>
    %715 = vector.broadcast %713 : vector<1x4xf32> to vector<4x4xf32>
    %716 = arith.mulf %714, %715 : vector<4x4xf32>
    %717 = vector.extract_strided_slice %674 {offsets = [0, 8], sizes = [4, 1], strides = [1, 1]} : vector<4x20xf32> to vector<4x1xf32>
    %718 = vector.extract_strided_slice %3 {offsets = [8, 0], sizes = [1, 4], strides = [1, 1]} : vector<20x4xf32> to vector<1x4xf32>
    %719 = vector.broadcast %717 : vector<4x1xf32> to vector<4x4xf32>
    %720 = vector.broadcast %718 : vector<1x4xf32> to vector<4x4xf32>
    %721 = arith.mulf %719, %720 : vector<4x4xf32>
    %722 = vector.extract_strided_slice %674 {offsets = [0, 9], sizes = [4, 1], strides = [1, 1]} : vector<4x20xf32> to vector<4x1xf32>
    %723 = vector.extract_strided_slice %3 {offsets = [9, 0], sizes = [1, 4], strides = [1, 1]} : vector<20x4xf32> to vector<1x4xf32>
    %724 = vector.broadcast %722 : vector<4x1xf32> to vector<4x4xf32>
    %725 = vector.broadcast %723 : vector<1x4xf32> to vector<4x4xf32>
    %726 = arith.mulf %724, %725 : vector<4x4xf32>
    %727 = vector.extract_strided_slice %674 {offsets = [0, 10], sizes = [4, 1], strides = [1, 1]} : vector<4x20xf32> to vector<4x1xf32>
    %728 = vector.extract_strided_slice %3 {offsets = [10, 0], sizes = [1, 4], strides = [1, 1]} : vector<20x4xf32> to vector<1x4xf32>
    %729 = vector.broadcast %727 : vector<4x1xf32> to vector<4x4xf32>
    %730 = vector.broadcast %728 : vector<1x4xf32> to vector<4x4xf32>
    %731 = arith.mulf %729, %730 : vector<4x4xf32>
    %732 = vector.extract_strided_slice %674 {offsets = [0, 11], sizes = [4, 1], strides = [1, 1]} : vector<4x20xf32> to vector<4x1xf32>
    %733 = vector.extract_strided_slice %3 {offsets = [11, 0], sizes = [1, 4], strides = [1, 1]} : vector<20x4xf32> to vector<1x4xf32>
    %734 = vector.broadcast %732 : vector<4x1xf32> to vector<4x4xf32>
    %735 = vector.broadcast %733 : vector<1x4xf32> to vector<4x4xf32>
    %736 = arith.mulf %734, %735 : vector<4x4xf32>
    %737 = vector.extract_strided_slice %674 {offsets = [0, 12], sizes = [4, 1], strides = [1, 1]} : vector<4x20xf32> to vector<4x1xf32>
    %738 = vector.extract_strided_slice %3 {offsets = [12, 0], sizes = [1, 4], strides = [1, 1]} : vector<20x4xf32> to vector<1x4xf32>
    %739 = vector.broadcast %737 : vector<4x1xf32> to vector<4x4xf32>
    %740 = vector.broadcast %738 : vector<1x4xf32> to vector<4x4xf32>
    %741 = arith.mulf %739, %740 : vector<4x4xf32>
    %742 = vector.extract_strided_slice %674 {offsets = [0, 13], sizes = [4, 1], strides = [1, 1]} : vector<4x20xf32> to vector<4x1xf32>
    %743 = vector.extract_strided_slice %3 {offsets = [13, 0], sizes = [1, 4], strides = [1, 1]} : vector<20x4xf32> to vector<1x4xf32>
    %744 = vector.broadcast %742 : vector<4x1xf32> to vector<4x4xf32>
    %745 = vector.broadcast %743 : vector<1x4xf32> to vector<4x4xf32>
    %746 = arith.mulf %744, %745 : vector<4x4xf32>
    %747 = vector.extract_strided_slice %674 {offsets = [0, 14], sizes = [4, 1], strides = [1, 1]} : vector<4x20xf32> to vector<4x1xf32>
    %748 = vector.extract_strided_slice %3 {offsets = [14, 0], sizes = [1, 4], strides = [1, 1]} : vector<20x4xf32> to vector<1x4xf32>
    %749 = vector.broadcast %747 : vector<4x1xf32> to vector<4x4xf32>
    %750 = vector.broadcast %748 : vector<1x4xf32> to vector<4x4xf32>
    %751 = arith.mulf %749, %750 : vector<4x4xf32>
    %752 = vector.extract_strided_slice %674 {offsets = [0, 15], sizes = [4, 1], strides = [1, 1]} : vector<4x20xf32> to vector<4x1xf32>
    %753 = vector.extract_strided_slice %3 {offsets = [15, 0], sizes = [1, 4], strides = [1, 1]} : vector<20x4xf32> to vector<1x4xf32>
    %754 = vector.broadcast %752 : vector<4x1xf32> to vector<4x4xf32>
    %755 = vector.broadcast %753 : vector<1x4xf32> to vector<4x4xf32>
    %756 = arith.mulf %754, %755 : vector<4x4xf32>
    %757 = vector.extract_strided_slice %674 {offsets = [0, 16], sizes = [4, 1], strides = [1, 1]} : vector<4x20xf32> to vector<4x1xf32>
    %758 = vector.extract_strided_slice %3 {offsets = [16, 0], sizes = [1, 4], strides = [1, 1]} : vector<20x4xf32> to vector<1x4xf32>
    %759 = vector.broadcast %757 : vector<4x1xf32> to vector<4x4xf32>
    %760 = vector.broadcast %758 : vector<1x4xf32> to vector<4x4xf32>
    %761 = arith.mulf %759, %760 : vector<4x4xf32>
    %762 = vector.extract_strided_slice %674 {offsets = [0, 17], sizes = [4, 1], strides = [1, 1]} : vector<4x20xf32> to vector<4x1xf32>
    %763 = vector.extract_strided_slice %3 {offsets = [17, 0], sizes = [1, 4], strides = [1, 1]} : vector<20x4xf32> to vector<1x4xf32>
    %764 = vector.broadcast %762 : vector<4x1xf32> to vector<4x4xf32>
    %765 = vector.broadcast %763 : vector<1x4xf32> to vector<4x4xf32>
    %766 = arith.mulf %764, %765 : vector<4x4xf32>
    %767 = vector.extract_strided_slice %674 {offsets = [0, 18], sizes = [4, 1], strides = [1, 1]} : vector<4x20xf32> to vector<4x1xf32>
    %768 = vector.extract_strided_slice %3 {offsets = [18, 0], sizes = [1, 4], strides = [1, 1]} : vector<20x4xf32> to vector<1x4xf32>
    %769 = vector.broadcast %767 : vector<4x1xf32> to vector<4x4xf32>
    %770 = vector.broadcast %768 : vector<1x4xf32> to vector<4x4xf32>
    %771 = arith.mulf %769, %770 : vector<4x4xf32>
    %772 = vector.extract_strided_slice %674 {offsets = [0, 19], sizes = [4, 1], strides = [1, 1]} : vector<4x20xf32> to vector<4x1xf32>
    %773 = vector.extract_strided_slice %3 {offsets = [19, 0], sizes = [1, 4], strides = [1, 1]} : vector<20x4xf32> to vector<1x4xf32>
    %774 = vector.broadcast %772 : vector<4x1xf32> to vector<4x4xf32>
    %775 = vector.broadcast %773 : vector<1x4xf32> to vector<4x4xf32>
    %776 = arith.mulf %774, %775 : vector<4x4xf32>
    %777 = arith.addf %681, %686 : vector<4x4xf32>
    %778 = arith.addf %691, %696 : vector<4x4xf32>
    %779 = arith.addf %701, %706 : vector<4x4xf32>
    %780 = arith.addf %711, %716 : vector<4x4xf32>
    %781 = arith.addf %721, %726 : vector<4x4xf32>
    %782 = arith.addf %731, %736 : vector<4x4xf32>
    %783 = arith.addf %741, %746 : vector<4x4xf32>
    %784 = arith.addf %751, %756 : vector<4x4xf32>
    %785 = arith.addf %761, %766 : vector<4x4xf32>
    %786 = arith.addf %771, %776 : vector<4x4xf32>
    %787 = arith.addf %777, %778 : vector<4x4xf32>
    %788 = arith.addf %779, %780 : vector<4x4xf32>
    %789 = arith.addf %781, %782 : vector<4x4xf32>
    %790 = arith.addf %783, %784 : vector<4x4xf32>
    %791 = arith.addf %785, %786 : vector<4x4xf32>
    %792 = arith.addf %787, %788 : vector<4x4xf32>
    %793 = arith.addf %789, %790 : vector<4x4xf32>
    %794 = arith.addf %792, %793 : vector<4x4xf32>
    %795 = arith.addf %794, %791 : vector<4x4xf32>
    %796 = arith.addf %795, %10 : vector<4x4xf32>
    %797 = vector.extract_strided_slice %0 {offsets = [0, 3], sizes = [4, 1], strides = [1, 1]} : vector<4x8xf32> to vector<4x1xf32>
    %798 = vector.broadcast %797 : vector<4x1xf32> to vector<4x80xf32>
    %799 = vector.broadcast %1 : vector<1x80xf32> to vector<4x80xf32>
    %800 = arith.mulf %798, %799 : vector<4x80xf32>
    %801 = arith.addf %800, %7 : vector<4x80xf32>
    %802 = vector.extract_strided_slice %676 {offsets = [0, 0], sizes = [4, 1], strides = [1, 1]} : vector<4x20xf32> to vector<4x1xf32>
    %803 = vector.extract_strided_slice %2 {offsets = [0, 0], sizes = [1, 80], strides = [1, 1]} : vector<20x80xf32> to vector<1x80xf32>
    %804 = vector.broadcast %802 : vector<4x1xf32> to vector<4x80xf32>
    %805 = vector.broadcast %803 : vector<1x80xf32> to vector<4x80xf32>
    %806 = arith.mulf %804, %805 : vector<4x80xf32>
    %807 = vector.extract_strided_slice %676 {offsets = [0, 1], sizes = [4, 1], strides = [1, 1]} : vector<4x20xf32> to vector<4x1xf32>
    %808 = vector.extract_strided_slice %2 {offsets = [1, 0], sizes = [1, 80], strides = [1, 1]} : vector<20x80xf32> to vector<1x80xf32>
    %809 = vector.broadcast %807 : vector<4x1xf32> to vector<4x80xf32>
    %810 = vector.broadcast %808 : vector<1x80xf32> to vector<4x80xf32>
    %811 = arith.mulf %809, %810 : vector<4x80xf32>
    %812 = vector.extract_strided_slice %676 {offsets = [0, 2], sizes = [4, 1], strides = [1, 1]} : vector<4x20xf32> to vector<4x1xf32>
    %813 = vector.extract_strided_slice %2 {offsets = [2, 0], sizes = [1, 80], strides = [1, 1]} : vector<20x80xf32> to vector<1x80xf32>
    %814 = vector.broadcast %812 : vector<4x1xf32> to vector<4x80xf32>
    %815 = vector.broadcast %813 : vector<1x80xf32> to vector<4x80xf32>
    %816 = arith.mulf %814, %815 : vector<4x80xf32>
    %817 = vector.extract_strided_slice %676 {offsets = [0, 3], sizes = [4, 1], strides = [1, 1]} : vector<4x20xf32> to vector<4x1xf32>
    %818 = vector.extract_strided_slice %2 {offsets = [3, 0], sizes = [1, 80], strides = [1, 1]} : vector<20x80xf32> to vector<1x80xf32>
    %819 = vector.broadcast %817 : vector<4x1xf32> to vector<4x80xf32>
    %820 = vector.broadcast %818 : vector<1x80xf32> to vector<4x80xf32>
    %821 = arith.mulf %819, %820 : vector<4x80xf32>
    %822 = vector.extract_strided_slice %676 {offsets = [0, 4], sizes = [4, 1], strides = [1, 1]} : vector<4x20xf32> to vector<4x1xf32>
    %823 = vector.extract_strided_slice %2 {offsets = [4, 0], sizes = [1, 80], strides = [1, 1]} : vector<20x80xf32> to vector<1x80xf32>
    %824 = vector.broadcast %822 : vector<4x1xf32> to vector<4x80xf32>
    %825 = vector.broadcast %823 : vector<1x80xf32> to vector<4x80xf32>
    %826 = arith.mulf %824, %825 : vector<4x80xf32>
    %827 = vector.extract_strided_slice %676 {offsets = [0, 5], sizes = [4, 1], strides = [1, 1]} : vector<4x20xf32> to vector<4x1xf32>
    %828 = vector.extract_strided_slice %2 {offsets = [5, 0], sizes = [1, 80], strides = [1, 1]} : vector<20x80xf32> to vector<1x80xf32>
    %829 = vector.broadcast %827 : vector<4x1xf32> to vector<4x80xf32>
    %830 = vector.broadcast %828 : vector<1x80xf32> to vector<4x80xf32>
    %831 = arith.mulf %829, %830 : vector<4x80xf32>
    %832 = vector.extract_strided_slice %676 {offsets = [0, 6], sizes = [4, 1], strides = [1, 1]} : vector<4x20xf32> to vector<4x1xf32>
    %833 = vector.extract_strided_slice %2 {offsets = [6, 0], sizes = [1, 80], strides = [1, 1]} : vector<20x80xf32> to vector<1x80xf32>
    %834 = vector.broadcast %832 : vector<4x1xf32> to vector<4x80xf32>
    %835 = vector.broadcast %833 : vector<1x80xf32> to vector<4x80xf32>
    %836 = arith.mulf %834, %835 : vector<4x80xf32>
    %837 = vector.extract_strided_slice %676 {offsets = [0, 7], sizes = [4, 1], strides = [1, 1]} : vector<4x20xf32> to vector<4x1xf32>
    %838 = vector.extract_strided_slice %2 {offsets = [7, 0], sizes = [1, 80], strides = [1, 1]} : vector<20x80xf32> to vector<1x80xf32>
    %839 = vector.broadcast %837 : vector<4x1xf32> to vector<4x80xf32>
    %840 = vector.broadcast %838 : vector<1x80xf32> to vector<4x80xf32>
    %841 = arith.mulf %839, %840 : vector<4x80xf32>
    %842 = vector.extract_strided_slice %676 {offsets = [0, 8], sizes = [4, 1], strides = [1, 1]} : vector<4x20xf32> to vector<4x1xf32>
    %843 = vector.extract_strided_slice %2 {offsets = [8, 0], sizes = [1, 80], strides = [1, 1]} : vector<20x80xf32> to vector<1x80xf32>
    %844 = vector.broadcast %842 : vector<4x1xf32> to vector<4x80xf32>
    %845 = vector.broadcast %843 : vector<1x80xf32> to vector<4x80xf32>
    %846 = arith.mulf %844, %845 : vector<4x80xf32>
    %847 = vector.extract_strided_slice %676 {offsets = [0, 9], sizes = [4, 1], strides = [1, 1]} : vector<4x20xf32> to vector<4x1xf32>
    %848 = vector.extract_strided_slice %2 {offsets = [9, 0], sizes = [1, 80], strides = [1, 1]} : vector<20x80xf32> to vector<1x80xf32>
    %849 = vector.broadcast %847 : vector<4x1xf32> to vector<4x80xf32>
    %850 = vector.broadcast %848 : vector<1x80xf32> to vector<4x80xf32>
    %851 = arith.mulf %849, %850 : vector<4x80xf32>
    %852 = vector.extract_strided_slice %676 {offsets = [0, 10], sizes = [4, 1], strides = [1, 1]} : vector<4x20xf32> to vector<4x1xf32>
    %853 = vector.extract_strided_slice %2 {offsets = [10, 0], sizes = [1, 80], strides = [1, 1]} : vector<20x80xf32> to vector<1x80xf32>
    %854 = vector.broadcast %852 : vector<4x1xf32> to vector<4x80xf32>
    %855 = vector.broadcast %853 : vector<1x80xf32> to vector<4x80xf32>
    %856 = arith.mulf %854, %855 : vector<4x80xf32>
    %857 = vector.extract_strided_slice %676 {offsets = [0, 11], sizes = [4, 1], strides = [1, 1]} : vector<4x20xf32> to vector<4x1xf32>
    %858 = vector.extract_strided_slice %2 {offsets = [11, 0], sizes = [1, 80], strides = [1, 1]} : vector<20x80xf32> to vector<1x80xf32>
    %859 = vector.broadcast %857 : vector<4x1xf32> to vector<4x80xf32>
    %860 = vector.broadcast %858 : vector<1x80xf32> to vector<4x80xf32>
    %861 = arith.mulf %859, %860 : vector<4x80xf32>
    %862 = vector.extract_strided_slice %676 {offsets = [0, 12], sizes = [4, 1], strides = [1, 1]} : vector<4x20xf32> to vector<4x1xf32>
    %863 = vector.extract_strided_slice %2 {offsets = [12, 0], sizes = [1, 80], strides = [1, 1]} : vector<20x80xf32> to vector<1x80xf32>
    %864 = vector.broadcast %862 : vector<4x1xf32> to vector<4x80xf32>
    %865 = vector.broadcast %863 : vector<1x80xf32> to vector<4x80xf32>
    %866 = arith.mulf %864, %865 : vector<4x80xf32>
    %867 = vector.extract_strided_slice %676 {offsets = [0, 13], sizes = [4, 1], strides = [1, 1]} : vector<4x20xf32> to vector<4x1xf32>
    %868 = vector.extract_strided_slice %2 {offsets = [13, 0], sizes = [1, 80], strides = [1, 1]} : vector<20x80xf32> to vector<1x80xf32>
    %869 = vector.broadcast %867 : vector<4x1xf32> to vector<4x80xf32>
    %870 = vector.broadcast %868 : vector<1x80xf32> to vector<4x80xf32>
    %871 = arith.mulf %869, %870 : vector<4x80xf32>
    %872 = vector.extract_strided_slice %676 {offsets = [0, 14], sizes = [4, 1], strides = [1, 1]} : vector<4x20xf32> to vector<4x1xf32>
    %873 = vector.extract_strided_slice %2 {offsets = [14, 0], sizes = [1, 80], strides = [1, 1]} : vector<20x80xf32> to vector<1x80xf32>
    %874 = vector.broadcast %872 : vector<4x1xf32> to vector<4x80xf32>
    %875 = vector.broadcast %873 : vector<1x80xf32> to vector<4x80xf32>
    %876 = arith.mulf %874, %875 : vector<4x80xf32>
    %877 = vector.extract_strided_slice %676 {offsets = [0, 15], sizes = [4, 1], strides = [1, 1]} : vector<4x20xf32> to vector<4x1xf32>
    %878 = vector.extract_strided_slice %2 {offsets = [15, 0], sizes = [1, 80], strides = [1, 1]} : vector<20x80xf32> to vector<1x80xf32>
    %879 = vector.broadcast %877 : vector<4x1xf32> to vector<4x80xf32>
    %880 = vector.broadcast %878 : vector<1x80xf32> to vector<4x80xf32>
    %881 = arith.mulf %879, %880 : vector<4x80xf32>
    %882 = vector.extract_strided_slice %676 {offsets = [0, 16], sizes = [4, 1], strides = [1, 1]} : vector<4x20xf32> to vector<4x1xf32>
    %883 = vector.extract_strided_slice %2 {offsets = [16, 0], sizes = [1, 80], strides = [1, 1]} : vector<20x80xf32> to vector<1x80xf32>
    %884 = vector.broadcast %882 : vector<4x1xf32> to vector<4x80xf32>
    %885 = vector.broadcast %883 : vector<1x80xf32> to vector<4x80xf32>
    %886 = arith.mulf %884, %885 : vector<4x80xf32>
    %887 = vector.extract_strided_slice %676 {offsets = [0, 17], sizes = [4, 1], strides = [1, 1]} : vector<4x20xf32> to vector<4x1xf32>
    %888 = vector.extract_strided_slice %2 {offsets = [17, 0], sizes = [1, 80], strides = [1, 1]} : vector<20x80xf32> to vector<1x80xf32>
    %889 = vector.broadcast %887 : vector<4x1xf32> to vector<4x80xf32>
    %890 = vector.broadcast %888 : vector<1x80xf32> to vector<4x80xf32>
    %891 = arith.mulf %889, %890 : vector<4x80xf32>
    %892 = vector.extract_strided_slice %676 {offsets = [0, 18], sizes = [4, 1], strides = [1, 1]} : vector<4x20xf32> to vector<4x1xf32>
    %893 = vector.extract_strided_slice %2 {offsets = [18, 0], sizes = [1, 80], strides = [1, 1]} : vector<20x80xf32> to vector<1x80xf32>
    %894 = vector.broadcast %892 : vector<4x1xf32> to vector<4x80xf32>
    %895 = vector.broadcast %893 : vector<1x80xf32> to vector<4x80xf32>
    %896 = arith.mulf %894, %895 : vector<4x80xf32>
    %897 = vector.extract_strided_slice %676 {offsets = [0, 19], sizes = [4, 1], strides = [1, 1]} : vector<4x20xf32> to vector<4x1xf32>
    %898 = vector.extract_strided_slice %2 {offsets = [19, 0], sizes = [1, 80], strides = [1, 1]} : vector<20x80xf32> to vector<1x80xf32>
    %899 = vector.broadcast %897 : vector<4x1xf32> to vector<4x80xf32>
    %900 = vector.broadcast %898 : vector<1x80xf32> to vector<4x80xf32>
    %901 = arith.mulf %899, %900 : vector<4x80xf32>
    %902 = arith.addf %806, %811 : vector<4x80xf32>
    %903 = arith.addf %816, %821 : vector<4x80xf32>
    %904 = arith.addf %826, %831 : vector<4x80xf32>
    %905 = arith.addf %836, %841 : vector<4x80xf32>
    %906 = arith.addf %846, %851 : vector<4x80xf32>
    %907 = arith.addf %856, %861 : vector<4x80xf32>
    %908 = arith.addf %866, %871 : vector<4x80xf32>
    %909 = arith.addf %876, %881 : vector<4x80xf32>
    %910 = arith.addf %886, %891 : vector<4x80xf32>
    %911 = arith.addf %896, %901 : vector<4x80xf32>
    %912 = arith.addf %902, %903 : vector<4x80xf32>
    %913 = arith.addf %904, %905 : vector<4x80xf32>
    %914 = arith.addf %906, %907 : vector<4x80xf32>
    %915 = arith.addf %908, %909 : vector<4x80xf32>
    %916 = arith.addf %910, %911 : vector<4x80xf32>
    %917 = arith.addf %912, %913 : vector<4x80xf32>
    %918 = arith.addf %914, %915 : vector<4x80xf32>
    %919 = arith.addf %917, %918 : vector<4x80xf32>
    %920 = arith.addf %919, %916 : vector<4x80xf32>
    %921 = arith.addf %801, %920 : vector<4x80xf32>
    %922 = arith.negf %921 : vector<4x80xf32>
    %923 = math.exp %922 : vector<4x80xf32>
    %cst_20 = arith.constant 1.000000e+00 : f32
    %924 = vector.broadcast %cst_20 : f32 to vector<4x80xf32>
    %925 = arith.addf %924, %923 : vector<4x80xf32>
    %926 = arith.divf %924, %925 : vector<4x80xf32>
    %927 = math.tanh %921 : vector<4x80xf32>
    %928 = vector.extract_strided_slice %926 {offsets = [0, 0], sizes = [4, 20], strides = [1, 1]} : vector<4x80xf32> to vector<4x20xf32>
    %929 = vector.extract_strided_slice %926 {offsets = [0, 20], sizes = [4, 20], strides = [1, 1]} : vector<4x80xf32> to vector<4x20xf32>
    %930 = vector.extract_strided_slice %927 {offsets = [0, 40], sizes = [4, 20], strides = [1, 1]} : vector<4x80xf32> to vector<4x20xf32>
    %931 = vector.extract_strided_slice %926 {offsets = [0, 60], sizes = [4, 20], strides = [1, 1]} : vector<4x80xf32> to vector<4x20xf32>
    %932 = arith.mulf %929, %674 : vector<4x20xf32>
    %933 = arith.mulf %928, %930 : vector<4x20xf32>
    %934 = arith.addf %932, %933 : vector<4x20xf32>
    %935 = math.tanh %934 : vector<4x20xf32>
    %936 = arith.mulf %931, %935 : vector<4x20xf32>
    %937 = vector.extract_strided_slice %934 {offsets = [0, 0], sizes = [4, 1], strides = [1, 1]} : vector<4x20xf32> to vector<4x1xf32>
    %938 = vector.extract_strided_slice %3 {offsets = [0, 0], sizes = [1, 4], strides = [1, 1]} : vector<20x4xf32> to vector<1x4xf32>
    %939 = vector.broadcast %937 : vector<4x1xf32> to vector<4x4xf32>
    %940 = vector.broadcast %938 : vector<1x4xf32> to vector<4x4xf32>
    %941 = arith.mulf %939, %940 : vector<4x4xf32>
    %942 = vector.extract_strided_slice %934 {offsets = [0, 1], sizes = [4, 1], strides = [1, 1]} : vector<4x20xf32> to vector<4x1xf32>
    %943 = vector.extract_strided_slice %3 {offsets = [1, 0], sizes = [1, 4], strides = [1, 1]} : vector<20x4xf32> to vector<1x4xf32>
    %944 = vector.broadcast %942 : vector<4x1xf32> to vector<4x4xf32>
    %945 = vector.broadcast %943 : vector<1x4xf32> to vector<4x4xf32>
    %946 = arith.mulf %944, %945 : vector<4x4xf32>
    %947 = vector.extract_strided_slice %934 {offsets = [0, 2], sizes = [4, 1], strides = [1, 1]} : vector<4x20xf32> to vector<4x1xf32>
    %948 = vector.extract_strided_slice %3 {offsets = [2, 0], sizes = [1, 4], strides = [1, 1]} : vector<20x4xf32> to vector<1x4xf32>
    %949 = vector.broadcast %947 : vector<4x1xf32> to vector<4x4xf32>
    %950 = vector.broadcast %948 : vector<1x4xf32> to vector<4x4xf32>
    %951 = arith.mulf %949, %950 : vector<4x4xf32>
    %952 = vector.extract_strided_slice %934 {offsets = [0, 3], sizes = [4, 1], strides = [1, 1]} : vector<4x20xf32> to vector<4x1xf32>
    %953 = vector.extract_strided_slice %3 {offsets = [3, 0], sizes = [1, 4], strides = [1, 1]} : vector<20x4xf32> to vector<1x4xf32>
    %954 = vector.broadcast %952 : vector<4x1xf32> to vector<4x4xf32>
    %955 = vector.broadcast %953 : vector<1x4xf32> to vector<4x4xf32>
    %956 = arith.mulf %954, %955 : vector<4x4xf32>
    %957 = vector.extract_strided_slice %934 {offsets = [0, 4], sizes = [4, 1], strides = [1, 1]} : vector<4x20xf32> to vector<4x1xf32>
    %958 = vector.extract_strided_slice %3 {offsets = [4, 0], sizes = [1, 4], strides = [1, 1]} : vector<20x4xf32> to vector<1x4xf32>
    %959 = vector.broadcast %957 : vector<4x1xf32> to vector<4x4xf32>
    %960 = vector.broadcast %958 : vector<1x4xf32> to vector<4x4xf32>
    %961 = arith.mulf %959, %960 : vector<4x4xf32>
    %962 = vector.extract_strided_slice %934 {offsets = [0, 5], sizes = [4, 1], strides = [1, 1]} : vector<4x20xf32> to vector<4x1xf32>
    %963 = vector.extract_strided_slice %3 {offsets = [5, 0], sizes = [1, 4], strides = [1, 1]} : vector<20x4xf32> to vector<1x4xf32>
    %964 = vector.broadcast %962 : vector<4x1xf32> to vector<4x4xf32>
    %965 = vector.broadcast %963 : vector<1x4xf32> to vector<4x4xf32>
    %966 = arith.mulf %964, %965 : vector<4x4xf32>
    %967 = vector.extract_strided_slice %934 {offsets = [0, 6], sizes = [4, 1], strides = [1, 1]} : vector<4x20xf32> to vector<4x1xf32>
    %968 = vector.extract_strided_slice %3 {offsets = [6, 0], sizes = [1, 4], strides = [1, 1]} : vector<20x4xf32> to vector<1x4xf32>
    %969 = vector.broadcast %967 : vector<4x1xf32> to vector<4x4xf32>
    %970 = vector.broadcast %968 : vector<1x4xf32> to vector<4x4xf32>
    %971 = arith.mulf %969, %970 : vector<4x4xf32>
    %972 = vector.extract_strided_slice %934 {offsets = [0, 7], sizes = [4, 1], strides = [1, 1]} : vector<4x20xf32> to vector<4x1xf32>
    %973 = vector.extract_strided_slice %3 {offsets = [7, 0], sizes = [1, 4], strides = [1, 1]} : vector<20x4xf32> to vector<1x4xf32>
    %974 = vector.broadcast %972 : vector<4x1xf32> to vector<4x4xf32>
    %975 = vector.broadcast %973 : vector<1x4xf32> to vector<4x4xf32>
    %976 = arith.mulf %974, %975 : vector<4x4xf32>
    %977 = vector.extract_strided_slice %934 {offsets = [0, 8], sizes = [4, 1], strides = [1, 1]} : vector<4x20xf32> to vector<4x1xf32>
    %978 = vector.extract_strided_slice %3 {offsets = [8, 0], sizes = [1, 4], strides = [1, 1]} : vector<20x4xf32> to vector<1x4xf32>
    %979 = vector.broadcast %977 : vector<4x1xf32> to vector<4x4xf32>
    %980 = vector.broadcast %978 : vector<1x4xf32> to vector<4x4xf32>
    %981 = arith.mulf %979, %980 : vector<4x4xf32>
    %982 = vector.extract_strided_slice %934 {offsets = [0, 9], sizes = [4, 1], strides = [1, 1]} : vector<4x20xf32> to vector<4x1xf32>
    %983 = vector.extract_strided_slice %3 {offsets = [9, 0], sizes = [1, 4], strides = [1, 1]} : vector<20x4xf32> to vector<1x4xf32>
    %984 = vector.broadcast %982 : vector<4x1xf32> to vector<4x4xf32>
    %985 = vector.broadcast %983 : vector<1x4xf32> to vector<4x4xf32>
    %986 = arith.mulf %984, %985 : vector<4x4xf32>
    %987 = vector.extract_strided_slice %934 {offsets = [0, 10], sizes = [4, 1], strides = [1, 1]} : vector<4x20xf32> to vector<4x1xf32>
    %988 = vector.extract_strided_slice %3 {offsets = [10, 0], sizes = [1, 4], strides = [1, 1]} : vector<20x4xf32> to vector<1x4xf32>
    %989 = vector.broadcast %987 : vector<4x1xf32> to vector<4x4xf32>
    %990 = vector.broadcast %988 : vector<1x4xf32> to vector<4x4xf32>
    %991 = arith.mulf %989, %990 : vector<4x4xf32>
    %992 = vector.extract_strided_slice %934 {offsets = [0, 11], sizes = [4, 1], strides = [1, 1]} : vector<4x20xf32> to vector<4x1xf32>
    %993 = vector.extract_strided_slice %3 {offsets = [11, 0], sizes = [1, 4], strides = [1, 1]} : vector<20x4xf32> to vector<1x4xf32>
    %994 = vector.broadcast %992 : vector<4x1xf32> to vector<4x4xf32>
    %995 = vector.broadcast %993 : vector<1x4xf32> to vector<4x4xf32>
    %996 = arith.mulf %994, %995 : vector<4x4xf32>
    %997 = vector.extract_strided_slice %934 {offsets = [0, 12], sizes = [4, 1], strides = [1, 1]} : vector<4x20xf32> to vector<4x1xf32>
    %998 = vector.extract_strided_slice %3 {offsets = [12, 0], sizes = [1, 4], strides = [1, 1]} : vector<20x4xf32> to vector<1x4xf32>
    %999 = vector.broadcast %997 : vector<4x1xf32> to vector<4x4xf32>
    %1000 = vector.broadcast %998 : vector<1x4xf32> to vector<4x4xf32>
    %1001 = arith.mulf %999, %1000 : vector<4x4xf32>
    %1002 = vector.extract_strided_slice %934 {offsets = [0, 13], sizes = [4, 1], strides = [1, 1]} : vector<4x20xf32> to vector<4x1xf32>
    %1003 = vector.extract_strided_slice %3 {offsets = [13, 0], sizes = [1, 4], strides = [1, 1]} : vector<20x4xf32> to vector<1x4xf32>
    %1004 = vector.broadcast %1002 : vector<4x1xf32> to vector<4x4xf32>
    %1005 = vector.broadcast %1003 : vector<1x4xf32> to vector<4x4xf32>
    %1006 = arith.mulf %1004, %1005 : vector<4x4xf32>
    %1007 = vector.extract_strided_slice %934 {offsets = [0, 14], sizes = [4, 1], strides = [1, 1]} : vector<4x20xf32> to vector<4x1xf32>
    %1008 = vector.extract_strided_slice %3 {offsets = [14, 0], sizes = [1, 4], strides = [1, 1]} : vector<20x4xf32> to vector<1x4xf32>
    %1009 = vector.broadcast %1007 : vector<4x1xf32> to vector<4x4xf32>
    %1010 = vector.broadcast %1008 : vector<1x4xf32> to vector<4x4xf32>
    %1011 = arith.mulf %1009, %1010 : vector<4x4xf32>
    %1012 = vector.extract_strided_slice %934 {offsets = [0, 15], sizes = [4, 1], strides = [1, 1]} : vector<4x20xf32> to vector<4x1xf32>
    %1013 = vector.extract_strided_slice %3 {offsets = [15, 0], sizes = [1, 4], strides = [1, 1]} : vector<20x4xf32> to vector<1x4xf32>
    %1014 = vector.broadcast %1012 : vector<4x1xf32> to vector<4x4xf32>
    %1015 = vector.broadcast %1013 : vector<1x4xf32> to vector<4x4xf32>
    %1016 = arith.mulf %1014, %1015 : vector<4x4xf32>
    %1017 = vector.extract_strided_slice %934 {offsets = [0, 16], sizes = [4, 1], strides = [1, 1]} : vector<4x20xf32> to vector<4x1xf32>
    %1018 = vector.extract_strided_slice %3 {offsets = [16, 0], sizes = [1, 4], strides = [1, 1]} : vector<20x4xf32> to vector<1x4xf32>
    %1019 = vector.broadcast %1017 : vector<4x1xf32> to vector<4x4xf32>
    %1020 = vector.broadcast %1018 : vector<1x4xf32> to vector<4x4xf32>
    %1021 = arith.mulf %1019, %1020 : vector<4x4xf32>
    %1022 = vector.extract_strided_slice %934 {offsets = [0, 17], sizes = [4, 1], strides = [1, 1]} : vector<4x20xf32> to vector<4x1xf32>
    %1023 = vector.extract_strided_slice %3 {offsets = [17, 0], sizes = [1, 4], strides = [1, 1]} : vector<20x4xf32> to vector<1x4xf32>
    %1024 = vector.broadcast %1022 : vector<4x1xf32> to vector<4x4xf32>
    %1025 = vector.broadcast %1023 : vector<1x4xf32> to vector<4x4xf32>
    %1026 = arith.mulf %1024, %1025 : vector<4x4xf32>
    %1027 = vector.extract_strided_slice %934 {offsets = [0, 18], sizes = [4, 1], strides = [1, 1]} : vector<4x20xf32> to vector<4x1xf32>
    %1028 = vector.extract_strided_slice %3 {offsets = [18, 0], sizes = [1, 4], strides = [1, 1]} : vector<20x4xf32> to vector<1x4xf32>
    %1029 = vector.broadcast %1027 : vector<4x1xf32> to vector<4x4xf32>
    %1030 = vector.broadcast %1028 : vector<1x4xf32> to vector<4x4xf32>
    %1031 = arith.mulf %1029, %1030 : vector<4x4xf32>
    %1032 = vector.extract_strided_slice %934 {offsets = [0, 19], sizes = [4, 1], strides = [1, 1]} : vector<4x20xf32> to vector<4x1xf32>
    %1033 = vector.extract_strided_slice %3 {offsets = [19, 0], sizes = [1, 4], strides = [1, 1]} : vector<20x4xf32> to vector<1x4xf32>
    %1034 = vector.broadcast %1032 : vector<4x1xf32> to vector<4x4xf32>
    %1035 = vector.broadcast %1033 : vector<1x4xf32> to vector<4x4xf32>
    %1036 = arith.mulf %1034, %1035 : vector<4x4xf32>
    %1037 = arith.addf %941, %946 : vector<4x4xf32>
    %1038 = arith.addf %951, %956 : vector<4x4xf32>
    %1039 = arith.addf %961, %966 : vector<4x4xf32>
    %1040 = arith.addf %971, %976 : vector<4x4xf32>
    %1041 = arith.addf %981, %986 : vector<4x4xf32>
    %1042 = arith.addf %991, %996 : vector<4x4xf32>
    %1043 = arith.addf %1001, %1006 : vector<4x4xf32>
    %1044 = arith.addf %1011, %1016 : vector<4x4xf32>
    %1045 = arith.addf %1021, %1026 : vector<4x4xf32>
    %1046 = arith.addf %1031, %1036 : vector<4x4xf32>
    %1047 = arith.addf %1037, %1038 : vector<4x4xf32>
    %1048 = arith.addf %1039, %1040 : vector<4x4xf32>
    %1049 = arith.addf %1041, %1042 : vector<4x4xf32>
    %1050 = arith.addf %1043, %1044 : vector<4x4xf32>
    %1051 = arith.addf %1045, %1046 : vector<4x4xf32>
    %1052 = arith.addf %1047, %1048 : vector<4x4xf32>
    %1053 = arith.addf %1049, %1050 : vector<4x4xf32>
    %1054 = arith.addf %1052, %1053 : vector<4x4xf32>
    %1055 = arith.addf %1054, %1051 : vector<4x4xf32>
    %1056 = arith.addf %1055, %10 : vector<4x4xf32>
    %1057 = vector.extract_strided_slice %0 {offsets = [0, 4], sizes = [4, 1], strides = [1, 1]} : vector<4x8xf32> to vector<4x1xf32>
    %1058 = vector.broadcast %1057 : vector<4x1xf32> to vector<4x80xf32>
    %1059 = vector.broadcast %1 : vector<1x80xf32> to vector<4x80xf32>
    %1060 = arith.mulf %1058, %1059 : vector<4x80xf32>
    %1061 = arith.addf %1060, %7 : vector<4x80xf32>
    %1062 = vector.extract_strided_slice %936 {offsets = [0, 0], sizes = [4, 1], strides = [1, 1]} : vector<4x20xf32> to vector<4x1xf32>
    %1063 = vector.extract_strided_slice %2 {offsets = [0, 0], sizes = [1, 80], strides = [1, 1]} : vector<20x80xf32> to vector<1x80xf32>
    %1064 = vector.broadcast %1062 : vector<4x1xf32> to vector<4x80xf32>
    %1065 = vector.broadcast %1063 : vector<1x80xf32> to vector<4x80xf32>
    %1066 = arith.mulf %1064, %1065 : vector<4x80xf32>
    %1067 = vector.extract_strided_slice %936 {offsets = [0, 1], sizes = [4, 1], strides = [1, 1]} : vector<4x20xf32> to vector<4x1xf32>
    %1068 = vector.extract_strided_slice %2 {offsets = [1, 0], sizes = [1, 80], strides = [1, 1]} : vector<20x80xf32> to vector<1x80xf32>
    %1069 = vector.broadcast %1067 : vector<4x1xf32> to vector<4x80xf32>
    %1070 = vector.broadcast %1068 : vector<1x80xf32> to vector<4x80xf32>
    %1071 = arith.mulf %1069, %1070 : vector<4x80xf32>
    %1072 = vector.extract_strided_slice %936 {offsets = [0, 2], sizes = [4, 1], strides = [1, 1]} : vector<4x20xf32> to vector<4x1xf32>
    %1073 = vector.extract_strided_slice %2 {offsets = [2, 0], sizes = [1, 80], strides = [1, 1]} : vector<20x80xf32> to vector<1x80xf32>
    %1074 = vector.broadcast %1072 : vector<4x1xf32> to vector<4x80xf32>
    %1075 = vector.broadcast %1073 : vector<1x80xf32> to vector<4x80xf32>
    %1076 = arith.mulf %1074, %1075 : vector<4x80xf32>
    %1077 = vector.extract_strided_slice %936 {offsets = [0, 3], sizes = [4, 1], strides = [1, 1]} : vector<4x20xf32> to vector<4x1xf32>
    %1078 = vector.extract_strided_slice %2 {offsets = [3, 0], sizes = [1, 80], strides = [1, 1]} : vector<20x80xf32> to vector<1x80xf32>
    %1079 = vector.broadcast %1077 : vector<4x1xf32> to vector<4x80xf32>
    %1080 = vector.broadcast %1078 : vector<1x80xf32> to vector<4x80xf32>
    %1081 = arith.mulf %1079, %1080 : vector<4x80xf32>
    %1082 = vector.extract_strided_slice %936 {offsets = [0, 4], sizes = [4, 1], strides = [1, 1]} : vector<4x20xf32> to vector<4x1xf32>
    %1083 = vector.extract_strided_slice %2 {offsets = [4, 0], sizes = [1, 80], strides = [1, 1]} : vector<20x80xf32> to vector<1x80xf32>
    %1084 = vector.broadcast %1082 : vector<4x1xf32> to vector<4x80xf32>
    %1085 = vector.broadcast %1083 : vector<1x80xf32> to vector<4x80xf32>
    %1086 = arith.mulf %1084, %1085 : vector<4x80xf32>
    %1087 = vector.extract_strided_slice %936 {offsets = [0, 5], sizes = [4, 1], strides = [1, 1]} : vector<4x20xf32> to vector<4x1xf32>
    %1088 = vector.extract_strided_slice %2 {offsets = [5, 0], sizes = [1, 80], strides = [1, 1]} : vector<20x80xf32> to vector<1x80xf32>
    %1089 = vector.broadcast %1087 : vector<4x1xf32> to vector<4x80xf32>
    %1090 = vector.broadcast %1088 : vector<1x80xf32> to vector<4x80xf32>
    %1091 = arith.mulf %1089, %1090 : vector<4x80xf32>
    %1092 = vector.extract_strided_slice %936 {offsets = [0, 6], sizes = [4, 1], strides = [1, 1]} : vector<4x20xf32> to vector<4x1xf32>
    %1093 = vector.extract_strided_slice %2 {offsets = [6, 0], sizes = [1, 80], strides = [1, 1]} : vector<20x80xf32> to vector<1x80xf32>
    %1094 = vector.broadcast %1092 : vector<4x1xf32> to vector<4x80xf32>
    %1095 = vector.broadcast %1093 : vector<1x80xf32> to vector<4x80xf32>
    %1096 = arith.mulf %1094, %1095 : vector<4x80xf32>
    %1097 = vector.extract_strided_slice %936 {offsets = [0, 7], sizes = [4, 1], strides = [1, 1]} : vector<4x20xf32> to vector<4x1xf32>
    %1098 = vector.extract_strided_slice %2 {offsets = [7, 0], sizes = [1, 80], strides = [1, 1]} : vector<20x80xf32> to vector<1x80xf32>
    %1099 = vector.broadcast %1097 : vector<4x1xf32> to vector<4x80xf32>
    %1100 = vector.broadcast %1098 : vector<1x80xf32> to vector<4x80xf32>
    %1101 = arith.mulf %1099, %1100 : vector<4x80xf32>
    %1102 = vector.extract_strided_slice %936 {offsets = [0, 8], sizes = [4, 1], strides = [1, 1]} : vector<4x20xf32> to vector<4x1xf32>
    %1103 = vector.extract_strided_slice %2 {offsets = [8, 0], sizes = [1, 80], strides = [1, 1]} : vector<20x80xf32> to vector<1x80xf32>
    %1104 = vector.broadcast %1102 : vector<4x1xf32> to vector<4x80xf32>
    %1105 = vector.broadcast %1103 : vector<1x80xf32> to vector<4x80xf32>
    %1106 = arith.mulf %1104, %1105 : vector<4x80xf32>
    %1107 = vector.extract_strided_slice %936 {offsets = [0, 9], sizes = [4, 1], strides = [1, 1]} : vector<4x20xf32> to vector<4x1xf32>
    %1108 = vector.extract_strided_slice %2 {offsets = [9, 0], sizes = [1, 80], strides = [1, 1]} : vector<20x80xf32> to vector<1x80xf32>
    %1109 = vector.broadcast %1107 : vector<4x1xf32> to vector<4x80xf32>
    %1110 = vector.broadcast %1108 : vector<1x80xf32> to vector<4x80xf32>
    %1111 = arith.mulf %1109, %1110 : vector<4x80xf32>
    %1112 = vector.extract_strided_slice %936 {offsets = [0, 10], sizes = [4, 1], strides = [1, 1]} : vector<4x20xf32> to vector<4x1xf32>
    %1113 = vector.extract_strided_slice %2 {offsets = [10, 0], sizes = [1, 80], strides = [1, 1]} : vector<20x80xf32> to vector<1x80xf32>
    %1114 = vector.broadcast %1112 : vector<4x1xf32> to vector<4x80xf32>
    %1115 = vector.broadcast %1113 : vector<1x80xf32> to vector<4x80xf32>
    %1116 = arith.mulf %1114, %1115 : vector<4x80xf32>
    %1117 = vector.extract_strided_slice %936 {offsets = [0, 11], sizes = [4, 1], strides = [1, 1]} : vector<4x20xf32> to vector<4x1xf32>
    %1118 = vector.extract_strided_slice %2 {offsets = [11, 0], sizes = [1, 80], strides = [1, 1]} : vector<20x80xf32> to vector<1x80xf32>
    %1119 = vector.broadcast %1117 : vector<4x1xf32> to vector<4x80xf32>
    %1120 = vector.broadcast %1118 : vector<1x80xf32> to vector<4x80xf32>
    %1121 = arith.mulf %1119, %1120 : vector<4x80xf32>
    %1122 = vector.extract_strided_slice %936 {offsets = [0, 12], sizes = [4, 1], strides = [1, 1]} : vector<4x20xf32> to vector<4x1xf32>
    %1123 = vector.extract_strided_slice %2 {offsets = [12, 0], sizes = [1, 80], strides = [1, 1]} : vector<20x80xf32> to vector<1x80xf32>
    %1124 = vector.broadcast %1122 : vector<4x1xf32> to vector<4x80xf32>
    %1125 = vector.broadcast %1123 : vector<1x80xf32> to vector<4x80xf32>
    %1126 = arith.mulf %1124, %1125 : vector<4x80xf32>
    %1127 = vector.extract_strided_slice %936 {offsets = [0, 13], sizes = [4, 1], strides = [1, 1]} : vector<4x20xf32> to vector<4x1xf32>
    %1128 = vector.extract_strided_slice %2 {offsets = [13, 0], sizes = [1, 80], strides = [1, 1]} : vector<20x80xf32> to vector<1x80xf32>
    %1129 = vector.broadcast %1127 : vector<4x1xf32> to vector<4x80xf32>
    %1130 = vector.broadcast %1128 : vector<1x80xf32> to vector<4x80xf32>
    %1131 = arith.mulf %1129, %1130 : vector<4x80xf32>
    %1132 = vector.extract_strided_slice %936 {offsets = [0, 14], sizes = [4, 1], strides = [1, 1]} : vector<4x20xf32> to vector<4x1xf32>
    %1133 = vector.extract_strided_slice %2 {offsets = [14, 0], sizes = [1, 80], strides = [1, 1]} : vector<20x80xf32> to vector<1x80xf32>
    %1134 = vector.broadcast %1132 : vector<4x1xf32> to vector<4x80xf32>
    %1135 = vector.broadcast %1133 : vector<1x80xf32> to vector<4x80xf32>
    %1136 = arith.mulf %1134, %1135 : vector<4x80xf32>
    %1137 = vector.extract_strided_slice %936 {offsets = [0, 15], sizes = [4, 1], strides = [1, 1]} : vector<4x20xf32> to vector<4x1xf32>
    %1138 = vector.extract_strided_slice %2 {offsets = [15, 0], sizes = [1, 80], strides = [1, 1]} : vector<20x80xf32> to vector<1x80xf32>
    %1139 = vector.broadcast %1137 : vector<4x1xf32> to vector<4x80xf32>
    %1140 = vector.broadcast %1138 : vector<1x80xf32> to vector<4x80xf32>
    %1141 = arith.mulf %1139, %1140 : vector<4x80xf32>
    %1142 = vector.extract_strided_slice %936 {offsets = [0, 16], sizes = [4, 1], strides = [1, 1]} : vector<4x20xf32> to vector<4x1xf32>
    %1143 = vector.extract_strided_slice %2 {offsets = [16, 0], sizes = [1, 80], strides = [1, 1]} : vector<20x80xf32> to vector<1x80xf32>
    %1144 = vector.broadcast %1142 : vector<4x1xf32> to vector<4x80xf32>
    %1145 = vector.broadcast %1143 : vector<1x80xf32> to vector<4x80xf32>
    %1146 = arith.mulf %1144, %1145 : vector<4x80xf32>
    %1147 = vector.extract_strided_slice %936 {offsets = [0, 17], sizes = [4, 1], strides = [1, 1]} : vector<4x20xf32> to vector<4x1xf32>
    %1148 = vector.extract_strided_slice %2 {offsets = [17, 0], sizes = [1, 80], strides = [1, 1]} : vector<20x80xf32> to vector<1x80xf32>
    %1149 = vector.broadcast %1147 : vector<4x1xf32> to vector<4x80xf32>
    %1150 = vector.broadcast %1148 : vector<1x80xf32> to vector<4x80xf32>
    %1151 = arith.mulf %1149, %1150 : vector<4x80xf32>
    %1152 = vector.extract_strided_slice %936 {offsets = [0, 18], sizes = [4, 1], strides = [1, 1]} : vector<4x20xf32> to vector<4x1xf32>
    %1153 = vector.extract_strided_slice %2 {offsets = [18, 0], sizes = [1, 80], strides = [1, 1]} : vector<20x80xf32> to vector<1x80xf32>
    %1154 = vector.broadcast %1152 : vector<4x1xf32> to vector<4x80xf32>
    %1155 = vector.broadcast %1153 : vector<1x80xf32> to vector<4x80xf32>
    %1156 = arith.mulf %1154, %1155 : vector<4x80xf32>
    %1157 = vector.extract_strided_slice %936 {offsets = [0, 19], sizes = [4, 1], strides = [1, 1]} : vector<4x20xf32> to vector<4x1xf32>
    %1158 = vector.extract_strided_slice %2 {offsets = [19, 0], sizes = [1, 80], strides = [1, 1]} : vector<20x80xf32> to vector<1x80xf32>
    %1159 = vector.broadcast %1157 : vector<4x1xf32> to vector<4x80xf32>
    %1160 = vector.broadcast %1158 : vector<1x80xf32> to vector<4x80xf32>
    %1161 = arith.mulf %1159, %1160 : vector<4x80xf32>
    %1162 = arith.addf %1066, %1071 : vector<4x80xf32>
    %1163 = arith.addf %1076, %1081 : vector<4x80xf32>
    %1164 = arith.addf %1086, %1091 : vector<4x80xf32>
    %1165 = arith.addf %1096, %1101 : vector<4x80xf32>
    %1166 = arith.addf %1106, %1111 : vector<4x80xf32>
    %1167 = arith.addf %1116, %1121 : vector<4x80xf32>
    %1168 = arith.addf %1126, %1131 : vector<4x80xf32>
    %1169 = arith.addf %1136, %1141 : vector<4x80xf32>
    %1170 = arith.addf %1146, %1151 : vector<4x80xf32>
    %1171 = arith.addf %1156, %1161 : vector<4x80xf32>
    %1172 = arith.addf %1162, %1163 : vector<4x80xf32>
    %1173 = arith.addf %1164, %1165 : vector<4x80xf32>
    %1174 = arith.addf %1166, %1167 : vector<4x80xf32>
    %1175 = arith.addf %1168, %1169 : vector<4x80xf32>
    %1176 = arith.addf %1170, %1171 : vector<4x80xf32>
    %1177 = arith.addf %1172, %1173 : vector<4x80xf32>
    %1178 = arith.addf %1174, %1175 : vector<4x80xf32>
    %1179 = arith.addf %1177, %1178 : vector<4x80xf32>
    %1180 = arith.addf %1179, %1176 : vector<4x80xf32>
    %1181 = arith.addf %1061, %1180 : vector<4x80xf32>
    %1182 = arith.negf %1181 : vector<4x80xf32>
    %1183 = math.exp %1182 : vector<4x80xf32>
    %cst_21 = arith.constant 1.000000e+00 : f32
    %1184 = vector.broadcast %cst_21 : f32 to vector<4x80xf32>
    %1185 = arith.addf %1184, %1183 : vector<4x80xf32>
    %1186 = arith.divf %1184, %1185 : vector<4x80xf32>
    %1187 = math.tanh %1181 : vector<4x80xf32>
    %1188 = vector.extract_strided_slice %1186 {offsets = [0, 0], sizes = [4, 20], strides = [1, 1]} : vector<4x80xf32> to vector<4x20xf32>
    %1189 = vector.extract_strided_slice %1186 {offsets = [0, 20], sizes = [4, 20], strides = [1, 1]} : vector<4x80xf32> to vector<4x20xf32>
    %1190 = vector.extract_strided_slice %1187 {offsets = [0, 40], sizes = [4, 20], strides = [1, 1]} : vector<4x80xf32> to vector<4x20xf32>
    %1191 = vector.extract_strided_slice %1186 {offsets = [0, 60], sizes = [4, 20], strides = [1, 1]} : vector<4x80xf32> to vector<4x20xf32>
    %1192 = arith.mulf %1189, %934 : vector<4x20xf32>
    %1193 = arith.mulf %1188, %1190 : vector<4x20xf32>
    %1194 = arith.addf %1192, %1193 : vector<4x20xf32>
    %1195 = math.tanh %1194 : vector<4x20xf32>
    %1196 = arith.mulf %1191, %1195 : vector<4x20xf32>
    %1197 = vector.extract_strided_slice %1194 {offsets = [0, 0], sizes = [4, 1], strides = [1, 1]} : vector<4x20xf32> to vector<4x1xf32>
    %1198 = vector.extract_strided_slice %3 {offsets = [0, 0], sizes = [1, 4], strides = [1, 1]} : vector<20x4xf32> to vector<1x4xf32>
    %1199 = vector.broadcast %1197 : vector<4x1xf32> to vector<4x4xf32>
    %1200 = vector.broadcast %1198 : vector<1x4xf32> to vector<4x4xf32>
    %1201 = arith.mulf %1199, %1200 : vector<4x4xf32>
    %1202 = vector.extract_strided_slice %1194 {offsets = [0, 1], sizes = [4, 1], strides = [1, 1]} : vector<4x20xf32> to vector<4x1xf32>
    %1203 = vector.extract_strided_slice %3 {offsets = [1, 0], sizes = [1, 4], strides = [1, 1]} : vector<20x4xf32> to vector<1x4xf32>
    %1204 = vector.broadcast %1202 : vector<4x1xf32> to vector<4x4xf32>
    %1205 = vector.broadcast %1203 : vector<1x4xf32> to vector<4x4xf32>
    %1206 = arith.mulf %1204, %1205 : vector<4x4xf32>
    %1207 = vector.extract_strided_slice %1194 {offsets = [0, 2], sizes = [4, 1], strides = [1, 1]} : vector<4x20xf32> to vector<4x1xf32>
    %1208 = vector.extract_strided_slice %3 {offsets = [2, 0], sizes = [1, 4], strides = [1, 1]} : vector<20x4xf32> to vector<1x4xf32>
    %1209 = vector.broadcast %1207 : vector<4x1xf32> to vector<4x4xf32>
    %1210 = vector.broadcast %1208 : vector<1x4xf32> to vector<4x4xf32>
    %1211 = arith.mulf %1209, %1210 : vector<4x4xf32>
    %1212 = vector.extract_strided_slice %1194 {offsets = [0, 3], sizes = [4, 1], strides = [1, 1]} : vector<4x20xf32> to vector<4x1xf32>
    %1213 = vector.extract_strided_slice %3 {offsets = [3, 0], sizes = [1, 4], strides = [1, 1]} : vector<20x4xf32> to vector<1x4xf32>
    %1214 = vector.broadcast %1212 : vector<4x1xf32> to vector<4x4xf32>
    %1215 = vector.broadcast %1213 : vector<1x4xf32> to vector<4x4xf32>
    %1216 = arith.mulf %1214, %1215 : vector<4x4xf32>
    %1217 = vector.extract_strided_slice %1194 {offsets = [0, 4], sizes = [4, 1], strides = [1, 1]} : vector<4x20xf32> to vector<4x1xf32>
    %1218 = vector.extract_strided_slice %3 {offsets = [4, 0], sizes = [1, 4], strides = [1, 1]} : vector<20x4xf32> to vector<1x4xf32>
    %1219 = vector.broadcast %1217 : vector<4x1xf32> to vector<4x4xf32>
    %1220 = vector.broadcast %1218 : vector<1x4xf32> to vector<4x4xf32>
    %1221 = arith.mulf %1219, %1220 : vector<4x4xf32>
    %1222 = vector.extract_strided_slice %1194 {offsets = [0, 5], sizes = [4, 1], strides = [1, 1]} : vector<4x20xf32> to vector<4x1xf32>
    %1223 = vector.extract_strided_slice %3 {offsets = [5, 0], sizes = [1, 4], strides = [1, 1]} : vector<20x4xf32> to vector<1x4xf32>
    %1224 = vector.broadcast %1222 : vector<4x1xf32> to vector<4x4xf32>
    %1225 = vector.broadcast %1223 : vector<1x4xf32> to vector<4x4xf32>
    %1226 = arith.mulf %1224, %1225 : vector<4x4xf32>
    %1227 = vector.extract_strided_slice %1194 {offsets = [0, 6], sizes = [4, 1], strides = [1, 1]} : vector<4x20xf32> to vector<4x1xf32>
    %1228 = vector.extract_strided_slice %3 {offsets = [6, 0], sizes = [1, 4], strides = [1, 1]} : vector<20x4xf32> to vector<1x4xf32>
    %1229 = vector.broadcast %1227 : vector<4x1xf32> to vector<4x4xf32>
    %1230 = vector.broadcast %1228 : vector<1x4xf32> to vector<4x4xf32>
    %1231 = arith.mulf %1229, %1230 : vector<4x4xf32>
    %1232 = vector.extract_strided_slice %1194 {offsets = [0, 7], sizes = [4, 1], strides = [1, 1]} : vector<4x20xf32> to vector<4x1xf32>
    %1233 = vector.extract_strided_slice %3 {offsets = [7, 0], sizes = [1, 4], strides = [1, 1]} : vector<20x4xf32> to vector<1x4xf32>
    %1234 = vector.broadcast %1232 : vector<4x1xf32> to vector<4x4xf32>
    %1235 = vector.broadcast %1233 : vector<1x4xf32> to vector<4x4xf32>
    %1236 = arith.mulf %1234, %1235 : vector<4x4xf32>
    %1237 = vector.extract_strided_slice %1194 {offsets = [0, 8], sizes = [4, 1], strides = [1, 1]} : vector<4x20xf32> to vector<4x1xf32>
    %1238 = vector.extract_strided_slice %3 {offsets = [8, 0], sizes = [1, 4], strides = [1, 1]} : vector<20x4xf32> to vector<1x4xf32>
    %1239 = vector.broadcast %1237 : vector<4x1xf32> to vector<4x4xf32>
    %1240 = vector.broadcast %1238 : vector<1x4xf32> to vector<4x4xf32>
    %1241 = arith.mulf %1239, %1240 : vector<4x4xf32>
    %1242 = vector.extract_strided_slice %1194 {offsets = [0, 9], sizes = [4, 1], strides = [1, 1]} : vector<4x20xf32> to vector<4x1xf32>
    %1243 = vector.extract_strided_slice %3 {offsets = [9, 0], sizes = [1, 4], strides = [1, 1]} : vector<20x4xf32> to vector<1x4xf32>
    %1244 = vector.broadcast %1242 : vector<4x1xf32> to vector<4x4xf32>
    %1245 = vector.broadcast %1243 : vector<1x4xf32> to vector<4x4xf32>
    %1246 = arith.mulf %1244, %1245 : vector<4x4xf32>
    %1247 = vector.extract_strided_slice %1194 {offsets = [0, 10], sizes = [4, 1], strides = [1, 1]} : vector<4x20xf32> to vector<4x1xf32>
    %1248 = vector.extract_strided_slice %3 {offsets = [10, 0], sizes = [1, 4], strides = [1, 1]} : vector<20x4xf32> to vector<1x4xf32>
    %1249 = vector.broadcast %1247 : vector<4x1xf32> to vector<4x4xf32>
    %1250 = vector.broadcast %1248 : vector<1x4xf32> to vector<4x4xf32>
    %1251 = arith.mulf %1249, %1250 : vector<4x4xf32>
    %1252 = vector.extract_strided_slice %1194 {offsets = [0, 11], sizes = [4, 1], strides = [1, 1]} : vector<4x20xf32> to vector<4x1xf32>
    %1253 = vector.extract_strided_slice %3 {offsets = [11, 0], sizes = [1, 4], strides = [1, 1]} : vector<20x4xf32> to vector<1x4xf32>
    %1254 = vector.broadcast %1252 : vector<4x1xf32> to vector<4x4xf32>
    %1255 = vector.broadcast %1253 : vector<1x4xf32> to vector<4x4xf32>
    %1256 = arith.mulf %1254, %1255 : vector<4x4xf32>
    %1257 = vector.extract_strided_slice %1194 {offsets = [0, 12], sizes = [4, 1], strides = [1, 1]} : vector<4x20xf32> to vector<4x1xf32>
    %1258 = vector.extract_strided_slice %3 {offsets = [12, 0], sizes = [1, 4], strides = [1, 1]} : vector<20x4xf32> to vector<1x4xf32>
    %1259 = vector.broadcast %1257 : vector<4x1xf32> to vector<4x4xf32>
    %1260 = vector.broadcast %1258 : vector<1x4xf32> to vector<4x4xf32>
    %1261 = arith.mulf %1259, %1260 : vector<4x4xf32>
    %1262 = vector.extract_strided_slice %1194 {offsets = [0, 13], sizes = [4, 1], strides = [1, 1]} : vector<4x20xf32> to vector<4x1xf32>
    %1263 = vector.extract_strided_slice %3 {offsets = [13, 0], sizes = [1, 4], strides = [1, 1]} : vector<20x4xf32> to vector<1x4xf32>
    %1264 = vector.broadcast %1262 : vector<4x1xf32> to vector<4x4xf32>
    %1265 = vector.broadcast %1263 : vector<1x4xf32> to vector<4x4xf32>
    %1266 = arith.mulf %1264, %1265 : vector<4x4xf32>
    %1267 = vector.extract_strided_slice %1194 {offsets = [0, 14], sizes = [4, 1], strides = [1, 1]} : vector<4x20xf32> to vector<4x1xf32>
    %1268 = vector.extract_strided_slice %3 {offsets = [14, 0], sizes = [1, 4], strides = [1, 1]} : vector<20x4xf32> to vector<1x4xf32>
    %1269 = vector.broadcast %1267 : vector<4x1xf32> to vector<4x4xf32>
    %1270 = vector.broadcast %1268 : vector<1x4xf32> to vector<4x4xf32>
    %1271 = arith.mulf %1269, %1270 : vector<4x4xf32>
    %1272 = vector.extract_strided_slice %1194 {offsets = [0, 15], sizes = [4, 1], strides = [1, 1]} : vector<4x20xf32> to vector<4x1xf32>
    %1273 = vector.extract_strided_slice %3 {offsets = [15, 0], sizes = [1, 4], strides = [1, 1]} : vector<20x4xf32> to vector<1x4xf32>
    %1274 = vector.broadcast %1272 : vector<4x1xf32> to vector<4x4xf32>
    %1275 = vector.broadcast %1273 : vector<1x4xf32> to vector<4x4xf32>
    %1276 = arith.mulf %1274, %1275 : vector<4x4xf32>
    %1277 = vector.extract_strided_slice %1194 {offsets = [0, 16], sizes = [4, 1], strides = [1, 1]} : vector<4x20xf32> to vector<4x1xf32>
    %1278 = vector.extract_strided_slice %3 {offsets = [16, 0], sizes = [1, 4], strides = [1, 1]} : vector<20x4xf32> to vector<1x4xf32>
    %1279 = vector.broadcast %1277 : vector<4x1xf32> to vector<4x4xf32>
    %1280 = vector.broadcast %1278 : vector<1x4xf32> to vector<4x4xf32>
    %1281 = arith.mulf %1279, %1280 : vector<4x4xf32>
    %1282 = vector.extract_strided_slice %1194 {offsets = [0, 17], sizes = [4, 1], strides = [1, 1]} : vector<4x20xf32> to vector<4x1xf32>
    %1283 = vector.extract_strided_slice %3 {offsets = [17, 0], sizes = [1, 4], strides = [1, 1]} : vector<20x4xf32> to vector<1x4xf32>
    %1284 = vector.broadcast %1282 : vector<4x1xf32> to vector<4x4xf32>
    %1285 = vector.broadcast %1283 : vector<1x4xf32> to vector<4x4xf32>
    %1286 = arith.mulf %1284, %1285 : vector<4x4xf32>
    %1287 = vector.extract_strided_slice %1194 {offsets = [0, 18], sizes = [4, 1], strides = [1, 1]} : vector<4x20xf32> to vector<4x1xf32>
    %1288 = vector.extract_strided_slice %3 {offsets = [18, 0], sizes = [1, 4], strides = [1, 1]} : vector<20x4xf32> to vector<1x4xf32>
    %1289 = vector.broadcast %1287 : vector<4x1xf32> to vector<4x4xf32>
    %1290 = vector.broadcast %1288 : vector<1x4xf32> to vector<4x4xf32>
    %1291 = arith.mulf %1289, %1290 : vector<4x4xf32>
    %1292 = vector.extract_strided_slice %1194 {offsets = [0, 19], sizes = [4, 1], strides = [1, 1]} : vector<4x20xf32> to vector<4x1xf32>
    %1293 = vector.extract_strided_slice %3 {offsets = [19, 0], sizes = [1, 4], strides = [1, 1]} : vector<20x4xf32> to vector<1x4xf32>
    %1294 = vector.broadcast %1292 : vector<4x1xf32> to vector<4x4xf32>
    %1295 = vector.broadcast %1293 : vector<1x4xf32> to vector<4x4xf32>
    %1296 = arith.mulf %1294, %1295 : vector<4x4xf32>
    %1297 = arith.addf %1201, %1206 : vector<4x4xf32>
    %1298 = arith.addf %1211, %1216 : vector<4x4xf32>
    %1299 = arith.addf %1221, %1226 : vector<4x4xf32>
    %1300 = arith.addf %1231, %1236 : vector<4x4xf32>
    %1301 = arith.addf %1241, %1246 : vector<4x4xf32>
    %1302 = arith.addf %1251, %1256 : vector<4x4xf32>
    %1303 = arith.addf %1261, %1266 : vector<4x4xf32>
    %1304 = arith.addf %1271, %1276 : vector<4x4xf32>
    %1305 = arith.addf %1281, %1286 : vector<4x4xf32>
    %1306 = arith.addf %1291, %1296 : vector<4x4xf32>
    %1307 = arith.addf %1297, %1298 : vector<4x4xf32>
    %1308 = arith.addf %1299, %1300 : vector<4x4xf32>
    %1309 = arith.addf %1301, %1302 : vector<4x4xf32>
    %1310 = arith.addf %1303, %1304 : vector<4x4xf32>
    %1311 = arith.addf %1305, %1306 : vector<4x4xf32>
    %1312 = arith.addf %1307, %1308 : vector<4x4xf32>
    %1313 = arith.addf %1309, %1310 : vector<4x4xf32>
    %1314 = arith.addf %1312, %1313 : vector<4x4xf32>
    %1315 = arith.addf %1314, %1311 : vector<4x4xf32>
    %1316 = arith.addf %1315, %10 : vector<4x4xf32>
    %1317 = vector.extract_strided_slice %0 {offsets = [0, 5], sizes = [4, 1], strides = [1, 1]} : vector<4x8xf32> to vector<4x1xf32>
    %1318 = vector.broadcast %1317 : vector<4x1xf32> to vector<4x80xf32>
    %1319 = vector.broadcast %1 : vector<1x80xf32> to vector<4x80xf32>
    %1320 = arith.mulf %1318, %1319 : vector<4x80xf32>
    %1321 = arith.addf %1320, %7 : vector<4x80xf32>
    %1322 = vector.extract_strided_slice %1196 {offsets = [0, 0], sizes = [4, 1], strides = [1, 1]} : vector<4x20xf32> to vector<4x1xf32>
    %1323 = vector.extract_strided_slice %2 {offsets = [0, 0], sizes = [1, 80], strides = [1, 1]} : vector<20x80xf32> to vector<1x80xf32>
    %1324 = vector.broadcast %1322 : vector<4x1xf32> to vector<4x80xf32>
    %1325 = vector.broadcast %1323 : vector<1x80xf32> to vector<4x80xf32>
    %1326 = arith.mulf %1324, %1325 : vector<4x80xf32>
    %1327 = vector.extract_strided_slice %1196 {offsets = [0, 1], sizes = [4, 1], strides = [1, 1]} : vector<4x20xf32> to vector<4x1xf32>
    %1328 = vector.extract_strided_slice %2 {offsets = [1, 0], sizes = [1, 80], strides = [1, 1]} : vector<20x80xf32> to vector<1x80xf32>
    %1329 = vector.broadcast %1327 : vector<4x1xf32> to vector<4x80xf32>
    %1330 = vector.broadcast %1328 : vector<1x80xf32> to vector<4x80xf32>
    %1331 = arith.mulf %1329, %1330 : vector<4x80xf32>
    %1332 = vector.extract_strided_slice %1196 {offsets = [0, 2], sizes = [4, 1], strides = [1, 1]} : vector<4x20xf32> to vector<4x1xf32>
    %1333 = vector.extract_strided_slice %2 {offsets = [2, 0], sizes = [1, 80], strides = [1, 1]} : vector<20x80xf32> to vector<1x80xf32>
    %1334 = vector.broadcast %1332 : vector<4x1xf32> to vector<4x80xf32>
    %1335 = vector.broadcast %1333 : vector<1x80xf32> to vector<4x80xf32>
    %1336 = arith.mulf %1334, %1335 : vector<4x80xf32>
    %1337 = vector.extract_strided_slice %1196 {offsets = [0, 3], sizes = [4, 1], strides = [1, 1]} : vector<4x20xf32> to vector<4x1xf32>
    %1338 = vector.extract_strided_slice %2 {offsets = [3, 0], sizes = [1, 80], strides = [1, 1]} : vector<20x80xf32> to vector<1x80xf32>
    %1339 = vector.broadcast %1337 : vector<4x1xf32> to vector<4x80xf32>
    %1340 = vector.broadcast %1338 : vector<1x80xf32> to vector<4x80xf32>
    %1341 = arith.mulf %1339, %1340 : vector<4x80xf32>
    %1342 = vector.extract_strided_slice %1196 {offsets = [0, 4], sizes = [4, 1], strides = [1, 1]} : vector<4x20xf32> to vector<4x1xf32>
    %1343 = vector.extract_strided_slice %2 {offsets = [4, 0], sizes = [1, 80], strides = [1, 1]} : vector<20x80xf32> to vector<1x80xf32>
    %1344 = vector.broadcast %1342 : vector<4x1xf32> to vector<4x80xf32>
    %1345 = vector.broadcast %1343 : vector<1x80xf32> to vector<4x80xf32>
    %1346 = arith.mulf %1344, %1345 : vector<4x80xf32>
    %1347 = vector.extract_strided_slice %1196 {offsets = [0, 5], sizes = [4, 1], strides = [1, 1]} : vector<4x20xf32> to vector<4x1xf32>
    %1348 = vector.extract_strided_slice %2 {offsets = [5, 0], sizes = [1, 80], strides = [1, 1]} : vector<20x80xf32> to vector<1x80xf32>
    %1349 = vector.broadcast %1347 : vector<4x1xf32> to vector<4x80xf32>
    %1350 = vector.broadcast %1348 : vector<1x80xf32> to vector<4x80xf32>
    %1351 = arith.mulf %1349, %1350 : vector<4x80xf32>
    %1352 = vector.extract_strided_slice %1196 {offsets = [0, 6], sizes = [4, 1], strides = [1, 1]} : vector<4x20xf32> to vector<4x1xf32>
    %1353 = vector.extract_strided_slice %2 {offsets = [6, 0], sizes = [1, 80], strides = [1, 1]} : vector<20x80xf32> to vector<1x80xf32>
    %1354 = vector.broadcast %1352 : vector<4x1xf32> to vector<4x80xf32>
    %1355 = vector.broadcast %1353 : vector<1x80xf32> to vector<4x80xf32>
    %1356 = arith.mulf %1354, %1355 : vector<4x80xf32>
    %1357 = vector.extract_strided_slice %1196 {offsets = [0, 7], sizes = [4, 1], strides = [1, 1]} : vector<4x20xf32> to vector<4x1xf32>
    %1358 = vector.extract_strided_slice %2 {offsets = [7, 0], sizes = [1, 80], strides = [1, 1]} : vector<20x80xf32> to vector<1x80xf32>
    %1359 = vector.broadcast %1357 : vector<4x1xf32> to vector<4x80xf32>
    %1360 = vector.broadcast %1358 : vector<1x80xf32> to vector<4x80xf32>
    %1361 = arith.mulf %1359, %1360 : vector<4x80xf32>
    %1362 = vector.extract_strided_slice %1196 {offsets = [0, 8], sizes = [4, 1], strides = [1, 1]} : vector<4x20xf32> to vector<4x1xf32>
    %1363 = vector.extract_strided_slice %2 {offsets = [8, 0], sizes = [1, 80], strides = [1, 1]} : vector<20x80xf32> to vector<1x80xf32>
    %1364 = vector.broadcast %1362 : vector<4x1xf32> to vector<4x80xf32>
    %1365 = vector.broadcast %1363 : vector<1x80xf32> to vector<4x80xf32>
    %1366 = arith.mulf %1364, %1365 : vector<4x80xf32>
    %1367 = vector.extract_strided_slice %1196 {offsets = [0, 9], sizes = [4, 1], strides = [1, 1]} : vector<4x20xf32> to vector<4x1xf32>
    %1368 = vector.extract_strided_slice %2 {offsets = [9, 0], sizes = [1, 80], strides = [1, 1]} : vector<20x80xf32> to vector<1x80xf32>
    %1369 = vector.broadcast %1367 : vector<4x1xf32> to vector<4x80xf32>
    %1370 = vector.broadcast %1368 : vector<1x80xf32> to vector<4x80xf32>
    %1371 = arith.mulf %1369, %1370 : vector<4x80xf32>
    %1372 = vector.extract_strided_slice %1196 {offsets = [0, 10], sizes = [4, 1], strides = [1, 1]} : vector<4x20xf32> to vector<4x1xf32>
    %1373 = vector.extract_strided_slice %2 {offsets = [10, 0], sizes = [1, 80], strides = [1, 1]} : vector<20x80xf32> to vector<1x80xf32>
    %1374 = vector.broadcast %1372 : vector<4x1xf32> to vector<4x80xf32>
    %1375 = vector.broadcast %1373 : vector<1x80xf32> to vector<4x80xf32>
    %1376 = arith.mulf %1374, %1375 : vector<4x80xf32>
    %1377 = vector.extract_strided_slice %1196 {offsets = [0, 11], sizes = [4, 1], strides = [1, 1]} : vector<4x20xf32> to vector<4x1xf32>
    %1378 = vector.extract_strided_slice %2 {offsets = [11, 0], sizes = [1, 80], strides = [1, 1]} : vector<20x80xf32> to vector<1x80xf32>
    %1379 = vector.broadcast %1377 : vector<4x1xf32> to vector<4x80xf32>
    %1380 = vector.broadcast %1378 : vector<1x80xf32> to vector<4x80xf32>
    %1381 = arith.mulf %1379, %1380 : vector<4x80xf32>
    %1382 = vector.extract_strided_slice %1196 {offsets = [0, 12], sizes = [4, 1], strides = [1, 1]} : vector<4x20xf32> to vector<4x1xf32>
    %1383 = vector.extract_strided_slice %2 {offsets = [12, 0], sizes = [1, 80], strides = [1, 1]} : vector<20x80xf32> to vector<1x80xf32>
    %1384 = vector.broadcast %1382 : vector<4x1xf32> to vector<4x80xf32>
    %1385 = vector.broadcast %1383 : vector<1x80xf32> to vector<4x80xf32>
    %1386 = arith.mulf %1384, %1385 : vector<4x80xf32>
    %1387 = vector.extract_strided_slice %1196 {offsets = [0, 13], sizes = [4, 1], strides = [1, 1]} : vector<4x20xf32> to vector<4x1xf32>
    %1388 = vector.extract_strided_slice %2 {offsets = [13, 0], sizes = [1, 80], strides = [1, 1]} : vector<20x80xf32> to vector<1x80xf32>
    %1389 = vector.broadcast %1387 : vector<4x1xf32> to vector<4x80xf32>
    %1390 = vector.broadcast %1388 : vector<1x80xf32> to vector<4x80xf32>
    %1391 = arith.mulf %1389, %1390 : vector<4x80xf32>
    %1392 = vector.extract_strided_slice %1196 {offsets = [0, 14], sizes = [4, 1], strides = [1, 1]} : vector<4x20xf32> to vector<4x1xf32>
    %1393 = vector.extract_strided_slice %2 {offsets = [14, 0], sizes = [1, 80], strides = [1, 1]} : vector<20x80xf32> to vector<1x80xf32>
    %1394 = vector.broadcast %1392 : vector<4x1xf32> to vector<4x80xf32>
    %1395 = vector.broadcast %1393 : vector<1x80xf32> to vector<4x80xf32>
    %1396 = arith.mulf %1394, %1395 : vector<4x80xf32>
    %1397 = vector.extract_strided_slice %1196 {offsets = [0, 15], sizes = [4, 1], strides = [1, 1]} : vector<4x20xf32> to vector<4x1xf32>
    %1398 = vector.extract_strided_slice %2 {offsets = [15, 0], sizes = [1, 80], strides = [1, 1]} : vector<20x80xf32> to vector<1x80xf32>
    %1399 = vector.broadcast %1397 : vector<4x1xf32> to vector<4x80xf32>
    %1400 = vector.broadcast %1398 : vector<1x80xf32> to vector<4x80xf32>
    %1401 = arith.mulf %1399, %1400 : vector<4x80xf32>
    %1402 = vector.extract_strided_slice %1196 {offsets = [0, 16], sizes = [4, 1], strides = [1, 1]} : vector<4x20xf32> to vector<4x1xf32>
    %1403 = vector.extract_strided_slice %2 {offsets = [16, 0], sizes = [1, 80], strides = [1, 1]} : vector<20x80xf32> to vector<1x80xf32>
    %1404 = vector.broadcast %1402 : vector<4x1xf32> to vector<4x80xf32>
    %1405 = vector.broadcast %1403 : vector<1x80xf32> to vector<4x80xf32>
    %1406 = arith.mulf %1404, %1405 : vector<4x80xf32>
    %1407 = vector.extract_strided_slice %1196 {offsets = [0, 17], sizes = [4, 1], strides = [1, 1]} : vector<4x20xf32> to vector<4x1xf32>
    %1408 = vector.extract_strided_slice %2 {offsets = [17, 0], sizes = [1, 80], strides = [1, 1]} : vector<20x80xf32> to vector<1x80xf32>
    %1409 = vector.broadcast %1407 : vector<4x1xf32> to vector<4x80xf32>
    %1410 = vector.broadcast %1408 : vector<1x80xf32> to vector<4x80xf32>
    %1411 = arith.mulf %1409, %1410 : vector<4x80xf32>
    %1412 = vector.extract_strided_slice %1196 {offsets = [0, 18], sizes = [4, 1], strides = [1, 1]} : vector<4x20xf32> to vector<4x1xf32>
    %1413 = vector.extract_strided_slice %2 {offsets = [18, 0], sizes = [1, 80], strides = [1, 1]} : vector<20x80xf32> to vector<1x80xf32>
    %1414 = vector.broadcast %1412 : vector<4x1xf32> to vector<4x80xf32>
    %1415 = vector.broadcast %1413 : vector<1x80xf32> to vector<4x80xf32>
    %1416 = arith.mulf %1414, %1415 : vector<4x80xf32>
    %1417 = vector.extract_strided_slice %1196 {offsets = [0, 19], sizes = [4, 1], strides = [1, 1]} : vector<4x20xf32> to vector<4x1xf32>
    %1418 = vector.extract_strided_slice %2 {offsets = [19, 0], sizes = [1, 80], strides = [1, 1]} : vector<20x80xf32> to vector<1x80xf32>
    %1419 = vector.broadcast %1417 : vector<4x1xf32> to vector<4x80xf32>
    %1420 = vector.broadcast %1418 : vector<1x80xf32> to vector<4x80xf32>
    %1421 = arith.mulf %1419, %1420 : vector<4x80xf32>
    %1422 = arith.addf %1326, %1331 : vector<4x80xf32>
    %1423 = arith.addf %1336, %1341 : vector<4x80xf32>
    %1424 = arith.addf %1346, %1351 : vector<4x80xf32>
    %1425 = arith.addf %1356, %1361 : vector<4x80xf32>
    %1426 = arith.addf %1366, %1371 : vector<4x80xf32>
    %1427 = arith.addf %1376, %1381 : vector<4x80xf32>
    %1428 = arith.addf %1386, %1391 : vector<4x80xf32>
    %1429 = arith.addf %1396, %1401 : vector<4x80xf32>
    %1430 = arith.addf %1406, %1411 : vector<4x80xf32>
    %1431 = arith.addf %1416, %1421 : vector<4x80xf32>
    %1432 = arith.addf %1422, %1423 : vector<4x80xf32>
    %1433 = arith.addf %1424, %1425 : vector<4x80xf32>
    %1434 = arith.addf %1426, %1427 : vector<4x80xf32>
    %1435 = arith.addf %1428, %1429 : vector<4x80xf32>
    %1436 = arith.addf %1430, %1431 : vector<4x80xf32>
    %1437 = arith.addf %1432, %1433 : vector<4x80xf32>
    %1438 = arith.addf %1434, %1435 : vector<4x80xf32>
    %1439 = arith.addf %1437, %1438 : vector<4x80xf32>
    %1440 = arith.addf %1439, %1436 : vector<4x80xf32>
    %1441 = arith.addf %1321, %1440 : vector<4x80xf32>
    %1442 = arith.negf %1441 : vector<4x80xf32>
    %1443 = math.exp %1442 : vector<4x80xf32>
    %cst_22 = arith.constant 1.000000e+00 : f32
    %1444 = vector.broadcast %cst_22 : f32 to vector<4x80xf32>
    %1445 = arith.addf %1444, %1443 : vector<4x80xf32>
    %1446 = arith.divf %1444, %1445 : vector<4x80xf32>
    %1447 = math.tanh %1441 : vector<4x80xf32>
    %1448 = vector.extract_strided_slice %1446 {offsets = [0, 0], sizes = [4, 20], strides = [1, 1]} : vector<4x80xf32> to vector<4x20xf32>
    %1449 = vector.extract_strided_slice %1446 {offsets = [0, 20], sizes = [4, 20], strides = [1, 1]} : vector<4x80xf32> to vector<4x20xf32>
    %1450 = vector.extract_strided_slice %1447 {offsets = [0, 40], sizes = [4, 20], strides = [1, 1]} : vector<4x80xf32> to vector<4x20xf32>
    %1451 = vector.extract_strided_slice %1446 {offsets = [0, 60], sizes = [4, 20], strides = [1, 1]} : vector<4x80xf32> to vector<4x20xf32>
    %1452 = arith.mulf %1449, %1194 : vector<4x20xf32>
    %1453 = arith.mulf %1448, %1450 : vector<4x20xf32>
    %1454 = arith.addf %1452, %1453 : vector<4x20xf32>
    %1455 = math.tanh %1454 : vector<4x20xf32>
    %1456 = arith.mulf %1451, %1455 : vector<4x20xf32>
    %1457 = vector.extract_strided_slice %1454 {offsets = [0, 0], sizes = [4, 1], strides = [1, 1]} : vector<4x20xf32> to vector<4x1xf32>
    %1458 = vector.extract_strided_slice %3 {offsets = [0, 0], sizes = [1, 4], strides = [1, 1]} : vector<20x4xf32> to vector<1x4xf32>
    %1459 = vector.broadcast %1457 : vector<4x1xf32> to vector<4x4xf32>
    %1460 = vector.broadcast %1458 : vector<1x4xf32> to vector<4x4xf32>
    %1461 = arith.mulf %1459, %1460 : vector<4x4xf32>
    %1462 = vector.extract_strided_slice %1454 {offsets = [0, 1], sizes = [4, 1], strides = [1, 1]} : vector<4x20xf32> to vector<4x1xf32>
    %1463 = vector.extract_strided_slice %3 {offsets = [1, 0], sizes = [1, 4], strides = [1, 1]} : vector<20x4xf32> to vector<1x4xf32>
    %1464 = vector.broadcast %1462 : vector<4x1xf32> to vector<4x4xf32>
    %1465 = vector.broadcast %1463 : vector<1x4xf32> to vector<4x4xf32>
    %1466 = arith.mulf %1464, %1465 : vector<4x4xf32>
    %1467 = vector.extract_strided_slice %1454 {offsets = [0, 2], sizes = [4, 1], strides = [1, 1]} : vector<4x20xf32> to vector<4x1xf32>
    %1468 = vector.extract_strided_slice %3 {offsets = [2, 0], sizes = [1, 4], strides = [1, 1]} : vector<20x4xf32> to vector<1x4xf32>
    %1469 = vector.broadcast %1467 : vector<4x1xf32> to vector<4x4xf32>
    %1470 = vector.broadcast %1468 : vector<1x4xf32> to vector<4x4xf32>
    %1471 = arith.mulf %1469, %1470 : vector<4x4xf32>
    %1472 = vector.extract_strided_slice %1454 {offsets = [0, 3], sizes = [4, 1], strides = [1, 1]} : vector<4x20xf32> to vector<4x1xf32>
    %1473 = vector.extract_strided_slice %3 {offsets = [3, 0], sizes = [1, 4], strides = [1, 1]} : vector<20x4xf32> to vector<1x4xf32>
    %1474 = vector.broadcast %1472 : vector<4x1xf32> to vector<4x4xf32>
    %1475 = vector.broadcast %1473 : vector<1x4xf32> to vector<4x4xf32>
    %1476 = arith.mulf %1474, %1475 : vector<4x4xf32>
    %1477 = vector.extract_strided_slice %1454 {offsets = [0, 4], sizes = [4, 1], strides = [1, 1]} : vector<4x20xf32> to vector<4x1xf32>
    %1478 = vector.extract_strided_slice %3 {offsets = [4, 0], sizes = [1, 4], strides = [1, 1]} : vector<20x4xf32> to vector<1x4xf32>
    %1479 = vector.broadcast %1477 : vector<4x1xf32> to vector<4x4xf32>
    %1480 = vector.broadcast %1478 : vector<1x4xf32> to vector<4x4xf32>
    %1481 = arith.mulf %1479, %1480 : vector<4x4xf32>
    %1482 = vector.extract_strided_slice %1454 {offsets = [0, 5], sizes = [4, 1], strides = [1, 1]} : vector<4x20xf32> to vector<4x1xf32>
    %1483 = vector.extract_strided_slice %3 {offsets = [5, 0], sizes = [1, 4], strides = [1, 1]} : vector<20x4xf32> to vector<1x4xf32>
    %1484 = vector.broadcast %1482 : vector<4x1xf32> to vector<4x4xf32>
    %1485 = vector.broadcast %1483 : vector<1x4xf32> to vector<4x4xf32>
    %1486 = arith.mulf %1484, %1485 : vector<4x4xf32>
    %1487 = vector.extract_strided_slice %1454 {offsets = [0, 6], sizes = [4, 1], strides = [1, 1]} : vector<4x20xf32> to vector<4x1xf32>
    %1488 = vector.extract_strided_slice %3 {offsets = [6, 0], sizes = [1, 4], strides = [1, 1]} : vector<20x4xf32> to vector<1x4xf32>
    %1489 = vector.broadcast %1487 : vector<4x1xf32> to vector<4x4xf32>
    %1490 = vector.broadcast %1488 : vector<1x4xf32> to vector<4x4xf32>
    %1491 = arith.mulf %1489, %1490 : vector<4x4xf32>
    %1492 = vector.extract_strided_slice %1454 {offsets = [0, 7], sizes = [4, 1], strides = [1, 1]} : vector<4x20xf32> to vector<4x1xf32>
    %1493 = vector.extract_strided_slice %3 {offsets = [7, 0], sizes = [1, 4], strides = [1, 1]} : vector<20x4xf32> to vector<1x4xf32>
    %1494 = vector.broadcast %1492 : vector<4x1xf32> to vector<4x4xf32>
    %1495 = vector.broadcast %1493 : vector<1x4xf32> to vector<4x4xf32>
    %1496 = arith.mulf %1494, %1495 : vector<4x4xf32>
    %1497 = vector.extract_strided_slice %1454 {offsets = [0, 8], sizes = [4, 1], strides = [1, 1]} : vector<4x20xf32> to vector<4x1xf32>
    %1498 = vector.extract_strided_slice %3 {offsets = [8, 0], sizes = [1, 4], strides = [1, 1]} : vector<20x4xf32> to vector<1x4xf32>
    %1499 = vector.broadcast %1497 : vector<4x1xf32> to vector<4x4xf32>
    %1500 = vector.broadcast %1498 : vector<1x4xf32> to vector<4x4xf32>
    %1501 = arith.mulf %1499, %1500 : vector<4x4xf32>
    %1502 = vector.extract_strided_slice %1454 {offsets = [0, 9], sizes = [4, 1], strides = [1, 1]} : vector<4x20xf32> to vector<4x1xf32>
    %1503 = vector.extract_strided_slice %3 {offsets = [9, 0], sizes = [1, 4], strides = [1, 1]} : vector<20x4xf32> to vector<1x4xf32>
    %1504 = vector.broadcast %1502 : vector<4x1xf32> to vector<4x4xf32>
    %1505 = vector.broadcast %1503 : vector<1x4xf32> to vector<4x4xf32>
    %1506 = arith.mulf %1504, %1505 : vector<4x4xf32>
    %1507 = vector.extract_strided_slice %1454 {offsets = [0, 10], sizes = [4, 1], strides = [1, 1]} : vector<4x20xf32> to vector<4x1xf32>
    %1508 = vector.extract_strided_slice %3 {offsets = [10, 0], sizes = [1, 4], strides = [1, 1]} : vector<20x4xf32> to vector<1x4xf32>
    %1509 = vector.broadcast %1507 : vector<4x1xf32> to vector<4x4xf32>
    %1510 = vector.broadcast %1508 : vector<1x4xf32> to vector<4x4xf32>
    %1511 = arith.mulf %1509, %1510 : vector<4x4xf32>
    %1512 = vector.extract_strided_slice %1454 {offsets = [0, 11], sizes = [4, 1], strides = [1, 1]} : vector<4x20xf32> to vector<4x1xf32>
    %1513 = vector.extract_strided_slice %3 {offsets = [11, 0], sizes = [1, 4], strides = [1, 1]} : vector<20x4xf32> to vector<1x4xf32>
    %1514 = vector.broadcast %1512 : vector<4x1xf32> to vector<4x4xf32>
    %1515 = vector.broadcast %1513 : vector<1x4xf32> to vector<4x4xf32>
    %1516 = arith.mulf %1514, %1515 : vector<4x4xf32>
    %1517 = vector.extract_strided_slice %1454 {offsets = [0, 12], sizes = [4, 1], strides = [1, 1]} : vector<4x20xf32> to vector<4x1xf32>
    %1518 = vector.extract_strided_slice %3 {offsets = [12, 0], sizes = [1, 4], strides = [1, 1]} : vector<20x4xf32> to vector<1x4xf32>
    %1519 = vector.broadcast %1517 : vector<4x1xf32> to vector<4x4xf32>
    %1520 = vector.broadcast %1518 : vector<1x4xf32> to vector<4x4xf32>
    %1521 = arith.mulf %1519, %1520 : vector<4x4xf32>
    %1522 = vector.extract_strided_slice %1454 {offsets = [0, 13], sizes = [4, 1], strides = [1, 1]} : vector<4x20xf32> to vector<4x1xf32>
    %1523 = vector.extract_strided_slice %3 {offsets = [13, 0], sizes = [1, 4], strides = [1, 1]} : vector<20x4xf32> to vector<1x4xf32>
    %1524 = vector.broadcast %1522 : vector<4x1xf32> to vector<4x4xf32>
    %1525 = vector.broadcast %1523 : vector<1x4xf32> to vector<4x4xf32>
    %1526 = arith.mulf %1524, %1525 : vector<4x4xf32>
    %1527 = vector.extract_strided_slice %1454 {offsets = [0, 14], sizes = [4, 1], strides = [1, 1]} : vector<4x20xf32> to vector<4x1xf32>
    %1528 = vector.extract_strided_slice %3 {offsets = [14, 0], sizes = [1, 4], strides = [1, 1]} : vector<20x4xf32> to vector<1x4xf32>
    %1529 = vector.broadcast %1527 : vector<4x1xf32> to vector<4x4xf32>
    %1530 = vector.broadcast %1528 : vector<1x4xf32> to vector<4x4xf32>
    %1531 = arith.mulf %1529, %1530 : vector<4x4xf32>
    %1532 = vector.extract_strided_slice %1454 {offsets = [0, 15], sizes = [4, 1], strides = [1, 1]} : vector<4x20xf32> to vector<4x1xf32>
    %1533 = vector.extract_strided_slice %3 {offsets = [15, 0], sizes = [1, 4], strides = [1, 1]} : vector<20x4xf32> to vector<1x4xf32>
    %1534 = vector.broadcast %1532 : vector<4x1xf32> to vector<4x4xf32>
    %1535 = vector.broadcast %1533 : vector<1x4xf32> to vector<4x4xf32>
    %1536 = arith.mulf %1534, %1535 : vector<4x4xf32>
    %1537 = vector.extract_strided_slice %1454 {offsets = [0, 16], sizes = [4, 1], strides = [1, 1]} : vector<4x20xf32> to vector<4x1xf32>
    %1538 = vector.extract_strided_slice %3 {offsets = [16, 0], sizes = [1, 4], strides = [1, 1]} : vector<20x4xf32> to vector<1x4xf32>
    %1539 = vector.broadcast %1537 : vector<4x1xf32> to vector<4x4xf32>
    %1540 = vector.broadcast %1538 : vector<1x4xf32> to vector<4x4xf32>
    %1541 = arith.mulf %1539, %1540 : vector<4x4xf32>
    %1542 = vector.extract_strided_slice %1454 {offsets = [0, 17], sizes = [4, 1], strides = [1, 1]} : vector<4x20xf32> to vector<4x1xf32>
    %1543 = vector.extract_strided_slice %3 {offsets = [17, 0], sizes = [1, 4], strides = [1, 1]} : vector<20x4xf32> to vector<1x4xf32>
    %1544 = vector.broadcast %1542 : vector<4x1xf32> to vector<4x4xf32>
    %1545 = vector.broadcast %1543 : vector<1x4xf32> to vector<4x4xf32>
    %1546 = arith.mulf %1544, %1545 : vector<4x4xf32>
    %1547 = vector.extract_strided_slice %1454 {offsets = [0, 18], sizes = [4, 1], strides = [1, 1]} : vector<4x20xf32> to vector<4x1xf32>
    %1548 = vector.extract_strided_slice %3 {offsets = [18, 0], sizes = [1, 4], strides = [1, 1]} : vector<20x4xf32> to vector<1x4xf32>
    %1549 = vector.broadcast %1547 : vector<4x1xf32> to vector<4x4xf32>
    %1550 = vector.broadcast %1548 : vector<1x4xf32> to vector<4x4xf32>
    %1551 = arith.mulf %1549, %1550 : vector<4x4xf32>
    %1552 = vector.extract_strided_slice %1454 {offsets = [0, 19], sizes = [4, 1], strides = [1, 1]} : vector<4x20xf32> to vector<4x1xf32>
    %1553 = vector.extract_strided_slice %3 {offsets = [19, 0], sizes = [1, 4], strides = [1, 1]} : vector<20x4xf32> to vector<1x4xf32>
    %1554 = vector.broadcast %1552 : vector<4x1xf32> to vector<4x4xf32>
    %1555 = vector.broadcast %1553 : vector<1x4xf32> to vector<4x4xf32>
    %1556 = arith.mulf %1554, %1555 : vector<4x4xf32>
    %1557 = arith.addf %1461, %1466 : vector<4x4xf32>
    %1558 = arith.addf %1471, %1476 : vector<4x4xf32>
    %1559 = arith.addf %1481, %1486 : vector<4x4xf32>
    %1560 = arith.addf %1491, %1496 : vector<4x4xf32>
    %1561 = arith.addf %1501, %1506 : vector<4x4xf32>
    %1562 = arith.addf %1511, %1516 : vector<4x4xf32>
    %1563 = arith.addf %1521, %1526 : vector<4x4xf32>
    %1564 = arith.addf %1531, %1536 : vector<4x4xf32>
    %1565 = arith.addf %1541, %1546 : vector<4x4xf32>
    %1566 = arith.addf %1551, %1556 : vector<4x4xf32>
    %1567 = arith.addf %1557, %1558 : vector<4x4xf32>
    %1568 = arith.addf %1559, %1560 : vector<4x4xf32>
    %1569 = arith.addf %1561, %1562 : vector<4x4xf32>
    %1570 = arith.addf %1563, %1564 : vector<4x4xf32>
    %1571 = arith.addf %1565, %1566 : vector<4x4xf32>
    %1572 = arith.addf %1567, %1568 : vector<4x4xf32>
    %1573 = arith.addf %1569, %1570 : vector<4x4xf32>
    %1574 = arith.addf %1572, %1573 : vector<4x4xf32>
    %1575 = arith.addf %1574, %1571 : vector<4x4xf32>
    %1576 = arith.addf %1575, %10 : vector<4x4xf32>
    %1577 = vector.extract_strided_slice %0 {offsets = [0, 6], sizes = [4, 1], strides = [1, 1]} : vector<4x8xf32> to vector<4x1xf32>
    %1578 = vector.broadcast %1577 : vector<4x1xf32> to vector<4x80xf32>
    %1579 = vector.broadcast %1 : vector<1x80xf32> to vector<4x80xf32>
    %1580 = arith.mulf %1578, %1579 : vector<4x80xf32>
    %1581 = arith.addf %1580, %7 : vector<4x80xf32>
    %1582 = vector.extract_strided_slice %1456 {offsets = [0, 0], sizes = [4, 1], strides = [1, 1]} : vector<4x20xf32> to vector<4x1xf32>
    %1583 = vector.extract_strided_slice %2 {offsets = [0, 0], sizes = [1, 80], strides = [1, 1]} : vector<20x80xf32> to vector<1x80xf32>
    %1584 = vector.broadcast %1582 : vector<4x1xf32> to vector<4x80xf32>
    %1585 = vector.broadcast %1583 : vector<1x80xf32> to vector<4x80xf32>
    %1586 = arith.mulf %1584, %1585 : vector<4x80xf32>
    %1587 = vector.extract_strided_slice %1456 {offsets = [0, 1], sizes = [4, 1], strides = [1, 1]} : vector<4x20xf32> to vector<4x1xf32>
    %1588 = vector.extract_strided_slice %2 {offsets = [1, 0], sizes = [1, 80], strides = [1, 1]} : vector<20x80xf32> to vector<1x80xf32>
    %1589 = vector.broadcast %1587 : vector<4x1xf32> to vector<4x80xf32>
    %1590 = vector.broadcast %1588 : vector<1x80xf32> to vector<4x80xf32>
    %1591 = arith.mulf %1589, %1590 : vector<4x80xf32>
    %1592 = vector.extract_strided_slice %1456 {offsets = [0, 2], sizes = [4, 1], strides = [1, 1]} : vector<4x20xf32> to vector<4x1xf32>
    %1593 = vector.extract_strided_slice %2 {offsets = [2, 0], sizes = [1, 80], strides = [1, 1]} : vector<20x80xf32> to vector<1x80xf32>
    %1594 = vector.broadcast %1592 : vector<4x1xf32> to vector<4x80xf32>
    %1595 = vector.broadcast %1593 : vector<1x80xf32> to vector<4x80xf32>
    %1596 = arith.mulf %1594, %1595 : vector<4x80xf32>
    %1597 = vector.extract_strided_slice %1456 {offsets = [0, 3], sizes = [4, 1], strides = [1, 1]} : vector<4x20xf32> to vector<4x1xf32>
    %1598 = vector.extract_strided_slice %2 {offsets = [3, 0], sizes = [1, 80], strides = [1, 1]} : vector<20x80xf32> to vector<1x80xf32>
    %1599 = vector.broadcast %1597 : vector<4x1xf32> to vector<4x80xf32>
    %1600 = vector.broadcast %1598 : vector<1x80xf32> to vector<4x80xf32>
    %1601 = arith.mulf %1599, %1600 : vector<4x80xf32>
    %1602 = vector.extract_strided_slice %1456 {offsets = [0, 4], sizes = [4, 1], strides = [1, 1]} : vector<4x20xf32> to vector<4x1xf32>
    %1603 = vector.extract_strided_slice %2 {offsets = [4, 0], sizes = [1, 80], strides = [1, 1]} : vector<20x80xf32> to vector<1x80xf32>
    %1604 = vector.broadcast %1602 : vector<4x1xf32> to vector<4x80xf32>
    %1605 = vector.broadcast %1603 : vector<1x80xf32> to vector<4x80xf32>
    %1606 = arith.mulf %1604, %1605 : vector<4x80xf32>
    %1607 = vector.extract_strided_slice %1456 {offsets = [0, 5], sizes = [4, 1], strides = [1, 1]} : vector<4x20xf32> to vector<4x1xf32>
    %1608 = vector.extract_strided_slice %2 {offsets = [5, 0], sizes = [1, 80], strides = [1, 1]} : vector<20x80xf32> to vector<1x80xf32>
    %1609 = vector.broadcast %1607 : vector<4x1xf32> to vector<4x80xf32>
    %1610 = vector.broadcast %1608 : vector<1x80xf32> to vector<4x80xf32>
    %1611 = arith.mulf %1609, %1610 : vector<4x80xf32>
    %1612 = vector.extract_strided_slice %1456 {offsets = [0, 6], sizes = [4, 1], strides = [1, 1]} : vector<4x20xf32> to vector<4x1xf32>
    %1613 = vector.extract_strided_slice %2 {offsets = [6, 0], sizes = [1, 80], strides = [1, 1]} : vector<20x80xf32> to vector<1x80xf32>
    %1614 = vector.broadcast %1612 : vector<4x1xf32> to vector<4x80xf32>
    %1615 = vector.broadcast %1613 : vector<1x80xf32> to vector<4x80xf32>
    %1616 = arith.mulf %1614, %1615 : vector<4x80xf32>
    %1617 = vector.extract_strided_slice %1456 {offsets = [0, 7], sizes = [4, 1], strides = [1, 1]} : vector<4x20xf32> to vector<4x1xf32>
    %1618 = vector.extract_strided_slice %2 {offsets = [7, 0], sizes = [1, 80], strides = [1, 1]} : vector<20x80xf32> to vector<1x80xf32>
    %1619 = vector.broadcast %1617 : vector<4x1xf32> to vector<4x80xf32>
    %1620 = vector.broadcast %1618 : vector<1x80xf32> to vector<4x80xf32>
    %1621 = arith.mulf %1619, %1620 : vector<4x80xf32>
    %1622 = vector.extract_strided_slice %1456 {offsets = [0, 8], sizes = [4, 1], strides = [1, 1]} : vector<4x20xf32> to vector<4x1xf32>
    %1623 = vector.extract_strided_slice %2 {offsets = [8, 0], sizes = [1, 80], strides = [1, 1]} : vector<20x80xf32> to vector<1x80xf32>
    %1624 = vector.broadcast %1622 : vector<4x1xf32> to vector<4x80xf32>
    %1625 = vector.broadcast %1623 : vector<1x80xf32> to vector<4x80xf32>
    %1626 = arith.mulf %1624, %1625 : vector<4x80xf32>
    %1627 = vector.extract_strided_slice %1456 {offsets = [0, 9], sizes = [4, 1], strides = [1, 1]} : vector<4x20xf32> to vector<4x1xf32>
    %1628 = vector.extract_strided_slice %2 {offsets = [9, 0], sizes = [1, 80], strides = [1, 1]} : vector<20x80xf32> to vector<1x80xf32>
    %1629 = vector.broadcast %1627 : vector<4x1xf32> to vector<4x80xf32>
    %1630 = vector.broadcast %1628 : vector<1x80xf32> to vector<4x80xf32>
    %1631 = arith.mulf %1629, %1630 : vector<4x80xf32>
    %1632 = vector.extract_strided_slice %1456 {offsets = [0, 10], sizes = [4, 1], strides = [1, 1]} : vector<4x20xf32> to vector<4x1xf32>
    %1633 = vector.extract_strided_slice %2 {offsets = [10, 0], sizes = [1, 80], strides = [1, 1]} : vector<20x80xf32> to vector<1x80xf32>
    %1634 = vector.broadcast %1632 : vector<4x1xf32> to vector<4x80xf32>
    %1635 = vector.broadcast %1633 : vector<1x80xf32> to vector<4x80xf32>
    %1636 = arith.mulf %1634, %1635 : vector<4x80xf32>
    %1637 = vector.extract_strided_slice %1456 {offsets = [0, 11], sizes = [4, 1], strides = [1, 1]} : vector<4x20xf32> to vector<4x1xf32>
    %1638 = vector.extract_strided_slice %2 {offsets = [11, 0], sizes = [1, 80], strides = [1, 1]} : vector<20x80xf32> to vector<1x80xf32>
    %1639 = vector.broadcast %1637 : vector<4x1xf32> to vector<4x80xf32>
    %1640 = vector.broadcast %1638 : vector<1x80xf32> to vector<4x80xf32>
    %1641 = arith.mulf %1639, %1640 : vector<4x80xf32>
    %1642 = vector.extract_strided_slice %1456 {offsets = [0, 12], sizes = [4, 1], strides = [1, 1]} : vector<4x20xf32> to vector<4x1xf32>
    %1643 = vector.extract_strided_slice %2 {offsets = [12, 0], sizes = [1, 80], strides = [1, 1]} : vector<20x80xf32> to vector<1x80xf32>
    %1644 = vector.broadcast %1642 : vector<4x1xf32> to vector<4x80xf32>
    %1645 = vector.broadcast %1643 : vector<1x80xf32> to vector<4x80xf32>
    %1646 = arith.mulf %1644, %1645 : vector<4x80xf32>
    %1647 = vector.extract_strided_slice %1456 {offsets = [0, 13], sizes = [4, 1], strides = [1, 1]} : vector<4x20xf32> to vector<4x1xf32>
    %1648 = vector.extract_strided_slice %2 {offsets = [13, 0], sizes = [1, 80], strides = [1, 1]} : vector<20x80xf32> to vector<1x80xf32>
    %1649 = vector.broadcast %1647 : vector<4x1xf32> to vector<4x80xf32>
    %1650 = vector.broadcast %1648 : vector<1x80xf32> to vector<4x80xf32>
    %1651 = arith.mulf %1649, %1650 : vector<4x80xf32>
    %1652 = vector.extract_strided_slice %1456 {offsets = [0, 14], sizes = [4, 1], strides = [1, 1]} : vector<4x20xf32> to vector<4x1xf32>
    %1653 = vector.extract_strided_slice %2 {offsets = [14, 0], sizes = [1, 80], strides = [1, 1]} : vector<20x80xf32> to vector<1x80xf32>
    %1654 = vector.broadcast %1652 : vector<4x1xf32> to vector<4x80xf32>
    %1655 = vector.broadcast %1653 : vector<1x80xf32> to vector<4x80xf32>
    %1656 = arith.mulf %1654, %1655 : vector<4x80xf32>
    %1657 = vector.extract_strided_slice %1456 {offsets = [0, 15], sizes = [4, 1], strides = [1, 1]} : vector<4x20xf32> to vector<4x1xf32>
    %1658 = vector.extract_strided_slice %2 {offsets = [15, 0], sizes = [1, 80], strides = [1, 1]} : vector<20x80xf32> to vector<1x80xf32>
    %1659 = vector.broadcast %1657 : vector<4x1xf32> to vector<4x80xf32>
    %1660 = vector.broadcast %1658 : vector<1x80xf32> to vector<4x80xf32>
    %1661 = arith.mulf %1659, %1660 : vector<4x80xf32>
    %1662 = vector.extract_strided_slice %1456 {offsets = [0, 16], sizes = [4, 1], strides = [1, 1]} : vector<4x20xf32> to vector<4x1xf32>
    %1663 = vector.extract_strided_slice %2 {offsets = [16, 0], sizes = [1, 80], strides = [1, 1]} : vector<20x80xf32> to vector<1x80xf32>
    %1664 = vector.broadcast %1662 : vector<4x1xf32> to vector<4x80xf32>
    %1665 = vector.broadcast %1663 : vector<1x80xf32> to vector<4x80xf32>
    %1666 = arith.mulf %1664, %1665 : vector<4x80xf32>
    %1667 = vector.extract_strided_slice %1456 {offsets = [0, 17], sizes = [4, 1], strides = [1, 1]} : vector<4x20xf32> to vector<4x1xf32>
    %1668 = vector.extract_strided_slice %2 {offsets = [17, 0], sizes = [1, 80], strides = [1, 1]} : vector<20x80xf32> to vector<1x80xf32>
    %1669 = vector.broadcast %1667 : vector<4x1xf32> to vector<4x80xf32>
    %1670 = vector.broadcast %1668 : vector<1x80xf32> to vector<4x80xf32>
    %1671 = arith.mulf %1669, %1670 : vector<4x80xf32>
    %1672 = vector.extract_strided_slice %1456 {offsets = [0, 18], sizes = [4, 1], strides = [1, 1]} : vector<4x20xf32> to vector<4x1xf32>
    %1673 = vector.extract_strided_slice %2 {offsets = [18, 0], sizes = [1, 80], strides = [1, 1]} : vector<20x80xf32> to vector<1x80xf32>
    %1674 = vector.broadcast %1672 : vector<4x1xf32> to vector<4x80xf32>
    %1675 = vector.broadcast %1673 : vector<1x80xf32> to vector<4x80xf32>
    %1676 = arith.mulf %1674, %1675 : vector<4x80xf32>
    %1677 = vector.extract_strided_slice %1456 {offsets = [0, 19], sizes = [4, 1], strides = [1, 1]} : vector<4x20xf32> to vector<4x1xf32>
    %1678 = vector.extract_strided_slice %2 {offsets = [19, 0], sizes = [1, 80], strides = [1, 1]} : vector<20x80xf32> to vector<1x80xf32>
    %1679 = vector.broadcast %1677 : vector<4x1xf32> to vector<4x80xf32>
    %1680 = vector.broadcast %1678 : vector<1x80xf32> to vector<4x80xf32>
    %1681 = arith.mulf %1679, %1680 : vector<4x80xf32>
    %1682 = arith.addf %1586, %1591 : vector<4x80xf32>
    %1683 = arith.addf %1596, %1601 : vector<4x80xf32>
    %1684 = arith.addf %1606, %1611 : vector<4x80xf32>
    %1685 = arith.addf %1616, %1621 : vector<4x80xf32>
    %1686 = arith.addf %1626, %1631 : vector<4x80xf32>
    %1687 = arith.addf %1636, %1641 : vector<4x80xf32>
    %1688 = arith.addf %1646, %1651 : vector<4x80xf32>
    %1689 = arith.addf %1656, %1661 : vector<4x80xf32>
    %1690 = arith.addf %1666, %1671 : vector<4x80xf32>
    %1691 = arith.addf %1676, %1681 : vector<4x80xf32>
    %1692 = arith.addf %1682, %1683 : vector<4x80xf32>
    %1693 = arith.addf %1684, %1685 : vector<4x80xf32>
    %1694 = arith.addf %1686, %1687 : vector<4x80xf32>
    %1695 = arith.addf %1688, %1689 : vector<4x80xf32>
    %1696 = arith.addf %1690, %1691 : vector<4x80xf32>
    %1697 = arith.addf %1692, %1693 : vector<4x80xf32>
    %1698 = arith.addf %1694, %1695 : vector<4x80xf32>
    %1699 = arith.addf %1697, %1698 : vector<4x80xf32>
    %1700 = arith.addf %1699, %1696 : vector<4x80xf32>
    %1701 = arith.addf %1581, %1700 : vector<4x80xf32>
    %1702 = arith.negf %1701 : vector<4x80xf32>
    %1703 = math.exp %1702 : vector<4x80xf32>
    %cst_23 = arith.constant 1.000000e+00 : f32
    %1704 = vector.broadcast %cst_23 : f32 to vector<4x80xf32>
    %1705 = arith.addf %1704, %1703 : vector<4x80xf32>
    %1706 = arith.divf %1704, %1705 : vector<4x80xf32>
    %1707 = math.tanh %1701 : vector<4x80xf32>
    %1708 = vector.extract_strided_slice %1706 {offsets = [0, 0], sizes = [4, 20], strides = [1, 1]} : vector<4x80xf32> to vector<4x20xf32>
    %1709 = vector.extract_strided_slice %1706 {offsets = [0, 20], sizes = [4, 20], strides = [1, 1]} : vector<4x80xf32> to vector<4x20xf32>
    %1710 = vector.extract_strided_slice %1707 {offsets = [0, 40], sizes = [4, 20], strides = [1, 1]} : vector<4x80xf32> to vector<4x20xf32>
    %1711 = vector.extract_strided_slice %1706 {offsets = [0, 60], sizes = [4, 20], strides = [1, 1]} : vector<4x80xf32> to vector<4x20xf32>
    %1712 = arith.mulf %1709, %1454 : vector<4x20xf32>
    %1713 = arith.mulf %1708, %1710 : vector<4x20xf32>
    %1714 = arith.addf %1712, %1713 : vector<4x20xf32>
    %1715 = math.tanh %1714 : vector<4x20xf32>
    %1716 = arith.mulf %1711, %1715 : vector<4x20xf32>
    %1717 = vector.extract_strided_slice %1714 {offsets = [0, 0], sizes = [4, 1], strides = [1, 1]} : vector<4x20xf32> to vector<4x1xf32>
    %1718 = vector.extract_strided_slice %3 {offsets = [0, 0], sizes = [1, 4], strides = [1, 1]} : vector<20x4xf32> to vector<1x4xf32>
    %1719 = vector.broadcast %1717 : vector<4x1xf32> to vector<4x4xf32>
    %1720 = vector.broadcast %1718 : vector<1x4xf32> to vector<4x4xf32>
    %1721 = arith.mulf %1719, %1720 : vector<4x4xf32>
    %1722 = vector.extract_strided_slice %1714 {offsets = [0, 1], sizes = [4, 1], strides = [1, 1]} : vector<4x20xf32> to vector<4x1xf32>
    %1723 = vector.extract_strided_slice %3 {offsets = [1, 0], sizes = [1, 4], strides = [1, 1]} : vector<20x4xf32> to vector<1x4xf32>
    %1724 = vector.broadcast %1722 : vector<4x1xf32> to vector<4x4xf32>
    %1725 = vector.broadcast %1723 : vector<1x4xf32> to vector<4x4xf32>
    %1726 = arith.mulf %1724, %1725 : vector<4x4xf32>
    %1727 = vector.extract_strided_slice %1714 {offsets = [0, 2], sizes = [4, 1], strides = [1, 1]} : vector<4x20xf32> to vector<4x1xf32>
    %1728 = vector.extract_strided_slice %3 {offsets = [2, 0], sizes = [1, 4], strides = [1, 1]} : vector<20x4xf32> to vector<1x4xf32>
    %1729 = vector.broadcast %1727 : vector<4x1xf32> to vector<4x4xf32>
    %1730 = vector.broadcast %1728 : vector<1x4xf32> to vector<4x4xf32>
    %1731 = arith.mulf %1729, %1730 : vector<4x4xf32>
    %1732 = vector.extract_strided_slice %1714 {offsets = [0, 3], sizes = [4, 1], strides = [1, 1]} : vector<4x20xf32> to vector<4x1xf32>
    %1733 = vector.extract_strided_slice %3 {offsets = [3, 0], sizes = [1, 4], strides = [1, 1]} : vector<20x4xf32> to vector<1x4xf32>
    %1734 = vector.broadcast %1732 : vector<4x1xf32> to vector<4x4xf32>
    %1735 = vector.broadcast %1733 : vector<1x4xf32> to vector<4x4xf32>
    %1736 = arith.mulf %1734, %1735 : vector<4x4xf32>
    %1737 = vector.extract_strided_slice %1714 {offsets = [0, 4], sizes = [4, 1], strides = [1, 1]} : vector<4x20xf32> to vector<4x1xf32>
    %1738 = vector.extract_strided_slice %3 {offsets = [4, 0], sizes = [1, 4], strides = [1, 1]} : vector<20x4xf32> to vector<1x4xf32>
    %1739 = vector.broadcast %1737 : vector<4x1xf32> to vector<4x4xf32>
    %1740 = vector.broadcast %1738 : vector<1x4xf32> to vector<4x4xf32>
    %1741 = arith.mulf %1739, %1740 : vector<4x4xf32>
    %1742 = vector.extract_strided_slice %1714 {offsets = [0, 5], sizes = [4, 1], strides = [1, 1]} : vector<4x20xf32> to vector<4x1xf32>
    %1743 = vector.extract_strided_slice %3 {offsets = [5, 0], sizes = [1, 4], strides = [1, 1]} : vector<20x4xf32> to vector<1x4xf32>
    %1744 = vector.broadcast %1742 : vector<4x1xf32> to vector<4x4xf32>
    %1745 = vector.broadcast %1743 : vector<1x4xf32> to vector<4x4xf32>
    %1746 = arith.mulf %1744, %1745 : vector<4x4xf32>
    %1747 = vector.extract_strided_slice %1714 {offsets = [0, 6], sizes = [4, 1], strides = [1, 1]} : vector<4x20xf32> to vector<4x1xf32>
    %1748 = vector.extract_strided_slice %3 {offsets = [6, 0], sizes = [1, 4], strides = [1, 1]} : vector<20x4xf32> to vector<1x4xf32>
    %1749 = vector.broadcast %1747 : vector<4x1xf32> to vector<4x4xf32>
    %1750 = vector.broadcast %1748 : vector<1x4xf32> to vector<4x4xf32>
    %1751 = arith.mulf %1749, %1750 : vector<4x4xf32>
    %1752 = vector.extract_strided_slice %1714 {offsets = [0, 7], sizes = [4, 1], strides = [1, 1]} : vector<4x20xf32> to vector<4x1xf32>
    %1753 = vector.extract_strided_slice %3 {offsets = [7, 0], sizes = [1, 4], strides = [1, 1]} : vector<20x4xf32> to vector<1x4xf32>
    %1754 = vector.broadcast %1752 : vector<4x1xf32> to vector<4x4xf32>
    %1755 = vector.broadcast %1753 : vector<1x4xf32> to vector<4x4xf32>
    %1756 = arith.mulf %1754, %1755 : vector<4x4xf32>
    %1757 = vector.extract_strided_slice %1714 {offsets = [0, 8], sizes = [4, 1], strides = [1, 1]} : vector<4x20xf32> to vector<4x1xf32>
    %1758 = vector.extract_strided_slice %3 {offsets = [8, 0], sizes = [1, 4], strides = [1, 1]} : vector<20x4xf32> to vector<1x4xf32>
    %1759 = vector.broadcast %1757 : vector<4x1xf32> to vector<4x4xf32>
    %1760 = vector.broadcast %1758 : vector<1x4xf32> to vector<4x4xf32>
    %1761 = arith.mulf %1759, %1760 : vector<4x4xf32>
    %1762 = vector.extract_strided_slice %1714 {offsets = [0, 9], sizes = [4, 1], strides = [1, 1]} : vector<4x20xf32> to vector<4x1xf32>
    %1763 = vector.extract_strided_slice %3 {offsets = [9, 0], sizes = [1, 4], strides = [1, 1]} : vector<20x4xf32> to vector<1x4xf32>
    %1764 = vector.broadcast %1762 : vector<4x1xf32> to vector<4x4xf32>
    %1765 = vector.broadcast %1763 : vector<1x4xf32> to vector<4x4xf32>
    %1766 = arith.mulf %1764, %1765 : vector<4x4xf32>
    %1767 = vector.extract_strided_slice %1714 {offsets = [0, 10], sizes = [4, 1], strides = [1, 1]} : vector<4x20xf32> to vector<4x1xf32>
    %1768 = vector.extract_strided_slice %3 {offsets = [10, 0], sizes = [1, 4], strides = [1, 1]} : vector<20x4xf32> to vector<1x4xf32>
    %1769 = vector.broadcast %1767 : vector<4x1xf32> to vector<4x4xf32>
    %1770 = vector.broadcast %1768 : vector<1x4xf32> to vector<4x4xf32>
    %1771 = arith.mulf %1769, %1770 : vector<4x4xf32>
    %1772 = vector.extract_strided_slice %1714 {offsets = [0, 11], sizes = [4, 1], strides = [1, 1]} : vector<4x20xf32> to vector<4x1xf32>
    %1773 = vector.extract_strided_slice %3 {offsets = [11, 0], sizes = [1, 4], strides = [1, 1]} : vector<20x4xf32> to vector<1x4xf32>
    %1774 = vector.broadcast %1772 : vector<4x1xf32> to vector<4x4xf32>
    %1775 = vector.broadcast %1773 : vector<1x4xf32> to vector<4x4xf32>
    %1776 = arith.mulf %1774, %1775 : vector<4x4xf32>
    %1777 = vector.extract_strided_slice %1714 {offsets = [0, 12], sizes = [4, 1], strides = [1, 1]} : vector<4x20xf32> to vector<4x1xf32>
    %1778 = vector.extract_strided_slice %3 {offsets = [12, 0], sizes = [1, 4], strides = [1, 1]} : vector<20x4xf32> to vector<1x4xf32>
    %1779 = vector.broadcast %1777 : vector<4x1xf32> to vector<4x4xf32>
    %1780 = vector.broadcast %1778 : vector<1x4xf32> to vector<4x4xf32>
    %1781 = arith.mulf %1779, %1780 : vector<4x4xf32>
    %1782 = vector.extract_strided_slice %1714 {offsets = [0, 13], sizes = [4, 1], strides = [1, 1]} : vector<4x20xf32> to vector<4x1xf32>
    %1783 = vector.extract_strided_slice %3 {offsets = [13, 0], sizes = [1, 4], strides = [1, 1]} : vector<20x4xf32> to vector<1x4xf32>
    %1784 = vector.broadcast %1782 : vector<4x1xf32> to vector<4x4xf32>
    %1785 = vector.broadcast %1783 : vector<1x4xf32> to vector<4x4xf32>
    %1786 = arith.mulf %1784, %1785 : vector<4x4xf32>
    %1787 = vector.extract_strided_slice %1714 {offsets = [0, 14], sizes = [4, 1], strides = [1, 1]} : vector<4x20xf32> to vector<4x1xf32>
    %1788 = vector.extract_strided_slice %3 {offsets = [14, 0], sizes = [1, 4], strides = [1, 1]} : vector<20x4xf32> to vector<1x4xf32>
    %1789 = vector.broadcast %1787 : vector<4x1xf32> to vector<4x4xf32>
    %1790 = vector.broadcast %1788 : vector<1x4xf32> to vector<4x4xf32>
    %1791 = arith.mulf %1789, %1790 : vector<4x4xf32>
    %1792 = vector.extract_strided_slice %1714 {offsets = [0, 15], sizes = [4, 1], strides = [1, 1]} : vector<4x20xf32> to vector<4x1xf32>
    %1793 = vector.extract_strided_slice %3 {offsets = [15, 0], sizes = [1, 4], strides = [1, 1]} : vector<20x4xf32> to vector<1x4xf32>
    %1794 = vector.broadcast %1792 : vector<4x1xf32> to vector<4x4xf32>
    %1795 = vector.broadcast %1793 : vector<1x4xf32> to vector<4x4xf32>
    %1796 = arith.mulf %1794, %1795 : vector<4x4xf32>
    %1797 = vector.extract_strided_slice %1714 {offsets = [0, 16], sizes = [4, 1], strides = [1, 1]} : vector<4x20xf32> to vector<4x1xf32>
    %1798 = vector.extract_strided_slice %3 {offsets = [16, 0], sizes = [1, 4], strides = [1, 1]} : vector<20x4xf32> to vector<1x4xf32>
    %1799 = vector.broadcast %1797 : vector<4x1xf32> to vector<4x4xf32>
    %1800 = vector.broadcast %1798 : vector<1x4xf32> to vector<4x4xf32>
    %1801 = arith.mulf %1799, %1800 : vector<4x4xf32>
    %1802 = vector.extract_strided_slice %1714 {offsets = [0, 17], sizes = [4, 1], strides = [1, 1]} : vector<4x20xf32> to vector<4x1xf32>
    %1803 = vector.extract_strided_slice %3 {offsets = [17, 0], sizes = [1, 4], strides = [1, 1]} : vector<20x4xf32> to vector<1x4xf32>
    %1804 = vector.broadcast %1802 : vector<4x1xf32> to vector<4x4xf32>
    %1805 = vector.broadcast %1803 : vector<1x4xf32> to vector<4x4xf32>
    %1806 = arith.mulf %1804, %1805 : vector<4x4xf32>
    %1807 = vector.extract_strided_slice %1714 {offsets = [0, 18], sizes = [4, 1], strides = [1, 1]} : vector<4x20xf32> to vector<4x1xf32>
    %1808 = vector.extract_strided_slice %3 {offsets = [18, 0], sizes = [1, 4], strides = [1, 1]} : vector<20x4xf32> to vector<1x4xf32>
    %1809 = vector.broadcast %1807 : vector<4x1xf32> to vector<4x4xf32>
    %1810 = vector.broadcast %1808 : vector<1x4xf32> to vector<4x4xf32>
    %1811 = arith.mulf %1809, %1810 : vector<4x4xf32>
    %1812 = vector.extract_strided_slice %1714 {offsets = [0, 19], sizes = [4, 1], strides = [1, 1]} : vector<4x20xf32> to vector<4x1xf32>
    %1813 = vector.extract_strided_slice %3 {offsets = [19, 0], sizes = [1, 4], strides = [1, 1]} : vector<20x4xf32> to vector<1x4xf32>
    %1814 = vector.broadcast %1812 : vector<4x1xf32> to vector<4x4xf32>
    %1815 = vector.broadcast %1813 : vector<1x4xf32> to vector<4x4xf32>
    %1816 = arith.mulf %1814, %1815 : vector<4x4xf32>
    %1817 = arith.addf %1721, %1726 : vector<4x4xf32>
    %1818 = arith.addf %1731, %1736 : vector<4x4xf32>
    %1819 = arith.addf %1741, %1746 : vector<4x4xf32>
    %1820 = arith.addf %1751, %1756 : vector<4x4xf32>
    %1821 = arith.addf %1761, %1766 : vector<4x4xf32>
    %1822 = arith.addf %1771, %1776 : vector<4x4xf32>
    %1823 = arith.addf %1781, %1786 : vector<4x4xf32>
    %1824 = arith.addf %1791, %1796 : vector<4x4xf32>
    %1825 = arith.addf %1801, %1806 : vector<4x4xf32>
    %1826 = arith.addf %1811, %1816 : vector<4x4xf32>
    %1827 = arith.addf %1817, %1818 : vector<4x4xf32>
    %1828 = arith.addf %1819, %1820 : vector<4x4xf32>
    %1829 = arith.addf %1821, %1822 : vector<4x4xf32>
    %1830 = arith.addf %1823, %1824 : vector<4x4xf32>
    %1831 = arith.addf %1825, %1826 : vector<4x4xf32>
    %1832 = arith.addf %1827, %1828 : vector<4x4xf32>
    %1833 = arith.addf %1829, %1830 : vector<4x4xf32>
    %1834 = arith.addf %1832, %1833 : vector<4x4xf32>
    %1835 = arith.addf %1834, %1831 : vector<4x4xf32>
    %1836 = arith.addf %1835, %10 : vector<4x4xf32>
    %1837 = vector.extract_strided_slice %0 {offsets = [0, 7], sizes = [4, 1], strides = [1, 1]} : vector<4x8xf32> to vector<4x1xf32>
    %1838 = vector.broadcast %1837 : vector<4x1xf32> to vector<4x80xf32>
    %1839 = vector.broadcast %1 : vector<1x80xf32> to vector<4x80xf32>
    %1840 = arith.mulf %1838, %1839 : vector<4x80xf32>
    %1841 = arith.addf %1840, %7 : vector<4x80xf32>
    %1842 = vector.extract_strided_slice %1716 {offsets = [0, 0], sizes = [4, 1], strides = [1, 1]} : vector<4x20xf32> to vector<4x1xf32>
    %1843 = vector.extract_strided_slice %2 {offsets = [0, 0], sizes = [1, 80], strides = [1, 1]} : vector<20x80xf32> to vector<1x80xf32>
    %1844 = vector.broadcast %1842 : vector<4x1xf32> to vector<4x80xf32>
    %1845 = vector.broadcast %1843 : vector<1x80xf32> to vector<4x80xf32>
    %1846 = arith.mulf %1844, %1845 : vector<4x80xf32>
    %1847 = vector.extract_strided_slice %1716 {offsets = [0, 1], sizes = [4, 1], strides = [1, 1]} : vector<4x20xf32> to vector<4x1xf32>
    %1848 = vector.extract_strided_slice %2 {offsets = [1, 0], sizes = [1, 80], strides = [1, 1]} : vector<20x80xf32> to vector<1x80xf32>
    %1849 = vector.broadcast %1847 : vector<4x1xf32> to vector<4x80xf32>
    %1850 = vector.broadcast %1848 : vector<1x80xf32> to vector<4x80xf32>
    %1851 = arith.mulf %1849, %1850 : vector<4x80xf32>
    %1852 = vector.extract_strided_slice %1716 {offsets = [0, 2], sizes = [4, 1], strides = [1, 1]} : vector<4x20xf32> to vector<4x1xf32>
    %1853 = vector.extract_strided_slice %2 {offsets = [2, 0], sizes = [1, 80], strides = [1, 1]} : vector<20x80xf32> to vector<1x80xf32>
    %1854 = vector.broadcast %1852 : vector<4x1xf32> to vector<4x80xf32>
    %1855 = vector.broadcast %1853 : vector<1x80xf32> to vector<4x80xf32>
    %1856 = arith.mulf %1854, %1855 : vector<4x80xf32>
    %1857 = vector.extract_strided_slice %1716 {offsets = [0, 3], sizes = [4, 1], strides = [1, 1]} : vector<4x20xf32> to vector<4x1xf32>
    %1858 = vector.extract_strided_slice %2 {offsets = [3, 0], sizes = [1, 80], strides = [1, 1]} : vector<20x80xf32> to vector<1x80xf32>
    %1859 = vector.broadcast %1857 : vector<4x1xf32> to vector<4x80xf32>
    %1860 = vector.broadcast %1858 : vector<1x80xf32> to vector<4x80xf32>
    %1861 = arith.mulf %1859, %1860 : vector<4x80xf32>
    %1862 = vector.extract_strided_slice %1716 {offsets = [0, 4], sizes = [4, 1], strides = [1, 1]} : vector<4x20xf32> to vector<4x1xf32>
    %1863 = vector.extract_strided_slice %2 {offsets = [4, 0], sizes = [1, 80], strides = [1, 1]} : vector<20x80xf32> to vector<1x80xf32>
    %1864 = vector.broadcast %1862 : vector<4x1xf32> to vector<4x80xf32>
    %1865 = vector.broadcast %1863 : vector<1x80xf32> to vector<4x80xf32>
    %1866 = arith.mulf %1864, %1865 : vector<4x80xf32>
    %1867 = vector.extract_strided_slice %1716 {offsets = [0, 5], sizes = [4, 1], strides = [1, 1]} : vector<4x20xf32> to vector<4x1xf32>
    %1868 = vector.extract_strided_slice %2 {offsets = [5, 0], sizes = [1, 80], strides = [1, 1]} : vector<20x80xf32> to vector<1x80xf32>
    %1869 = vector.broadcast %1867 : vector<4x1xf32> to vector<4x80xf32>
    %1870 = vector.broadcast %1868 : vector<1x80xf32> to vector<4x80xf32>
    %1871 = arith.mulf %1869, %1870 : vector<4x80xf32>
    %1872 = vector.extract_strided_slice %1716 {offsets = [0, 6], sizes = [4, 1], strides = [1, 1]} : vector<4x20xf32> to vector<4x1xf32>
    %1873 = vector.extract_strided_slice %2 {offsets = [6, 0], sizes = [1, 80], strides = [1, 1]} : vector<20x80xf32> to vector<1x80xf32>
    %1874 = vector.broadcast %1872 : vector<4x1xf32> to vector<4x80xf32>
    %1875 = vector.broadcast %1873 : vector<1x80xf32> to vector<4x80xf32>
    %1876 = arith.mulf %1874, %1875 : vector<4x80xf32>
    %1877 = vector.extract_strided_slice %1716 {offsets = [0, 7], sizes = [4, 1], strides = [1, 1]} : vector<4x20xf32> to vector<4x1xf32>
    %1878 = vector.extract_strided_slice %2 {offsets = [7, 0], sizes = [1, 80], strides = [1, 1]} : vector<20x80xf32> to vector<1x80xf32>
    %1879 = vector.broadcast %1877 : vector<4x1xf32> to vector<4x80xf32>
    %1880 = vector.broadcast %1878 : vector<1x80xf32> to vector<4x80xf32>
    %1881 = arith.mulf %1879, %1880 : vector<4x80xf32>
    %1882 = vector.extract_strided_slice %1716 {offsets = [0, 8], sizes = [4, 1], strides = [1, 1]} : vector<4x20xf32> to vector<4x1xf32>
    %1883 = vector.extract_strided_slice %2 {offsets = [8, 0], sizes = [1, 80], strides = [1, 1]} : vector<20x80xf32> to vector<1x80xf32>
    %1884 = vector.broadcast %1882 : vector<4x1xf32> to vector<4x80xf32>
    %1885 = vector.broadcast %1883 : vector<1x80xf32> to vector<4x80xf32>
    %1886 = arith.mulf %1884, %1885 : vector<4x80xf32>
    %1887 = vector.extract_strided_slice %1716 {offsets = [0, 9], sizes = [4, 1], strides = [1, 1]} : vector<4x20xf32> to vector<4x1xf32>
    %1888 = vector.extract_strided_slice %2 {offsets = [9, 0], sizes = [1, 80], strides = [1, 1]} : vector<20x80xf32> to vector<1x80xf32>
    %1889 = vector.broadcast %1887 : vector<4x1xf32> to vector<4x80xf32>
    %1890 = vector.broadcast %1888 : vector<1x80xf32> to vector<4x80xf32>
    %1891 = arith.mulf %1889, %1890 : vector<4x80xf32>
    %1892 = vector.extract_strided_slice %1716 {offsets = [0, 10], sizes = [4, 1], strides = [1, 1]} : vector<4x20xf32> to vector<4x1xf32>
    %1893 = vector.extract_strided_slice %2 {offsets = [10, 0], sizes = [1, 80], strides = [1, 1]} : vector<20x80xf32> to vector<1x80xf32>
    %1894 = vector.broadcast %1892 : vector<4x1xf32> to vector<4x80xf32>
    %1895 = vector.broadcast %1893 : vector<1x80xf32> to vector<4x80xf32>
    %1896 = arith.mulf %1894, %1895 : vector<4x80xf32>
    %1897 = vector.extract_strided_slice %1716 {offsets = [0, 11], sizes = [4, 1], strides = [1, 1]} : vector<4x20xf32> to vector<4x1xf32>
    %1898 = vector.extract_strided_slice %2 {offsets = [11, 0], sizes = [1, 80], strides = [1, 1]} : vector<20x80xf32> to vector<1x80xf32>
    %1899 = vector.broadcast %1897 : vector<4x1xf32> to vector<4x80xf32>
    %1900 = vector.broadcast %1898 : vector<1x80xf32> to vector<4x80xf32>
    %1901 = arith.mulf %1899, %1900 : vector<4x80xf32>
    %1902 = vector.extract_strided_slice %1716 {offsets = [0, 12], sizes = [4, 1], strides = [1, 1]} : vector<4x20xf32> to vector<4x1xf32>
    %1903 = vector.extract_strided_slice %2 {offsets = [12, 0], sizes = [1, 80], strides = [1, 1]} : vector<20x80xf32> to vector<1x80xf32>
    %1904 = vector.broadcast %1902 : vector<4x1xf32> to vector<4x80xf32>
    %1905 = vector.broadcast %1903 : vector<1x80xf32> to vector<4x80xf32>
    %1906 = arith.mulf %1904, %1905 : vector<4x80xf32>
    %1907 = vector.extract_strided_slice %1716 {offsets = [0, 13], sizes = [4, 1], strides = [1, 1]} : vector<4x20xf32> to vector<4x1xf32>
    %1908 = vector.extract_strided_slice %2 {offsets = [13, 0], sizes = [1, 80], strides = [1, 1]} : vector<20x80xf32> to vector<1x80xf32>
    %1909 = vector.broadcast %1907 : vector<4x1xf32> to vector<4x80xf32>
    %1910 = vector.broadcast %1908 : vector<1x80xf32> to vector<4x80xf32>
    %1911 = arith.mulf %1909, %1910 : vector<4x80xf32>
    %1912 = vector.extract_strided_slice %1716 {offsets = [0, 14], sizes = [4, 1], strides = [1, 1]} : vector<4x20xf32> to vector<4x1xf32>
    %1913 = vector.extract_strided_slice %2 {offsets = [14, 0], sizes = [1, 80], strides = [1, 1]} : vector<20x80xf32> to vector<1x80xf32>
    %1914 = vector.broadcast %1912 : vector<4x1xf32> to vector<4x80xf32>
    %1915 = vector.broadcast %1913 : vector<1x80xf32> to vector<4x80xf32>
    %1916 = arith.mulf %1914, %1915 : vector<4x80xf32>
    %1917 = vector.extract_strided_slice %1716 {offsets = [0, 15], sizes = [4, 1], strides = [1, 1]} : vector<4x20xf32> to vector<4x1xf32>
    %1918 = vector.extract_strided_slice %2 {offsets = [15, 0], sizes = [1, 80], strides = [1, 1]} : vector<20x80xf32> to vector<1x80xf32>
    %1919 = vector.broadcast %1917 : vector<4x1xf32> to vector<4x80xf32>
    %1920 = vector.broadcast %1918 : vector<1x80xf32> to vector<4x80xf32>
    %1921 = arith.mulf %1919, %1920 : vector<4x80xf32>
    %1922 = vector.extract_strided_slice %1716 {offsets = [0, 16], sizes = [4, 1], strides = [1, 1]} : vector<4x20xf32> to vector<4x1xf32>
    %1923 = vector.extract_strided_slice %2 {offsets = [16, 0], sizes = [1, 80], strides = [1, 1]} : vector<20x80xf32> to vector<1x80xf32>
    %1924 = vector.broadcast %1922 : vector<4x1xf32> to vector<4x80xf32>
    %1925 = vector.broadcast %1923 : vector<1x80xf32> to vector<4x80xf32>
    %1926 = arith.mulf %1924, %1925 : vector<4x80xf32>
    %1927 = vector.extract_strided_slice %1716 {offsets = [0, 17], sizes = [4, 1], strides = [1, 1]} : vector<4x20xf32> to vector<4x1xf32>
    %1928 = vector.extract_strided_slice %2 {offsets = [17, 0], sizes = [1, 80], strides = [1, 1]} : vector<20x80xf32> to vector<1x80xf32>
    %1929 = vector.broadcast %1927 : vector<4x1xf32> to vector<4x80xf32>
    %1930 = vector.broadcast %1928 : vector<1x80xf32> to vector<4x80xf32>
    %1931 = arith.mulf %1929, %1930 : vector<4x80xf32>
    %1932 = vector.extract_strided_slice %1716 {offsets = [0, 18], sizes = [4, 1], strides = [1, 1]} : vector<4x20xf32> to vector<4x1xf32>
    %1933 = vector.extract_strided_slice %2 {offsets = [18, 0], sizes = [1, 80], strides = [1, 1]} : vector<20x80xf32> to vector<1x80xf32>
    %1934 = vector.broadcast %1932 : vector<4x1xf32> to vector<4x80xf32>
    %1935 = vector.broadcast %1933 : vector<1x80xf32> to vector<4x80xf32>
    %1936 = arith.mulf %1934, %1935 : vector<4x80xf32>
    %1937 = vector.extract_strided_slice %1716 {offsets = [0, 19], sizes = [4, 1], strides = [1, 1]} : vector<4x20xf32> to vector<4x1xf32>
    %1938 = vector.extract_strided_slice %2 {offsets = [19, 0], sizes = [1, 80], strides = [1, 1]} : vector<20x80xf32> to vector<1x80xf32>
    %1939 = vector.broadcast %1937 : vector<4x1xf32> to vector<4x80xf32>
    %1940 = vector.broadcast %1938 : vector<1x80xf32> to vector<4x80xf32>
    %1941 = arith.mulf %1939, %1940 : vector<4x80xf32>
    %1942 = arith.addf %1846, %1851 : vector<4x80xf32>
    %1943 = arith.addf %1856, %1861 : vector<4x80xf32>
    %1944 = arith.addf %1866, %1871 : vector<4x80xf32>
    %1945 = arith.addf %1876, %1881 : vector<4x80xf32>
    %1946 = arith.addf %1886, %1891 : vector<4x80xf32>
    %1947 = arith.addf %1896, %1901 : vector<4x80xf32>
    %1948 = arith.addf %1906, %1911 : vector<4x80xf32>
    %1949 = arith.addf %1916, %1921 : vector<4x80xf32>
    %1950 = arith.addf %1926, %1931 : vector<4x80xf32>
    %1951 = arith.addf %1936, %1941 : vector<4x80xf32>
    %1952 = arith.addf %1942, %1943 : vector<4x80xf32>
    %1953 = arith.addf %1944, %1945 : vector<4x80xf32>
    %1954 = arith.addf %1946, %1947 : vector<4x80xf32>
    %1955 = arith.addf %1948, %1949 : vector<4x80xf32>
    %1956 = arith.addf %1950, %1951 : vector<4x80xf32>
    %1957 = arith.addf %1952, %1953 : vector<4x80xf32>
    %1958 = arith.addf %1954, %1955 : vector<4x80xf32>
    %1959 = arith.addf %1957, %1958 : vector<4x80xf32>
    %1960 = arith.addf %1959, %1956 : vector<4x80xf32>
    %1961 = arith.addf %1841, %1960 : vector<4x80xf32>
    %1962 = arith.negf %1961 : vector<4x80xf32>
    %1963 = math.exp %1962 : vector<4x80xf32>
    %cst_24 = arith.constant 1.000000e+00 : f32
    %1964 = vector.broadcast %cst_24 : f32 to vector<4x80xf32>
    %1965 = arith.addf %1964, %1963 : vector<4x80xf32>
    %1966 = arith.divf %1964, %1965 : vector<4x80xf32>
    %1967 = math.tanh %1961 : vector<4x80xf32>
    %1968 = vector.extract_strided_slice %1966 {offsets = [0, 0], sizes = [4, 20], strides = [1, 1]} : vector<4x80xf32> to vector<4x20xf32>
    %1969 = vector.extract_strided_slice %1966 {offsets = [0, 20], sizes = [4, 20], strides = [1, 1]} : vector<4x80xf32> to vector<4x20xf32>
    %1970 = vector.extract_strided_slice %1967 {offsets = [0, 40], sizes = [4, 20], strides = [1, 1]} : vector<4x80xf32> to vector<4x20xf32>
    %1971 = vector.extract_strided_slice %1966 {offsets = [0, 60], sizes = [4, 20], strides = [1, 1]} : vector<4x80xf32> to vector<4x20xf32>
    %1972 = arith.mulf %1969, %1714 : vector<4x20xf32>
    %1973 = arith.mulf %1968, %1970 : vector<4x20xf32>
    %1974 = arith.addf %1972, %1973 : vector<4x20xf32>
    %1975 = math.tanh %1974 : vector<4x20xf32>
    %1976 = arith.mulf %1971, %1975 : vector<4x20xf32>
    %1977 = vector.extract_strided_slice %1974 {offsets = [0, 0], sizes = [4, 1], strides = [1, 1]} : vector<4x20xf32> to vector<4x1xf32>
    %1978 = vector.extract_strided_slice %3 {offsets = [0, 0], sizes = [1, 4], strides = [1, 1]} : vector<20x4xf32> to vector<1x4xf32>
    %1979 = vector.broadcast %1977 : vector<4x1xf32> to vector<4x4xf32>
    %1980 = vector.broadcast %1978 : vector<1x4xf32> to vector<4x4xf32>
    %1981 = arith.mulf %1979, %1980 : vector<4x4xf32>
    %1982 = vector.extract_strided_slice %1974 {offsets = [0, 1], sizes = [4, 1], strides = [1, 1]} : vector<4x20xf32> to vector<4x1xf32>
    %1983 = vector.extract_strided_slice %3 {offsets = [1, 0], sizes = [1, 4], strides = [1, 1]} : vector<20x4xf32> to vector<1x4xf32>
    %1984 = vector.broadcast %1982 : vector<4x1xf32> to vector<4x4xf32>
    %1985 = vector.broadcast %1983 : vector<1x4xf32> to vector<4x4xf32>
    %1986 = arith.mulf %1984, %1985 : vector<4x4xf32>
    %1987 = vector.extract_strided_slice %1974 {offsets = [0, 2], sizes = [4, 1], strides = [1, 1]} : vector<4x20xf32> to vector<4x1xf32>
    %1988 = vector.extract_strided_slice %3 {offsets = [2, 0], sizes = [1, 4], strides = [1, 1]} : vector<20x4xf32> to vector<1x4xf32>
    %1989 = vector.broadcast %1987 : vector<4x1xf32> to vector<4x4xf32>
    %1990 = vector.broadcast %1988 : vector<1x4xf32> to vector<4x4xf32>
    %1991 = arith.mulf %1989, %1990 : vector<4x4xf32>
    %1992 = vector.extract_strided_slice %1974 {offsets = [0, 3], sizes = [4, 1], strides = [1, 1]} : vector<4x20xf32> to vector<4x1xf32>
    %1993 = vector.extract_strided_slice %3 {offsets = [3, 0], sizes = [1, 4], strides = [1, 1]} : vector<20x4xf32> to vector<1x4xf32>
    %1994 = vector.broadcast %1992 : vector<4x1xf32> to vector<4x4xf32>
    %1995 = vector.broadcast %1993 : vector<1x4xf32> to vector<4x4xf32>
    %1996 = arith.mulf %1994, %1995 : vector<4x4xf32>
    %1997 = vector.extract_strided_slice %1974 {offsets = [0, 4], sizes = [4, 1], strides = [1, 1]} : vector<4x20xf32> to vector<4x1xf32>
    %1998 = vector.extract_strided_slice %3 {offsets = [4, 0], sizes = [1, 4], strides = [1, 1]} : vector<20x4xf32> to vector<1x4xf32>
    %1999 = vector.broadcast %1997 : vector<4x1xf32> to vector<4x4xf32>
    %2000 = vector.broadcast %1998 : vector<1x4xf32> to vector<4x4xf32>
    %2001 = arith.mulf %1999, %2000 : vector<4x4xf32>
    %2002 = vector.extract_strided_slice %1974 {offsets = [0, 5], sizes = [4, 1], strides = [1, 1]} : vector<4x20xf32> to vector<4x1xf32>
    %2003 = vector.extract_strided_slice %3 {offsets = [5, 0], sizes = [1, 4], strides = [1, 1]} : vector<20x4xf32> to vector<1x4xf32>
    %2004 = vector.broadcast %2002 : vector<4x1xf32> to vector<4x4xf32>
    %2005 = vector.broadcast %2003 : vector<1x4xf32> to vector<4x4xf32>
    %2006 = arith.mulf %2004, %2005 : vector<4x4xf32>
    %2007 = vector.extract_strided_slice %1974 {offsets = [0, 6], sizes = [4, 1], strides = [1, 1]} : vector<4x20xf32> to vector<4x1xf32>
    %2008 = vector.extract_strided_slice %3 {offsets = [6, 0], sizes = [1, 4], strides = [1, 1]} : vector<20x4xf32> to vector<1x4xf32>
    %2009 = vector.broadcast %2007 : vector<4x1xf32> to vector<4x4xf32>
    %2010 = vector.broadcast %2008 : vector<1x4xf32> to vector<4x4xf32>
    %2011 = arith.mulf %2009, %2010 : vector<4x4xf32>
    %2012 = vector.extract_strided_slice %1974 {offsets = [0, 7], sizes = [4, 1], strides = [1, 1]} : vector<4x20xf32> to vector<4x1xf32>
    %2013 = vector.extract_strided_slice %3 {offsets = [7, 0], sizes = [1, 4], strides = [1, 1]} : vector<20x4xf32> to vector<1x4xf32>
    %2014 = vector.broadcast %2012 : vector<4x1xf32> to vector<4x4xf32>
    %2015 = vector.broadcast %2013 : vector<1x4xf32> to vector<4x4xf32>
    %2016 = arith.mulf %2014, %2015 : vector<4x4xf32>
    %2017 = vector.extract_strided_slice %1974 {offsets = [0, 8], sizes = [4, 1], strides = [1, 1]} : vector<4x20xf32> to vector<4x1xf32>
    %2018 = vector.extract_strided_slice %3 {offsets = [8, 0], sizes = [1, 4], strides = [1, 1]} : vector<20x4xf32> to vector<1x4xf32>
    %2019 = vector.broadcast %2017 : vector<4x1xf32> to vector<4x4xf32>
    %2020 = vector.broadcast %2018 : vector<1x4xf32> to vector<4x4xf32>
    %2021 = arith.mulf %2019, %2020 : vector<4x4xf32>
    %2022 = vector.extract_strided_slice %1974 {offsets = [0, 9], sizes = [4, 1], strides = [1, 1]} : vector<4x20xf32> to vector<4x1xf32>
    %2023 = vector.extract_strided_slice %3 {offsets = [9, 0], sizes = [1, 4], strides = [1, 1]} : vector<20x4xf32> to vector<1x4xf32>
    %2024 = vector.broadcast %2022 : vector<4x1xf32> to vector<4x4xf32>
    %2025 = vector.broadcast %2023 : vector<1x4xf32> to vector<4x4xf32>
    %2026 = arith.mulf %2024, %2025 : vector<4x4xf32>
    %2027 = vector.extract_strided_slice %1974 {offsets = [0, 10], sizes = [4, 1], strides = [1, 1]} : vector<4x20xf32> to vector<4x1xf32>
    %2028 = vector.extract_strided_slice %3 {offsets = [10, 0], sizes = [1, 4], strides = [1, 1]} : vector<20x4xf32> to vector<1x4xf32>
    %2029 = vector.broadcast %2027 : vector<4x1xf32> to vector<4x4xf32>
    %2030 = vector.broadcast %2028 : vector<1x4xf32> to vector<4x4xf32>
    %2031 = arith.mulf %2029, %2030 : vector<4x4xf32>
    %2032 = vector.extract_strided_slice %1974 {offsets = [0, 11], sizes = [4, 1], strides = [1, 1]} : vector<4x20xf32> to vector<4x1xf32>
    %2033 = vector.extract_strided_slice %3 {offsets = [11, 0], sizes = [1, 4], strides = [1, 1]} : vector<20x4xf32> to vector<1x4xf32>
    %2034 = vector.broadcast %2032 : vector<4x1xf32> to vector<4x4xf32>
    %2035 = vector.broadcast %2033 : vector<1x4xf32> to vector<4x4xf32>
    %2036 = arith.mulf %2034, %2035 : vector<4x4xf32>
    %2037 = vector.extract_strided_slice %1974 {offsets = [0, 12], sizes = [4, 1], strides = [1, 1]} : vector<4x20xf32> to vector<4x1xf32>
    %2038 = vector.extract_strided_slice %3 {offsets = [12, 0], sizes = [1, 4], strides = [1, 1]} : vector<20x4xf32> to vector<1x4xf32>
    %2039 = vector.broadcast %2037 : vector<4x1xf32> to vector<4x4xf32>
    %2040 = vector.broadcast %2038 : vector<1x4xf32> to vector<4x4xf32>
    %2041 = arith.mulf %2039, %2040 : vector<4x4xf32>
    %2042 = vector.extract_strided_slice %1974 {offsets = [0, 13], sizes = [4, 1], strides = [1, 1]} : vector<4x20xf32> to vector<4x1xf32>
    %2043 = vector.extract_strided_slice %3 {offsets = [13, 0], sizes = [1, 4], strides = [1, 1]} : vector<20x4xf32> to vector<1x4xf32>
    %2044 = vector.broadcast %2042 : vector<4x1xf32> to vector<4x4xf32>
    %2045 = vector.broadcast %2043 : vector<1x4xf32> to vector<4x4xf32>
    %2046 = arith.mulf %2044, %2045 : vector<4x4xf32>
    %2047 = vector.extract_strided_slice %1974 {offsets = [0, 14], sizes = [4, 1], strides = [1, 1]} : vector<4x20xf32> to vector<4x1xf32>
    %2048 = vector.extract_strided_slice %3 {offsets = [14, 0], sizes = [1, 4], strides = [1, 1]} : vector<20x4xf32> to vector<1x4xf32>
    %2049 = vector.broadcast %2047 : vector<4x1xf32> to vector<4x4xf32>
    %2050 = vector.broadcast %2048 : vector<1x4xf32> to vector<4x4xf32>
    %2051 = arith.mulf %2049, %2050 : vector<4x4xf32>
    %2052 = vector.extract_strided_slice %1974 {offsets = [0, 15], sizes = [4, 1], strides = [1, 1]} : vector<4x20xf32> to vector<4x1xf32>
    %2053 = vector.extract_strided_slice %3 {offsets = [15, 0], sizes = [1, 4], strides = [1, 1]} : vector<20x4xf32> to vector<1x4xf32>
    %2054 = vector.broadcast %2052 : vector<4x1xf32> to vector<4x4xf32>
    %2055 = vector.broadcast %2053 : vector<1x4xf32> to vector<4x4xf32>
    %2056 = arith.mulf %2054, %2055 : vector<4x4xf32>
    %2057 = vector.extract_strided_slice %1974 {offsets = [0, 16], sizes = [4, 1], strides = [1, 1]} : vector<4x20xf32> to vector<4x1xf32>
    %2058 = vector.extract_strided_slice %3 {offsets = [16, 0], sizes = [1, 4], strides = [1, 1]} : vector<20x4xf32> to vector<1x4xf32>
    %2059 = vector.broadcast %2057 : vector<4x1xf32> to vector<4x4xf32>
    %2060 = vector.broadcast %2058 : vector<1x4xf32> to vector<4x4xf32>
    %2061 = arith.mulf %2059, %2060 : vector<4x4xf32>
    %2062 = vector.extract_strided_slice %1974 {offsets = [0, 17], sizes = [4, 1], strides = [1, 1]} : vector<4x20xf32> to vector<4x1xf32>
    %2063 = vector.extract_strided_slice %3 {offsets = [17, 0], sizes = [1, 4], strides = [1, 1]} : vector<20x4xf32> to vector<1x4xf32>
    %2064 = vector.broadcast %2062 : vector<4x1xf32> to vector<4x4xf32>
    %2065 = vector.broadcast %2063 : vector<1x4xf32> to vector<4x4xf32>
    %2066 = arith.mulf %2064, %2065 : vector<4x4xf32>
    %2067 = vector.extract_strided_slice %1974 {offsets = [0, 18], sizes = [4, 1], strides = [1, 1]} : vector<4x20xf32> to vector<4x1xf32>
    %2068 = vector.extract_strided_slice %3 {offsets = [18, 0], sizes = [1, 4], strides = [1, 1]} : vector<20x4xf32> to vector<1x4xf32>
    %2069 = vector.broadcast %2067 : vector<4x1xf32> to vector<4x4xf32>
    %2070 = vector.broadcast %2068 : vector<1x4xf32> to vector<4x4xf32>
    %2071 = arith.mulf %2069, %2070 : vector<4x4xf32>
    %2072 = vector.extract_strided_slice %1974 {offsets = [0, 19], sizes = [4, 1], strides = [1, 1]} : vector<4x20xf32> to vector<4x1xf32>
    %2073 = vector.extract_strided_slice %3 {offsets = [19, 0], sizes = [1, 4], strides = [1, 1]} : vector<20x4xf32> to vector<1x4xf32>
    %2074 = vector.broadcast %2072 : vector<4x1xf32> to vector<4x4xf32>
    %2075 = vector.broadcast %2073 : vector<1x4xf32> to vector<4x4xf32>
    %2076 = arith.mulf %2074, %2075 : vector<4x4xf32>
    %2077 = arith.addf %1981, %1986 : vector<4x4xf32>
    %2078 = arith.addf %1991, %1996 : vector<4x4xf32>
    %2079 = arith.addf %2001, %2006 : vector<4x4xf32>
    %2080 = arith.addf %2011, %2016 : vector<4x4xf32>
    %2081 = arith.addf %2021, %2026 : vector<4x4xf32>
    %2082 = arith.addf %2031, %2036 : vector<4x4xf32>
    %2083 = arith.addf %2041, %2046 : vector<4x4xf32>
    %2084 = arith.addf %2051, %2056 : vector<4x4xf32>
    %2085 = arith.addf %2061, %2066 : vector<4x4xf32>
    %2086 = arith.addf %2071, %2076 : vector<4x4xf32>
    %2087 = arith.addf %2077, %2078 : vector<4x4xf32>
    %2088 = arith.addf %2079, %2080 : vector<4x4xf32>
    %2089 = arith.addf %2081, %2082 : vector<4x4xf32>
    %2090 = arith.addf %2083, %2084 : vector<4x4xf32>
    %2091 = arith.addf %2085, %2086 : vector<4x4xf32>
    %2092 = arith.addf %2087, %2088 : vector<4x4xf32>
    %2093 = arith.addf %2089, %2090 : vector<4x4xf32>
    %2094 = arith.addf %2092, %2093 : vector<4x4xf32>
    %2095 = arith.addf %2094, %2091 : vector<4x4xf32>
    %2096 = arith.addf %2095, %10 : vector<4x4xf32>
    %2097 = vector.broadcast %15 : vector<4x1xf32> to vector<4x4xf32>
    %2098 = vector.broadcast %4 : vector<1x4xf32> to vector<4x4xf32>
    %2099 = arith.mulf %2097, %2098 : vector<4x4xf32>
    %2100 = arith.addf %276, %2099 : vector<4x4xf32>
    %2101 = arith.negf %2100 : vector<4x4xf32>
    %2102 = math.exp %2101 : vector<4x4xf32>
    %cst_25 = arith.constant 1.000000e+00 : f32
    %2103 = vector.broadcast %cst_25 : f32 to vector<4x4xf32>
    %2104 = arith.addf %2103, %2102 : vector<4x4xf32>
    %2105 = arith.divf %2103, %2104 : vector<4x4xf32>
    %2106 = math.tanh %2100 : vector<4x4xf32>
    %2107 = vector.extract_strided_slice %2105 {offsets = [0, 0], sizes = [4, 1], strides = [1, 1]} : vector<4x4xf32> to vector<4x1xf32>
    %2108 = vector.extract_strided_slice %2105 {offsets = [0, 1], sizes = [4, 1], strides = [1, 1]} : vector<4x4xf32> to vector<4x1xf32>
    %2109 = vector.extract_strided_slice %2106 {offsets = [0, 2], sizes = [4, 1], strides = [1, 1]} : vector<4x4xf32> to vector<4x1xf32>
    %2110 = vector.extract_strided_slice %2105 {offsets = [0, 3], sizes = [4, 1], strides = [1, 1]} : vector<4x4xf32> to vector<4x1xf32>
    %2111 = arith.mulf %2108, %16 : vector<4x1xf32>
    %2112 = arith.mulf %2107, %2109 : vector<4x1xf32>
    %2113 = arith.addf %2111, %2112 : vector<4x1xf32>
    %2114 = math.tanh %2113 : vector<4x1xf32>
    %2115 = arith.mulf %2110, %2114 : vector<4x1xf32>
    %c0_i32 = arith.constant 0 : i32
    %2116 = vector.broadcast %c0_i32 : i32 to vector<4x12xi32>
    %2117 = arith.cmpi eq, %11, %2116 : vector<4x12xi32>
    %2118 = vector.shape_cast %2113 : vector<4x1xf32> to vector<4x1xf32>
    %2119 = vector.broadcast %2118 : vector<4x1xf32> to vector<4x12xf32>
    %2120 = arith.select %2117, %2119, %12 : vector<4x12xi1>, vector<4x12xf32>
    %2121 = vector.broadcast %2115 : vector<4x1xf32> to vector<4x4xf32>
    %2122 = vector.broadcast %4 : vector<1x4xf32> to vector<4x4xf32>
    %2123 = arith.mulf %2121, %2122 : vector<4x4xf32>
    %2124 = arith.addf %536, %2123 : vector<4x4xf32>
    %2125 = arith.negf %2124 : vector<4x4xf32>
    %2126 = math.exp %2125 : vector<4x4xf32>
    %cst_26 = arith.constant 1.000000e+00 : f32
    %2127 = vector.broadcast %cst_26 : f32 to vector<4x4xf32>
    %2128 = arith.addf %2127, %2126 : vector<4x4xf32>
    %2129 = arith.divf %2127, %2128 : vector<4x4xf32>
    %2130 = math.tanh %2124 : vector<4x4xf32>
    %2131 = vector.extract_strided_slice %2129 {offsets = [0, 0], sizes = [4, 1], strides = [1, 1]} : vector<4x4xf32> to vector<4x1xf32>
    %2132 = vector.extract_strided_slice %2129 {offsets = [0, 1], sizes = [4, 1], strides = [1, 1]} : vector<4x4xf32> to vector<4x1xf32>
    %2133 = vector.extract_strided_slice %2130 {offsets = [0, 2], sizes = [4, 1], strides = [1, 1]} : vector<4x4xf32> to vector<4x1xf32>
    %2134 = vector.extract_strided_slice %2129 {offsets = [0, 3], sizes = [4, 1], strides = [1, 1]} : vector<4x4xf32> to vector<4x1xf32>
    %2135 = arith.mulf %2132, %2113 : vector<4x1xf32>
    %2136 = arith.mulf %2131, %2133 : vector<4x1xf32>
    %2137 = arith.addf %2135, %2136 : vector<4x1xf32>
    %2138 = math.tanh %2137 : vector<4x1xf32>
    %2139 = arith.mulf %2134, %2138 : vector<4x1xf32>
    %c1_i32 = arith.constant 1 : i32
    %2140 = vector.broadcast %c1_i32 : i32 to vector<4x12xi32>
    %2141 = arith.cmpi eq, %11, %2140 : vector<4x12xi32>
    %2142 = vector.shape_cast %2137 : vector<4x1xf32> to vector<4x1xf32>
    %2143 = vector.broadcast %2142 : vector<4x1xf32> to vector<4x12xf32>
    %2144 = arith.select %2141, %2143, %2120 : vector<4x12xi1>, vector<4x12xf32>
    %2145 = vector.broadcast %2139 : vector<4x1xf32> to vector<4x4xf32>
    %2146 = vector.broadcast %4 : vector<1x4xf32> to vector<4x4xf32>
    %2147 = arith.mulf %2145, %2146 : vector<4x4xf32>
    %2148 = arith.addf %796, %2147 : vector<4x4xf32>
    %2149 = arith.negf %2148 : vector<4x4xf32>
    %2150 = math.exp %2149 : vector<4x4xf32>
    %cst_27 = arith.constant 1.000000e+00 : f32
    %2151 = vector.broadcast %cst_27 : f32 to vector<4x4xf32>
    %2152 = arith.addf %2151, %2150 : vector<4x4xf32>
    %2153 = arith.divf %2151, %2152 : vector<4x4xf32>
    %2154 = math.tanh %2148 : vector<4x4xf32>
    %2155 = vector.extract_strided_slice %2153 {offsets = [0, 0], sizes = [4, 1], strides = [1, 1]} : vector<4x4xf32> to vector<4x1xf32>
    %2156 = vector.extract_strided_slice %2153 {offsets = [0, 1], sizes = [4, 1], strides = [1, 1]} : vector<4x4xf32> to vector<4x1xf32>
    %2157 = vector.extract_strided_slice %2154 {offsets = [0, 2], sizes = [4, 1], strides = [1, 1]} : vector<4x4xf32> to vector<4x1xf32>
    %2158 = vector.extract_strided_slice %2153 {offsets = [0, 3], sizes = [4, 1], strides = [1, 1]} : vector<4x4xf32> to vector<4x1xf32>
    %2159 = arith.mulf %2156, %2137 : vector<4x1xf32>
    %2160 = arith.mulf %2155, %2157 : vector<4x1xf32>
    %2161 = arith.addf %2159, %2160 : vector<4x1xf32>
    %2162 = math.tanh %2161 : vector<4x1xf32>
    %2163 = arith.mulf %2158, %2162 : vector<4x1xf32>
    %c2_i32 = arith.constant 2 : i32
    %2164 = vector.broadcast %c2_i32 : i32 to vector<4x12xi32>
    %2165 = arith.cmpi eq, %11, %2164 : vector<4x12xi32>
    %2166 = vector.shape_cast %2161 : vector<4x1xf32> to vector<4x1xf32>
    %2167 = vector.broadcast %2166 : vector<4x1xf32> to vector<4x12xf32>
    %2168 = arith.select %2165, %2167, %2144 : vector<4x12xi1>, vector<4x12xf32>
    %2169 = vector.broadcast %2163 : vector<4x1xf32> to vector<4x4xf32>
    %2170 = vector.broadcast %4 : vector<1x4xf32> to vector<4x4xf32>
    %2171 = arith.mulf %2169, %2170 : vector<4x4xf32>
    %2172 = arith.addf %1056, %2171 : vector<4x4xf32>
    %2173 = arith.negf %2172 : vector<4x4xf32>
    %2174 = math.exp %2173 : vector<4x4xf32>
    %cst_28 = arith.constant 1.000000e+00 : f32
    %2175 = vector.broadcast %cst_28 : f32 to vector<4x4xf32>
    %2176 = arith.addf %2175, %2174 : vector<4x4xf32>
    %2177 = arith.divf %2175, %2176 : vector<4x4xf32>
    %2178 = math.tanh %2172 : vector<4x4xf32>
    %2179 = vector.extract_strided_slice %2177 {offsets = [0, 0], sizes = [4, 1], strides = [1, 1]} : vector<4x4xf32> to vector<4x1xf32>
    %2180 = vector.extract_strided_slice %2177 {offsets = [0, 1], sizes = [4, 1], strides = [1, 1]} : vector<4x4xf32> to vector<4x1xf32>
    %2181 = vector.extract_strided_slice %2178 {offsets = [0, 2], sizes = [4, 1], strides = [1, 1]} : vector<4x4xf32> to vector<4x1xf32>
    %2182 = vector.extract_strided_slice %2177 {offsets = [0, 3], sizes = [4, 1], strides = [1, 1]} : vector<4x4xf32> to vector<4x1xf32>
    %2183 = arith.mulf %2180, %2161 : vector<4x1xf32>
    %2184 = arith.mulf %2179, %2181 : vector<4x1xf32>
    %2185 = arith.addf %2183, %2184 : vector<4x1xf32>
    %2186 = math.tanh %2185 : vector<4x1xf32>
    %2187 = arith.mulf %2182, %2186 : vector<4x1xf32>
    %c3_i32 = arith.constant 3 : i32
    %2188 = vector.broadcast %c3_i32 : i32 to vector<4x12xi32>
    %2189 = arith.cmpi eq, %11, %2188 : vector<4x12xi32>
    %2190 = vector.shape_cast %2185 : vector<4x1xf32> to vector<4x1xf32>
    %2191 = vector.broadcast %2190 : vector<4x1xf32> to vector<4x12xf32>
    %2192 = arith.select %2189, %2191, %2168 : vector<4x12xi1>, vector<4x12xf32>
    %2193 = vector.broadcast %2187 : vector<4x1xf32> to vector<4x4xf32>
    %2194 = vector.broadcast %4 : vector<1x4xf32> to vector<4x4xf32>
    %2195 = arith.mulf %2193, %2194 : vector<4x4xf32>
    %2196 = arith.addf %1316, %2195 : vector<4x4xf32>
    %2197 = arith.negf %2196 : vector<4x4xf32>
    %2198 = math.exp %2197 : vector<4x4xf32>
    %cst_29 = arith.constant 1.000000e+00 : f32
    %2199 = vector.broadcast %cst_29 : f32 to vector<4x4xf32>
    %2200 = arith.addf %2199, %2198 : vector<4x4xf32>
    %2201 = arith.divf %2199, %2200 : vector<4x4xf32>
    %2202 = math.tanh %2196 : vector<4x4xf32>
    %2203 = vector.extract_strided_slice %2201 {offsets = [0, 0], sizes = [4, 1], strides = [1, 1]} : vector<4x4xf32> to vector<4x1xf32>
    %2204 = vector.extract_strided_slice %2201 {offsets = [0, 1], sizes = [4, 1], strides = [1, 1]} : vector<4x4xf32> to vector<4x1xf32>
    %2205 = vector.extract_strided_slice %2202 {offsets = [0, 2], sizes = [4, 1], strides = [1, 1]} : vector<4x4xf32> to vector<4x1xf32>
    %2206 = vector.extract_strided_slice %2201 {offsets = [0, 3], sizes = [4, 1], strides = [1, 1]} : vector<4x4xf32> to vector<4x1xf32>
    %2207 = arith.mulf %2204, %2185 : vector<4x1xf32>
    %2208 = arith.mulf %2203, %2205 : vector<4x1xf32>
    %2209 = arith.addf %2207, %2208 : vector<4x1xf32>
    %2210 = math.tanh %2209 : vector<4x1xf32>
    %2211 = arith.mulf %2206, %2210 : vector<4x1xf32>
    %c4_i32 = arith.constant 4 : i32
    %2212 = vector.broadcast %c4_i32 : i32 to vector<4x12xi32>
    %2213 = arith.cmpi eq, %11, %2212 : vector<4x12xi32>
    %2214 = vector.shape_cast %2209 : vector<4x1xf32> to vector<4x1xf32>
    %2215 = vector.broadcast %2214 : vector<4x1xf32> to vector<4x12xf32>
    %2216 = arith.select %2213, %2215, %2192 : vector<4x12xi1>, vector<4x12xf32>
    %2217 = vector.broadcast %2211 : vector<4x1xf32> to vector<4x4xf32>
    %2218 = vector.broadcast %4 : vector<1x4xf32> to vector<4x4xf32>
    %2219 = arith.mulf %2217, %2218 : vector<4x4xf32>
    %2220 = arith.addf %1576, %2219 : vector<4x4xf32>
    %2221 = arith.negf %2220 : vector<4x4xf32>
    %2222 = math.exp %2221 : vector<4x4xf32>
    %cst_30 = arith.constant 1.000000e+00 : f32
    %2223 = vector.broadcast %cst_30 : f32 to vector<4x4xf32>
    %2224 = arith.addf %2223, %2222 : vector<4x4xf32>
    %2225 = arith.divf %2223, %2224 : vector<4x4xf32>
    %2226 = math.tanh %2220 : vector<4x4xf32>
    %2227 = vector.extract_strided_slice %2225 {offsets = [0, 0], sizes = [4, 1], strides = [1, 1]} : vector<4x4xf32> to vector<4x1xf32>
    %2228 = vector.extract_strided_slice %2225 {offsets = [0, 1], sizes = [4, 1], strides = [1, 1]} : vector<4x4xf32> to vector<4x1xf32>
    %2229 = vector.extract_strided_slice %2226 {offsets = [0, 2], sizes = [4, 1], strides = [1, 1]} : vector<4x4xf32> to vector<4x1xf32>
    %2230 = vector.extract_strided_slice %2225 {offsets = [0, 3], sizes = [4, 1], strides = [1, 1]} : vector<4x4xf32> to vector<4x1xf32>
    %2231 = arith.mulf %2228, %2209 : vector<4x1xf32>
    %2232 = arith.mulf %2227, %2229 : vector<4x1xf32>
    %2233 = arith.addf %2231, %2232 : vector<4x1xf32>
    %2234 = math.tanh %2233 : vector<4x1xf32>
    %2235 = arith.mulf %2230, %2234 : vector<4x1xf32>
    %c5_i32 = arith.constant 5 : i32
    %2236 = vector.broadcast %c5_i32 : i32 to vector<4x12xi32>
    %2237 = arith.cmpi eq, %11, %2236 : vector<4x12xi32>
    %2238 = vector.shape_cast %2233 : vector<4x1xf32> to vector<4x1xf32>
    %2239 = vector.broadcast %2238 : vector<4x1xf32> to vector<4x12xf32>
    %2240 = arith.select %2237, %2239, %2216 : vector<4x12xi1>, vector<4x12xf32>
    %2241 = vector.broadcast %2235 : vector<4x1xf32> to vector<4x4xf32>
    %2242 = vector.broadcast %4 : vector<1x4xf32> to vector<4x4xf32>
    %2243 = arith.mulf %2241, %2242 : vector<4x4xf32>
    %2244 = arith.addf %1836, %2243 : vector<4x4xf32>
    %2245 = arith.negf %2244 : vector<4x4xf32>
    %2246 = math.exp %2245 : vector<4x4xf32>
    %cst_31 = arith.constant 1.000000e+00 : f32
    %2247 = vector.broadcast %cst_31 : f32 to vector<4x4xf32>
    %2248 = arith.addf %2247, %2246 : vector<4x4xf32>
    %2249 = arith.divf %2247, %2248 : vector<4x4xf32>
    %2250 = math.tanh %2244 : vector<4x4xf32>
    %2251 = vector.extract_strided_slice %2249 {offsets = [0, 0], sizes = [4, 1], strides = [1, 1]} : vector<4x4xf32> to vector<4x1xf32>
    %2252 = vector.extract_strided_slice %2249 {offsets = [0, 1], sizes = [4, 1], strides = [1, 1]} : vector<4x4xf32> to vector<4x1xf32>
    %2253 = vector.extract_strided_slice %2250 {offsets = [0, 2], sizes = [4, 1], strides = [1, 1]} : vector<4x4xf32> to vector<4x1xf32>
    %2254 = vector.extract_strided_slice %2249 {offsets = [0, 3], sizes = [4, 1], strides = [1, 1]} : vector<4x4xf32> to vector<4x1xf32>
    %2255 = arith.mulf %2252, %2233 : vector<4x1xf32>
    %2256 = arith.mulf %2251, %2253 : vector<4x1xf32>
    %2257 = arith.addf %2255, %2256 : vector<4x1xf32>
    %2258 = math.tanh %2257 : vector<4x1xf32>
    %2259 = arith.mulf %2254, %2258 : vector<4x1xf32>
    %c6_i32 = arith.constant 6 : i32
    %2260 = vector.broadcast %c6_i32 : i32 to vector<4x12xi32>
    %2261 = arith.cmpi eq, %11, %2260 : vector<4x12xi32>
    %2262 = vector.shape_cast %2257 : vector<4x1xf32> to vector<4x1xf32>
    %2263 = vector.broadcast %2262 : vector<4x1xf32> to vector<4x12xf32>
    %2264 = arith.select %2261, %2263, %2240 : vector<4x12xi1>, vector<4x12xf32>
    %2265 = vector.broadcast %2259 : vector<4x1xf32> to vector<4x4xf32>
    %2266 = vector.broadcast %4 : vector<1x4xf32> to vector<4x4xf32>
    %2267 = arith.mulf %2265, %2266 : vector<4x4xf32>
    %2268 = arith.addf %2096, %2267 : vector<4x4xf32>
    %2269 = arith.negf %2268 : vector<4x4xf32>
    %2270 = math.exp %2269 : vector<4x4xf32>
    %cst_32 = arith.constant 1.000000e+00 : f32
    %2271 = vector.broadcast %cst_32 : f32 to vector<4x4xf32>
    %2272 = arith.addf %2271, %2270 : vector<4x4xf32>
    %2273 = arith.divf %2271, %2272 : vector<4x4xf32>
    %2274 = math.tanh %2268 : vector<4x4xf32>
    %2275 = vector.extract_strided_slice %2273 {offsets = [0, 0], sizes = [4, 1], strides = [1, 1]} : vector<4x4xf32> to vector<4x1xf32>
    %2276 = vector.extract_strided_slice %2273 {offsets = [0, 1], sizes = [4, 1], strides = [1, 1]} : vector<4x4xf32> to vector<4x1xf32>
    %2277 = vector.extract_strided_slice %2274 {offsets = [0, 2], sizes = [4, 1], strides = [1, 1]} : vector<4x4xf32> to vector<4x1xf32>
    %2278 = vector.extract_strided_slice %2273 {offsets = [0, 3], sizes = [4, 1], strides = [1, 1]} : vector<4x4xf32> to vector<4x1xf32>
    %2279 = arith.mulf %2276, %2257 : vector<4x1xf32>
    %2280 = arith.mulf %2275, %2277 : vector<4x1xf32>
    %2281 = arith.addf %2279, %2280 : vector<4x1xf32>
    %2282 = math.tanh %2281 : vector<4x1xf32>
    %2283 = arith.mulf %2278, %2282 : vector<4x1xf32>
    %c7_i32 = arith.constant 7 : i32
    %2284 = vector.broadcast %c7_i32 : i32 to vector<4x12xi32>
    %2285 = arith.cmpi eq, %11, %2284 : vector<4x12xi32>
    %2286 = vector.shape_cast %2281 : vector<4x1xf32> to vector<4x1xf32>
    %2287 = vector.broadcast %2286 : vector<4x1xf32> to vector<4x12xf32>
    %2288 = arith.select %2285, %2287, %2264 : vector<4x12xi1>, vector<4x12xf32>
    %2289 = vector.broadcast %2281 : vector<4x1xf32> to vector<4x80xf32>
    %2290 = vector.broadcast %1 : vector<1x80xf32> to vector<4x80xf32>
    %2291 = arith.mulf %2289, %2290 : vector<4x80xf32>
    %2292 = arith.addf %2291, %7 : vector<4x80xf32>
    %2293 = vector.extract_strided_slice %1976 {offsets = [0, 0], sizes = [4, 1], strides = [1, 1]} : vector<4x20xf32> to vector<4x1xf32>
    %2294 = vector.extract_strided_slice %2 {offsets = [0, 0], sizes = [1, 80], strides = [1, 1]} : vector<20x80xf32> to vector<1x80xf32>
    %2295 = vector.broadcast %2293 : vector<4x1xf32> to vector<4x80xf32>
    %2296 = vector.broadcast %2294 : vector<1x80xf32> to vector<4x80xf32>
    %2297 = arith.mulf %2295, %2296 : vector<4x80xf32>
    %2298 = vector.extract_strided_slice %1976 {offsets = [0, 1], sizes = [4, 1], strides = [1, 1]} : vector<4x20xf32> to vector<4x1xf32>
    %2299 = vector.extract_strided_slice %2 {offsets = [1, 0], sizes = [1, 80], strides = [1, 1]} : vector<20x80xf32> to vector<1x80xf32>
    %2300 = vector.broadcast %2298 : vector<4x1xf32> to vector<4x80xf32>
    %2301 = vector.broadcast %2299 : vector<1x80xf32> to vector<4x80xf32>
    %2302 = arith.mulf %2300, %2301 : vector<4x80xf32>
    %2303 = vector.extract_strided_slice %1976 {offsets = [0, 2], sizes = [4, 1], strides = [1, 1]} : vector<4x20xf32> to vector<4x1xf32>
    %2304 = vector.extract_strided_slice %2 {offsets = [2, 0], sizes = [1, 80], strides = [1, 1]} : vector<20x80xf32> to vector<1x80xf32>
    %2305 = vector.broadcast %2303 : vector<4x1xf32> to vector<4x80xf32>
    %2306 = vector.broadcast %2304 : vector<1x80xf32> to vector<4x80xf32>
    %2307 = arith.mulf %2305, %2306 : vector<4x80xf32>
    %2308 = vector.extract_strided_slice %1976 {offsets = [0, 3], sizes = [4, 1], strides = [1, 1]} : vector<4x20xf32> to vector<4x1xf32>
    %2309 = vector.extract_strided_slice %2 {offsets = [3, 0], sizes = [1, 80], strides = [1, 1]} : vector<20x80xf32> to vector<1x80xf32>
    %2310 = vector.broadcast %2308 : vector<4x1xf32> to vector<4x80xf32>
    %2311 = vector.broadcast %2309 : vector<1x80xf32> to vector<4x80xf32>
    %2312 = arith.mulf %2310, %2311 : vector<4x80xf32>
    %2313 = vector.extract_strided_slice %1976 {offsets = [0, 4], sizes = [4, 1], strides = [1, 1]} : vector<4x20xf32> to vector<4x1xf32>
    %2314 = vector.extract_strided_slice %2 {offsets = [4, 0], sizes = [1, 80], strides = [1, 1]} : vector<20x80xf32> to vector<1x80xf32>
    %2315 = vector.broadcast %2313 : vector<4x1xf32> to vector<4x80xf32>
    %2316 = vector.broadcast %2314 : vector<1x80xf32> to vector<4x80xf32>
    %2317 = arith.mulf %2315, %2316 : vector<4x80xf32>
    %2318 = vector.extract_strided_slice %1976 {offsets = [0, 5], sizes = [4, 1], strides = [1, 1]} : vector<4x20xf32> to vector<4x1xf32>
    %2319 = vector.extract_strided_slice %2 {offsets = [5, 0], sizes = [1, 80], strides = [1, 1]} : vector<20x80xf32> to vector<1x80xf32>
    %2320 = vector.broadcast %2318 : vector<4x1xf32> to vector<4x80xf32>
    %2321 = vector.broadcast %2319 : vector<1x80xf32> to vector<4x80xf32>
    %2322 = arith.mulf %2320, %2321 : vector<4x80xf32>
    %2323 = vector.extract_strided_slice %1976 {offsets = [0, 6], sizes = [4, 1], strides = [1, 1]} : vector<4x20xf32> to vector<4x1xf32>
    %2324 = vector.extract_strided_slice %2 {offsets = [6, 0], sizes = [1, 80], strides = [1, 1]} : vector<20x80xf32> to vector<1x80xf32>
    %2325 = vector.broadcast %2323 : vector<4x1xf32> to vector<4x80xf32>
    %2326 = vector.broadcast %2324 : vector<1x80xf32> to vector<4x80xf32>
    %2327 = arith.mulf %2325, %2326 : vector<4x80xf32>
    %2328 = vector.extract_strided_slice %1976 {offsets = [0, 7], sizes = [4, 1], strides = [1, 1]} : vector<4x20xf32> to vector<4x1xf32>
    %2329 = vector.extract_strided_slice %2 {offsets = [7, 0], sizes = [1, 80], strides = [1, 1]} : vector<20x80xf32> to vector<1x80xf32>
    %2330 = vector.broadcast %2328 : vector<4x1xf32> to vector<4x80xf32>
    %2331 = vector.broadcast %2329 : vector<1x80xf32> to vector<4x80xf32>
    %2332 = arith.mulf %2330, %2331 : vector<4x80xf32>
    %2333 = vector.extract_strided_slice %1976 {offsets = [0, 8], sizes = [4, 1], strides = [1, 1]} : vector<4x20xf32> to vector<4x1xf32>
    %2334 = vector.extract_strided_slice %2 {offsets = [8, 0], sizes = [1, 80], strides = [1, 1]} : vector<20x80xf32> to vector<1x80xf32>
    %2335 = vector.broadcast %2333 : vector<4x1xf32> to vector<4x80xf32>
    %2336 = vector.broadcast %2334 : vector<1x80xf32> to vector<4x80xf32>
    %2337 = arith.mulf %2335, %2336 : vector<4x80xf32>
    %2338 = vector.extract_strided_slice %1976 {offsets = [0, 9], sizes = [4, 1], strides = [1, 1]} : vector<4x20xf32> to vector<4x1xf32>
    %2339 = vector.extract_strided_slice %2 {offsets = [9, 0], sizes = [1, 80], strides = [1, 1]} : vector<20x80xf32> to vector<1x80xf32>
    %2340 = vector.broadcast %2338 : vector<4x1xf32> to vector<4x80xf32>
    %2341 = vector.broadcast %2339 : vector<1x80xf32> to vector<4x80xf32>
    %2342 = arith.mulf %2340, %2341 : vector<4x80xf32>
    %2343 = vector.extract_strided_slice %1976 {offsets = [0, 10], sizes = [4, 1], strides = [1, 1]} : vector<4x20xf32> to vector<4x1xf32>
    %2344 = vector.extract_strided_slice %2 {offsets = [10, 0], sizes = [1, 80], strides = [1, 1]} : vector<20x80xf32> to vector<1x80xf32>
    %2345 = vector.broadcast %2343 : vector<4x1xf32> to vector<4x80xf32>
    %2346 = vector.broadcast %2344 : vector<1x80xf32> to vector<4x80xf32>
    %2347 = arith.mulf %2345, %2346 : vector<4x80xf32>
    %2348 = vector.extract_strided_slice %1976 {offsets = [0, 11], sizes = [4, 1], strides = [1, 1]} : vector<4x20xf32> to vector<4x1xf32>
    %2349 = vector.extract_strided_slice %2 {offsets = [11, 0], sizes = [1, 80], strides = [1, 1]} : vector<20x80xf32> to vector<1x80xf32>
    %2350 = vector.broadcast %2348 : vector<4x1xf32> to vector<4x80xf32>
    %2351 = vector.broadcast %2349 : vector<1x80xf32> to vector<4x80xf32>
    %2352 = arith.mulf %2350, %2351 : vector<4x80xf32>
    %2353 = vector.extract_strided_slice %1976 {offsets = [0, 12], sizes = [4, 1], strides = [1, 1]} : vector<4x20xf32> to vector<4x1xf32>
    %2354 = vector.extract_strided_slice %2 {offsets = [12, 0], sizes = [1, 80], strides = [1, 1]} : vector<20x80xf32> to vector<1x80xf32>
    %2355 = vector.broadcast %2353 : vector<4x1xf32> to vector<4x80xf32>
    %2356 = vector.broadcast %2354 : vector<1x80xf32> to vector<4x80xf32>
    %2357 = arith.mulf %2355, %2356 : vector<4x80xf32>
    %2358 = vector.extract_strided_slice %1976 {offsets = [0, 13], sizes = [4, 1], strides = [1, 1]} : vector<4x20xf32> to vector<4x1xf32>
    %2359 = vector.extract_strided_slice %2 {offsets = [13, 0], sizes = [1, 80], strides = [1, 1]} : vector<20x80xf32> to vector<1x80xf32>
    %2360 = vector.broadcast %2358 : vector<4x1xf32> to vector<4x80xf32>
    %2361 = vector.broadcast %2359 : vector<1x80xf32> to vector<4x80xf32>
    %2362 = arith.mulf %2360, %2361 : vector<4x80xf32>
    %2363 = vector.extract_strided_slice %1976 {offsets = [0, 14], sizes = [4, 1], strides = [1, 1]} : vector<4x20xf32> to vector<4x1xf32>
    %2364 = vector.extract_strided_slice %2 {offsets = [14, 0], sizes = [1, 80], strides = [1, 1]} : vector<20x80xf32> to vector<1x80xf32>
    %2365 = vector.broadcast %2363 : vector<4x1xf32> to vector<4x80xf32>
    %2366 = vector.broadcast %2364 : vector<1x80xf32> to vector<4x80xf32>
    %2367 = arith.mulf %2365, %2366 : vector<4x80xf32>
    %2368 = vector.extract_strided_slice %1976 {offsets = [0, 15], sizes = [4, 1], strides = [1, 1]} : vector<4x20xf32> to vector<4x1xf32>
    %2369 = vector.extract_strided_slice %2 {offsets = [15, 0], sizes = [1, 80], strides = [1, 1]} : vector<20x80xf32> to vector<1x80xf32>
    %2370 = vector.broadcast %2368 : vector<4x1xf32> to vector<4x80xf32>
    %2371 = vector.broadcast %2369 : vector<1x80xf32> to vector<4x80xf32>
    %2372 = arith.mulf %2370, %2371 : vector<4x80xf32>
    %2373 = vector.extract_strided_slice %1976 {offsets = [0, 16], sizes = [4, 1], strides = [1, 1]} : vector<4x20xf32> to vector<4x1xf32>
    %2374 = vector.extract_strided_slice %2 {offsets = [16, 0], sizes = [1, 80], strides = [1, 1]} : vector<20x80xf32> to vector<1x80xf32>
    %2375 = vector.broadcast %2373 : vector<4x1xf32> to vector<4x80xf32>
    %2376 = vector.broadcast %2374 : vector<1x80xf32> to vector<4x80xf32>
    %2377 = arith.mulf %2375, %2376 : vector<4x80xf32>
    %2378 = vector.extract_strided_slice %1976 {offsets = [0, 17], sizes = [4, 1], strides = [1, 1]} : vector<4x20xf32> to vector<4x1xf32>
    %2379 = vector.extract_strided_slice %2 {offsets = [17, 0], sizes = [1, 80], strides = [1, 1]} : vector<20x80xf32> to vector<1x80xf32>
    %2380 = vector.broadcast %2378 : vector<4x1xf32> to vector<4x80xf32>
    %2381 = vector.broadcast %2379 : vector<1x80xf32> to vector<4x80xf32>
    %2382 = arith.mulf %2380, %2381 : vector<4x80xf32>
    %2383 = vector.extract_strided_slice %1976 {offsets = [0, 18], sizes = [4, 1], strides = [1, 1]} : vector<4x20xf32> to vector<4x1xf32>
    %2384 = vector.extract_strided_slice %2 {offsets = [18, 0], sizes = [1, 80], strides = [1, 1]} : vector<20x80xf32> to vector<1x80xf32>
    %2385 = vector.broadcast %2383 : vector<4x1xf32> to vector<4x80xf32>
    %2386 = vector.broadcast %2384 : vector<1x80xf32> to vector<4x80xf32>
    %2387 = arith.mulf %2385, %2386 : vector<4x80xf32>
    %2388 = vector.extract_strided_slice %1976 {offsets = [0, 19], sizes = [4, 1], strides = [1, 1]} : vector<4x20xf32> to vector<4x1xf32>
    %2389 = vector.extract_strided_slice %2 {offsets = [19, 0], sizes = [1, 80], strides = [1, 1]} : vector<20x80xf32> to vector<1x80xf32>
    %2390 = vector.broadcast %2388 : vector<4x1xf32> to vector<4x80xf32>
    %2391 = vector.broadcast %2389 : vector<1x80xf32> to vector<4x80xf32>
    %2392 = arith.mulf %2390, %2391 : vector<4x80xf32>
    %2393 = arith.addf %2297, %2302 : vector<4x80xf32>
    %2394 = arith.addf %2307, %2312 : vector<4x80xf32>
    %2395 = arith.addf %2317, %2322 : vector<4x80xf32>
    %2396 = arith.addf %2327, %2332 : vector<4x80xf32>
    %2397 = arith.addf %2337, %2342 : vector<4x80xf32>
    %2398 = arith.addf %2347, %2352 : vector<4x80xf32>
    %2399 = arith.addf %2357, %2362 : vector<4x80xf32>
    %2400 = arith.addf %2367, %2372 : vector<4x80xf32>
    %2401 = arith.addf %2377, %2382 : vector<4x80xf32>
    %2402 = arith.addf %2387, %2392 : vector<4x80xf32>
    %2403 = arith.addf %2393, %2394 : vector<4x80xf32>
    %2404 = arith.addf %2395, %2396 : vector<4x80xf32>
    %2405 = arith.addf %2397, %2398 : vector<4x80xf32>
    %2406 = arith.addf %2399, %2400 : vector<4x80xf32>
    %2407 = arith.addf %2401, %2402 : vector<4x80xf32>
    %2408 = arith.addf %2403, %2404 : vector<4x80xf32>
    %2409 = arith.addf %2405, %2406 : vector<4x80xf32>
    %2410 = arith.addf %2408, %2409 : vector<4x80xf32>
    %2411 = arith.addf %2410, %2407 : vector<4x80xf32>
    %2412 = arith.addf %2292, %2411 : vector<4x80xf32>
    %2413 = arith.negf %2412 : vector<4x80xf32>
    %2414 = math.exp %2413 : vector<4x80xf32>
    %cst_33 = arith.constant 1.000000e+00 : f32
    %2415 = vector.broadcast %cst_33 : f32 to vector<4x80xf32>
    %2416 = arith.addf %2415, %2414 : vector<4x80xf32>
    %2417 = arith.divf %2415, %2416 : vector<4x80xf32>
    %2418 = math.tanh %2412 : vector<4x80xf32>
    %2419 = vector.extract_strided_slice %2417 {offsets = [0, 0], sizes = [4, 20], strides = [1, 1]} : vector<4x80xf32> to vector<4x20xf32>
    %2420 = vector.extract_strided_slice %2417 {offsets = [0, 20], sizes = [4, 20], strides = [1, 1]} : vector<4x80xf32> to vector<4x20xf32>
    %2421 = vector.extract_strided_slice %2418 {offsets = [0, 40], sizes = [4, 20], strides = [1, 1]} : vector<4x80xf32> to vector<4x20xf32>
    %2422 = vector.extract_strided_slice %2417 {offsets = [0, 60], sizes = [4, 20], strides = [1, 1]} : vector<4x80xf32> to vector<4x20xf32>
    %2423 = arith.mulf %2420, %1974 : vector<4x20xf32>
    %2424 = arith.mulf %2419, %2421 : vector<4x20xf32>
    %2425 = arith.addf %2423, %2424 : vector<4x20xf32>
    %2426 = math.tanh %2425 : vector<4x20xf32>
    %2427 = arith.mulf %2422, %2426 : vector<4x20xf32>
    %2428 = vector.extract_strided_slice %2425 {offsets = [0, 0], sizes = [4, 1], strides = [1, 1]} : vector<4x20xf32> to vector<4x1xf32>
    %2429 = vector.extract_strided_slice %3 {offsets = [0, 0], sizes = [1, 4], strides = [1, 1]} : vector<20x4xf32> to vector<1x4xf32>
    %2430 = vector.broadcast %2428 : vector<4x1xf32> to vector<4x4xf32>
    %2431 = vector.broadcast %2429 : vector<1x4xf32> to vector<4x4xf32>
    %2432 = arith.mulf %2430, %2431 : vector<4x4xf32>
    %2433 = vector.extract_strided_slice %2425 {offsets = [0, 1], sizes = [4, 1], strides = [1, 1]} : vector<4x20xf32> to vector<4x1xf32>
    %2434 = vector.extract_strided_slice %3 {offsets = [1, 0], sizes = [1, 4], strides = [1, 1]} : vector<20x4xf32> to vector<1x4xf32>
    %2435 = vector.broadcast %2433 : vector<4x1xf32> to vector<4x4xf32>
    %2436 = vector.broadcast %2434 : vector<1x4xf32> to vector<4x4xf32>
    %2437 = arith.mulf %2435, %2436 : vector<4x4xf32>
    %2438 = vector.extract_strided_slice %2425 {offsets = [0, 2], sizes = [4, 1], strides = [1, 1]} : vector<4x20xf32> to vector<4x1xf32>
    %2439 = vector.extract_strided_slice %3 {offsets = [2, 0], sizes = [1, 4], strides = [1, 1]} : vector<20x4xf32> to vector<1x4xf32>
    %2440 = vector.broadcast %2438 : vector<4x1xf32> to vector<4x4xf32>
    %2441 = vector.broadcast %2439 : vector<1x4xf32> to vector<4x4xf32>
    %2442 = arith.mulf %2440, %2441 : vector<4x4xf32>
    %2443 = vector.extract_strided_slice %2425 {offsets = [0, 3], sizes = [4, 1], strides = [1, 1]} : vector<4x20xf32> to vector<4x1xf32>
    %2444 = vector.extract_strided_slice %3 {offsets = [3, 0], sizes = [1, 4], strides = [1, 1]} : vector<20x4xf32> to vector<1x4xf32>
    %2445 = vector.broadcast %2443 : vector<4x1xf32> to vector<4x4xf32>
    %2446 = vector.broadcast %2444 : vector<1x4xf32> to vector<4x4xf32>
    %2447 = arith.mulf %2445, %2446 : vector<4x4xf32>
    %2448 = vector.extract_strided_slice %2425 {offsets = [0, 4], sizes = [4, 1], strides = [1, 1]} : vector<4x20xf32> to vector<4x1xf32>
    %2449 = vector.extract_strided_slice %3 {offsets = [4, 0], sizes = [1, 4], strides = [1, 1]} : vector<20x4xf32> to vector<1x4xf32>
    %2450 = vector.broadcast %2448 : vector<4x1xf32> to vector<4x4xf32>
    %2451 = vector.broadcast %2449 : vector<1x4xf32> to vector<4x4xf32>
    %2452 = arith.mulf %2450, %2451 : vector<4x4xf32>
    %2453 = vector.extract_strided_slice %2425 {offsets = [0, 5], sizes = [4, 1], strides = [1, 1]} : vector<4x20xf32> to vector<4x1xf32>
    %2454 = vector.extract_strided_slice %3 {offsets = [5, 0], sizes = [1, 4], strides = [1, 1]} : vector<20x4xf32> to vector<1x4xf32>
    %2455 = vector.broadcast %2453 : vector<4x1xf32> to vector<4x4xf32>
    %2456 = vector.broadcast %2454 : vector<1x4xf32> to vector<4x4xf32>
    %2457 = arith.mulf %2455, %2456 : vector<4x4xf32>
    %2458 = vector.extract_strided_slice %2425 {offsets = [0, 6], sizes = [4, 1], strides = [1, 1]} : vector<4x20xf32> to vector<4x1xf32>
    %2459 = vector.extract_strided_slice %3 {offsets = [6, 0], sizes = [1, 4], strides = [1, 1]} : vector<20x4xf32> to vector<1x4xf32>
    %2460 = vector.broadcast %2458 : vector<4x1xf32> to vector<4x4xf32>
    %2461 = vector.broadcast %2459 : vector<1x4xf32> to vector<4x4xf32>
    %2462 = arith.mulf %2460, %2461 : vector<4x4xf32>
    %2463 = vector.extract_strided_slice %2425 {offsets = [0, 7], sizes = [4, 1], strides = [1, 1]} : vector<4x20xf32> to vector<4x1xf32>
    %2464 = vector.extract_strided_slice %3 {offsets = [7, 0], sizes = [1, 4], strides = [1, 1]} : vector<20x4xf32> to vector<1x4xf32>
    %2465 = vector.broadcast %2463 : vector<4x1xf32> to vector<4x4xf32>
    %2466 = vector.broadcast %2464 : vector<1x4xf32> to vector<4x4xf32>
    %2467 = arith.mulf %2465, %2466 : vector<4x4xf32>
    %2468 = vector.extract_strided_slice %2425 {offsets = [0, 8], sizes = [4, 1], strides = [1, 1]} : vector<4x20xf32> to vector<4x1xf32>
    %2469 = vector.extract_strided_slice %3 {offsets = [8, 0], sizes = [1, 4], strides = [1, 1]} : vector<20x4xf32> to vector<1x4xf32>
    %2470 = vector.broadcast %2468 : vector<4x1xf32> to vector<4x4xf32>
    %2471 = vector.broadcast %2469 : vector<1x4xf32> to vector<4x4xf32>
    %2472 = arith.mulf %2470, %2471 : vector<4x4xf32>
    %2473 = vector.extract_strided_slice %2425 {offsets = [0, 9], sizes = [4, 1], strides = [1, 1]} : vector<4x20xf32> to vector<4x1xf32>
    %2474 = vector.extract_strided_slice %3 {offsets = [9, 0], sizes = [1, 4], strides = [1, 1]} : vector<20x4xf32> to vector<1x4xf32>
    %2475 = vector.broadcast %2473 : vector<4x1xf32> to vector<4x4xf32>
    %2476 = vector.broadcast %2474 : vector<1x4xf32> to vector<4x4xf32>
    %2477 = arith.mulf %2475, %2476 : vector<4x4xf32>
    %2478 = vector.extract_strided_slice %2425 {offsets = [0, 10], sizes = [4, 1], strides = [1, 1]} : vector<4x20xf32> to vector<4x1xf32>
    %2479 = vector.extract_strided_slice %3 {offsets = [10, 0], sizes = [1, 4], strides = [1, 1]} : vector<20x4xf32> to vector<1x4xf32>
    %2480 = vector.broadcast %2478 : vector<4x1xf32> to vector<4x4xf32>
    %2481 = vector.broadcast %2479 : vector<1x4xf32> to vector<4x4xf32>
    %2482 = arith.mulf %2480, %2481 : vector<4x4xf32>
    %2483 = vector.extract_strided_slice %2425 {offsets = [0, 11], sizes = [4, 1], strides = [1, 1]} : vector<4x20xf32> to vector<4x1xf32>
    %2484 = vector.extract_strided_slice %3 {offsets = [11, 0], sizes = [1, 4], strides = [1, 1]} : vector<20x4xf32> to vector<1x4xf32>
    %2485 = vector.broadcast %2483 : vector<4x1xf32> to vector<4x4xf32>
    %2486 = vector.broadcast %2484 : vector<1x4xf32> to vector<4x4xf32>
    %2487 = arith.mulf %2485, %2486 : vector<4x4xf32>
    %2488 = vector.extract_strided_slice %2425 {offsets = [0, 12], sizes = [4, 1], strides = [1, 1]} : vector<4x20xf32> to vector<4x1xf32>
    %2489 = vector.extract_strided_slice %3 {offsets = [12, 0], sizes = [1, 4], strides = [1, 1]} : vector<20x4xf32> to vector<1x4xf32>
    %2490 = vector.broadcast %2488 : vector<4x1xf32> to vector<4x4xf32>
    %2491 = vector.broadcast %2489 : vector<1x4xf32> to vector<4x4xf32>
    %2492 = arith.mulf %2490, %2491 : vector<4x4xf32>
    %2493 = vector.extract_strided_slice %2425 {offsets = [0, 13], sizes = [4, 1], strides = [1, 1]} : vector<4x20xf32> to vector<4x1xf32>
    %2494 = vector.extract_strided_slice %3 {offsets = [13, 0], sizes = [1, 4], strides = [1, 1]} : vector<20x4xf32> to vector<1x4xf32>
    %2495 = vector.broadcast %2493 : vector<4x1xf32> to vector<4x4xf32>
    %2496 = vector.broadcast %2494 : vector<1x4xf32> to vector<4x4xf32>
    %2497 = arith.mulf %2495, %2496 : vector<4x4xf32>
    %2498 = vector.extract_strided_slice %2425 {offsets = [0, 14], sizes = [4, 1], strides = [1, 1]} : vector<4x20xf32> to vector<4x1xf32>
    %2499 = vector.extract_strided_slice %3 {offsets = [14, 0], sizes = [1, 4], strides = [1, 1]} : vector<20x4xf32> to vector<1x4xf32>
    %2500 = vector.broadcast %2498 : vector<4x1xf32> to vector<4x4xf32>
    %2501 = vector.broadcast %2499 : vector<1x4xf32> to vector<4x4xf32>
    %2502 = arith.mulf %2500, %2501 : vector<4x4xf32>
    %2503 = vector.extract_strided_slice %2425 {offsets = [0, 15], sizes = [4, 1], strides = [1, 1]} : vector<4x20xf32> to vector<4x1xf32>
    %2504 = vector.extract_strided_slice %3 {offsets = [15, 0], sizes = [1, 4], strides = [1, 1]} : vector<20x4xf32> to vector<1x4xf32>
    %2505 = vector.broadcast %2503 : vector<4x1xf32> to vector<4x4xf32>
    %2506 = vector.broadcast %2504 : vector<1x4xf32> to vector<4x4xf32>
    %2507 = arith.mulf %2505, %2506 : vector<4x4xf32>
    %2508 = vector.extract_strided_slice %2425 {offsets = [0, 16], sizes = [4, 1], strides = [1, 1]} : vector<4x20xf32> to vector<4x1xf32>
    %2509 = vector.extract_strided_slice %3 {offsets = [16, 0], sizes = [1, 4], strides = [1, 1]} : vector<20x4xf32> to vector<1x4xf32>
    %2510 = vector.broadcast %2508 : vector<4x1xf32> to vector<4x4xf32>
    %2511 = vector.broadcast %2509 : vector<1x4xf32> to vector<4x4xf32>
    %2512 = arith.mulf %2510, %2511 : vector<4x4xf32>
    %2513 = vector.extract_strided_slice %2425 {offsets = [0, 17], sizes = [4, 1], strides = [1, 1]} : vector<4x20xf32> to vector<4x1xf32>
    %2514 = vector.extract_strided_slice %3 {offsets = [17, 0], sizes = [1, 4], strides = [1, 1]} : vector<20x4xf32> to vector<1x4xf32>
    %2515 = vector.broadcast %2513 : vector<4x1xf32> to vector<4x4xf32>
    %2516 = vector.broadcast %2514 : vector<1x4xf32> to vector<4x4xf32>
    %2517 = arith.mulf %2515, %2516 : vector<4x4xf32>
    %2518 = vector.extract_strided_slice %2425 {offsets = [0, 18], sizes = [4, 1], strides = [1, 1]} : vector<4x20xf32> to vector<4x1xf32>
    %2519 = vector.extract_strided_slice %3 {offsets = [18, 0], sizes = [1, 4], strides = [1, 1]} : vector<20x4xf32> to vector<1x4xf32>
    %2520 = vector.broadcast %2518 : vector<4x1xf32> to vector<4x4xf32>
    %2521 = vector.broadcast %2519 : vector<1x4xf32> to vector<4x4xf32>
    %2522 = arith.mulf %2520, %2521 : vector<4x4xf32>
    %2523 = vector.extract_strided_slice %2425 {offsets = [0, 19], sizes = [4, 1], strides = [1, 1]} : vector<4x20xf32> to vector<4x1xf32>
    %2524 = vector.extract_strided_slice %3 {offsets = [19, 0], sizes = [1, 4], strides = [1, 1]} : vector<20x4xf32> to vector<1x4xf32>
    %2525 = vector.broadcast %2523 : vector<4x1xf32> to vector<4x4xf32>
    %2526 = vector.broadcast %2524 : vector<1x4xf32> to vector<4x4xf32>
    %2527 = arith.mulf %2525, %2526 : vector<4x4xf32>
    %2528 = arith.addf %2432, %2437 : vector<4x4xf32>
    %2529 = arith.addf %2442, %2447 : vector<4x4xf32>
    %2530 = arith.addf %2452, %2457 : vector<4x4xf32>
    %2531 = arith.addf %2462, %2467 : vector<4x4xf32>
    %2532 = arith.addf %2472, %2477 : vector<4x4xf32>
    %2533 = arith.addf %2482, %2487 : vector<4x4xf32>
    %2534 = arith.addf %2492, %2497 : vector<4x4xf32>
    %2535 = arith.addf %2502, %2507 : vector<4x4xf32>
    %2536 = arith.addf %2512, %2517 : vector<4x4xf32>
    %2537 = arith.addf %2522, %2527 : vector<4x4xf32>
    %2538 = arith.addf %2528, %2529 : vector<4x4xf32>
    %2539 = arith.addf %2530, %2531 : vector<4x4xf32>
    %2540 = arith.addf %2532, %2533 : vector<4x4xf32>
    %2541 = arith.addf %2534, %2535 : vector<4x4xf32>
    %2542 = arith.addf %2536, %2537 : vector<4x4xf32>
    %2543 = arith.addf %2538, %2539 : vector<4x4xf32>
    %2544 = arith.addf %2540, %2541 : vector<4x4xf32>
    %2545 = arith.addf %2543, %2544 : vector<4x4xf32>
    %2546 = arith.addf %2545, %2542 : vector<4x4xf32>
    %2547 = arith.addf %2546, %10 : vector<4x4xf32>
    %2548 = vector.broadcast %2283 : vector<4x1xf32> to vector<4x4xf32>
    %2549 = vector.broadcast %4 : vector<1x4xf32> to vector<4x4xf32>
    %2550 = arith.mulf %2548, %2549 : vector<4x4xf32>
    %2551 = arith.addf %2547, %2550 : vector<4x4xf32>
    %2552 = arith.negf %2551 : vector<4x4xf32>
    %2553 = math.exp %2552 : vector<4x4xf32>
    %cst_34 = arith.constant 1.000000e+00 : f32
    %2554 = vector.broadcast %cst_34 : f32 to vector<4x4xf32>
    %2555 = arith.addf %2554, %2553 : vector<4x4xf32>
    %2556 = arith.divf %2554, %2555 : vector<4x4xf32>
    %2557 = math.tanh %2551 : vector<4x4xf32>
    %2558 = vector.extract_strided_slice %2556 {offsets = [0, 0], sizes = [4, 1], strides = [1, 1]} : vector<4x4xf32> to vector<4x1xf32>
    %2559 = vector.extract_strided_slice %2556 {offsets = [0, 1], sizes = [4, 1], strides = [1, 1]} : vector<4x4xf32> to vector<4x1xf32>
    %2560 = vector.extract_strided_slice %2557 {offsets = [0, 2], sizes = [4, 1], strides = [1, 1]} : vector<4x4xf32> to vector<4x1xf32>
    %2561 = vector.extract_strided_slice %2556 {offsets = [0, 3], sizes = [4, 1], strides = [1, 1]} : vector<4x4xf32> to vector<4x1xf32>
    %2562 = arith.mulf %2559, %2281 : vector<4x1xf32>
    %2563 = arith.mulf %2558, %2560 : vector<4x1xf32>
    %2564 = arith.addf %2562, %2563 : vector<4x1xf32>
    %2565 = math.tanh %2564 : vector<4x1xf32>
    %2566 = arith.mulf %2561, %2565 : vector<4x1xf32>
    %c8_i32 = arith.constant 8 : i32
    %2567 = vector.broadcast %c8_i32 : i32 to vector<4x12xi32>
    %2568 = arith.cmpi eq, %11, %2567 : vector<4x12xi32>
    %2569 = vector.shape_cast %2564 : vector<4x1xf32> to vector<4x1xf32>
    %2570 = vector.broadcast %2569 : vector<4x1xf32> to vector<4x12xf32>
    %2571 = arith.select %2568, %2570, %2288 : vector<4x12xi1>, vector<4x12xf32>
    %2572 = vector.broadcast %2564 : vector<4x1xf32> to vector<4x80xf32>
    %2573 = vector.broadcast %1 : vector<1x80xf32> to vector<4x80xf32>
    %2574 = arith.mulf %2572, %2573 : vector<4x80xf32>
    %2575 = arith.addf %2574, %7 : vector<4x80xf32>
    %2576 = vector.extract_strided_slice %2427 {offsets = [0, 0], sizes = [4, 1], strides = [1, 1]} : vector<4x20xf32> to vector<4x1xf32>
    %2577 = vector.extract_strided_slice %2 {offsets = [0, 0], sizes = [1, 80], strides = [1, 1]} : vector<20x80xf32> to vector<1x80xf32>
    %2578 = vector.broadcast %2576 : vector<4x1xf32> to vector<4x80xf32>
    %2579 = vector.broadcast %2577 : vector<1x80xf32> to vector<4x80xf32>
    %2580 = arith.mulf %2578, %2579 : vector<4x80xf32>
    %2581 = vector.extract_strided_slice %2427 {offsets = [0, 1], sizes = [4, 1], strides = [1, 1]} : vector<4x20xf32> to vector<4x1xf32>
    %2582 = vector.extract_strided_slice %2 {offsets = [1, 0], sizes = [1, 80], strides = [1, 1]} : vector<20x80xf32> to vector<1x80xf32>
    %2583 = vector.broadcast %2581 : vector<4x1xf32> to vector<4x80xf32>
    %2584 = vector.broadcast %2582 : vector<1x80xf32> to vector<4x80xf32>
    %2585 = arith.mulf %2583, %2584 : vector<4x80xf32>
    %2586 = vector.extract_strided_slice %2427 {offsets = [0, 2], sizes = [4, 1], strides = [1, 1]} : vector<4x20xf32> to vector<4x1xf32>
    %2587 = vector.extract_strided_slice %2 {offsets = [2, 0], sizes = [1, 80], strides = [1, 1]} : vector<20x80xf32> to vector<1x80xf32>
    %2588 = vector.broadcast %2586 : vector<4x1xf32> to vector<4x80xf32>
    %2589 = vector.broadcast %2587 : vector<1x80xf32> to vector<4x80xf32>
    %2590 = arith.mulf %2588, %2589 : vector<4x80xf32>
    %2591 = vector.extract_strided_slice %2427 {offsets = [0, 3], sizes = [4, 1], strides = [1, 1]} : vector<4x20xf32> to vector<4x1xf32>
    %2592 = vector.extract_strided_slice %2 {offsets = [3, 0], sizes = [1, 80], strides = [1, 1]} : vector<20x80xf32> to vector<1x80xf32>
    %2593 = vector.broadcast %2591 : vector<4x1xf32> to vector<4x80xf32>
    %2594 = vector.broadcast %2592 : vector<1x80xf32> to vector<4x80xf32>
    %2595 = arith.mulf %2593, %2594 : vector<4x80xf32>
    %2596 = vector.extract_strided_slice %2427 {offsets = [0, 4], sizes = [4, 1], strides = [1, 1]} : vector<4x20xf32> to vector<4x1xf32>
    %2597 = vector.extract_strided_slice %2 {offsets = [4, 0], sizes = [1, 80], strides = [1, 1]} : vector<20x80xf32> to vector<1x80xf32>
    %2598 = vector.broadcast %2596 : vector<4x1xf32> to vector<4x80xf32>
    %2599 = vector.broadcast %2597 : vector<1x80xf32> to vector<4x80xf32>
    %2600 = arith.mulf %2598, %2599 : vector<4x80xf32>
    %2601 = vector.extract_strided_slice %2427 {offsets = [0, 5], sizes = [4, 1], strides = [1, 1]} : vector<4x20xf32> to vector<4x1xf32>
    %2602 = vector.extract_strided_slice %2 {offsets = [5, 0], sizes = [1, 80], strides = [1, 1]} : vector<20x80xf32> to vector<1x80xf32>
    %2603 = vector.broadcast %2601 : vector<4x1xf32> to vector<4x80xf32>
    %2604 = vector.broadcast %2602 : vector<1x80xf32> to vector<4x80xf32>
    %2605 = arith.mulf %2603, %2604 : vector<4x80xf32>
    %2606 = vector.extract_strided_slice %2427 {offsets = [0, 6], sizes = [4, 1], strides = [1, 1]} : vector<4x20xf32> to vector<4x1xf32>
    %2607 = vector.extract_strided_slice %2 {offsets = [6, 0], sizes = [1, 80], strides = [1, 1]} : vector<20x80xf32> to vector<1x80xf32>
    %2608 = vector.broadcast %2606 : vector<4x1xf32> to vector<4x80xf32>
    %2609 = vector.broadcast %2607 : vector<1x80xf32> to vector<4x80xf32>
    %2610 = arith.mulf %2608, %2609 : vector<4x80xf32>
    %2611 = vector.extract_strided_slice %2427 {offsets = [0, 7], sizes = [4, 1], strides = [1, 1]} : vector<4x20xf32> to vector<4x1xf32>
    %2612 = vector.extract_strided_slice %2 {offsets = [7, 0], sizes = [1, 80], strides = [1, 1]} : vector<20x80xf32> to vector<1x80xf32>
    %2613 = vector.broadcast %2611 : vector<4x1xf32> to vector<4x80xf32>
    %2614 = vector.broadcast %2612 : vector<1x80xf32> to vector<4x80xf32>
    %2615 = arith.mulf %2613, %2614 : vector<4x80xf32>
    %2616 = vector.extract_strided_slice %2427 {offsets = [0, 8], sizes = [4, 1], strides = [1, 1]} : vector<4x20xf32> to vector<4x1xf32>
    %2617 = vector.extract_strided_slice %2 {offsets = [8, 0], sizes = [1, 80], strides = [1, 1]} : vector<20x80xf32> to vector<1x80xf32>
    %2618 = vector.broadcast %2616 : vector<4x1xf32> to vector<4x80xf32>
    %2619 = vector.broadcast %2617 : vector<1x80xf32> to vector<4x80xf32>
    %2620 = arith.mulf %2618, %2619 : vector<4x80xf32>
    %2621 = vector.extract_strided_slice %2427 {offsets = [0, 9], sizes = [4, 1], strides = [1, 1]} : vector<4x20xf32> to vector<4x1xf32>
    %2622 = vector.extract_strided_slice %2 {offsets = [9, 0], sizes = [1, 80], strides = [1, 1]} : vector<20x80xf32> to vector<1x80xf32>
    %2623 = vector.broadcast %2621 : vector<4x1xf32> to vector<4x80xf32>
    %2624 = vector.broadcast %2622 : vector<1x80xf32> to vector<4x80xf32>
    %2625 = arith.mulf %2623, %2624 : vector<4x80xf32>
    %2626 = vector.extract_strided_slice %2427 {offsets = [0, 10], sizes = [4, 1], strides = [1, 1]} : vector<4x20xf32> to vector<4x1xf32>
    %2627 = vector.extract_strided_slice %2 {offsets = [10, 0], sizes = [1, 80], strides = [1, 1]} : vector<20x80xf32> to vector<1x80xf32>
    %2628 = vector.broadcast %2626 : vector<4x1xf32> to vector<4x80xf32>
    %2629 = vector.broadcast %2627 : vector<1x80xf32> to vector<4x80xf32>
    %2630 = arith.mulf %2628, %2629 : vector<4x80xf32>
    %2631 = vector.extract_strided_slice %2427 {offsets = [0, 11], sizes = [4, 1], strides = [1, 1]} : vector<4x20xf32> to vector<4x1xf32>
    %2632 = vector.extract_strided_slice %2 {offsets = [11, 0], sizes = [1, 80], strides = [1, 1]} : vector<20x80xf32> to vector<1x80xf32>
    %2633 = vector.broadcast %2631 : vector<4x1xf32> to vector<4x80xf32>
    %2634 = vector.broadcast %2632 : vector<1x80xf32> to vector<4x80xf32>
    %2635 = arith.mulf %2633, %2634 : vector<4x80xf32>
    %2636 = vector.extract_strided_slice %2427 {offsets = [0, 12], sizes = [4, 1], strides = [1, 1]} : vector<4x20xf32> to vector<4x1xf32>
    %2637 = vector.extract_strided_slice %2 {offsets = [12, 0], sizes = [1, 80], strides = [1, 1]} : vector<20x80xf32> to vector<1x80xf32>
    %2638 = vector.broadcast %2636 : vector<4x1xf32> to vector<4x80xf32>
    %2639 = vector.broadcast %2637 : vector<1x80xf32> to vector<4x80xf32>
    %2640 = arith.mulf %2638, %2639 : vector<4x80xf32>
    %2641 = vector.extract_strided_slice %2427 {offsets = [0, 13], sizes = [4, 1], strides = [1, 1]} : vector<4x20xf32> to vector<4x1xf32>
    %2642 = vector.extract_strided_slice %2 {offsets = [13, 0], sizes = [1, 80], strides = [1, 1]} : vector<20x80xf32> to vector<1x80xf32>
    %2643 = vector.broadcast %2641 : vector<4x1xf32> to vector<4x80xf32>
    %2644 = vector.broadcast %2642 : vector<1x80xf32> to vector<4x80xf32>
    %2645 = arith.mulf %2643, %2644 : vector<4x80xf32>
    %2646 = vector.extract_strided_slice %2427 {offsets = [0, 14], sizes = [4, 1], strides = [1, 1]} : vector<4x20xf32> to vector<4x1xf32>
    %2647 = vector.extract_strided_slice %2 {offsets = [14, 0], sizes = [1, 80], strides = [1, 1]} : vector<20x80xf32> to vector<1x80xf32>
    %2648 = vector.broadcast %2646 : vector<4x1xf32> to vector<4x80xf32>
    %2649 = vector.broadcast %2647 : vector<1x80xf32> to vector<4x80xf32>
    %2650 = arith.mulf %2648, %2649 : vector<4x80xf32>
    %2651 = vector.extract_strided_slice %2427 {offsets = [0, 15], sizes = [4, 1], strides = [1, 1]} : vector<4x20xf32> to vector<4x1xf32>
    %2652 = vector.extract_strided_slice %2 {offsets = [15, 0], sizes = [1, 80], strides = [1, 1]} : vector<20x80xf32> to vector<1x80xf32>
    %2653 = vector.broadcast %2651 : vector<4x1xf32> to vector<4x80xf32>
    %2654 = vector.broadcast %2652 : vector<1x80xf32> to vector<4x80xf32>
    %2655 = arith.mulf %2653, %2654 : vector<4x80xf32>
    %2656 = vector.extract_strided_slice %2427 {offsets = [0, 16], sizes = [4, 1], strides = [1, 1]} : vector<4x20xf32> to vector<4x1xf32>
    %2657 = vector.extract_strided_slice %2 {offsets = [16, 0], sizes = [1, 80], strides = [1, 1]} : vector<20x80xf32> to vector<1x80xf32>
    %2658 = vector.broadcast %2656 : vector<4x1xf32> to vector<4x80xf32>
    %2659 = vector.broadcast %2657 : vector<1x80xf32> to vector<4x80xf32>
    %2660 = arith.mulf %2658, %2659 : vector<4x80xf32>
    %2661 = vector.extract_strided_slice %2427 {offsets = [0, 17], sizes = [4, 1], strides = [1, 1]} : vector<4x20xf32> to vector<4x1xf32>
    %2662 = vector.extract_strided_slice %2 {offsets = [17, 0], sizes = [1, 80], strides = [1, 1]} : vector<20x80xf32> to vector<1x80xf32>
    %2663 = vector.broadcast %2661 : vector<4x1xf32> to vector<4x80xf32>
    %2664 = vector.broadcast %2662 : vector<1x80xf32> to vector<4x80xf32>
    %2665 = arith.mulf %2663, %2664 : vector<4x80xf32>
    %2666 = vector.extract_strided_slice %2427 {offsets = [0, 18], sizes = [4, 1], strides = [1, 1]} : vector<4x20xf32> to vector<4x1xf32>
    %2667 = vector.extract_strided_slice %2 {offsets = [18, 0], sizes = [1, 80], strides = [1, 1]} : vector<20x80xf32> to vector<1x80xf32>
    %2668 = vector.broadcast %2666 : vector<4x1xf32> to vector<4x80xf32>
    %2669 = vector.broadcast %2667 : vector<1x80xf32> to vector<4x80xf32>
    %2670 = arith.mulf %2668, %2669 : vector<4x80xf32>
    %2671 = vector.extract_strided_slice %2427 {offsets = [0, 19], sizes = [4, 1], strides = [1, 1]} : vector<4x20xf32> to vector<4x1xf32>
    %2672 = vector.extract_strided_slice %2 {offsets = [19, 0], sizes = [1, 80], strides = [1, 1]} : vector<20x80xf32> to vector<1x80xf32>
    %2673 = vector.broadcast %2671 : vector<4x1xf32> to vector<4x80xf32>
    %2674 = vector.broadcast %2672 : vector<1x80xf32> to vector<4x80xf32>
    %2675 = arith.mulf %2673, %2674 : vector<4x80xf32>
    %2676 = arith.addf %2580, %2585 : vector<4x80xf32>
    %2677 = arith.addf %2590, %2595 : vector<4x80xf32>
    %2678 = arith.addf %2600, %2605 : vector<4x80xf32>
    %2679 = arith.addf %2610, %2615 : vector<4x80xf32>
    %2680 = arith.addf %2620, %2625 : vector<4x80xf32>
    %2681 = arith.addf %2630, %2635 : vector<4x80xf32>
    %2682 = arith.addf %2640, %2645 : vector<4x80xf32>
    %2683 = arith.addf %2650, %2655 : vector<4x80xf32>
    %2684 = arith.addf %2660, %2665 : vector<4x80xf32>
    %2685 = arith.addf %2670, %2675 : vector<4x80xf32>
    %2686 = arith.addf %2676, %2677 : vector<4x80xf32>
    %2687 = arith.addf %2678, %2679 : vector<4x80xf32>
    %2688 = arith.addf %2680, %2681 : vector<4x80xf32>
    %2689 = arith.addf %2682, %2683 : vector<4x80xf32>
    %2690 = arith.addf %2684, %2685 : vector<4x80xf32>
    %2691 = arith.addf %2686, %2687 : vector<4x80xf32>
    %2692 = arith.addf %2688, %2689 : vector<4x80xf32>
    %2693 = arith.addf %2691, %2692 : vector<4x80xf32>
    %2694 = arith.addf %2693, %2690 : vector<4x80xf32>
    %2695 = arith.addf %2575, %2694 : vector<4x80xf32>
    %2696 = arith.negf %2695 : vector<4x80xf32>
    %2697 = math.exp %2696 : vector<4x80xf32>
    %cst_35 = arith.constant 1.000000e+00 : f32
    %2698 = vector.broadcast %cst_35 : f32 to vector<4x80xf32>
    %2699 = arith.addf %2698, %2697 : vector<4x80xf32>
    %2700 = arith.divf %2698, %2699 : vector<4x80xf32>
    %2701 = math.tanh %2695 : vector<4x80xf32>
    %2702 = vector.extract_strided_slice %2700 {offsets = [0, 0], sizes = [4, 20], strides = [1, 1]} : vector<4x80xf32> to vector<4x20xf32>
    %2703 = vector.extract_strided_slice %2700 {offsets = [0, 20], sizes = [4, 20], strides = [1, 1]} : vector<4x80xf32> to vector<4x20xf32>
    %2704 = vector.extract_strided_slice %2701 {offsets = [0, 40], sizes = [4, 20], strides = [1, 1]} : vector<4x80xf32> to vector<4x20xf32>
    %2705 = vector.extract_strided_slice %2700 {offsets = [0, 60], sizes = [4, 20], strides = [1, 1]} : vector<4x80xf32> to vector<4x20xf32>
    %2706 = arith.mulf %2703, %2425 : vector<4x20xf32>
    %2707 = arith.mulf %2702, %2704 : vector<4x20xf32>
    %2708 = arith.addf %2706, %2707 : vector<4x20xf32>
    %2709 = math.tanh %2708 : vector<4x20xf32>
    %2710 = arith.mulf %2705, %2709 : vector<4x20xf32>
    %2711 = vector.extract_strided_slice %2708 {offsets = [0, 0], sizes = [4, 1], strides = [1, 1]} : vector<4x20xf32> to vector<4x1xf32>
    %2712 = vector.extract_strided_slice %3 {offsets = [0, 0], sizes = [1, 4], strides = [1, 1]} : vector<20x4xf32> to vector<1x4xf32>
    %2713 = vector.broadcast %2711 : vector<4x1xf32> to vector<4x4xf32>
    %2714 = vector.broadcast %2712 : vector<1x4xf32> to vector<4x4xf32>
    %2715 = arith.mulf %2713, %2714 : vector<4x4xf32>
    %2716 = vector.extract_strided_slice %2708 {offsets = [0, 1], sizes = [4, 1], strides = [1, 1]} : vector<4x20xf32> to vector<4x1xf32>
    %2717 = vector.extract_strided_slice %3 {offsets = [1, 0], sizes = [1, 4], strides = [1, 1]} : vector<20x4xf32> to vector<1x4xf32>
    %2718 = vector.broadcast %2716 : vector<4x1xf32> to vector<4x4xf32>
    %2719 = vector.broadcast %2717 : vector<1x4xf32> to vector<4x4xf32>
    %2720 = arith.mulf %2718, %2719 : vector<4x4xf32>
    %2721 = vector.extract_strided_slice %2708 {offsets = [0, 2], sizes = [4, 1], strides = [1, 1]} : vector<4x20xf32> to vector<4x1xf32>
    %2722 = vector.extract_strided_slice %3 {offsets = [2, 0], sizes = [1, 4], strides = [1, 1]} : vector<20x4xf32> to vector<1x4xf32>
    %2723 = vector.broadcast %2721 : vector<4x1xf32> to vector<4x4xf32>
    %2724 = vector.broadcast %2722 : vector<1x4xf32> to vector<4x4xf32>
    %2725 = arith.mulf %2723, %2724 : vector<4x4xf32>
    %2726 = vector.extract_strided_slice %2708 {offsets = [0, 3], sizes = [4, 1], strides = [1, 1]} : vector<4x20xf32> to vector<4x1xf32>
    %2727 = vector.extract_strided_slice %3 {offsets = [3, 0], sizes = [1, 4], strides = [1, 1]} : vector<20x4xf32> to vector<1x4xf32>
    %2728 = vector.broadcast %2726 : vector<4x1xf32> to vector<4x4xf32>
    %2729 = vector.broadcast %2727 : vector<1x4xf32> to vector<4x4xf32>
    %2730 = arith.mulf %2728, %2729 : vector<4x4xf32>
    %2731 = vector.extract_strided_slice %2708 {offsets = [0, 4], sizes = [4, 1], strides = [1, 1]} : vector<4x20xf32> to vector<4x1xf32>
    %2732 = vector.extract_strided_slice %3 {offsets = [4, 0], sizes = [1, 4], strides = [1, 1]} : vector<20x4xf32> to vector<1x4xf32>
    %2733 = vector.broadcast %2731 : vector<4x1xf32> to vector<4x4xf32>
    %2734 = vector.broadcast %2732 : vector<1x4xf32> to vector<4x4xf32>
    %2735 = arith.mulf %2733, %2734 : vector<4x4xf32>
    %2736 = vector.extract_strided_slice %2708 {offsets = [0, 5], sizes = [4, 1], strides = [1, 1]} : vector<4x20xf32> to vector<4x1xf32>
    %2737 = vector.extract_strided_slice %3 {offsets = [5, 0], sizes = [1, 4], strides = [1, 1]} : vector<20x4xf32> to vector<1x4xf32>
    %2738 = vector.broadcast %2736 : vector<4x1xf32> to vector<4x4xf32>
    %2739 = vector.broadcast %2737 : vector<1x4xf32> to vector<4x4xf32>
    %2740 = arith.mulf %2738, %2739 : vector<4x4xf32>
    %2741 = vector.extract_strided_slice %2708 {offsets = [0, 6], sizes = [4, 1], strides = [1, 1]} : vector<4x20xf32> to vector<4x1xf32>
    %2742 = vector.extract_strided_slice %3 {offsets = [6, 0], sizes = [1, 4], strides = [1, 1]} : vector<20x4xf32> to vector<1x4xf32>
    %2743 = vector.broadcast %2741 : vector<4x1xf32> to vector<4x4xf32>
    %2744 = vector.broadcast %2742 : vector<1x4xf32> to vector<4x4xf32>
    %2745 = arith.mulf %2743, %2744 : vector<4x4xf32>
    %2746 = vector.extract_strided_slice %2708 {offsets = [0, 7], sizes = [4, 1], strides = [1, 1]} : vector<4x20xf32> to vector<4x1xf32>
    %2747 = vector.extract_strided_slice %3 {offsets = [7, 0], sizes = [1, 4], strides = [1, 1]} : vector<20x4xf32> to vector<1x4xf32>
    %2748 = vector.broadcast %2746 : vector<4x1xf32> to vector<4x4xf32>
    %2749 = vector.broadcast %2747 : vector<1x4xf32> to vector<4x4xf32>
    %2750 = arith.mulf %2748, %2749 : vector<4x4xf32>
    %2751 = vector.extract_strided_slice %2708 {offsets = [0, 8], sizes = [4, 1], strides = [1, 1]} : vector<4x20xf32> to vector<4x1xf32>
    %2752 = vector.extract_strided_slice %3 {offsets = [8, 0], sizes = [1, 4], strides = [1, 1]} : vector<20x4xf32> to vector<1x4xf32>
    %2753 = vector.broadcast %2751 : vector<4x1xf32> to vector<4x4xf32>
    %2754 = vector.broadcast %2752 : vector<1x4xf32> to vector<4x4xf32>
    %2755 = arith.mulf %2753, %2754 : vector<4x4xf32>
    %2756 = vector.extract_strided_slice %2708 {offsets = [0, 9], sizes = [4, 1], strides = [1, 1]} : vector<4x20xf32> to vector<4x1xf32>
    %2757 = vector.extract_strided_slice %3 {offsets = [9, 0], sizes = [1, 4], strides = [1, 1]} : vector<20x4xf32> to vector<1x4xf32>
    %2758 = vector.broadcast %2756 : vector<4x1xf32> to vector<4x4xf32>
    %2759 = vector.broadcast %2757 : vector<1x4xf32> to vector<4x4xf32>
    %2760 = arith.mulf %2758, %2759 : vector<4x4xf32>
    %2761 = vector.extract_strided_slice %2708 {offsets = [0, 10], sizes = [4, 1], strides = [1, 1]} : vector<4x20xf32> to vector<4x1xf32>
    %2762 = vector.extract_strided_slice %3 {offsets = [10, 0], sizes = [1, 4], strides = [1, 1]} : vector<20x4xf32> to vector<1x4xf32>
    %2763 = vector.broadcast %2761 : vector<4x1xf32> to vector<4x4xf32>
    %2764 = vector.broadcast %2762 : vector<1x4xf32> to vector<4x4xf32>
    %2765 = arith.mulf %2763, %2764 : vector<4x4xf32>
    %2766 = vector.extract_strided_slice %2708 {offsets = [0, 11], sizes = [4, 1], strides = [1, 1]} : vector<4x20xf32> to vector<4x1xf32>
    %2767 = vector.extract_strided_slice %3 {offsets = [11, 0], sizes = [1, 4], strides = [1, 1]} : vector<20x4xf32> to vector<1x4xf32>
    %2768 = vector.broadcast %2766 : vector<4x1xf32> to vector<4x4xf32>
    %2769 = vector.broadcast %2767 : vector<1x4xf32> to vector<4x4xf32>
    %2770 = arith.mulf %2768, %2769 : vector<4x4xf32>
    %2771 = vector.extract_strided_slice %2708 {offsets = [0, 12], sizes = [4, 1], strides = [1, 1]} : vector<4x20xf32> to vector<4x1xf32>
    %2772 = vector.extract_strided_slice %3 {offsets = [12, 0], sizes = [1, 4], strides = [1, 1]} : vector<20x4xf32> to vector<1x4xf32>
    %2773 = vector.broadcast %2771 : vector<4x1xf32> to vector<4x4xf32>
    %2774 = vector.broadcast %2772 : vector<1x4xf32> to vector<4x4xf32>
    %2775 = arith.mulf %2773, %2774 : vector<4x4xf32>
    %2776 = vector.extract_strided_slice %2708 {offsets = [0, 13], sizes = [4, 1], strides = [1, 1]} : vector<4x20xf32> to vector<4x1xf32>
    %2777 = vector.extract_strided_slice %3 {offsets = [13, 0], sizes = [1, 4], strides = [1, 1]} : vector<20x4xf32> to vector<1x4xf32>
    %2778 = vector.broadcast %2776 : vector<4x1xf32> to vector<4x4xf32>
    %2779 = vector.broadcast %2777 : vector<1x4xf32> to vector<4x4xf32>
    %2780 = arith.mulf %2778, %2779 : vector<4x4xf32>
    %2781 = vector.extract_strided_slice %2708 {offsets = [0, 14], sizes = [4, 1], strides = [1, 1]} : vector<4x20xf32> to vector<4x1xf32>
    %2782 = vector.extract_strided_slice %3 {offsets = [14, 0], sizes = [1, 4], strides = [1, 1]} : vector<20x4xf32> to vector<1x4xf32>
    %2783 = vector.broadcast %2781 : vector<4x1xf32> to vector<4x4xf32>
    %2784 = vector.broadcast %2782 : vector<1x4xf32> to vector<4x4xf32>
    %2785 = arith.mulf %2783, %2784 : vector<4x4xf32>
    %2786 = vector.extract_strided_slice %2708 {offsets = [0, 15], sizes = [4, 1], strides = [1, 1]} : vector<4x20xf32> to vector<4x1xf32>
    %2787 = vector.extract_strided_slice %3 {offsets = [15, 0], sizes = [1, 4], strides = [1, 1]} : vector<20x4xf32> to vector<1x4xf32>
    %2788 = vector.broadcast %2786 : vector<4x1xf32> to vector<4x4xf32>
    %2789 = vector.broadcast %2787 : vector<1x4xf32> to vector<4x4xf32>
    %2790 = arith.mulf %2788, %2789 : vector<4x4xf32>
    %2791 = vector.extract_strided_slice %2708 {offsets = [0, 16], sizes = [4, 1], strides = [1, 1]} : vector<4x20xf32> to vector<4x1xf32>
    %2792 = vector.extract_strided_slice %3 {offsets = [16, 0], sizes = [1, 4], strides = [1, 1]} : vector<20x4xf32> to vector<1x4xf32>
    %2793 = vector.broadcast %2791 : vector<4x1xf32> to vector<4x4xf32>
    %2794 = vector.broadcast %2792 : vector<1x4xf32> to vector<4x4xf32>
    %2795 = arith.mulf %2793, %2794 : vector<4x4xf32>
    %2796 = vector.extract_strided_slice %2708 {offsets = [0, 17], sizes = [4, 1], strides = [1, 1]} : vector<4x20xf32> to vector<4x1xf32>
    %2797 = vector.extract_strided_slice %3 {offsets = [17, 0], sizes = [1, 4], strides = [1, 1]} : vector<20x4xf32> to vector<1x4xf32>
    %2798 = vector.broadcast %2796 : vector<4x1xf32> to vector<4x4xf32>
    %2799 = vector.broadcast %2797 : vector<1x4xf32> to vector<4x4xf32>
    %2800 = arith.mulf %2798, %2799 : vector<4x4xf32>
    %2801 = vector.extract_strided_slice %2708 {offsets = [0, 18], sizes = [4, 1], strides = [1, 1]} : vector<4x20xf32> to vector<4x1xf32>
    %2802 = vector.extract_strided_slice %3 {offsets = [18, 0], sizes = [1, 4], strides = [1, 1]} : vector<20x4xf32> to vector<1x4xf32>
    %2803 = vector.broadcast %2801 : vector<4x1xf32> to vector<4x4xf32>
    %2804 = vector.broadcast %2802 : vector<1x4xf32> to vector<4x4xf32>
    %2805 = arith.mulf %2803, %2804 : vector<4x4xf32>
    %2806 = vector.extract_strided_slice %2708 {offsets = [0, 19], sizes = [4, 1], strides = [1, 1]} : vector<4x20xf32> to vector<4x1xf32>
    %2807 = vector.extract_strided_slice %3 {offsets = [19, 0], sizes = [1, 4], strides = [1, 1]} : vector<20x4xf32> to vector<1x4xf32>
    %2808 = vector.broadcast %2806 : vector<4x1xf32> to vector<4x4xf32>
    %2809 = vector.broadcast %2807 : vector<1x4xf32> to vector<4x4xf32>
    %2810 = arith.mulf %2808, %2809 : vector<4x4xf32>
    %2811 = arith.addf %2715, %2720 : vector<4x4xf32>
    %2812 = arith.addf %2725, %2730 : vector<4x4xf32>
    %2813 = arith.addf %2735, %2740 : vector<4x4xf32>
    %2814 = arith.addf %2745, %2750 : vector<4x4xf32>
    %2815 = arith.addf %2755, %2760 : vector<4x4xf32>
    %2816 = arith.addf %2765, %2770 : vector<4x4xf32>
    %2817 = arith.addf %2775, %2780 : vector<4x4xf32>
    %2818 = arith.addf %2785, %2790 : vector<4x4xf32>
    %2819 = arith.addf %2795, %2800 : vector<4x4xf32>
    %2820 = arith.addf %2805, %2810 : vector<4x4xf32>
    %2821 = arith.addf %2811, %2812 : vector<4x4xf32>
    %2822 = arith.addf %2813, %2814 : vector<4x4xf32>
    %2823 = arith.addf %2815, %2816 : vector<4x4xf32>
    %2824 = arith.addf %2817, %2818 : vector<4x4xf32>
    %2825 = arith.addf %2819, %2820 : vector<4x4xf32>
    %2826 = arith.addf %2821, %2822 : vector<4x4xf32>
    %2827 = arith.addf %2823, %2824 : vector<4x4xf32>
    %2828 = arith.addf %2826, %2827 : vector<4x4xf32>
    %2829 = arith.addf %2828, %2825 : vector<4x4xf32>
    %2830 = arith.addf %2829, %10 : vector<4x4xf32>
    %2831 = vector.broadcast %2566 : vector<4x1xf32> to vector<4x4xf32>
    %2832 = vector.broadcast %4 : vector<1x4xf32> to vector<4x4xf32>
    %2833 = arith.mulf %2831, %2832 : vector<4x4xf32>
    %2834 = arith.addf %2830, %2833 : vector<4x4xf32>
    %2835 = arith.negf %2834 : vector<4x4xf32>
    %2836 = math.exp %2835 : vector<4x4xf32>
    %cst_36 = arith.constant 1.000000e+00 : f32
    %2837 = vector.broadcast %cst_36 : f32 to vector<4x4xf32>
    %2838 = arith.addf %2837, %2836 : vector<4x4xf32>
    %2839 = arith.divf %2837, %2838 : vector<4x4xf32>
    %2840 = math.tanh %2834 : vector<4x4xf32>
    %2841 = vector.extract_strided_slice %2839 {offsets = [0, 0], sizes = [4, 1], strides = [1, 1]} : vector<4x4xf32> to vector<4x1xf32>
    %2842 = vector.extract_strided_slice %2839 {offsets = [0, 1], sizes = [4, 1], strides = [1, 1]} : vector<4x4xf32> to vector<4x1xf32>
    %2843 = vector.extract_strided_slice %2840 {offsets = [0, 2], sizes = [4, 1], strides = [1, 1]} : vector<4x4xf32> to vector<4x1xf32>
    %2844 = vector.extract_strided_slice %2839 {offsets = [0, 3], sizes = [4, 1], strides = [1, 1]} : vector<4x4xf32> to vector<4x1xf32>
    %2845 = arith.mulf %2842, %2564 : vector<4x1xf32>
    %2846 = arith.mulf %2841, %2843 : vector<4x1xf32>
    %2847 = arith.addf %2845, %2846 : vector<4x1xf32>
    %2848 = math.tanh %2847 : vector<4x1xf32>
    %2849 = arith.mulf %2844, %2848 : vector<4x1xf32>
    %c9_i32 = arith.constant 9 : i32
    %2850 = vector.broadcast %c9_i32 : i32 to vector<4x12xi32>
    %2851 = arith.cmpi eq, %11, %2850 : vector<4x12xi32>
    %2852 = vector.shape_cast %2847 : vector<4x1xf32> to vector<4x1xf32>
    %2853 = vector.broadcast %2852 : vector<4x1xf32> to vector<4x12xf32>
    %2854 = arith.select %2851, %2853, %2571 : vector<4x12xi1>, vector<4x12xf32>
    %2855 = vector.broadcast %2847 : vector<4x1xf32> to vector<4x80xf32>
    %2856 = vector.broadcast %1 : vector<1x80xf32> to vector<4x80xf32>
    %2857 = arith.mulf %2855, %2856 : vector<4x80xf32>
    %2858 = arith.addf %2857, %7 : vector<4x80xf32>
    %2859 = vector.extract_strided_slice %2710 {offsets = [0, 0], sizes = [4, 1], strides = [1, 1]} : vector<4x20xf32> to vector<4x1xf32>
    %2860 = vector.extract_strided_slice %2 {offsets = [0, 0], sizes = [1, 80], strides = [1, 1]} : vector<20x80xf32> to vector<1x80xf32>
    %2861 = vector.broadcast %2859 : vector<4x1xf32> to vector<4x80xf32>
    %2862 = vector.broadcast %2860 : vector<1x80xf32> to vector<4x80xf32>
    %2863 = arith.mulf %2861, %2862 : vector<4x80xf32>
    %2864 = vector.extract_strided_slice %2710 {offsets = [0, 1], sizes = [4, 1], strides = [1, 1]} : vector<4x20xf32> to vector<4x1xf32>
    %2865 = vector.extract_strided_slice %2 {offsets = [1, 0], sizes = [1, 80], strides = [1, 1]} : vector<20x80xf32> to vector<1x80xf32>
    %2866 = vector.broadcast %2864 : vector<4x1xf32> to vector<4x80xf32>
    %2867 = vector.broadcast %2865 : vector<1x80xf32> to vector<4x80xf32>
    %2868 = arith.mulf %2866, %2867 : vector<4x80xf32>
    %2869 = vector.extract_strided_slice %2710 {offsets = [0, 2], sizes = [4, 1], strides = [1, 1]} : vector<4x20xf32> to vector<4x1xf32>
    %2870 = vector.extract_strided_slice %2 {offsets = [2, 0], sizes = [1, 80], strides = [1, 1]} : vector<20x80xf32> to vector<1x80xf32>
    %2871 = vector.broadcast %2869 : vector<4x1xf32> to vector<4x80xf32>
    %2872 = vector.broadcast %2870 : vector<1x80xf32> to vector<4x80xf32>
    %2873 = arith.mulf %2871, %2872 : vector<4x80xf32>
    %2874 = vector.extract_strided_slice %2710 {offsets = [0, 3], sizes = [4, 1], strides = [1, 1]} : vector<4x20xf32> to vector<4x1xf32>
    %2875 = vector.extract_strided_slice %2 {offsets = [3, 0], sizes = [1, 80], strides = [1, 1]} : vector<20x80xf32> to vector<1x80xf32>
    %2876 = vector.broadcast %2874 : vector<4x1xf32> to vector<4x80xf32>
    %2877 = vector.broadcast %2875 : vector<1x80xf32> to vector<4x80xf32>
    %2878 = arith.mulf %2876, %2877 : vector<4x80xf32>
    %2879 = vector.extract_strided_slice %2710 {offsets = [0, 4], sizes = [4, 1], strides = [1, 1]} : vector<4x20xf32> to vector<4x1xf32>
    %2880 = vector.extract_strided_slice %2 {offsets = [4, 0], sizes = [1, 80], strides = [1, 1]} : vector<20x80xf32> to vector<1x80xf32>
    %2881 = vector.broadcast %2879 : vector<4x1xf32> to vector<4x80xf32>
    %2882 = vector.broadcast %2880 : vector<1x80xf32> to vector<4x80xf32>
    %2883 = arith.mulf %2881, %2882 : vector<4x80xf32>
    %2884 = vector.extract_strided_slice %2710 {offsets = [0, 5], sizes = [4, 1], strides = [1, 1]} : vector<4x20xf32> to vector<4x1xf32>
    %2885 = vector.extract_strided_slice %2 {offsets = [5, 0], sizes = [1, 80], strides = [1, 1]} : vector<20x80xf32> to vector<1x80xf32>
    %2886 = vector.broadcast %2884 : vector<4x1xf32> to vector<4x80xf32>
    %2887 = vector.broadcast %2885 : vector<1x80xf32> to vector<4x80xf32>
    %2888 = arith.mulf %2886, %2887 : vector<4x80xf32>
    %2889 = vector.extract_strided_slice %2710 {offsets = [0, 6], sizes = [4, 1], strides = [1, 1]} : vector<4x20xf32> to vector<4x1xf32>
    %2890 = vector.extract_strided_slice %2 {offsets = [6, 0], sizes = [1, 80], strides = [1, 1]} : vector<20x80xf32> to vector<1x80xf32>
    %2891 = vector.broadcast %2889 : vector<4x1xf32> to vector<4x80xf32>
    %2892 = vector.broadcast %2890 : vector<1x80xf32> to vector<4x80xf32>
    %2893 = arith.mulf %2891, %2892 : vector<4x80xf32>
    %2894 = vector.extract_strided_slice %2710 {offsets = [0, 7], sizes = [4, 1], strides = [1, 1]} : vector<4x20xf32> to vector<4x1xf32>
    %2895 = vector.extract_strided_slice %2 {offsets = [7, 0], sizes = [1, 80], strides = [1, 1]} : vector<20x80xf32> to vector<1x80xf32>
    %2896 = vector.broadcast %2894 : vector<4x1xf32> to vector<4x80xf32>
    %2897 = vector.broadcast %2895 : vector<1x80xf32> to vector<4x80xf32>
    %2898 = arith.mulf %2896, %2897 : vector<4x80xf32>
    %2899 = vector.extract_strided_slice %2710 {offsets = [0, 8], sizes = [4, 1], strides = [1, 1]} : vector<4x20xf32> to vector<4x1xf32>
    %2900 = vector.extract_strided_slice %2 {offsets = [8, 0], sizes = [1, 80], strides = [1, 1]} : vector<20x80xf32> to vector<1x80xf32>
    %2901 = vector.broadcast %2899 : vector<4x1xf32> to vector<4x80xf32>
    %2902 = vector.broadcast %2900 : vector<1x80xf32> to vector<4x80xf32>
    %2903 = arith.mulf %2901, %2902 : vector<4x80xf32>
    %2904 = vector.extract_strided_slice %2710 {offsets = [0, 9], sizes = [4, 1], strides = [1, 1]} : vector<4x20xf32> to vector<4x1xf32>
    %2905 = vector.extract_strided_slice %2 {offsets = [9, 0], sizes = [1, 80], strides = [1, 1]} : vector<20x80xf32> to vector<1x80xf32>
    %2906 = vector.broadcast %2904 : vector<4x1xf32> to vector<4x80xf32>
    %2907 = vector.broadcast %2905 : vector<1x80xf32> to vector<4x80xf32>
    %2908 = arith.mulf %2906, %2907 : vector<4x80xf32>
    %2909 = vector.extract_strided_slice %2710 {offsets = [0, 10], sizes = [4, 1], strides = [1, 1]} : vector<4x20xf32> to vector<4x1xf32>
    %2910 = vector.extract_strided_slice %2 {offsets = [10, 0], sizes = [1, 80], strides = [1, 1]} : vector<20x80xf32> to vector<1x80xf32>
    %2911 = vector.broadcast %2909 : vector<4x1xf32> to vector<4x80xf32>
    %2912 = vector.broadcast %2910 : vector<1x80xf32> to vector<4x80xf32>
    %2913 = arith.mulf %2911, %2912 : vector<4x80xf32>
    %2914 = vector.extract_strided_slice %2710 {offsets = [0, 11], sizes = [4, 1], strides = [1, 1]} : vector<4x20xf32> to vector<4x1xf32>
    %2915 = vector.extract_strided_slice %2 {offsets = [11, 0], sizes = [1, 80], strides = [1, 1]} : vector<20x80xf32> to vector<1x80xf32>
    %2916 = vector.broadcast %2914 : vector<4x1xf32> to vector<4x80xf32>
    %2917 = vector.broadcast %2915 : vector<1x80xf32> to vector<4x80xf32>
    %2918 = arith.mulf %2916, %2917 : vector<4x80xf32>
    %2919 = vector.extract_strided_slice %2710 {offsets = [0, 12], sizes = [4, 1], strides = [1, 1]} : vector<4x20xf32> to vector<4x1xf32>
    %2920 = vector.extract_strided_slice %2 {offsets = [12, 0], sizes = [1, 80], strides = [1, 1]} : vector<20x80xf32> to vector<1x80xf32>
    %2921 = vector.broadcast %2919 : vector<4x1xf32> to vector<4x80xf32>
    %2922 = vector.broadcast %2920 : vector<1x80xf32> to vector<4x80xf32>
    %2923 = arith.mulf %2921, %2922 : vector<4x80xf32>
    %2924 = vector.extract_strided_slice %2710 {offsets = [0, 13], sizes = [4, 1], strides = [1, 1]} : vector<4x20xf32> to vector<4x1xf32>
    %2925 = vector.extract_strided_slice %2 {offsets = [13, 0], sizes = [1, 80], strides = [1, 1]} : vector<20x80xf32> to vector<1x80xf32>
    %2926 = vector.broadcast %2924 : vector<4x1xf32> to vector<4x80xf32>
    %2927 = vector.broadcast %2925 : vector<1x80xf32> to vector<4x80xf32>
    %2928 = arith.mulf %2926, %2927 : vector<4x80xf32>
    %2929 = vector.extract_strided_slice %2710 {offsets = [0, 14], sizes = [4, 1], strides = [1, 1]} : vector<4x20xf32> to vector<4x1xf32>
    %2930 = vector.extract_strided_slice %2 {offsets = [14, 0], sizes = [1, 80], strides = [1, 1]} : vector<20x80xf32> to vector<1x80xf32>
    %2931 = vector.broadcast %2929 : vector<4x1xf32> to vector<4x80xf32>
    %2932 = vector.broadcast %2930 : vector<1x80xf32> to vector<4x80xf32>
    %2933 = arith.mulf %2931, %2932 : vector<4x80xf32>
    %2934 = vector.extract_strided_slice %2710 {offsets = [0, 15], sizes = [4, 1], strides = [1, 1]} : vector<4x20xf32> to vector<4x1xf32>
    %2935 = vector.extract_strided_slice %2 {offsets = [15, 0], sizes = [1, 80], strides = [1, 1]} : vector<20x80xf32> to vector<1x80xf32>
    %2936 = vector.broadcast %2934 : vector<4x1xf32> to vector<4x80xf32>
    %2937 = vector.broadcast %2935 : vector<1x80xf32> to vector<4x80xf32>
    %2938 = arith.mulf %2936, %2937 : vector<4x80xf32>
    %2939 = vector.extract_strided_slice %2710 {offsets = [0, 16], sizes = [4, 1], strides = [1, 1]} : vector<4x20xf32> to vector<4x1xf32>
    %2940 = vector.extract_strided_slice %2 {offsets = [16, 0], sizes = [1, 80], strides = [1, 1]} : vector<20x80xf32> to vector<1x80xf32>
    %2941 = vector.broadcast %2939 : vector<4x1xf32> to vector<4x80xf32>
    %2942 = vector.broadcast %2940 : vector<1x80xf32> to vector<4x80xf32>
    %2943 = arith.mulf %2941, %2942 : vector<4x80xf32>
    %2944 = vector.extract_strided_slice %2710 {offsets = [0, 17], sizes = [4, 1], strides = [1, 1]} : vector<4x20xf32> to vector<4x1xf32>
    %2945 = vector.extract_strided_slice %2 {offsets = [17, 0], sizes = [1, 80], strides = [1, 1]} : vector<20x80xf32> to vector<1x80xf32>
    %2946 = vector.broadcast %2944 : vector<4x1xf32> to vector<4x80xf32>
    %2947 = vector.broadcast %2945 : vector<1x80xf32> to vector<4x80xf32>
    %2948 = arith.mulf %2946, %2947 : vector<4x80xf32>
    %2949 = vector.extract_strided_slice %2710 {offsets = [0, 18], sizes = [4, 1], strides = [1, 1]} : vector<4x20xf32> to vector<4x1xf32>
    %2950 = vector.extract_strided_slice %2 {offsets = [18, 0], sizes = [1, 80], strides = [1, 1]} : vector<20x80xf32> to vector<1x80xf32>
    %2951 = vector.broadcast %2949 : vector<4x1xf32> to vector<4x80xf32>
    %2952 = vector.broadcast %2950 : vector<1x80xf32> to vector<4x80xf32>
    %2953 = arith.mulf %2951, %2952 : vector<4x80xf32>
    %2954 = vector.extract_strided_slice %2710 {offsets = [0, 19], sizes = [4, 1], strides = [1, 1]} : vector<4x20xf32> to vector<4x1xf32>
    %2955 = vector.extract_strided_slice %2 {offsets = [19, 0], sizes = [1, 80], strides = [1, 1]} : vector<20x80xf32> to vector<1x80xf32>
    %2956 = vector.broadcast %2954 : vector<4x1xf32> to vector<4x80xf32>
    %2957 = vector.broadcast %2955 : vector<1x80xf32> to vector<4x80xf32>
    %2958 = arith.mulf %2956, %2957 : vector<4x80xf32>
    %2959 = arith.addf %2863, %2868 : vector<4x80xf32>
    %2960 = arith.addf %2873, %2878 : vector<4x80xf32>
    %2961 = arith.addf %2883, %2888 : vector<4x80xf32>
    %2962 = arith.addf %2893, %2898 : vector<4x80xf32>
    %2963 = arith.addf %2903, %2908 : vector<4x80xf32>
    %2964 = arith.addf %2913, %2918 : vector<4x80xf32>
    %2965 = arith.addf %2923, %2928 : vector<4x80xf32>
    %2966 = arith.addf %2933, %2938 : vector<4x80xf32>
    %2967 = arith.addf %2943, %2948 : vector<4x80xf32>
    %2968 = arith.addf %2953, %2958 : vector<4x80xf32>
    %2969 = arith.addf %2959, %2960 : vector<4x80xf32>
    %2970 = arith.addf %2961, %2962 : vector<4x80xf32>
    %2971 = arith.addf %2963, %2964 : vector<4x80xf32>
    %2972 = arith.addf %2965, %2966 : vector<4x80xf32>
    %2973 = arith.addf %2967, %2968 : vector<4x80xf32>
    %2974 = arith.addf %2969, %2970 : vector<4x80xf32>
    %2975 = arith.addf %2971, %2972 : vector<4x80xf32>
    %2976 = arith.addf %2974, %2975 : vector<4x80xf32>
    %2977 = arith.addf %2976, %2973 : vector<4x80xf32>
    %2978 = arith.addf %2858, %2977 : vector<4x80xf32>
    %2979 = arith.negf %2978 : vector<4x80xf32>
    %2980 = math.exp %2979 : vector<4x80xf32>
    %cst_37 = arith.constant 1.000000e+00 : f32
    %2981 = vector.broadcast %cst_37 : f32 to vector<4x80xf32>
    %2982 = arith.addf %2981, %2980 : vector<4x80xf32>
    %2983 = arith.divf %2981, %2982 : vector<4x80xf32>
    %2984 = math.tanh %2978 : vector<4x80xf32>
    %2985 = vector.extract_strided_slice %2983 {offsets = [0, 0], sizes = [4, 20], strides = [1, 1]} : vector<4x80xf32> to vector<4x20xf32>
    %2986 = vector.extract_strided_slice %2983 {offsets = [0, 20], sizes = [4, 20], strides = [1, 1]} : vector<4x80xf32> to vector<4x20xf32>
    %2987 = vector.extract_strided_slice %2984 {offsets = [0, 40], sizes = [4, 20], strides = [1, 1]} : vector<4x80xf32> to vector<4x20xf32>
    %2988 = vector.extract_strided_slice %2983 {offsets = [0, 60], sizes = [4, 20], strides = [1, 1]} : vector<4x80xf32> to vector<4x20xf32>
    %2989 = arith.mulf %2986, %2708 : vector<4x20xf32>
    %2990 = arith.mulf %2985, %2987 : vector<4x20xf32>
    %2991 = arith.addf %2989, %2990 : vector<4x20xf32>
    %2992 = math.tanh %2991 : vector<4x20xf32>
    %2993 = arith.mulf %2988, %2992 : vector<4x20xf32>
    %2994 = vector.extract_strided_slice %2991 {offsets = [0, 0], sizes = [4, 1], strides = [1, 1]} : vector<4x20xf32> to vector<4x1xf32>
    %2995 = vector.extract_strided_slice %3 {offsets = [0, 0], sizes = [1, 4], strides = [1, 1]} : vector<20x4xf32> to vector<1x4xf32>
    %2996 = vector.broadcast %2994 : vector<4x1xf32> to vector<4x4xf32>
    %2997 = vector.broadcast %2995 : vector<1x4xf32> to vector<4x4xf32>
    %2998 = arith.mulf %2996, %2997 : vector<4x4xf32>
    %2999 = vector.extract_strided_slice %2991 {offsets = [0, 1], sizes = [4, 1], strides = [1, 1]} : vector<4x20xf32> to vector<4x1xf32>
    %3000 = vector.extract_strided_slice %3 {offsets = [1, 0], sizes = [1, 4], strides = [1, 1]} : vector<20x4xf32> to vector<1x4xf32>
    %3001 = vector.broadcast %2999 : vector<4x1xf32> to vector<4x4xf32>
    %3002 = vector.broadcast %3000 : vector<1x4xf32> to vector<4x4xf32>
    %3003 = arith.mulf %3001, %3002 : vector<4x4xf32>
    %3004 = vector.extract_strided_slice %2991 {offsets = [0, 2], sizes = [4, 1], strides = [1, 1]} : vector<4x20xf32> to vector<4x1xf32>
    %3005 = vector.extract_strided_slice %3 {offsets = [2, 0], sizes = [1, 4], strides = [1, 1]} : vector<20x4xf32> to vector<1x4xf32>
    %3006 = vector.broadcast %3004 : vector<4x1xf32> to vector<4x4xf32>
    %3007 = vector.broadcast %3005 : vector<1x4xf32> to vector<4x4xf32>
    %3008 = arith.mulf %3006, %3007 : vector<4x4xf32>
    %3009 = vector.extract_strided_slice %2991 {offsets = [0, 3], sizes = [4, 1], strides = [1, 1]} : vector<4x20xf32> to vector<4x1xf32>
    %3010 = vector.extract_strided_slice %3 {offsets = [3, 0], sizes = [1, 4], strides = [1, 1]} : vector<20x4xf32> to vector<1x4xf32>
    %3011 = vector.broadcast %3009 : vector<4x1xf32> to vector<4x4xf32>
    %3012 = vector.broadcast %3010 : vector<1x4xf32> to vector<4x4xf32>
    %3013 = arith.mulf %3011, %3012 : vector<4x4xf32>
    %3014 = vector.extract_strided_slice %2991 {offsets = [0, 4], sizes = [4, 1], strides = [1, 1]} : vector<4x20xf32> to vector<4x1xf32>
    %3015 = vector.extract_strided_slice %3 {offsets = [4, 0], sizes = [1, 4], strides = [1, 1]} : vector<20x4xf32> to vector<1x4xf32>
    %3016 = vector.broadcast %3014 : vector<4x1xf32> to vector<4x4xf32>
    %3017 = vector.broadcast %3015 : vector<1x4xf32> to vector<4x4xf32>
    %3018 = arith.mulf %3016, %3017 : vector<4x4xf32>
    %3019 = vector.extract_strided_slice %2991 {offsets = [0, 5], sizes = [4, 1], strides = [1, 1]} : vector<4x20xf32> to vector<4x1xf32>
    %3020 = vector.extract_strided_slice %3 {offsets = [5, 0], sizes = [1, 4], strides = [1, 1]} : vector<20x4xf32> to vector<1x4xf32>
    %3021 = vector.broadcast %3019 : vector<4x1xf32> to vector<4x4xf32>
    %3022 = vector.broadcast %3020 : vector<1x4xf32> to vector<4x4xf32>
    %3023 = arith.mulf %3021, %3022 : vector<4x4xf32>
    %3024 = vector.extract_strided_slice %2991 {offsets = [0, 6], sizes = [4, 1], strides = [1, 1]} : vector<4x20xf32> to vector<4x1xf32>
    %3025 = vector.extract_strided_slice %3 {offsets = [6, 0], sizes = [1, 4], strides = [1, 1]} : vector<20x4xf32> to vector<1x4xf32>
    %3026 = vector.broadcast %3024 : vector<4x1xf32> to vector<4x4xf32>
    %3027 = vector.broadcast %3025 : vector<1x4xf32> to vector<4x4xf32>
    %3028 = arith.mulf %3026, %3027 : vector<4x4xf32>
    %3029 = vector.extract_strided_slice %2991 {offsets = [0, 7], sizes = [4, 1], strides = [1, 1]} : vector<4x20xf32> to vector<4x1xf32>
    %3030 = vector.extract_strided_slice %3 {offsets = [7, 0], sizes = [1, 4], strides = [1, 1]} : vector<20x4xf32> to vector<1x4xf32>
    %3031 = vector.broadcast %3029 : vector<4x1xf32> to vector<4x4xf32>
    %3032 = vector.broadcast %3030 : vector<1x4xf32> to vector<4x4xf32>
    %3033 = arith.mulf %3031, %3032 : vector<4x4xf32>
    %3034 = vector.extract_strided_slice %2991 {offsets = [0, 8], sizes = [4, 1], strides = [1, 1]} : vector<4x20xf32> to vector<4x1xf32>
    %3035 = vector.extract_strided_slice %3 {offsets = [8, 0], sizes = [1, 4], strides = [1, 1]} : vector<20x4xf32> to vector<1x4xf32>
    %3036 = vector.broadcast %3034 : vector<4x1xf32> to vector<4x4xf32>
    %3037 = vector.broadcast %3035 : vector<1x4xf32> to vector<4x4xf32>
    %3038 = arith.mulf %3036, %3037 : vector<4x4xf32>
    %3039 = vector.extract_strided_slice %2991 {offsets = [0, 9], sizes = [4, 1], strides = [1, 1]} : vector<4x20xf32> to vector<4x1xf32>
    %3040 = vector.extract_strided_slice %3 {offsets = [9, 0], sizes = [1, 4], strides = [1, 1]} : vector<20x4xf32> to vector<1x4xf32>
    %3041 = vector.broadcast %3039 : vector<4x1xf32> to vector<4x4xf32>
    %3042 = vector.broadcast %3040 : vector<1x4xf32> to vector<4x4xf32>
    %3043 = arith.mulf %3041, %3042 : vector<4x4xf32>
    %3044 = vector.extract_strided_slice %2991 {offsets = [0, 10], sizes = [4, 1], strides = [1, 1]} : vector<4x20xf32> to vector<4x1xf32>
    %3045 = vector.extract_strided_slice %3 {offsets = [10, 0], sizes = [1, 4], strides = [1, 1]} : vector<20x4xf32> to vector<1x4xf32>
    %3046 = vector.broadcast %3044 : vector<4x1xf32> to vector<4x4xf32>
    %3047 = vector.broadcast %3045 : vector<1x4xf32> to vector<4x4xf32>
    %3048 = arith.mulf %3046, %3047 : vector<4x4xf32>
    %3049 = vector.extract_strided_slice %2991 {offsets = [0, 11], sizes = [4, 1], strides = [1, 1]} : vector<4x20xf32> to vector<4x1xf32>
    %3050 = vector.extract_strided_slice %3 {offsets = [11, 0], sizes = [1, 4], strides = [1, 1]} : vector<20x4xf32> to vector<1x4xf32>
    %3051 = vector.broadcast %3049 : vector<4x1xf32> to vector<4x4xf32>
    %3052 = vector.broadcast %3050 : vector<1x4xf32> to vector<4x4xf32>
    %3053 = arith.mulf %3051, %3052 : vector<4x4xf32>
    %3054 = vector.extract_strided_slice %2991 {offsets = [0, 12], sizes = [4, 1], strides = [1, 1]} : vector<4x20xf32> to vector<4x1xf32>
    %3055 = vector.extract_strided_slice %3 {offsets = [12, 0], sizes = [1, 4], strides = [1, 1]} : vector<20x4xf32> to vector<1x4xf32>
    %3056 = vector.broadcast %3054 : vector<4x1xf32> to vector<4x4xf32>
    %3057 = vector.broadcast %3055 : vector<1x4xf32> to vector<4x4xf32>
    %3058 = arith.mulf %3056, %3057 : vector<4x4xf32>
    %3059 = vector.extract_strided_slice %2991 {offsets = [0, 13], sizes = [4, 1], strides = [1, 1]} : vector<4x20xf32> to vector<4x1xf32>
    %3060 = vector.extract_strided_slice %3 {offsets = [13, 0], sizes = [1, 4], strides = [1, 1]} : vector<20x4xf32> to vector<1x4xf32>
    %3061 = vector.broadcast %3059 : vector<4x1xf32> to vector<4x4xf32>
    %3062 = vector.broadcast %3060 : vector<1x4xf32> to vector<4x4xf32>
    %3063 = arith.mulf %3061, %3062 : vector<4x4xf32>
    %3064 = vector.extract_strided_slice %2991 {offsets = [0, 14], sizes = [4, 1], strides = [1, 1]} : vector<4x20xf32> to vector<4x1xf32>
    %3065 = vector.extract_strided_slice %3 {offsets = [14, 0], sizes = [1, 4], strides = [1, 1]} : vector<20x4xf32> to vector<1x4xf32>
    %3066 = vector.broadcast %3064 : vector<4x1xf32> to vector<4x4xf32>
    %3067 = vector.broadcast %3065 : vector<1x4xf32> to vector<4x4xf32>
    %3068 = arith.mulf %3066, %3067 : vector<4x4xf32>
    %3069 = vector.extract_strided_slice %2991 {offsets = [0, 15], sizes = [4, 1], strides = [1, 1]} : vector<4x20xf32> to vector<4x1xf32>
    %3070 = vector.extract_strided_slice %3 {offsets = [15, 0], sizes = [1, 4], strides = [1, 1]} : vector<20x4xf32> to vector<1x4xf32>
    %3071 = vector.broadcast %3069 : vector<4x1xf32> to vector<4x4xf32>
    %3072 = vector.broadcast %3070 : vector<1x4xf32> to vector<4x4xf32>
    %3073 = arith.mulf %3071, %3072 : vector<4x4xf32>
    %3074 = vector.extract_strided_slice %2991 {offsets = [0, 16], sizes = [4, 1], strides = [1, 1]} : vector<4x20xf32> to vector<4x1xf32>
    %3075 = vector.extract_strided_slice %3 {offsets = [16, 0], sizes = [1, 4], strides = [1, 1]} : vector<20x4xf32> to vector<1x4xf32>
    %3076 = vector.broadcast %3074 : vector<4x1xf32> to vector<4x4xf32>
    %3077 = vector.broadcast %3075 : vector<1x4xf32> to vector<4x4xf32>
    %3078 = arith.mulf %3076, %3077 : vector<4x4xf32>
    %3079 = vector.extract_strided_slice %2991 {offsets = [0, 17], sizes = [4, 1], strides = [1, 1]} : vector<4x20xf32> to vector<4x1xf32>
    %3080 = vector.extract_strided_slice %3 {offsets = [17, 0], sizes = [1, 4], strides = [1, 1]} : vector<20x4xf32> to vector<1x4xf32>
    %3081 = vector.broadcast %3079 : vector<4x1xf32> to vector<4x4xf32>
    %3082 = vector.broadcast %3080 : vector<1x4xf32> to vector<4x4xf32>
    %3083 = arith.mulf %3081, %3082 : vector<4x4xf32>
    %3084 = vector.extract_strided_slice %2991 {offsets = [0, 18], sizes = [4, 1], strides = [1, 1]} : vector<4x20xf32> to vector<4x1xf32>
    %3085 = vector.extract_strided_slice %3 {offsets = [18, 0], sizes = [1, 4], strides = [1, 1]} : vector<20x4xf32> to vector<1x4xf32>
    %3086 = vector.broadcast %3084 : vector<4x1xf32> to vector<4x4xf32>
    %3087 = vector.broadcast %3085 : vector<1x4xf32> to vector<4x4xf32>
    %3088 = arith.mulf %3086, %3087 : vector<4x4xf32>
    %3089 = vector.extract_strided_slice %2991 {offsets = [0, 19], sizes = [4, 1], strides = [1, 1]} : vector<4x20xf32> to vector<4x1xf32>
    %3090 = vector.extract_strided_slice %3 {offsets = [19, 0], sizes = [1, 4], strides = [1, 1]} : vector<20x4xf32> to vector<1x4xf32>
    %3091 = vector.broadcast %3089 : vector<4x1xf32> to vector<4x4xf32>
    %3092 = vector.broadcast %3090 : vector<1x4xf32> to vector<4x4xf32>
    %3093 = arith.mulf %3091, %3092 : vector<4x4xf32>
    %3094 = arith.addf %2998, %3003 : vector<4x4xf32>
    %3095 = arith.addf %3008, %3013 : vector<4x4xf32>
    %3096 = arith.addf %3018, %3023 : vector<4x4xf32>
    %3097 = arith.addf %3028, %3033 : vector<4x4xf32>
    %3098 = arith.addf %3038, %3043 : vector<4x4xf32>
    %3099 = arith.addf %3048, %3053 : vector<4x4xf32>
    %3100 = arith.addf %3058, %3063 : vector<4x4xf32>
    %3101 = arith.addf %3068, %3073 : vector<4x4xf32>
    %3102 = arith.addf %3078, %3083 : vector<4x4xf32>
    %3103 = arith.addf %3088, %3093 : vector<4x4xf32>
    %3104 = arith.addf %3094, %3095 : vector<4x4xf32>
    %3105 = arith.addf %3096, %3097 : vector<4x4xf32>
    %3106 = arith.addf %3098, %3099 : vector<4x4xf32>
    %3107 = arith.addf %3100, %3101 : vector<4x4xf32>
    %3108 = arith.addf %3102, %3103 : vector<4x4xf32>
    %3109 = arith.addf %3104, %3105 : vector<4x4xf32>
    %3110 = arith.addf %3106, %3107 : vector<4x4xf32>
    %3111 = arith.addf %3109, %3110 : vector<4x4xf32>
    %3112 = arith.addf %3111, %3108 : vector<4x4xf32>
    %3113 = arith.addf %3112, %10 : vector<4x4xf32>
    %3114 = vector.broadcast %2849 : vector<4x1xf32> to vector<4x4xf32>
    %3115 = vector.broadcast %4 : vector<1x4xf32> to vector<4x4xf32>
    %3116 = arith.mulf %3114, %3115 : vector<4x4xf32>
    %3117 = arith.addf %3113, %3116 : vector<4x4xf32>
    %3118 = arith.negf %3117 : vector<4x4xf32>
    %3119 = math.exp %3118 : vector<4x4xf32>
    %cst_38 = arith.constant 1.000000e+00 : f32
    %3120 = vector.broadcast %cst_38 : f32 to vector<4x4xf32>
    %3121 = arith.addf %3120, %3119 : vector<4x4xf32>
    %3122 = arith.divf %3120, %3121 : vector<4x4xf32>
    %3123 = math.tanh %3117 : vector<4x4xf32>
    %3124 = vector.extract_strided_slice %3122 {offsets = [0, 0], sizes = [4, 1], strides = [1, 1]} : vector<4x4xf32> to vector<4x1xf32>
    %3125 = vector.extract_strided_slice %3122 {offsets = [0, 1], sizes = [4, 1], strides = [1, 1]} : vector<4x4xf32> to vector<4x1xf32>
    %3126 = vector.extract_strided_slice %3123 {offsets = [0, 2], sizes = [4, 1], strides = [1, 1]} : vector<4x4xf32> to vector<4x1xf32>
    %3127 = vector.extract_strided_slice %3122 {offsets = [0, 3], sizes = [4, 1], strides = [1, 1]} : vector<4x4xf32> to vector<4x1xf32>
    %3128 = arith.mulf %3125, %2847 : vector<4x1xf32>
    %3129 = arith.mulf %3124, %3126 : vector<4x1xf32>
    %3130 = arith.addf %3128, %3129 : vector<4x1xf32>
    %3131 = math.tanh %3130 : vector<4x1xf32>
    %3132 = arith.mulf %3127, %3131 : vector<4x1xf32>
    %c10_i32 = arith.constant 10 : i32
    %3133 = vector.broadcast %c10_i32 : i32 to vector<4x12xi32>
    %3134 = arith.cmpi eq, %11, %3133 : vector<4x12xi32>
    %3135 = vector.shape_cast %3130 : vector<4x1xf32> to vector<4x1xf32>
    %3136 = vector.broadcast %3135 : vector<4x1xf32> to vector<4x12xf32>
    %3137 = arith.select %3134, %3136, %2854 : vector<4x12xi1>, vector<4x12xf32>
    %3138 = vector.broadcast %3130 : vector<4x1xf32> to vector<4x80xf32>
    %3139 = vector.broadcast %1 : vector<1x80xf32> to vector<4x80xf32>
    %3140 = arith.mulf %3138, %3139 : vector<4x80xf32>
    %3141 = arith.addf %3140, %7 : vector<4x80xf32>
    %3142 = vector.extract_strided_slice %2993 {offsets = [0, 0], sizes = [4, 1], strides = [1, 1]} : vector<4x20xf32> to vector<4x1xf32>
    %3143 = vector.extract_strided_slice %2 {offsets = [0, 0], sizes = [1, 80], strides = [1, 1]} : vector<20x80xf32> to vector<1x80xf32>
    %3144 = vector.broadcast %3142 : vector<4x1xf32> to vector<4x80xf32>
    %3145 = vector.broadcast %3143 : vector<1x80xf32> to vector<4x80xf32>
    %3146 = arith.mulf %3144, %3145 : vector<4x80xf32>
    %3147 = vector.extract_strided_slice %2993 {offsets = [0, 1], sizes = [4, 1], strides = [1, 1]} : vector<4x20xf32> to vector<4x1xf32>
    %3148 = vector.extract_strided_slice %2 {offsets = [1, 0], sizes = [1, 80], strides = [1, 1]} : vector<20x80xf32> to vector<1x80xf32>
    %3149 = vector.broadcast %3147 : vector<4x1xf32> to vector<4x80xf32>
    %3150 = vector.broadcast %3148 : vector<1x80xf32> to vector<4x80xf32>
    %3151 = arith.mulf %3149, %3150 : vector<4x80xf32>
    %3152 = vector.extract_strided_slice %2993 {offsets = [0, 2], sizes = [4, 1], strides = [1, 1]} : vector<4x20xf32> to vector<4x1xf32>
    %3153 = vector.extract_strided_slice %2 {offsets = [2, 0], sizes = [1, 80], strides = [1, 1]} : vector<20x80xf32> to vector<1x80xf32>
    %3154 = vector.broadcast %3152 : vector<4x1xf32> to vector<4x80xf32>
    %3155 = vector.broadcast %3153 : vector<1x80xf32> to vector<4x80xf32>
    %3156 = arith.mulf %3154, %3155 : vector<4x80xf32>
    %3157 = vector.extract_strided_slice %2993 {offsets = [0, 3], sizes = [4, 1], strides = [1, 1]} : vector<4x20xf32> to vector<4x1xf32>
    %3158 = vector.extract_strided_slice %2 {offsets = [3, 0], sizes = [1, 80], strides = [1, 1]} : vector<20x80xf32> to vector<1x80xf32>
    %3159 = vector.broadcast %3157 : vector<4x1xf32> to vector<4x80xf32>
    %3160 = vector.broadcast %3158 : vector<1x80xf32> to vector<4x80xf32>
    %3161 = arith.mulf %3159, %3160 : vector<4x80xf32>
    %3162 = vector.extract_strided_slice %2993 {offsets = [0, 4], sizes = [4, 1], strides = [1, 1]} : vector<4x20xf32> to vector<4x1xf32>
    %3163 = vector.extract_strided_slice %2 {offsets = [4, 0], sizes = [1, 80], strides = [1, 1]} : vector<20x80xf32> to vector<1x80xf32>
    %3164 = vector.broadcast %3162 : vector<4x1xf32> to vector<4x80xf32>
    %3165 = vector.broadcast %3163 : vector<1x80xf32> to vector<4x80xf32>
    %3166 = arith.mulf %3164, %3165 : vector<4x80xf32>
    %3167 = vector.extract_strided_slice %2993 {offsets = [0, 5], sizes = [4, 1], strides = [1, 1]} : vector<4x20xf32> to vector<4x1xf32>
    %3168 = vector.extract_strided_slice %2 {offsets = [5, 0], sizes = [1, 80], strides = [1, 1]} : vector<20x80xf32> to vector<1x80xf32>
    %3169 = vector.broadcast %3167 : vector<4x1xf32> to vector<4x80xf32>
    %3170 = vector.broadcast %3168 : vector<1x80xf32> to vector<4x80xf32>
    %3171 = arith.mulf %3169, %3170 : vector<4x80xf32>
    %3172 = vector.extract_strided_slice %2993 {offsets = [0, 6], sizes = [4, 1], strides = [1, 1]} : vector<4x20xf32> to vector<4x1xf32>
    %3173 = vector.extract_strided_slice %2 {offsets = [6, 0], sizes = [1, 80], strides = [1, 1]} : vector<20x80xf32> to vector<1x80xf32>
    %3174 = vector.broadcast %3172 : vector<4x1xf32> to vector<4x80xf32>
    %3175 = vector.broadcast %3173 : vector<1x80xf32> to vector<4x80xf32>
    %3176 = arith.mulf %3174, %3175 : vector<4x80xf32>
    %3177 = vector.extract_strided_slice %2993 {offsets = [0, 7], sizes = [4, 1], strides = [1, 1]} : vector<4x20xf32> to vector<4x1xf32>
    %3178 = vector.extract_strided_slice %2 {offsets = [7, 0], sizes = [1, 80], strides = [1, 1]} : vector<20x80xf32> to vector<1x80xf32>
    %3179 = vector.broadcast %3177 : vector<4x1xf32> to vector<4x80xf32>
    %3180 = vector.broadcast %3178 : vector<1x80xf32> to vector<4x80xf32>
    %3181 = arith.mulf %3179, %3180 : vector<4x80xf32>
    %3182 = vector.extract_strided_slice %2993 {offsets = [0, 8], sizes = [4, 1], strides = [1, 1]} : vector<4x20xf32> to vector<4x1xf32>
    %3183 = vector.extract_strided_slice %2 {offsets = [8, 0], sizes = [1, 80], strides = [1, 1]} : vector<20x80xf32> to vector<1x80xf32>
    %3184 = vector.broadcast %3182 : vector<4x1xf32> to vector<4x80xf32>
    %3185 = vector.broadcast %3183 : vector<1x80xf32> to vector<4x80xf32>
    %3186 = arith.mulf %3184, %3185 : vector<4x80xf32>
    %3187 = vector.extract_strided_slice %2993 {offsets = [0, 9], sizes = [4, 1], strides = [1, 1]} : vector<4x20xf32> to vector<4x1xf32>
    %3188 = vector.extract_strided_slice %2 {offsets = [9, 0], sizes = [1, 80], strides = [1, 1]} : vector<20x80xf32> to vector<1x80xf32>
    %3189 = vector.broadcast %3187 : vector<4x1xf32> to vector<4x80xf32>
    %3190 = vector.broadcast %3188 : vector<1x80xf32> to vector<4x80xf32>
    %3191 = arith.mulf %3189, %3190 : vector<4x80xf32>
    %3192 = vector.extract_strided_slice %2993 {offsets = [0, 10], sizes = [4, 1], strides = [1, 1]} : vector<4x20xf32> to vector<4x1xf32>
    %3193 = vector.extract_strided_slice %2 {offsets = [10, 0], sizes = [1, 80], strides = [1, 1]} : vector<20x80xf32> to vector<1x80xf32>
    %3194 = vector.broadcast %3192 : vector<4x1xf32> to vector<4x80xf32>
    %3195 = vector.broadcast %3193 : vector<1x80xf32> to vector<4x80xf32>
    %3196 = arith.mulf %3194, %3195 : vector<4x80xf32>
    %3197 = vector.extract_strided_slice %2993 {offsets = [0, 11], sizes = [4, 1], strides = [1, 1]} : vector<4x20xf32> to vector<4x1xf32>
    %3198 = vector.extract_strided_slice %2 {offsets = [11, 0], sizes = [1, 80], strides = [1, 1]} : vector<20x80xf32> to vector<1x80xf32>
    %3199 = vector.broadcast %3197 : vector<4x1xf32> to vector<4x80xf32>
    %3200 = vector.broadcast %3198 : vector<1x80xf32> to vector<4x80xf32>
    %3201 = arith.mulf %3199, %3200 : vector<4x80xf32>
    %3202 = vector.extract_strided_slice %2993 {offsets = [0, 12], sizes = [4, 1], strides = [1, 1]} : vector<4x20xf32> to vector<4x1xf32>
    %3203 = vector.extract_strided_slice %2 {offsets = [12, 0], sizes = [1, 80], strides = [1, 1]} : vector<20x80xf32> to vector<1x80xf32>
    %3204 = vector.broadcast %3202 : vector<4x1xf32> to vector<4x80xf32>
    %3205 = vector.broadcast %3203 : vector<1x80xf32> to vector<4x80xf32>
    %3206 = arith.mulf %3204, %3205 : vector<4x80xf32>
    %3207 = vector.extract_strided_slice %2993 {offsets = [0, 13], sizes = [4, 1], strides = [1, 1]} : vector<4x20xf32> to vector<4x1xf32>
    %3208 = vector.extract_strided_slice %2 {offsets = [13, 0], sizes = [1, 80], strides = [1, 1]} : vector<20x80xf32> to vector<1x80xf32>
    %3209 = vector.broadcast %3207 : vector<4x1xf32> to vector<4x80xf32>
    %3210 = vector.broadcast %3208 : vector<1x80xf32> to vector<4x80xf32>
    %3211 = arith.mulf %3209, %3210 : vector<4x80xf32>
    %3212 = vector.extract_strided_slice %2993 {offsets = [0, 14], sizes = [4, 1], strides = [1, 1]} : vector<4x20xf32> to vector<4x1xf32>
    %3213 = vector.extract_strided_slice %2 {offsets = [14, 0], sizes = [1, 80], strides = [1, 1]} : vector<20x80xf32> to vector<1x80xf32>
    %3214 = vector.broadcast %3212 : vector<4x1xf32> to vector<4x80xf32>
    %3215 = vector.broadcast %3213 : vector<1x80xf32> to vector<4x80xf32>
    %3216 = arith.mulf %3214, %3215 : vector<4x80xf32>
    %3217 = vector.extract_strided_slice %2993 {offsets = [0, 15], sizes = [4, 1], strides = [1, 1]} : vector<4x20xf32> to vector<4x1xf32>
    %3218 = vector.extract_strided_slice %2 {offsets = [15, 0], sizes = [1, 80], strides = [1, 1]} : vector<20x80xf32> to vector<1x80xf32>
    %3219 = vector.broadcast %3217 : vector<4x1xf32> to vector<4x80xf32>
    %3220 = vector.broadcast %3218 : vector<1x80xf32> to vector<4x80xf32>
    %3221 = arith.mulf %3219, %3220 : vector<4x80xf32>
    %3222 = vector.extract_strided_slice %2993 {offsets = [0, 16], sizes = [4, 1], strides = [1, 1]} : vector<4x20xf32> to vector<4x1xf32>
    %3223 = vector.extract_strided_slice %2 {offsets = [16, 0], sizes = [1, 80], strides = [1, 1]} : vector<20x80xf32> to vector<1x80xf32>
    %3224 = vector.broadcast %3222 : vector<4x1xf32> to vector<4x80xf32>
    %3225 = vector.broadcast %3223 : vector<1x80xf32> to vector<4x80xf32>
    %3226 = arith.mulf %3224, %3225 : vector<4x80xf32>
    %3227 = vector.extract_strided_slice %2993 {offsets = [0, 17], sizes = [4, 1], strides = [1, 1]} : vector<4x20xf32> to vector<4x1xf32>
    %3228 = vector.extract_strided_slice %2 {offsets = [17, 0], sizes = [1, 80], strides = [1, 1]} : vector<20x80xf32> to vector<1x80xf32>
    %3229 = vector.broadcast %3227 : vector<4x1xf32> to vector<4x80xf32>
    %3230 = vector.broadcast %3228 : vector<1x80xf32> to vector<4x80xf32>
    %3231 = arith.mulf %3229, %3230 : vector<4x80xf32>
    %3232 = vector.extract_strided_slice %2993 {offsets = [0, 18], sizes = [4, 1], strides = [1, 1]} : vector<4x20xf32> to vector<4x1xf32>
    %3233 = vector.extract_strided_slice %2 {offsets = [18, 0], sizes = [1, 80], strides = [1, 1]} : vector<20x80xf32> to vector<1x80xf32>
    %3234 = vector.broadcast %3232 : vector<4x1xf32> to vector<4x80xf32>
    %3235 = vector.broadcast %3233 : vector<1x80xf32> to vector<4x80xf32>
    %3236 = arith.mulf %3234, %3235 : vector<4x80xf32>
    %3237 = vector.extract_strided_slice %2993 {offsets = [0, 19], sizes = [4, 1], strides = [1, 1]} : vector<4x20xf32> to vector<4x1xf32>
    %3238 = vector.extract_strided_slice %2 {offsets = [19, 0], sizes = [1, 80], strides = [1, 1]} : vector<20x80xf32> to vector<1x80xf32>
    %3239 = vector.broadcast %3237 : vector<4x1xf32> to vector<4x80xf32>
    %3240 = vector.broadcast %3238 : vector<1x80xf32> to vector<4x80xf32>
    %3241 = arith.mulf %3239, %3240 : vector<4x80xf32>
    %3242 = arith.addf %3146, %3151 : vector<4x80xf32>
    %3243 = arith.addf %3156, %3161 : vector<4x80xf32>
    %3244 = arith.addf %3166, %3171 : vector<4x80xf32>
    %3245 = arith.addf %3176, %3181 : vector<4x80xf32>
    %3246 = arith.addf %3186, %3191 : vector<4x80xf32>
    %3247 = arith.addf %3196, %3201 : vector<4x80xf32>
    %3248 = arith.addf %3206, %3211 : vector<4x80xf32>
    %3249 = arith.addf %3216, %3221 : vector<4x80xf32>
    %3250 = arith.addf %3226, %3231 : vector<4x80xf32>
    %3251 = arith.addf %3236, %3241 : vector<4x80xf32>
    %3252 = arith.addf %3242, %3243 : vector<4x80xf32>
    %3253 = arith.addf %3244, %3245 : vector<4x80xf32>
    %3254 = arith.addf %3246, %3247 : vector<4x80xf32>
    %3255 = arith.addf %3248, %3249 : vector<4x80xf32>
    %3256 = arith.addf %3250, %3251 : vector<4x80xf32>
    %3257 = arith.addf %3252, %3253 : vector<4x80xf32>
    %3258 = arith.addf %3254, %3255 : vector<4x80xf32>
    %3259 = arith.addf %3257, %3258 : vector<4x80xf32>
    %3260 = arith.addf %3259, %3256 : vector<4x80xf32>
    %3261 = arith.addf %3141, %3260 : vector<4x80xf32>
    %3262 = arith.negf %3261 : vector<4x80xf32>
    %3263 = math.exp %3262 : vector<4x80xf32>
    %cst_39 = arith.constant 1.000000e+00 : f32
    %3264 = vector.broadcast %cst_39 : f32 to vector<4x80xf32>
    %3265 = arith.addf %3264, %3263 : vector<4x80xf32>
    %3266 = arith.divf %3264, %3265 : vector<4x80xf32>
    %3267 = math.tanh %3261 : vector<4x80xf32>
    %3268 = vector.extract_strided_slice %3266 {offsets = [0, 0], sizes = [4, 20], strides = [1, 1]} : vector<4x80xf32> to vector<4x20xf32>
    %3269 = vector.extract_strided_slice %3266 {offsets = [0, 20], sizes = [4, 20], strides = [1, 1]} : vector<4x80xf32> to vector<4x20xf32>
    %3270 = vector.extract_strided_slice %3267 {offsets = [0, 40], sizes = [4, 20], strides = [1, 1]} : vector<4x80xf32> to vector<4x20xf32>
    %3271 = arith.mulf %3269, %2991 : vector<4x20xf32>
    %3272 = arith.mulf %3268, %3270 : vector<4x20xf32>
    %3273 = arith.addf %3271, %3272 : vector<4x20xf32>
    %3274 = vector.extract_strided_slice %3273 {offsets = [0, 0], sizes = [4, 1], strides = [1, 1]} : vector<4x20xf32> to vector<4x1xf32>
    %3275 = vector.extract_strided_slice %3 {offsets = [0, 0], sizes = [1, 4], strides = [1, 1]} : vector<20x4xf32> to vector<1x4xf32>
    %3276 = vector.broadcast %3274 : vector<4x1xf32> to vector<4x4xf32>
    %3277 = vector.broadcast %3275 : vector<1x4xf32> to vector<4x4xf32>
    %3278 = arith.mulf %3276, %3277 : vector<4x4xf32>
    %3279 = vector.extract_strided_slice %3273 {offsets = [0, 1], sizes = [4, 1], strides = [1, 1]} : vector<4x20xf32> to vector<4x1xf32>
    %3280 = vector.extract_strided_slice %3 {offsets = [1, 0], sizes = [1, 4], strides = [1, 1]} : vector<20x4xf32> to vector<1x4xf32>
    %3281 = vector.broadcast %3279 : vector<4x1xf32> to vector<4x4xf32>
    %3282 = vector.broadcast %3280 : vector<1x4xf32> to vector<4x4xf32>
    %3283 = arith.mulf %3281, %3282 : vector<4x4xf32>
    %3284 = vector.extract_strided_slice %3273 {offsets = [0, 2], sizes = [4, 1], strides = [1, 1]} : vector<4x20xf32> to vector<4x1xf32>
    %3285 = vector.extract_strided_slice %3 {offsets = [2, 0], sizes = [1, 4], strides = [1, 1]} : vector<20x4xf32> to vector<1x4xf32>
    %3286 = vector.broadcast %3284 : vector<4x1xf32> to vector<4x4xf32>
    %3287 = vector.broadcast %3285 : vector<1x4xf32> to vector<4x4xf32>
    %3288 = arith.mulf %3286, %3287 : vector<4x4xf32>
    %3289 = vector.extract_strided_slice %3273 {offsets = [0, 3], sizes = [4, 1], strides = [1, 1]} : vector<4x20xf32> to vector<4x1xf32>
    %3290 = vector.extract_strided_slice %3 {offsets = [3, 0], sizes = [1, 4], strides = [1, 1]} : vector<20x4xf32> to vector<1x4xf32>
    %3291 = vector.broadcast %3289 : vector<4x1xf32> to vector<4x4xf32>
    %3292 = vector.broadcast %3290 : vector<1x4xf32> to vector<4x4xf32>
    %3293 = arith.mulf %3291, %3292 : vector<4x4xf32>
    %3294 = vector.extract_strided_slice %3273 {offsets = [0, 4], sizes = [4, 1], strides = [1, 1]} : vector<4x20xf32> to vector<4x1xf32>
    %3295 = vector.extract_strided_slice %3 {offsets = [4, 0], sizes = [1, 4], strides = [1, 1]} : vector<20x4xf32> to vector<1x4xf32>
    %3296 = vector.broadcast %3294 : vector<4x1xf32> to vector<4x4xf32>
    %3297 = vector.broadcast %3295 : vector<1x4xf32> to vector<4x4xf32>
    %3298 = arith.mulf %3296, %3297 : vector<4x4xf32>
    %3299 = vector.extract_strided_slice %3273 {offsets = [0, 5], sizes = [4, 1], strides = [1, 1]} : vector<4x20xf32> to vector<4x1xf32>
    %3300 = vector.extract_strided_slice %3 {offsets = [5, 0], sizes = [1, 4], strides = [1, 1]} : vector<20x4xf32> to vector<1x4xf32>
    %3301 = vector.broadcast %3299 : vector<4x1xf32> to vector<4x4xf32>
    %3302 = vector.broadcast %3300 : vector<1x4xf32> to vector<4x4xf32>
    %3303 = arith.mulf %3301, %3302 : vector<4x4xf32>
    %3304 = vector.extract_strided_slice %3273 {offsets = [0, 6], sizes = [4, 1], strides = [1, 1]} : vector<4x20xf32> to vector<4x1xf32>
    %3305 = vector.extract_strided_slice %3 {offsets = [6, 0], sizes = [1, 4], strides = [1, 1]} : vector<20x4xf32> to vector<1x4xf32>
    %3306 = vector.broadcast %3304 : vector<4x1xf32> to vector<4x4xf32>
    %3307 = vector.broadcast %3305 : vector<1x4xf32> to vector<4x4xf32>
    %3308 = arith.mulf %3306, %3307 : vector<4x4xf32>
    %3309 = vector.extract_strided_slice %3273 {offsets = [0, 7], sizes = [4, 1], strides = [1, 1]} : vector<4x20xf32> to vector<4x1xf32>
    %3310 = vector.extract_strided_slice %3 {offsets = [7, 0], sizes = [1, 4], strides = [1, 1]} : vector<20x4xf32> to vector<1x4xf32>
    %3311 = vector.broadcast %3309 : vector<4x1xf32> to vector<4x4xf32>
    %3312 = vector.broadcast %3310 : vector<1x4xf32> to vector<4x4xf32>
    %3313 = arith.mulf %3311, %3312 : vector<4x4xf32>
    %3314 = vector.extract_strided_slice %3273 {offsets = [0, 8], sizes = [4, 1], strides = [1, 1]} : vector<4x20xf32> to vector<4x1xf32>
    %3315 = vector.extract_strided_slice %3 {offsets = [8, 0], sizes = [1, 4], strides = [1, 1]} : vector<20x4xf32> to vector<1x4xf32>
    %3316 = vector.broadcast %3314 : vector<4x1xf32> to vector<4x4xf32>
    %3317 = vector.broadcast %3315 : vector<1x4xf32> to vector<4x4xf32>
    %3318 = arith.mulf %3316, %3317 : vector<4x4xf32>
    %3319 = vector.extract_strided_slice %3273 {offsets = [0, 9], sizes = [4, 1], strides = [1, 1]} : vector<4x20xf32> to vector<4x1xf32>
    %3320 = vector.extract_strided_slice %3 {offsets = [9, 0], sizes = [1, 4], strides = [1, 1]} : vector<20x4xf32> to vector<1x4xf32>
    %3321 = vector.broadcast %3319 : vector<4x1xf32> to vector<4x4xf32>
    %3322 = vector.broadcast %3320 : vector<1x4xf32> to vector<4x4xf32>
    %3323 = arith.mulf %3321, %3322 : vector<4x4xf32>
    %3324 = vector.extract_strided_slice %3273 {offsets = [0, 10], sizes = [4, 1], strides = [1, 1]} : vector<4x20xf32> to vector<4x1xf32>
    %3325 = vector.extract_strided_slice %3 {offsets = [10, 0], sizes = [1, 4], strides = [1, 1]} : vector<20x4xf32> to vector<1x4xf32>
    %3326 = vector.broadcast %3324 : vector<4x1xf32> to vector<4x4xf32>
    %3327 = vector.broadcast %3325 : vector<1x4xf32> to vector<4x4xf32>
    %3328 = arith.mulf %3326, %3327 : vector<4x4xf32>
    %3329 = vector.extract_strided_slice %3273 {offsets = [0, 11], sizes = [4, 1], strides = [1, 1]} : vector<4x20xf32> to vector<4x1xf32>
    %3330 = vector.extract_strided_slice %3 {offsets = [11, 0], sizes = [1, 4], strides = [1, 1]} : vector<20x4xf32> to vector<1x4xf32>
    %3331 = vector.broadcast %3329 : vector<4x1xf32> to vector<4x4xf32>
    %3332 = vector.broadcast %3330 : vector<1x4xf32> to vector<4x4xf32>
    %3333 = arith.mulf %3331, %3332 : vector<4x4xf32>
    %3334 = vector.extract_strided_slice %3273 {offsets = [0, 12], sizes = [4, 1], strides = [1, 1]} : vector<4x20xf32> to vector<4x1xf32>
    %3335 = vector.extract_strided_slice %3 {offsets = [12, 0], sizes = [1, 4], strides = [1, 1]} : vector<20x4xf32> to vector<1x4xf32>
    %3336 = vector.broadcast %3334 : vector<4x1xf32> to vector<4x4xf32>
    %3337 = vector.broadcast %3335 : vector<1x4xf32> to vector<4x4xf32>
    %3338 = arith.mulf %3336, %3337 : vector<4x4xf32>
    %3339 = vector.extract_strided_slice %3273 {offsets = [0, 13], sizes = [4, 1], strides = [1, 1]} : vector<4x20xf32> to vector<4x1xf32>
    %3340 = vector.extract_strided_slice %3 {offsets = [13, 0], sizes = [1, 4], strides = [1, 1]} : vector<20x4xf32> to vector<1x4xf32>
    %3341 = vector.broadcast %3339 : vector<4x1xf32> to vector<4x4xf32>
    %3342 = vector.broadcast %3340 : vector<1x4xf32> to vector<4x4xf32>
    %3343 = arith.mulf %3341, %3342 : vector<4x4xf32>
    %3344 = vector.extract_strided_slice %3273 {offsets = [0, 14], sizes = [4, 1], strides = [1, 1]} : vector<4x20xf32> to vector<4x1xf32>
    %3345 = vector.extract_strided_slice %3 {offsets = [14, 0], sizes = [1, 4], strides = [1, 1]} : vector<20x4xf32> to vector<1x4xf32>
    %3346 = vector.broadcast %3344 : vector<4x1xf32> to vector<4x4xf32>
    %3347 = vector.broadcast %3345 : vector<1x4xf32> to vector<4x4xf32>
    %3348 = arith.mulf %3346, %3347 : vector<4x4xf32>
    %3349 = vector.extract_strided_slice %3273 {offsets = [0, 15], sizes = [4, 1], strides = [1, 1]} : vector<4x20xf32> to vector<4x1xf32>
    %3350 = vector.extract_strided_slice %3 {offsets = [15, 0], sizes = [1, 4], strides = [1, 1]} : vector<20x4xf32> to vector<1x4xf32>
    %3351 = vector.broadcast %3349 : vector<4x1xf32> to vector<4x4xf32>
    %3352 = vector.broadcast %3350 : vector<1x4xf32> to vector<4x4xf32>
    %3353 = arith.mulf %3351, %3352 : vector<4x4xf32>
    %3354 = vector.extract_strided_slice %3273 {offsets = [0, 16], sizes = [4, 1], strides = [1, 1]} : vector<4x20xf32> to vector<4x1xf32>
    %3355 = vector.extract_strided_slice %3 {offsets = [16, 0], sizes = [1, 4], strides = [1, 1]} : vector<20x4xf32> to vector<1x4xf32>
    %3356 = vector.broadcast %3354 : vector<4x1xf32> to vector<4x4xf32>
    %3357 = vector.broadcast %3355 : vector<1x4xf32> to vector<4x4xf32>
    %3358 = arith.mulf %3356, %3357 : vector<4x4xf32>
    %3359 = vector.extract_strided_slice %3273 {offsets = [0, 17], sizes = [4, 1], strides = [1, 1]} : vector<4x20xf32> to vector<4x1xf32>
    %3360 = vector.extract_strided_slice %3 {offsets = [17, 0], sizes = [1, 4], strides = [1, 1]} : vector<20x4xf32> to vector<1x4xf32>
    %3361 = vector.broadcast %3359 : vector<4x1xf32> to vector<4x4xf32>
    %3362 = vector.broadcast %3360 : vector<1x4xf32> to vector<4x4xf32>
    %3363 = arith.mulf %3361, %3362 : vector<4x4xf32>
    %3364 = vector.extract_strided_slice %3273 {offsets = [0, 18], sizes = [4, 1], strides = [1, 1]} : vector<4x20xf32> to vector<4x1xf32>
    %3365 = vector.extract_strided_slice %3 {offsets = [18, 0], sizes = [1, 4], strides = [1, 1]} : vector<20x4xf32> to vector<1x4xf32>
    %3366 = vector.broadcast %3364 : vector<4x1xf32> to vector<4x4xf32>
    %3367 = vector.broadcast %3365 : vector<1x4xf32> to vector<4x4xf32>
    %3368 = arith.mulf %3366, %3367 : vector<4x4xf32>
    %3369 = vector.extract_strided_slice %3273 {offsets = [0, 19], sizes = [4, 1], strides = [1, 1]} : vector<4x20xf32> to vector<4x1xf32>
    %3370 = vector.extract_strided_slice %3 {offsets = [19, 0], sizes = [1, 4], strides = [1, 1]} : vector<20x4xf32> to vector<1x4xf32>
    %3371 = vector.broadcast %3369 : vector<4x1xf32> to vector<4x4xf32>
    %3372 = vector.broadcast %3370 : vector<1x4xf32> to vector<4x4xf32>
    %3373 = arith.mulf %3371, %3372 : vector<4x4xf32>
    %3374 = arith.addf %3278, %3283 : vector<4x4xf32>
    %3375 = arith.addf %3288, %3293 : vector<4x4xf32>
    %3376 = arith.addf %3298, %3303 : vector<4x4xf32>
    %3377 = arith.addf %3308, %3313 : vector<4x4xf32>
    %3378 = arith.addf %3318, %3323 : vector<4x4xf32>
    %3379 = arith.addf %3328, %3333 : vector<4x4xf32>
    %3380 = arith.addf %3338, %3343 : vector<4x4xf32>
    %3381 = arith.addf %3348, %3353 : vector<4x4xf32>
    %3382 = arith.addf %3358, %3363 : vector<4x4xf32>
    %3383 = arith.addf %3368, %3373 : vector<4x4xf32>
    %3384 = arith.addf %3374, %3375 : vector<4x4xf32>
    %3385 = arith.addf %3376, %3377 : vector<4x4xf32>
    %3386 = arith.addf %3378, %3379 : vector<4x4xf32>
    %3387 = arith.addf %3380, %3381 : vector<4x4xf32>
    %3388 = arith.addf %3382, %3383 : vector<4x4xf32>
    %3389 = arith.addf %3384, %3385 : vector<4x4xf32>
    %3390 = arith.addf %3386, %3387 : vector<4x4xf32>
    %3391 = arith.addf %3389, %3390 : vector<4x4xf32>
    %3392 = arith.addf %3391, %3388 : vector<4x4xf32>
    %3393 = arith.addf %3392, %10 : vector<4x4xf32>
    %3394 = vector.broadcast %3132 : vector<4x1xf32> to vector<4x4xf32>
    %3395 = vector.broadcast %4 : vector<1x4xf32> to vector<4x4xf32>
    %3396 = arith.mulf %3394, %3395 : vector<4x4xf32>
    %3397 = arith.addf %3393, %3396 : vector<4x4xf32>
    %3398 = arith.negf %3397 : vector<4x4xf32>
    %3399 = math.exp %3398 : vector<4x4xf32>
    %cst_40 = arith.constant 1.000000e+00 : f32
    %3400 = vector.broadcast %cst_40 : f32 to vector<4x4xf32>
    %3401 = arith.addf %3400, %3399 : vector<4x4xf32>
    %3402 = arith.divf %3400, %3401 : vector<4x4xf32>
    %3403 = math.tanh %3397 : vector<4x4xf32>
    %3404 = vector.extract_strided_slice %3402 {offsets = [0, 0], sizes = [4, 1], strides = [1, 1]} : vector<4x4xf32> to vector<4x1xf32>
    %3405 = vector.extract_strided_slice %3402 {offsets = [0, 1], sizes = [4, 1], strides = [1, 1]} : vector<4x4xf32> to vector<4x1xf32>
    %3406 = vector.extract_strided_slice %3403 {offsets = [0, 2], sizes = [4, 1], strides = [1, 1]} : vector<4x4xf32> to vector<4x1xf32>
    %3407 = arith.mulf %3405, %3130 : vector<4x1xf32>
    %3408 = arith.mulf %3404, %3406 : vector<4x1xf32>
    %3409 = arith.addf %3407, %3408 : vector<4x1xf32>
    %c11_i32 = arith.constant 11 : i32
    %3410 = vector.broadcast %c11_i32 : i32 to vector<4x12xi32>
    %3411 = arith.cmpi eq, %11, %3410 : vector<4x12xi32>
    %3412 = vector.shape_cast %3409 : vector<4x1xf32> to vector<4x1xf32>
    %3413 = vector.broadcast %3412 : vector<4x1xf32> to vector<4x12xf32>
    %3414 = arith.select %3411, %3413, %3137 : vector<4x12xi1>, vector<4x12xf32>
    %c0_41 = arith.constant 0 : index
    %c0_42 = arith.constant 0 : index
    %3415 = vector.load %arg7[%c0_41, %c0_42] : memref<4x12xf32, #tpu.memory_space<vmem>>, vector<4x12xf32>
    tpu.vector_store %arg7[%c0_41, %c0_42], %3414 {strides = array<i32>} : memref<4x12xf32, #tpu.memory_space<vmem>>, vector<4x12xf32>,
    return
  }
}

</mosaic_0001>

<llo_original>
// kernel: tpu_custom_call.1
$region0: #{tpu_custom_call.1}
  #allocation0 [shape = 'u32[]', space=smem, size = 0x4, offset = 0x4, fixed_abs, tag = 'smem constant byte address 0x4 - core index']
  #allocation1 [shape = 'u32[144,128]{1,0:T(1,128)}', space=vmem, size = 0x12000, scoped, tag = 'internal scratch']
  %s0 = inlined_call_operand.vmem [shape: f32[4,8], index: 0, kind: input, shape index: {}]
  %s1 = inlined_call_operand.vmem [shape: f32[1,80], index: 1, kind: input, shape index: {}]
  %s2 = inlined_call_operand.vmem [shape: f32[20,80], index: 2, kind: input, shape index: {}]
  %s3 = inlined_call_operand.vmem [shape: f32[1,80], index: 3, kind: input, shape index: {}]
  %s4 = inlined_call_operand.vmem [shape: f32[20,4], index: 4, kind: input, shape index: {}]
  %s5 = inlined_call_operand.vmem [shape: f32[1,4], index: 5, kind: input, shape index: {}]
  %s6 = inlined_call_operand.vmem [shape: f32[1,4], index: 6, kind: input, shape index: {}]
  %s7 = inlined_call_operand.hbm [shape: f32[4,12], index: 7, kind: output, shape index: {}]
  %s8 = sld [smem:[#allocation0]]
  $region38: #{tpu_custom_call.1} parent=0
    _
  %s10 = ssub.s32 1, %s8
  %s11 = scalar_select 0, %s10, %s8
  $region1: #{tpu_custom_call.1} parent=0
    #allocation2 [shape = 'u8[2048]{0}', space=vmem, size = 0x800, scoped, tag = 'output window, operand 0, single buffered']
    #allocation3 [shape = 's32[1]{0}', space=sflag, size = 0x4, scoped, tag = 'scoped memory for tpu_custom_call.1']
    %12 = vsyncpa [#allocation3], 0
    // Predicated region
    $region2: #{tpu_custom_call.1} parent=1 // pred_check
      _
    $region3: #{tpu_custom_call.1} parent=1 // pred_check_branch
      %14 = sbr.rel (0) target = $region5
    $region4: #{tpu_custom_call.1} parent=1 // pred_region
      _
    $region5: #{tpu_custom_call.1} parent=1 // pred_fallthru
      _
    // Predicated region
    $region6: #{tpu_custom_call.1} parent=1 // pred_check
      _
    $region7: #{tpu_custom_call.1} parent=1 // pred_check_branch
      %16 = sbr.rel (0) target = $region9
    $region8: #{tpu_custom_call.1} parent=1 // pred_region
      _
    $region9: #{tpu_custom_call.1} parent=1 // pred_fallthru
      _
    // Predicated region
    $region10: #{tpu_custom_call.1} parent=1 // pred_check
      _
    $region11: #{tpu_custom_call.1} parent=1 // pred_check_branch
      %18 = sbr.rel (0) target = $region13
    $region12: #{tpu_custom_call.1} parent=1 // pred_region
      _
    $region13: #{tpu_custom_call.1} parent=1 // pred_fallthru
      _
    // Predicated region
    $region14: #{tpu_custom_call.1} parent=1 // pred_check
      _
    $region15: #{tpu_custom_call.1} parent=1 // pred_check_branch
      %20 = sbr.rel (0) target = $region17
    $region16: #{tpu_custom_call.1} parent=1 // pred_region
      _
    $region17: #{tpu_custom_call.1} parent=1 // pred_fallthru
      _
    // Predicated region
    $region18: #{tpu_custom_call.1} parent=1 // pred_check
      _
    $region19: #{tpu_custom_call.1} parent=1 // pred_check_branch
      %22 = sbr.rel (0) target = $region21
    $region20: #{tpu_custom_call.1} parent=1 // pred_region
      _
    $region21: #{tpu_custom_call.1} parent=1 // pred_fallthru
      _
    // Predicated region
    $region22: #{tpu_custom_call.1} parent=1 // pred_check
      _
    $region23: #{tpu_custom_call.1} parent=1 // pred_check_branch
      %24 = sbr.rel (0) target = $region25
    $region24: #{tpu_custom_call.1} parent=1 // pred_region
      _
    $region25: #{tpu_custom_call.1} parent=1 // pred_fallthru
      _
    // Predicated region
    $region26: #{tpu_custom_call.1} parent=1 // pred_check
      _
    $region27: #{tpu_custom_call.1} parent=1 // pred_check_branch
      %26 = sbr.rel (0) target = $region29
    $region28: #{tpu_custom_call.1} parent=1 // pred_region
      _
    $region29: #{tpu_custom_call.1} parent=1 // pred_fallthru
      _
    %v27 = vld [vmem:[%s0] sm:$0xf]
    %v28 = vld [vmem:[%s1] sm:$0x1]
    %v29 = vld [vmem:[%s2] sm:$0xff]
    %v30 = vld [vmem:[%s2 + $0x8] sm:$0xff]
    %v31 = vld [vmem:[%s2 + $0x10] sm:$0xf]
    %v32 = vld [vmem:[%s4] sm:$0xff]
    %v33 = vld [vmem:[%s4 + $0x8] sm:$0xff]
    %v34 = vld [vmem:[%s4 + $0x10] sm:$0xf]
    %v35 = vld [vmem:[%s5] sm:$0x1]
    %v36 = vld [vmem:[%s3] sm:$0x1]
    %v38 = vlaneseq
    %v39 = vshrl.u32 %v38, 7
    %v40 = vsub.s32 0, %v39
    %v41 = vrot.slane %v36, %v40
    %v43 = vld [vmem:[%s6] sm:$0x1]
    %v45 = vlaneseq
    %v46 = vshrl.u32 %v45, 7
    %v47 = vsub.s32 0, %v46
    %v48 = vrot.slane %v43, %v47
    %v50 = vlaneseq
    %v51 = vand.u32 %v50, 127
    %53 = vset.pattern.permute.xlu0 0
    %54 = vperm.xlu0 %53, %v27
    %v55 = vpop.permute.xlu0 %54
    %v58 = vlaneseq
    %v59 = vshrl.u32 %v58, 7
    %v60 = vsub.s32 0, %v59
    %v61 = vrot.slane %v28, %v60
    %v63 = vmul.f32 %v55, %v61
    %v64 = vadd.f32 %v63, %v41
    %v65 = vlaneseq
    %v66 = vshrl.u32 %v65, 7
    %v67 = vsub.s32 0, %v66
    %v68 = vrot.slane %v29, %v67
    %v69 = vmul.f32 %v68, 0.0
    %v70 = vlaneseq
    %v71 = vshrl.u32 %v70, 7
    %v72 = vsub.s32 1, %v71
    %v73 = vrot.slane %v29, %v72
    %v74 = vmul.f32 %v73, 0.0
    %v75 = vlaneseq
    %v76 = vshrl.u32 %v75, 7
    %v77 = vsub.s32 2, %v76
    %v78 = vrot.slane %v29, %v77
    %v79 = vmul.f32 %v78, 0.0
    %v80 = vlaneseq
    %v81 = vshrl.u32 %v80, 7
    %v82 = vsub.s32 3, %v81
    %v83 = vrot.slane %v29, %v82
    %v84 = vmul.f32 %v83, 0.0
    %v85 = vlaneseq
    %v86 = vshrl.u32 %v85, 7
    %v87 = vsub.s32 4, %v86
    %v88 = vrot.slane %v29, %v87
    %v89 = vmul.f32 %v88, 0.0
    %v90 = vlaneseq
    %v91 = vshrl.u32 %v90, 7
    %v92 = vsub.s32 5, %v91
    %v93 = vrot.slane %v29, %v92
    %v94 = vmul.f32 %v93, 0.0
    %v95 = vlaneseq
    %v96 = vshrl.u32 %v95, 7
    %v97 = vsub.s32 6, %v96
    %v98 = vrot.slane %v29, %v97
    %v99 = vmul.f32 %v98, 0.0
    %v100 = vlaneseq
    %v101 = vshrl.u32 %v100, 7
    %v102 = vsub.s32 7, %v101
    %v103 = vrot.slane %v29, %v102
    %v104 = vmul.f32 %v103, 0.0
    %v105 = vlaneseq
    %v106 = vshrl.u32 %v105, 7
    %v107 = vsub.s32 0, %v106
    %v108 = vrot.slane %v30, %v107
    %v109 = vmul.f32 %v108, 0.0
    %v110 = vlaneseq
    %v111 = vshrl.u32 %v110, 7
    %v112 = vsub.s32 1, %v111
    %v113 = vrot.slane %v30, %v112
    %v114 = vmul.f32 %v113, 0.0
    %v115 = vlaneseq
    %v116 = vshrl.u32 %v115, 7
    %v117 = vsub.s32 2, %v116
    %v118 = vrot.slane %v30, %v117
    %v119 = vmul.f32 %v118, 0.0
    %v120 = vlaneseq
    %v121 = vshrl.u32 %v120, 7
    %v122 = vsub.s32 3, %v121
    %v123 = vrot.slane %v30, %v122
    %v124 = vmul.f32 %v123, 0.0
    %v125 = vlaneseq
    %v126 = vshrl.u32 %v125, 7
    %v127 = vsub.s32 4, %v126
    %v128 = vrot.slane %v30, %v127
    %v129 = vmul.f32 %v128, 0.0
    %v130 = vlaneseq
    %v131 = vshrl.u32 %v130, 7
    %v132 = vsub.s32 5, %v131
    %v133 = vrot.slane %v30, %v132
    %v134 = vmul.f32 %v133, 0.0
    %v135 = vlaneseq
    %v136 = vshrl.u32 %v135, 7
    %v137 = vsub.s32 6, %v136
    %v138 = vrot.slane %v30, %v137
    %v139 = vmul.f32 %v138, 0.0
    %v140 = vlaneseq
    %v141 = vshrl.u32 %v140, 7
    %v142 = vsub.s32 7, %v141
    %v143 = vrot.slane %v30, %v142
    %v144 = vmul.f32 %v143, 0.0
    %v145 = vlaneseq
    %v146 = vshrl.u32 %v145, 7
    %v147 = vsub.s32 0, %v146
    %v148 = vrot.slane %v31, %v147
    %v149 = vmul.f32 %v148, 0.0
    %v150 = vlaneseq
    %v151 = vshrl.u32 %v150, 7
    %v152 = vsub.s32 1, %v151
    %v153 = vrot.slane %v31, %v152
    %v154 = vmul.f32 %v153, 0.0
    %v155 = vlaneseq
    %v156 = vshrl.u32 %v155, 7
    %v157 = vsub.s32 2, %v156
    %v158 = vrot.slane %v31, %v157
    %v159 = vmul.f32 %v158, 0.0
    %v160 = vlaneseq
    %v161 = vshrl.u32 %v160, 7
    %v162 = vsub.s32 3, %v161
    %v163 = vrot.slane %v31, %v162
    %v164 = vmul.f32 %v163, 0.0
    %v165 = vadd.f32 %v69, %v74
    %v166 = vadd.f32 %v79, %v84
    %v167 = vadd.f32 %v89, %v94
    %v168 = vadd.f32 %v99, %v104
    %v169 = vadd.f32 %v109, %v114
    %v170 = vadd.f32 %v119, %v124
    %v171 = vadd.f32 %v129, %v134
    %v172 = vadd.f32 %v139, %v144
    %v173 = vadd.f32 %v149, %v154
    %v174 = vadd.f32 %v159, %v164
    %v175 = vadd.f32 %v165, %v166
    %v176 = vadd.f32 %v167, %v168
    %v177 = vadd.f32 %v169, %v170
    %v178 = vadd.f32 %v171, %v172
    %v179 = vadd.f32 %v173, %v174
    %v180 = vadd.f32 %v175, %v176
    %v181 = vadd.f32 %v177, %v178
    %v182 = vadd.f32 %v180, %v181
    %v183 = vadd.f32 %v182, %v179
    %v184 = vadd.f32 %v64, %v183
    %v185 = vxor.u32 %v184, 2147483648
    %v186 = vmul.f32 %v185, 1.442695
    %v187 = vpow.pop %v186
    %v188 = vadd.f32 %v187, 1.0
    %v189 = vrcp.pop %v188
    %v190 = vmul.f32 1.0, %v189
    %v191 = vtanh.pop %v184
    %v192 = vmul.f32 %v190, 0.0
    %194 = vrot.lane.b32.xlu0 %v191, 88
    %v195 = vpop.permute.xlu0 %194
    %v197 = vmul.f32 %v190, %v195
    %199 = vrot.lane.b32.xlu0 %v197, 20
    %v200 = vpop.permute.xlu0 %199
    %v202 = vadd.f32 %v192, %v200
    %v203 = vtanh.pop %v202
    %205 = vrot.lane.b32.xlu0 %v203, 40
    %v206 = vpop.permute.xlu0 %205
    %v208 = vmul.f32 %v190, %v206
    %210 = vset.pattern.permute.xlu0 20
    %211 = vperm.xlu0 %210, %v202
    %v212 = vpop.permute.xlu0 %211
    %v214 = vlaneseq
    %v215 = vshrl.u32 %v214, 7
    %v216 = vsub.s32 0, %v215
    %v217 = vrot.slane %v32, %v216
    %v218 = vmul.f32 %v212, %v217
    %219 = vset.pattern.permute.xlu0 21
    %220 = vperm.xlu0 %219, %v202
    %v221 = vpop.permute.xlu0 %220
    %v223 = vlaneseq
    %v224 = vshrl.u32 %v223, 7
    %v225 = vsub.s32 1, %v224
    %v226 = vrot.slane %v32, %v225
    %v227 = vmul.f32 %v221, %v226
    %228 = vset.pattern.permute.xlu0 22
    %229 = vperm.xlu0 %228, %v202
    %v230 = vpop.permute.xlu0 %229
    %v232 = vlaneseq
    %v233 = vshrl.u32 %v232, 7
    %v234 = vsub.s32 2, %v233
    %v235 = vrot.slane %v32, %v234
    %v236 = vmul.f32 %v230, %v235
    %237 = vset.pattern.permute.xlu0 23
    %238 = vperm.xlu0 %237, %v202
    %v239 = vpop.permute.xlu0 %238
    %v241 = vlaneseq
    %v242 = vshrl.u32 %v241, 7
    %v243 = vsub.s32 3, %v242
    %v244 = vrot.slane %v32, %v243
    %v245 = vmul.f32 %v239, %v244
    %246 = vset.pattern.permute.xlu0 24
    %247 = vperm.xlu0 %246, %v202
    %v248 = vpop.permute.xlu0 %247
    %v250 = vlaneseq
    %v251 = vshrl.u32 %v250, 7
    %v252 = vsub.s32 4, %v251
    %v253 = vrot.slane %v32, %v252
    %v254 = vmul.f32 %v248, %v253
    %255 = vset.pattern.permute.xlu0 25
    %256 = vperm.xlu0 %255, %v202
    %v257 = vpop.permute.xlu0 %256
    %v259 = vlaneseq
    %v260 = vshrl.u32 %v259, 7
    %v261 = vsub.s32 5, %v260
    %v262 = vrot.slane %v32, %v261
    %v263 = vmul.f32 %v257, %v262
    %264 = vset.pattern.permute.xlu0 26
    %265 = vperm.xlu0 %264, %v202
    %v266 = vpop.permute.xlu0 %265
    %v268 = vlaneseq
    %v269 = vshrl.u32 %v268, 7
    %v270 = vsub.s32 6, %v269
    %v271 = vrot.slane %v32, %v270
    %v272 = vmul.f32 %v266, %v271
    %273 = vset.pattern.permute.xlu0 27
    %274 = vperm.xlu0 %273, %v202
    %v275 = vpop.permute.xlu0 %274
    %v277 = vlaneseq
    %v278 = vshrl.u32 %v277, 7
    %v279 = vsub.s32 7, %v278
    %v280 = vrot.slane %v32, %v279
    %v281 = vmul.f32 %v275, %v280
    %282 = vset.pattern.permute.xlu0 28
    %283 = vperm.xlu0 %282, %v202
    %v284 = vpop.permute.xlu0 %283
    %v286 = vlaneseq
    %v287 = vshrl.u32 %v286, 7
    %v288 = vsub.s32 0, %v287
    %v289 = vrot.slane %v33, %v288
    %v290 = vmul.f32 %v284, %v289
    %291 = vset.pattern.permute.xlu0 29
    %292 = vperm.xlu0 %291, %v202
    %v293 = vpop.permute.xlu0 %292
    %v295 = vlaneseq
    %v296 = vshrl.u32 %v295, 7
    %v297 = vsub.s32 1, %v296
    %v298 = vrot.slane %v33, %v297
    %v299 = vmul.f32 %v293, %v298
    %300 = vset.pattern.permute.xlu0 30
    %301 = vperm.xlu0 %300, %v202
    %v302 = vpop.permute.xlu0 %301
    %v304 = vlaneseq
    %v305 = vshrl.u32 %v304, 7
    %v306 = vsub.s32 2, %v305
    %v307 = vrot.slane %v33, %v306
    %v308 = vmul.f32 %v302, %v307
    %309 = vset.pattern.permute.xlu0 31
    %310 = vperm.xlu0 %309, %v202
    %v311 = vpop.permute.xlu0 %310
    %v313 = vlaneseq
    %v314 = vshrl.u32 %v313, 7
    %v315 = vsub.s32 3, %v314
    %v316 = vrot.slane %v33, %v315
    %v317 = vmul.f32 %v311, %v316
    %318 = vset.pattern.permute.xlu0 32
    %319 = vperm.xlu0 %318, %v202
    %v320 = vpop.permute.xlu0 %319
    %v322 = vlaneseq
    %v323 = vshrl.u32 %v322, 7
    %v324 = vsub.s32 4, %v323
    %v325 = vrot.slane %v33, %v324
    %v326 = vmul.f32 %v320, %v325
    %327 = vset.pattern.permute.xlu0 33
    %328 = vperm.xlu0 %327, %v202
    %v329 = vpop.permute.xlu0 %328
    %v331 = vlaneseq
    %v332 = vshrl.u32 %v331, 7
    %v333 = vsub.s32 5, %v332
    %v334 = vrot.slane %v33, %v333
    %v335 = vmul.f32 %v329, %v334
    %336 = vset.pattern.permute.xlu0 34
    %337 = vperm.xlu0 %336, %v202
    %v338 = vpop.permute.xlu0 %337
    %v340 = vlaneseq
    %v341 = vshrl.u32 %v340, 7
    %v342 = vsub.s32 6, %v341
    %v343 = vrot.slane %v33, %v342
    %v344 = vmul.f32 %v338, %v343
    %345 = vset.pattern.permute.xlu0 35
    %346 = vperm.xlu0 %345, %v202
    %v347 = vpop.permute.xlu0 %346
    %v349 = vlaneseq
    %v350 = vshrl.u32 %v349, 7
    %v351 = vsub.s32 7, %v350
    %v352 = vrot.slane %v33, %v351
    %v353 = vmul.f32 %v347, %v352
    %354 = vset.pattern.permute.xlu0 36
    %355 = vperm.xlu0 %354, %v202
    %v356 = vpop.permute.xlu0 %355
    %v358 = vlaneseq
    %v359 = vshrl.u32 %v358, 7
    %v360 = vsub.s32 0, %v359
    %v361 = vrot.slane %v34, %v360
    %v362 = vmul.f32 %v356, %v361
    %363 = vset.pattern.permute.xlu0 37
    %364 = vperm.xlu0 %363, %v202
    %v365 = vpop.permute.xlu0 %364
    %v367 = vlaneseq
    %v368 = vshrl.u32 %v367, 7
    %v369 = vsub.s32 1, %v368
    %v370 = vrot.slane %v34, %v369
    %v371 = vmul.f32 %v365, %v370
    %372 = vset.pattern.permute.xlu0 38
    %373 = vperm.xlu0 %372, %v202
    %v374 = vpop.permute.xlu0 %373
    %v376 = vlaneseq
    %v377 = vshrl.u32 %v376, 7
    %v378 = vsub.s32 2, %v377
    %v379 = vrot.slane %v34, %v378
    %v380 = vmul.f32 %v374, %v379
    %381 = vset.pattern.permute.xlu0 39
    %382 = vperm.xlu0 %381, %v202
    %v383 = vpop.permute.xlu0 %382
    %v385 = vlaneseq
    %v386 = vshrl.u32 %v385, 7
    %v387 = vsub.s32 3, %v386
    %v388 = vrot.slane %v34, %v387
    %v389 = vmul.f32 %v383, %v388
    %v390 = vadd.f32 %v218, %v227
    %v391 = vadd.f32 %v236, %v245
    %v392 = vadd.f32 %v254, %v263
    %v393 = vadd.f32 %v272, %v281
    %v394 = vadd.f32 %v290, %v299
    %v395 = vadd.f32 %v308, %v317
    %v396 = vadd.f32 %v326, %v335
    %v397 = vadd.f32 %v344, %v353
    %v398 = vadd.f32 %v362, %v371
    %v399 = vadd.f32 %v380, %v389
    %v400 = vadd.f32 %v390, %v391
    %v401 = vadd.f32 %v392, %v393
    %v402 = vadd.f32 %v394, %v395
    %v403 = vadd.f32 %v396, %v397
    %v404 = vadd.f32 %v398, %v399
    %v405 = vadd.f32 %v400, %v401
    %v406 = vadd.f32 %v402, %v403
    %v407 = vadd.f32 %v405, %v406
    %v408 = vadd.f32 %v407, %v404
    %v409 = vadd.f32 %v408, %v48
    %410 = vset.pattern.permute.xlu0 1
    %411 = vperm.xlu0 %410, %v27
    %v412 = vpop.permute.xlu0 %411
    %v414 = vmul.f32 %v412, %v61
    %v415 = vadd.f32 %v414, %v41
    %417 = vset.pattern.permute.xlu0 60
    %418 = vperm.xlu0 %417, %v208
    %v419 = vpop.permute.xlu0 %418
    %v421 = vmul.f32 %v419, %v68
    %422 = vset.pattern.permute.xlu0 61
    %423 = vperm.xlu0 %422, %v208
    %v424 = vpop.permute.xlu0 %423
    %v426 = vmul.f32 %v424, %v73
    %427 = vset.pattern.permute.xlu0 62
    %428 = vperm.xlu0 %427, %v208
    %v429 = vpop.permute.xlu0 %428
    %v431 = vmul.f32 %v429, %v78
    %432 = vset.pattern.permute.xlu0 63
    %433 = vperm.xlu0 %432, %v208
    %v434 = vpop.permute.xlu0 %433
    %v436 = vmul.f32 %v434, %v83
    %437 = vset.pattern.permute.xlu0 64
    %438 = vperm.xlu0 %437, %v208
    %v439 = vpop.permute.xlu0 %438
    %v441 = vmul.f32 %v439, %v88
    %442 = vset.pattern.permute.xlu0 65
    %443 = vperm.xlu0 %442, %v208
    %v444 = vpop.permute.xlu0 %443
    %v446 = vmul.f32 %v444, %v93
    %447 = vset.pattern.permute.xlu0 66
    %448 = vperm.xlu0 %447, %v208
    %v449 = vpop.permute.xlu0 %448
    %v451 = vmul.f32 %v449, %v98
    %452 = vset.pattern.permute.xlu0 67
    %453 = vperm.xlu0 %452, %v208
    %v454 = vpop.permute.xlu0 %453
    %v456 = vmul.f32 %v454, %v103
    %457 = vset.pattern.permute.xlu0 68
    %458 = vperm.xlu0 %457, %v208
    %v459 = vpop.permute.xlu0 %458
    %v461 = vmul.f32 %v459, %v108
    %462 = vset.pattern.permute.xlu0 69
    %463 = vperm.xlu0 %462, %v208
    %v464 = vpop.permute.xlu0 %463
    %v466 = vmul.f32 %v464, %v113
    %467 = vset.pattern.permute.xlu0 70
    %468 = vperm.xlu0 %467, %v208
    %v469 = vpop.permute.xlu0 %468
    %v471 = vmul.f32 %v469, %v118
    %472 = vset.pattern.permute.xlu0 71
    %473 = vperm.xlu0 %472, %v208
    %v474 = vpop.permute.xlu0 %473
    %v476 = vmul.f32 %v474, %v123
    %477 = vset.pattern.permute.xlu0 72
    %478 = vperm.xlu0 %477, %v208
    %v479 = vpop.permute.xlu0 %478
    %v481 = vmul.f32 %v479, %v128
    %482 = vset.pattern.permute.xlu0 73
    %483 = vperm.xlu0 %482, %v208
    %v484 = vpop.permute.xlu0 %483
    %v486 = vmul.f32 %v484, %v133
    %487 = vset.pattern.permute.xlu0 74
    %488 = vperm.xlu0 %487, %v208
    %v489 = vpop.permute.xlu0 %488
    %v491 = vmul.f32 %v489, %v138
    %492 = vset.pattern.permute.xlu0 75
    %493 = vperm.xlu0 %492, %v208
    %v494 = vpop.permute.xlu0 %493
    %v496 = vmul.f32 %v494, %v143
    %497 = vset.pattern.permute.xlu0 76
    %498 = vperm.xlu0 %497, %v208
    %v499 = vpop.permute.xlu0 %498
    %v501 = vmul.f32 %v499, %v148
    %502 = vset.pattern.permute.xlu0 77
    %503 = vperm.xlu0 %502, %v208
    %v504 = vpop.permute.xlu0 %503
    %v506 = vmul.f32 %v504, %v153
    %507 = vset.pattern.permute.xlu0 78
    %508 = vperm.xlu0 %507, %v208
    %v509 = vpop.permute.xlu0 %508
    %v511 = vmul.f32 %v509, %v158
    %512 = vset.pattern.permute.xlu0 79
    %513 = vperm.xlu0 %512, %v208
    %v514 = vpop.permute.xlu0 %513
    %v516 = vmul.f32 %v514, %v163
    %v517 = vadd.f32 %v421, %v426
    %v518 = vadd.f32 %v431, %v436
    %v519 = vadd.f32 %v441, %v446
    %v520 = vadd.f32 %v451, %v456
    %v521 = vadd.f32 %v461, %v466
    %v522 = vadd.f32 %v471, %v476
    %v523 = vadd.f32 %v481, %v486
    %v524 = vadd.f32 %v491, %v496
    %v525 = vadd.f32 %v501, %v506
    %v526 = vadd.f32 %v511, %v516
    %v527 = vadd.f32 %v517, %v518
    %v528 = vadd.f32 %v519, %v520
    %v529 = vadd.f32 %v521, %v522
    %v530 = vadd.f32 %v523, %v524
    %v531 = vadd.f32 %v525, %v526
    %v532 = vadd.f32 %v527, %v528
    %v533 = vadd.f32 %v529, %v530
    %v534 = vadd.f32 %v532, %v533
    %v535 = vadd.f32 %v534, %v531
    %v536 = vadd.f32 %v415, %v535
    %v537 = vxor.u32 %v536, 2147483648
    %v538 = vmul.f32 %v537, 1.442695
    %v539 = vpow.pop %v538
    %v540 = vadd.f32 %v539, 1.0
    %v541 = vrcp.pop %v540
    %v542 = vmul.f32 1.0, %v541
    %v543 = vtanh.pop %v536
    %v544 = vmul.f32 %v542, %v202
    %546 = vrot.lane.b32.xlu0 %v543, 88
    %v547 = vpop.permute.xlu0 %546
    %v549 = vmul.f32 %v542, %v547
    %551 = vrot.lane.b32.xlu0 %v549, 20
    %v552 = vpop.permute.xlu0 %551
    %v554 = vadd.f32 %v544, %v552
    %v555 = vtanh.pop %v554
    %557 = vrot.lane.b32.xlu0 %v555, 40
    %v558 = vpop.permute.xlu0 %557
    %v560 = vmul.f32 %v542, %v558
    %562 = vset.pattern.permute.xlu0 20
    %563 = vperm.xlu0 %562, %v554
    %v564 = vpop.permute.xlu0 %563
    %v566 = vmul.f32 %v564, %v217
    %567 = vset.pattern.permute.xlu0 21
    %568 = vperm.xlu0 %567, %v554
    %v569 = vpop.permute.xlu0 %568
    %v571 = vmul.f32 %v569, %v226
    %572 = vset.pattern.permute.xlu0 22
    %573 = vperm.xlu0 %572, %v554
    %v574 = vpop.permute.xlu0 %573
    %v576 = vmul.f32 %v574, %v235
    %577 = vset.pattern.permute.xlu0 23
    %578 = vperm.xlu0 %577, %v554
    %v579 = vpop.permute.xlu0 %578
    %v581 = vmul.f32 %v579, %v244
    %582 = vset.pattern.permute.xlu0 24
    %583 = vperm.xlu0 %582, %v554
    %v584 = vpop.permute.xlu0 %583
    %v586 = vmul.f32 %v584, %v253
    %587 = vset.pattern.permute.xlu0 25
    %588 = vperm.xlu0 %587, %v554
    %v589 = vpop.permute.xlu0 %588
    %v591 = vmul.f32 %v589, %v262
    %592 = vset.pattern.permute.xlu0 26
    %593 = vperm.xlu0 %592, %v554
    %v594 = vpop.permute.xlu0 %593
    %v596 = vmul.f32 %v594, %v271
    %597 = vset.pattern.permute.xlu0 27
    %598 = vperm.xlu0 %597, %v554
    %v599 = vpop.permute.xlu0 %598
    %v601 = vmul.f32 %v599, %v280
    %602 = vset.pattern.permute.xlu0 28
    %603 = vperm.xlu0 %602, %v554
    %v604 = vpop.permute.xlu0 %603
    %v606 = vmul.f32 %v604, %v289
    %607 = vset.pattern.permute.xlu0 29
    %608 = vperm.xlu0 %607, %v554
    %v609 = vpop.permute.xlu0 %608
    %v611 = vmul.f32 %v609, %v298
    %612 = vset.pattern.permute.xlu0 30
    %613 = vperm.xlu0 %612, %v554
    %v614 = vpop.permute.xlu0 %613
    %v616 = vmul.f32 %v614, %v307
    %617 = vset.pattern.permute.xlu0 31
    %618 = vperm.xlu0 %617, %v554
    %v619 = vpop.permute.xlu0 %618
    %v621 = vmul.f32 %v619, %v316
    %622 = vset.pattern.permute.xlu0 32
    %623 = vperm.xlu0 %622, %v554
    %v624 = vpop.permute.xlu0 %623
    %v626 = vmul.f32 %v624, %v325
    %627 = vset.pattern.permute.xlu0 33
    %628 = vperm.xlu0 %627, %v554
    %v629 = vpop.permute.xlu0 %628
    %v631 = vmul.f32 %v629, %v334
    %632 = vset.pattern.permute.xlu0 34
    %633 = vperm.xlu0 %632, %v554
    %v634 = vpop.permute.xlu0 %633
    %v636 = vmul.f32 %v634, %v343
    %637 = vset.pattern.permute.xlu0 35
    %638 = vperm.xlu0 %637, %v554
    %v639 = vpop.permute.xlu0 %638
    %v641 = vmul.f32 %v639, %v352
    %642 = vset.pattern.permute.xlu0 36
    %643 = vperm.xlu0 %642, %v554
    %v644 = vpop.permute.xlu0 %643
    %v646 = vmul.f32 %v644, %v361
    %647 = vset.pattern.permute.xlu0 37
    %648 = vperm.xlu0 %647, %v554
    %v649 = vpop.permute.xlu0 %648
    %v651 = vmul.f32 %v649, %v370
    %652 = vset.pattern.permute.xlu0 38
    %653 = vperm.xlu0 %652, %v554
    %v654 = vpop.permute.xlu0 %653
    %v656 = vmul.f32 %v654, %v379
    %657 = vset.pattern.permute.xlu0 39
    %658 = vperm.xlu0 %657, %v554
    %v659 = vpop.permute.xlu0 %658
    %v661 = vmul.f32 %v659, %v388
    %v662 = vadd.f32 %v566, %v571
    %v663 = vadd.f32 %v576, %v581
    %v664 = vadd.f32 %v586, %v591
    %v665 = vadd.f32 %v596, %v601
    %v666 = vadd.f32 %v606, %v611
    %v667 = vadd.f32 %v616, %v621
    %v668 = vadd.f32 %v626, %v631
    %v669 = vadd.f32 %v636, %v641
    %v670 = vadd.f32 %v646, %v651
    %v671 = vadd.f32 %v656, %v661
    %v672 = vadd.f32 %v662, %v663
    %v673 = vadd.f32 %v664, %v665
    %v674 = vadd.f32 %v666, %v667
    %v675 = vadd.f32 %v668, %v669
    %v676 = vadd.f32 %v670, %v671
    %v677 = vadd.f32 %v672, %v673
    %v678 = vadd.f32 %v674, %v675
    %v679 = vadd.f32 %v677, %v678
    %v680 = vadd.f32 %v679, %v676
    %v681 = vadd.f32 %v680, %v48
    %682 = vset.pattern.permute.xlu0 2
    %683 = vperm.xlu0 %682, %v27
    %v684 = vpop.permute.xlu0 %683
    %v686 = vmul.f32 %v684, %v61
    %v687 = vadd.f32 %v686, %v41
    %689 = vset.pattern.permute.xlu0 60
    %690 = vperm.xlu0 %689, %v560
    %v691 = vpop.permute.xlu0 %690
    %v693 = vmul.f32 %v691, %v68
    %694 = vset.pattern.permute.xlu0 61
    %695 = vperm.xlu0 %694, %v560
    %v696 = vpop.permute.xlu0 %695
    %v698 = vmul.f32 %v696, %v73
    %699 = vset.pattern.permute.xlu0 62
    %700 = vperm.xlu0 %699, %v560
    %v701 = vpop.permute.xlu0 %700
    %v703 = vmul.f32 %v701, %v78
    %704 = vset.pattern.permute.xlu0 63
    %705 = vperm.xlu0 %704, %v560
    %v706 = vpop.permute.xlu0 %705
    %v708 = vmul.f32 %v706, %v83
    %709 = vset.pattern.permute.xlu0 64
    %710 = vperm.xlu0 %709, %v560
    %v711 = vpop.permute.xlu0 %710
    %v713 = vmul.f32 %v711, %v88
    %714 = vset.pattern.permute.xlu0 65
    %715 = vperm.xlu0 %714, %v560
    %v716 = vpop.permute.xlu0 %715
    %v718 = vmul.f32 %v716, %v93
    %719 = vset.pattern.permute.xlu0 66
    %720 = vperm.xlu0 %719, %v560
    %v721 = vpop.permute.xlu0 %720
    %v723 = vmul.f32 %v721, %v98
    %724 = vset.pattern.permute.xlu0 67
    %725 = vperm.xlu0 %724, %v560
    %v726 = vpop.permute.xlu0 %725
    %v728 = vmul.f32 %v726, %v103
    %729 = vset.pattern.permute.xlu0 68
    %730 = vperm.xlu0 %729, %v560
    %v731 = vpop.permute.xlu0 %730
    %v733 = vmul.f32 %v731, %v108
    %734 = vset.pattern.permute.xlu0 69
    %735 = vperm.xlu0 %734, %v560
    %v736 = vpop.permute.xlu0 %735
    %v738 = vmul.f32 %v736, %v113
    %739 = vset.pattern.permute.xlu0 70
    %740 = vperm.xlu0 %739, %v560
    %v741 = vpop.permute.xlu0 %740
    %v743 = vmul.f32 %v741, %v118
    %744 = vset.pattern.permute.xlu0 71
    %745 = vperm.xlu0 %744, %v560
    %v746 = vpop.permute.xlu0 %745
    %v748 = vmul.f32 %v746, %v123
    %749 = vset.pattern.permute.xlu0 72
    %750 = vperm.xlu0 %749, %v560
    %v751 = vpop.permute.xlu0 %750
    %v753 = vmul.f32 %v751, %v128
    %754 = vset.pattern.permute.xlu0 73
    %755 = vperm.xlu0 %754, %v560
    %v756 = vpop.permute.xlu0 %755
    %v758 = vmul.f32 %v756, %v133
    %759 = vset.pattern.permute.xlu0 74
    %760 = vperm.xlu0 %759, %v560
    %v761 = vpop.permute.xlu0 %760
    %v763 = vmul.f32 %v761, %v138
    %764 = vset.pattern.permute.xlu0 75
    %765 = vperm.xlu0 %764, %v560
    %v766 = vpop.permute.xlu0 %765
    %v768 = vmul.f32 %v766, %v143
    %769 = vset.pattern.permute.xlu0 76
    %770 = vperm.xlu0 %769, %v560
    %v771 = vpop.permute.xlu0 %770
    %v773 = vmul.f32 %v771, %v148
    %774 = vset.pattern.permute.xlu0 77
    %775 = vperm.xlu0 %774, %v560
    %v776 = vpop.permute.xlu0 %775
    %v778 = vmul.f32 %v776, %v153
    %779 = vset.pattern.permute.xlu0 78
    %780 = vperm.xlu0 %779, %v560
    %v781 = vpop.permute.xlu0 %780
    %v783 = vmul.f32 %v781, %v158
    %784 = vset.pattern.permute.xlu0 79
    %785 = vperm.xlu0 %784, %v560
    %v786 = vpop.permute.xlu0 %785
    %v788 = vmul.f32 %v786, %v163
    %v789 = vadd.f32 %v693, %v698
    %v790 = vadd.f32 %v703, %v708
    %v791 = vadd.f32 %v713, %v718
    %v792 = vadd.f32 %v723, %v728
    %v793 = vadd.f32 %v733, %v738
    %v794 = vadd.f32 %v743, %v748
    %v795 = vadd.f32 %v753, %v758
    %v796 = vadd.f32 %v763, %v768
    %v797 = vadd.f32 %v773, %v778
    %v798 = vadd.f32 %v783, %v788
    %v799 = vadd.f32 %v789, %v790
    %v800 = vadd.f32 %v791, %v792
    %v801 = vadd.f32 %v793, %v794
    %v802 = vadd.f32 %v795, %v796
    %v803 = vadd.f32 %v797, %v798
    %v804 = vadd.f32 %v799, %v800
    %v805 = vadd.f32 %v801, %v802
    %v806 = vadd.f32 %v804, %v805
    %v807 = vadd.f32 %v806, %v803
    %v808 = vadd.f32 %v687, %v807
    %v809 = vxor.u32 %v808, 2147483648
    %v810 = vmul.f32 %v809, 1.442695
    %v811 = vpow.pop %v810
    %v812 = vadd.f32 %v811, 1.0
    %v813 = vrcp.pop %v812
    %v814 = vmul.f32 1.0, %v813
    %v815 = vtanh.pop %v808
    %v816 = vmul.f32 %v814, %v554
    %818 = vrot.lane.b32.xlu0 %v815, 88
    %v819 = vpop.permute.xlu0 %818
    %v821 = vmul.f32 %v814, %v819
    %823 = vrot.lane.b32.xlu0 %v821, 20
    %v824 = vpop.permute.xlu0 %823
    %v826 = vadd.f32 %v816, %v824
    %v827 = vtanh.pop %v826
    %829 = vrot.lane.b32.xlu0 %v827, 40
    %v830 = vpop.permute.xlu0 %829
    %v832 = vmul.f32 %v814, %v830
    %834 = vset.pattern.permute.xlu0 20
    %835 = vperm.xlu0 %834, %v826
    %v836 = vpop.permute.xlu0 %835
    %v838 = vmul.f32 %v836, %v217
    %839 = vset.pattern.permute.xlu0 21
    %840 = vperm.xlu0 %839, %v826
    %v841 = vpop.permute.xlu0 %840
    %v843 = vmul.f32 %v841, %v226
    %844 = vset.pattern.permute.xlu0 22
    %845 = vperm.xlu0 %844, %v826
    %v846 = vpop.permute.xlu0 %845
    %v848 = vmul.f32 %v846, %v235
    %849 = vset.pattern.permute.xlu0 23
    %850 = vperm.xlu0 %849, %v826
    %v851 = vpop.permute.xlu0 %850
    %v853 = vmul.f32 %v851, %v244
    %854 = vset.pattern.permute.xlu0 24
    %855 = vperm.xlu0 %854, %v826
    %v856 = vpop.permute.xlu0 %855
    %v858 = vmul.f32 %v856, %v253
    %859 = vset.pattern.permute.xlu0 25
    %860 = vperm.xlu0 %859, %v826
    %v861 = vpop.permute.xlu0 %860
    %v863 = vmul.f32 %v861, %v262
    %864 = vset.pattern.permute.xlu0 26
    %865 = vperm.xlu0 %864, %v826
    %v866 = vpop.permute.xlu0 %865
    %v868 = vmul.f32 %v866, %v271
    %869 = vset.pattern.permute.xlu0 27
    %870 = vperm.xlu0 %869, %v826
    %v871 = vpop.permute.xlu0 %870
    %v873 = vmul.f32 %v871, %v280
    %874 = vset.pattern.permute.xlu0 28
    %875 = vperm.xlu0 %874, %v826
    %v876 = vpop.permute.xlu0 %875
    %v878 = vmul.f32 %v876, %v289
    %879 = vset.pattern.permute.xlu0 29
    %880 = vperm.xlu0 %879, %v826
    %v881 = vpop.permute.xlu0 %880
    %v883 = vmul.f32 %v881, %v298
    %884 = vset.pattern.permute.xlu0 30
    %885 = vperm.xlu0 %884, %v826
    %v886 = vpop.permute.xlu0 %885
    %v888 = vmul.f32 %v886, %v307
    %889 = vset.pattern.permute.xlu0 31
    %890 = vperm.xlu0 %889, %v826
    %v891 = vpop.permute.xlu0 %890
    %v893 = vmul.f32 %v891, %v316
    %894 = vset.pattern.permute.xlu0 32
    %895 = vperm.xlu0 %894, %v826
    %v896 = vpop.permute.xlu0 %895
    %v898 = vmul.f32 %v896, %v325
    %899 = vset.pattern.permute.xlu0 33
    %900 = vperm.xlu0 %899, %v826
    %v901 = vpop.permute.xlu0 %900
    %v903 = vmul.f32 %v901, %v334
    %904 = vset.pattern.permute.xlu0 34
    %905 = vperm.xlu0 %904, %v826
    %v906 = vpop.permute.xlu0 %905
    %v908 = vmul.f32 %v906, %v343
    %909 = vset.pattern.permute.xlu0 35
    %910 = vperm.xlu0 %909, %v826
    %v911 = vpop.permute.xlu0 %910
    %v913 = vmul.f32 %v911, %v352
    %914 = vset.pattern.permute.xlu0 36
    %915 = vperm.xlu0 %914, %v826
    %v916 = vpop.permute.xlu0 %915
    %v918 = vmul.f32 %v916, %v361
    %919 = vset.pattern.permute.xlu0 37
    %920 = vperm.xlu0 %919, %v826
    %v921 = vpop.permute.xlu0 %920
    %v923 = vmul.f32 %v921, %v370
    %924 = vset.pattern.permute.xlu0 38
    %925 = vperm.xlu0 %924, %v826
    %v926 = vpop.permute.xlu0 %925
    %v928 = vmul.f32 %v926, %v379
    %929 = vset.pattern.permute.xlu0 39
    %930 = vperm.xlu0 %929, %v826
    %v931 = vpop.permute.xlu0 %930
    %v933 = vmul.f32 %v931, %v388
    %v934 = vadd.f32 %v838, %v843
    %v935 = vadd.f32 %v848, %v853
    %v936 = vadd.f32 %v858, %v863
    %v937 = vadd.f32 %v868, %v873
    %v938 = vadd.f32 %v878, %v883
    %v939 = vadd.f32 %v888, %v893
    %v940 = vadd.f32 %v898, %v903
    %v941 = vadd.f32 %v908, %v913
    %v942 = vadd.f32 %v918, %v923
    %v943 = vadd.f32 %v928, %v933
    %v944 = vadd.f32 %v934, %v935
    %v945 = vadd.f32 %v936, %v937
    %v946 = vadd.f32 %v938, %v939
    %v947 = vadd.f32 %v940, %v941
    %v948 = vadd.f32 %v942, %v943
    %v949 = vadd.f32 %v944, %v945
    %v950 = vadd.f32 %v946, %v947
    %v951 = vadd.f32 %v949, %v950
    %v952 = vadd.f32 %v951, %v948
    %v953 = vadd.f32 %v952, %v48
    %954 = vset.pattern.permute.xlu0 3
    %955 = vperm.xlu0 %954, %v27
    %v956 = vpop.permute.xlu0 %955
    %v958 = vmul.f32 %v956, %v61
    %v959 = vadd.f32 %v958, %v41
    %961 = vset.pattern.permute.xlu0 60
    %962 = vperm.xlu0 %961, %v832
    %v963 = vpop.permute.xlu0 %962
    %v965 = vmul.f32 %v963, %v68
    %966 = vset.pattern.permute.xlu0 61
    %967 = vperm.xlu0 %966, %v832
    %v968 = vpop.permute.xlu0 %967
    %v970 = vmul.f32 %v968, %v73
    %971 = vset.pattern.permute.xlu0 62
    %972 = vperm.xlu0 %971, %v832
    %v973 = vpop.permute.xlu0 %972
    %v975 = vmul.f32 %v973, %v78
    %976 = vset.pattern.permute.xlu0 63
    %977 = vperm.xlu0 %976, %v832
    %v978 = vpop.permute.xlu0 %977
    %v980 = vmul.f32 %v978, %v83
    %981 = vset.pattern.permute.xlu0 64
    %982 = vperm.xlu0 %981, %v832
    %v983 = vpop.permute.xlu0 %982
    %v985 = vmul.f32 %v983, %v88
    %986 = vset.pattern.permute.xlu0 65
    %987 = vperm.xlu0 %986, %v832
    %v988 = vpop.permute.xlu0 %987
    %v990 = vmul.f32 %v988, %v93
    %991 = vset.pattern.permute.xlu0 66
    %992 = vperm.xlu0 %991, %v832
    %v993 = vpop.permute.xlu0 %992
    %v995 = vmul.f32 %v993, %v98
    %996 = vset.pattern.permute.xlu0 67
    %997 = vperm.xlu0 %996, %v832
    %v998 = vpop.permute.xlu0 %997
    %v1000 = vmul.f32 %v998, %v103
    %1001 = vset.pattern.permute.xlu0 68
    %1002 = vperm.xlu0 %1001, %v832
    %v1003 = vpop.permute.xlu0 %1002
    %v1005 = vmul.f32 %v1003, %v108
    %1006 = vset.pattern.permute.xlu0 69
    %1007 = vperm.xlu0 %1006, %v832
    %v1008 = vpop.permute.xlu0 %1007
    %v1010 = vmul.f32 %v1008, %v113
    %1011 = vset.pattern.permute.xlu0 70
    %1012 = vperm.xlu0 %1011, %v832
    %v1013 = vpop.permute.xlu0 %1012
    %v1015 = vmul.f32 %v1013, %v118
    %1016 = vset.pattern.permute.xlu0 71
    %1017 = vperm.xlu0 %1016, %v832
    %v1018 = vpop.permute.xlu0 %1017
    %v1020 = vmul.f32 %v1018, %v123
    %1021 = vset.pattern.permute.xlu0 72
    %1022 = vperm.xlu0 %1021, %v832
    %v1023 = vpop.permute.xlu0 %1022
    %v1025 = vmul.f32 %v1023, %v128
    %1026 = vset.pattern.permute.xlu0 73
    %1027 = vperm.xlu0 %1026, %v832
    %v1028 = vpop.permute.xlu0 %1027
    %v1030 = vmul.f32 %v1028, %v133
    %1031 = vset.pattern.permute.xlu0 74
    %1032 = vperm.xlu0 %1031, %v832
    %v1033 = vpop.permute.xlu0 %1032
    %v1035 = vmul.f32 %v1033, %v138
    %1036 = vset.pattern.permute.xlu0 75
    %1037 = vperm.xlu0 %1036, %v832
    %v1038 = vpop.permute.xlu0 %1037
    %v1040 = vmul.f32 %v1038, %v143
    %1041 = vset.pattern.permute.xlu0 76
    %1042 = vperm.xlu0 %1041, %v832
    %v1043 = vpop.permute.xlu0 %1042
    %v1045 = vmul.f32 %v1043, %v148
    %1046 = vset.pattern.permute.xlu0 77
    %1047 = vperm.xlu0 %1046, %v832
    %v1048 = vpop.permute.xlu0 %1047
    %v1050 = vmul.f32 %v1048, %v153
    %1051 = vset.pattern.permute.xlu0 78
    %1052 = vperm.xlu0 %1051, %v832
    %v1053 = vpop.permute.xlu0 %1052
    %v1055 = vmul.f32 %v1053, %v158
    %1056 = vset.pattern.permute.xlu0 79
    %1057 = vperm.xlu0 %1056, %v832
    %v1058 = vpop.permute.xlu0 %1057
    %v1060 = vmul.f32 %v1058, %v163
    %v1061 = vadd.f32 %v965, %v970
    %v1062 = vadd.f32 %v975, %v980
    %v1063 = vadd.f32 %v985, %v990
    %v1064 = vadd.f32 %v995, %v1000
    %v1065 = vadd.f32 %v1005, %v1010
    %v1066 = vadd.f32 %v1015, %v1020
    %v1067 = vadd.f32 %v1025, %v1030
    %v1068 = vadd.f32 %v1035, %v1040
    %v1069 = vadd.f32 %v1045, %v1050
    %v1070 = vadd.f32 %v1055, %v1060
    %v1071 = vadd.f32 %v1061, %v1062
    %v1072 = vadd.f32 %v1063, %v1064
    %v1073 = vadd.f32 %v1065, %v1066
    %v1074 = vadd.f32 %v1067, %v1068
    %v1075 = vadd.f32 %v1069, %v1070
    %v1076 = vadd.f32 %v1071, %v1072
    %v1077 = vadd.f32 %v1073, %v1074
    %v1078 = vadd.f32 %v1076, %v1077
    %v1079 = vadd.f32 %v1078, %v1075
    %v1080 = vadd.f32 %v959, %v1079
    %v1081 = vxor.u32 %v1080, 2147483648
    %v1082 = vmul.f32 %v1081, 1.442695
    %v1083 = vpow.pop %v1082
    %v1084 = vadd.f32 %v1083, 1.0
    %v1085 = vrcp.pop %v1084
    %v1086 = vmul.f32 1.0, %v1085
    %v1087 = vtanh.pop %v1080
    %v1088 = vmul.f32 %v1086, %v826
    %1090 = vrot.lane.b32.xlu0 %v1087, 88
    %v1091 = vpop.permute.xlu0 %1090
    %v1093 = vmul.f32 %v1086, %v1091
    %1095 = vrot.lane.b32.xlu0 %v1093, 20
    %v1096 = vpop.permute.xlu0 %1095
    %v1098 = vadd.f32 %v1088, %v1096
    %v1099 = vtanh.pop %v1098
    %1101 = vrot.lane.b32.xlu0 %v1099, 40
    %v1102 = vpop.permute.xlu0 %1101
    %v1104 = vmul.f32 %v1086, %v1102
    %1106 = vset.pattern.permute.xlu0 20
    %1107 = vperm.xlu0 %1106, %v1098
    %v1108 = vpop.permute.xlu0 %1107
    %v1110 = vmul.f32 %v1108, %v217
    %1111 = vset.pattern.permute.xlu0 21
    %1112 = vperm.xlu0 %1111, %v1098
    %v1113 = vpop.permute.xlu0 %1112
    %v1115 = vmul.f32 %v1113, %v226
    %1116 = vset.pattern.permute.xlu0 22
    %1117 = vperm.xlu0 %1116, %v1098
    %v1118 = vpop.permute.xlu0 %1117
    %v1120 = vmul.f32 %v1118, %v235
    %1121 = vset.pattern.permute.xlu0 23
    %1122 = vperm.xlu0 %1121, %v1098
    %v1123 = vpop.permute.xlu0 %1122
    %v1125 = vmul.f32 %v1123, %v244
    %1126 = vset.pattern.permute.xlu0 24
    %1127 = vperm.xlu0 %1126, %v1098
    %v1128 = vpop.permute.xlu0 %1127
    %v1130 = vmul.f32 %v1128, %v253
    %1131 = vset.pattern.permute.xlu0 25
    %1132 = vperm.xlu0 %1131, %v1098
    %v1133 = vpop.permute.xlu0 %1132
    %v1135 = vmul.f32 %v1133, %v262
    %1136 = vset.pattern.permute.xlu0 26
    %1137 = vperm.xlu0 %1136, %v1098
    %v1138 = vpop.permute.xlu0 %1137
    %v1140 = vmul.f32 %v1138, %v271
    %1141 = vset.pattern.permute.xlu0 27
    %1142 = vperm.xlu0 %1141, %v1098
    %v1143 = vpop.permute.xlu0 %1142
    %v1145 = vmul.f32 %v1143, %v280
    %1146 = vset.pattern.permute.xlu0 28
    %1147 = vperm.xlu0 %1146, %v1098
    %v1148 = vpop.permute.xlu0 %1147
    %v1150 = vmul.f32 %v1148, %v289
    %1151 = vset.pattern.permute.xlu0 29
    %1152 = vperm.xlu0 %1151, %v1098
    %v1153 = vpop.permute.xlu0 %1152
    %v1155 = vmul.f32 %v1153, %v298
    %1156 = vset.pattern.permute.xlu0 30
    %1157 = vperm.xlu0 %1156, %v1098
    %v1158 = vpop.permute.xlu0 %1157
    %v1160 = vmul.f32 %v1158, %v307
    %1161 = vset.pattern.permute.xlu0 31
    %1162 = vperm.xlu0 %1161, %v1098
    %v1163 = vpop.permute.xlu0 %1162
    %v1165 = vmul.f32 %v1163, %v316
    %1166 = vset.pattern.permute.xlu0 32
    %1167 = vperm.xlu0 %1166, %v1098
    %v1168 = vpop.permute.xlu0 %1167
    %v1170 = vmul.f32 %v1168, %v325
    %1171 = vset.pattern.permute.xlu0 33
    %1172 = vperm.xlu0 %1171, %v1098
    %v1173 = vpop.permute.xlu0 %1172
    %v1175 = vmul.f32 %v1173, %v334
    %1176 = vset.pattern.permute.xlu0 34
    %1177 = vperm.xlu0 %1176, %v1098
    %v1178 = vpop.permute.xlu0 %1177
    %v1180 = vmul.f32 %v1178, %v343
    %1181 = vset.pattern.permute.xlu0 35
    %1182 = vperm.xlu0 %1181, %v1098
    %v1183 = vpop.permute.xlu0 %1182
    %v1185 = vmul.f32 %v1183, %v352
    %1186 = vset.pattern.permute.xlu0 36
    %1187 = vperm.xlu0 %1186, %v1098
    %v1188 = vpop.permute.xlu0 %1187
    %v1190 = vmul.f32 %v1188, %v361
    %1191 = vset.pattern.permute.xlu0 37
    %1192 = vperm.xlu0 %1191, %v1098
    %v1193 = vpop.permute.xlu0 %1192
    %v1195 = vmul.f32 %v1193, %v370
    %1196 = vset.pattern.permute.xlu0 38
    %1197 = vperm.xlu0 %1196, %v1098
    %v1198 = vpop.permute.xlu0 %1197
    %v1200 = vmul.f32 %v1198, %v379
    %1201 = vset.pattern.permute.xlu0 39
    %1202 = vperm.xlu0 %1201, %v1098
    %v1203 = vpop.permute.xlu0 %1202
    %v1205 = vmul.f32 %v1203, %v388
    %v1206 = vadd.f32 %v1110, %v1115
    %v1207 = vadd.f32 %v1120, %v1125
    %v1208 = vadd.f32 %v1130, %v1135
    %v1209 = vadd.f32 %v1140, %v1145
    %v1210 = vadd.f32 %v1150, %v1155
    %v1211 = vadd.f32 %v1160, %v1165
    %v1212 = vadd.f32 %v1170, %v1175
    %v1213 = vadd.f32 %v1180, %v1185
    %v1214 = vadd.f32 %v1190, %v1195
    %v1215 = vadd.f32 %v1200, %v1205
    %v1216 = vadd.f32 %v1206, %v1207
    %v1217 = vadd.f32 %v1208, %v1209
    %v1218 = vadd.f32 %v1210, %v1211
    %v1219 = vadd.f32 %v1212, %v1213
    %v1220 = vadd.f32 %v1214, %v1215
    %v1221 = vadd.f32 %v1216, %v1217
    %v1222 = vadd.f32 %v1218, %v1219
    %v1223 = vadd.f32 %v1221, %v1222
    %v1224 = vadd.f32 %v1223, %v1220
    %v1225 = vadd.f32 %v1224, %v48
    %1226 = vset.pattern.permute.xlu0 4
    %1227 = vperm.xlu0 %1226, %v27
    %v1228 = vpop.permute.xlu0 %1227
    %v1230 = vmul.f32 %v1228, %v61
    %v1231 = vadd.f32 %v1230, %v41
    %1233 = vset.pattern.permute.xlu0 60
    %1234 = vperm.xlu0 %1233, %v1104
    %v1235 = vpop.permute.xlu0 %1234
    %v1237 = vmul.f32 %v1235, %v68
    %1238 = vset.pattern.permute.xlu0 61
    %1239 = vperm.xlu0 %1238, %v1104
    %v1240 = vpop.permute.xlu0 %1239
    %v1242 = vmul.f32 %v1240, %v73
    %1243 = vset.pattern.permute.xlu0 62
    %1244 = vperm.xlu0 %1243, %v1104
    %v1245 = vpop.permute.xlu0 %1244
    %v1247 = vmul.f32 %v1245, %v78
    %1248 = vset.pattern.permute.xlu0 63
    %1249 = vperm.xlu0 %1248, %v1104
    %v1250 = vpop.permute.xlu0 %1249
    %v1252 = vmul.f32 %v1250, %v83
    %1253 = vset.pattern.permute.xlu0 64
    %1254 = vperm.xlu0 %1253, %v1104
    %v1255 = vpop.permute.xlu0 %1254
    %v1257 = vmul.f32 %v1255, %v88
    %1258 = vset.pattern.permute.xlu0 65
    %1259 = vperm.xlu0 %1258, %v1104
    %v1260 = vpop.permute.xlu0 %1259
    %v1262 = vmul.f32 %v1260, %v93
    %1263 = vset.pattern.permute.xlu0 66
    %1264 = vperm.xlu0 %1263, %v1104
    %v1265 = vpop.permute.xlu0 %1264
    %v1267 = vmul.f32 %v1265, %v98
    %1268 = vset.pattern.permute.xlu0 67
    %1269 = vperm.xlu0 %1268, %v1104
    %v1270 = vpop.permute.xlu0 %1269
    %v1272 = vmul.f32 %v1270, %v103
    %1273 = vset.pattern.permute.xlu0 68
    %1274 = vperm.xlu0 %1273, %v1104
    %v1275 = vpop.permute.xlu0 %1274
    %v1277 = vmul.f32 %v1275, %v108
    %1278 = vset.pattern.permute.xlu0 69
    %1279 = vperm.xlu0 %1278, %v1104
    %v1280 = vpop.permute.xlu0 %1279
    %v1282 = vmul.f32 %v1280, %v113
    %1283 = vset.pattern.permute.xlu0 70
    %1284 = vperm.xlu0 %1283, %v1104
    %v1285 = vpop.permute.xlu0 %1284
    %v1287 = vmul.f32 %v1285, %v118
    %1288 = vset.pattern.permute.xlu0 71
    %1289 = vperm.xlu0 %1288, %v1104
    %v1290 = vpop.permute.xlu0 %1289
    %v1292 = vmul.f32 %v1290, %v123
    %1293 = vset.pattern.permute.xlu0 72
    %1294 = vperm.xlu0 %1293, %v1104
    %v1295 = vpop.permute.xlu0 %1294
    %v1297 = vmul.f32 %v1295, %v128
    %1298 = vset.pattern.permute.xlu0 73
    %1299 = vperm.xlu0 %1298, %v1104
    %v1300 = vpop.permute.xlu0 %1299
    %v1302 = vmul.f32 %v1300, %v133
    %1303 = vset.pattern.permute.xlu0 74
    %1304 = vperm.xlu0 %1303, %v1104
    %v1305 = vpop.permute.xlu0 %1304
    %v1307 = vmul.f32 %v1305, %v138
    %1308 = vset.pattern.permute.xlu0 75
    %1309 = vperm.xlu0 %1308, %v1104
    %v1310 = vpop.permute.xlu0 %1309
    %v1312 = vmul.f32 %v1310, %v143
    %1313 = vset.pattern.permute.xlu0 76
    %1314 = vperm.xlu0 %1313, %v1104
    %v1315 = vpop.permute.xlu0 %1314
    %v1317 = vmul.f32 %v1315, %v148
    %1318 = vset.pattern.permute.xlu0 77
    %1319 = vperm.xlu0 %1318, %v1104
    %v1320 = vpop.permute.xlu0 %1319
    %v1322 = vmul.f32 %v1320, %v153
    %1323 = vset.pattern.permute.xlu0 78
    %1324 = vperm.xlu0 %1323, %v1104
    %v1325 = vpop.permute.xlu0 %1324
    %v1327 = vmul.f32 %v1325, %v158
    %1328 = vset.pattern.permute.xlu0 79
    %1329 = vperm.xlu0 %1328, %v1104
    %v1330 = vpop.permute.xlu0 %1329
    %v1332 = vmul.f32 %v1330, %v163
    %v1333 = vadd.f32 %v1237, %v1242
    %v1334 = vadd.f32 %v1247, %v1252
    %v1335 = vadd.f32 %v1257, %v1262
    %v1336 = vadd.f32 %v1267, %v1272
    %v1337 = vadd.f32 %v1277, %v1282
    %v1338 = vadd.f32 %v1287, %v1292
    %v1339 = vadd.f32 %v1297, %v1302
    %v1340 = vadd.f32 %v1307, %v1312
    %v1341 = vadd.f32 %v1317, %v1322
    %v1342 = vadd.f32 %v1327, %v1332
    %v1343 = vadd.f32 %v1333, %v1334
    %v1344 = vadd.f32 %v1335, %v1336
    %v1345 = vadd.f32 %v1337, %v1338
    %v1346 = vadd.f32 %v1339, %v1340
    %v1347 = vadd.f32 %v1341, %v1342
    %v1348 = vadd.f32 %v1343, %v1344
    %v1349 = vadd.f32 %v1345, %v1346
    %v1350 = vadd.f32 %v1348, %v1349
    %v1351 = vadd.f32 %v1350, %v1347
    %v1352 = vadd.f32 %v1231, %v1351
    %v1353 = vxor.u32 %v1352, 2147483648
    %v1354 = vmul.f32 %v1353, 1.442695
    %v1355 = vpow.pop %v1354
    %v1356 = vadd.f32 %v1355, 1.0
    %v1357 = vrcp.pop %v1356
    %v1358 = vmul.f32 1.0, %v1357
    %v1359 = vtanh.pop %v1352
    %v1360 = vmul.f32 %v1358, %v1098
    %1362 = vrot.lane.b32.xlu0 %v1359, 88
    %v1363 = vpop.permute.xlu0 %1362
    %v1365 = vmul.f32 %v1358, %v1363
    %1367 = vrot.lane.b32.xlu0 %v1365, 20
    %v1368 = vpop.permute.xlu0 %1367
    %v1370 = vadd.f32 %v1360, %v1368
    %v1371 = vtanh.pop %v1370
    %1373 = vrot.lane.b32.xlu0 %v1371, 40
    %v1374 = vpop.permute.xlu0 %1373
    %v1376 = vmul.f32 %v1358, %v1374
    %1378 = vset.pattern.permute.xlu0 20
    %1379 = vperm.xlu0 %1378, %v1370
    %v1380 = vpop.permute.xlu0 %1379
    %v1382 = vmul.f32 %v1380, %v217
    %1383 = vset.pattern.permute.xlu0 21
    %1384 = vperm.xlu0 %1383, %v1370
    %v1385 = vpop.permute.xlu0 %1384
    %v1387 = vmul.f32 %v1385, %v226
    %1388 = vset.pattern.permute.xlu0 22
    %1389 = vperm.xlu0 %1388, %v1370
    %v1390 = vpop.permute.xlu0 %1389
    %v1392 = vmul.f32 %v1390, %v235
    %1393 = vset.pattern.permute.xlu0 23
    %1394 = vperm.xlu0 %1393, %v1370
    %v1395 = vpop.permute.xlu0 %1394
    %v1397 = vmul.f32 %v1395, %v244
    %1398 = vset.pattern.permute.xlu0 24
    %1399 = vperm.xlu0 %1398, %v1370
    %v1400 = vpop.permute.xlu0 %1399
    %v1402 = vmul.f32 %v1400, %v253
    %1403 = vset.pattern.permute.xlu0 25
    %1404 = vperm.xlu0 %1403, %v1370
    %v1405 = vpop.permute.xlu0 %1404
    %v1407 = vmul.f32 %v1405, %v262
    %1408 = vset.pattern.permute.xlu0 26
    %1409 = vperm.xlu0 %1408, %v1370
    %v1410 = vpop.permute.xlu0 %1409
    %v1412 = vmul.f32 %v1410, %v271
    %1413 = vset.pattern.permute.xlu0 27
    %1414 = vperm.xlu0 %1413, %v1370
    %v1415 = vpop.permute.xlu0 %1414
    %v1417 = vmul.f32 %v1415, %v280
    %1418 = vset.pattern.permute.xlu0 28
    %1419 = vperm.xlu0 %1418, %v1370
    %v1420 = vpop.permute.xlu0 %1419
    %v1422 = vmul.f32 %v1420, %v289
    %1423 = vset.pattern.permute.xlu0 29
    %1424 = vperm.xlu0 %1423, %v1370
    %v1425 = vpop.permute.xlu0 %1424
    %v1427 = vmul.f32 %v1425, %v298
    %1428 = vset.pattern.permute.xlu0 30
    %1429 = vperm.xlu0 %1428, %v1370
    %v1430 = vpop.permute.xlu0 %1429
    %v1432 = vmul.f32 %v1430, %v307
    %1433 = vset.pattern.permute.xlu0 31
    %1434 = vperm.xlu0 %1433, %v1370
    %v1435 = vpop.permute.xlu0 %1434
    %v1437 = vmul.f32 %v1435, %v316
    %1438 = vset.pattern.permute.xlu0 32
    %1439 = vperm.xlu0 %1438, %v1370
    %v1440 = vpop.permute.xlu0 %1439
    %v1442 = vmul.f32 %v1440, %v325
    %1443 = vset.pattern.permute.xlu0 33
    %1444 = vperm.xlu0 %1443, %v1370
    %v1445 = vpop.permute.xlu0 %1444
    %v1447 = vmul.f32 %v1445, %v334
    %1448 = vset.pattern.permute.xlu0 34
    %1449 = vperm.xlu0 %1448, %v1370
    %v1450 = vpop.permute.xlu0 %1449
    %v1452 = vmul.f32 %v1450, %v343
    %1453 = vset.pattern.permute.xlu0 35
    %1454 = vperm.xlu0 %1453, %v1370
    %v1455 = vpop.permute.xlu0 %1454
    %v1457 = vmul.f32 %v1455, %v352
    %1458 = vset.pattern.permute.xlu0 36
    %1459 = vperm.xlu0 %1458, %v1370
    %v1460 = vpop.permute.xlu0 %1459
    %v1462 = vmul.f32 %v1460, %v361
    %1463 = vset.pattern.permute.xlu0 37
    %1464 = vperm.xlu0 %1463, %v1370
    %v1465 = vpop.permute.xlu0 %1464
    %v1467 = vmul.f32 %v1465, %v370
    %1468 = vset.pattern.permute.xlu0 38
    %1469 = vperm.xlu0 %1468, %v1370
    %v1470 = vpop.permute.xlu0 %1469
    %v1472 = vmul.f32 %v1470, %v379
    %1473 = vset.pattern.permute.xlu0 39
    %1474 = vperm.xlu0 %1473, %v1370
    %v1475 = vpop.permute.xlu0 %1474
    %v1477 = vmul.f32 %v1475, %v388
    %v1478 = vadd.f32 %v1382, %v1387
    %v1479 = vadd.f32 %v1392, %v1397
    %v1480 = vadd.f32 %v1402, %v1407
    %v1481 = vadd.f32 %v1412, %v1417
    %v1482 = vadd.f32 %v1422, %v1427
    %v1483 = vadd.f32 %v1432, %v1437
    %v1484 = vadd.f32 %v1442, %v1447
    %v1485 = vadd.f32 %v1452, %v1457
    %v1486 = vadd.f32 %v1462, %v1467
    %v1487 = vadd.f32 %v1472, %v1477
    %v1488 = vadd.f32 %v1478, %v1479
    %v1489 = vadd.f32 %v1480, %v1481
    %v1490 = vadd.f32 %v1482, %v1483
    %v1491 = vadd.f32 %v1484, %v1485
    %v1492 = vadd.f32 %v1486, %v1487
    %v1493 = vadd.f32 %v1488, %v1489
    %v1494 = vadd.f32 %v1490, %v1491
    %v1495 = vadd.f32 %v1493, %v1494
    %v1496 = vadd.f32 %v1495, %v1492
    %v1497 = vadd.f32 %v1496, %v48
    %1498 = vset.pattern.permute.xlu0 5
    %1499 = vperm.xlu0 %1498, %v27
    %v1500 = vpop.permute.xlu0 %1499
    %v1502 = vmul.f32 %v1500, %v61
    %v1503 = vadd.f32 %v1502, %v41
    %1505 = vset.pattern.permute.xlu0 60
    %1506 = vperm.xlu0 %1505, %v1376
    %v1507 = vpop.permute.xlu0 %1506
    %v1509 = vmul.f32 %v1507, %v68
    %1510 = vset.pattern.permute.xlu0 61
    %1511 = vperm.xlu0 %1510, %v1376
    %v1512 = vpop.permute.xlu0 %1511
    %v1514 = vmul.f32 %v1512, %v73
    %1515 = vset.pattern.permute.xlu0 62
    %1516 = vperm.xlu0 %1515, %v1376
    %v1517 = vpop.permute.xlu0 %1516
    %v1519 = vmul.f32 %v1517, %v78
    %1520 = vset.pattern.permute.xlu0 63
    %1521 = vperm.xlu0 %1520, %v1376
    %v1522 = vpop.permute.xlu0 %1521
    %v1524 = vmul.f32 %v1522, %v83
    %1525 = vset.pattern.permute.xlu0 64
    %1526 = vperm.xlu0 %1525, %v1376
    %v1527 = vpop.permute.xlu0 %1526
    %v1529 = vmul.f32 %v1527, %v88
    %1530 = vset.pattern.permute.xlu0 65
    %1531 = vperm.xlu0 %1530, %v1376
    %v1532 = vpop.permute.xlu0 %1531
    %v1534 = vmul.f32 %v1532, %v93
    %1535 = vset.pattern.permute.xlu0 66
    %1536 = vperm.xlu0 %1535, %v1376
    %v1537 = vpop.permute.xlu0 %1536
    %v1539 = vmul.f32 %v1537, %v98
    %1540 = vset.pattern.permute.xlu0 67
    %1541 = vperm.xlu0 %1540, %v1376
    %v1542 = vpop.permute.xlu0 %1541
    %v1544 = vmul.f32 %v1542, %v103
    %1545 = vset.pattern.permute.xlu0 68
    %1546 = vperm.xlu0 %1545, %v1376
    %v1547 = vpop.permute.xlu0 %1546
    %v1549 = vmul.f32 %v1547, %v108
    %1550 = vset.pattern.permute.xlu0 69
    %1551 = vperm.xlu0 %1550, %v1376
    %v1552 = vpop.permute.xlu0 %1551
    %v1554 = vmul.f32 %v1552, %v113
    %1555 = vset.pattern.permute.xlu0 70
    %1556 = vperm.xlu0 %1555, %v1376
    %v1557 = vpop.permute.xlu0 %1556
    %v1559 = vmul.f32 %v1557, %v118
    %1560 = vset.pattern.permute.xlu0 71
    %1561 = vperm.xlu0 %1560, %v1376
    %v1562 = vpop.permute.xlu0 %1561
    %v1564 = vmul.f32 %v1562, %v123
    %1565 = vset.pattern.permute.xlu0 72
    %1566 = vperm.xlu0 %1565, %v1376
    %v1567 = vpop.permute.xlu0 %1566
    %v1569 = vmul.f32 %v1567, %v128
    %1570 = vset.pattern.permute.xlu0 73
    %1571 = vperm.xlu0 %1570, %v1376
    %v1572 = vpop.permute.xlu0 %1571
    %v1574 = vmul.f32 %v1572, %v133
    %1575 = vset.pattern.permute.xlu0 74
    %1576 = vperm.xlu0 %1575, %v1376
    %v1577 = vpop.permute.xlu0 %1576
    %v1579 = vmul.f32 %v1577, %v138
    %1580 = vset.pattern.permute.xlu0 75
    %1581 = vperm.xlu0 %1580, %v1376
    %v1582 = vpop.permute.xlu0 %1581
    %v1584 = vmul.f32 %v1582, %v143
    %1585 = vset.pattern.permute.xlu0 76
    %1586 = vperm.xlu0 %1585, %v1376
    %v1587 = vpop.permute.xlu0 %1586
    %v1589 = vmul.f32 %v1587, %v148
    %1590 = vset.pattern.permute.xlu0 77
    %1591 = vperm.xlu0 %1590, %v1376
    %v1592 = vpop.permute.xlu0 %1591
    %v1594 = vmul.f32 %v1592, %v153
    %1595 = vset.pattern.permute.xlu0 78
    %1596 = vperm.xlu0 %1595, %v1376
    %v1597 = vpop.permute.xlu0 %1596
    %v1599 = vmul.f32 %v1597, %v158
    %1600 = vset.pattern.permute.xlu0 79
    %1601 = vperm.xlu0 %1600, %v1376
    %v1602 = vpop.permute.xlu0 %1601
    %v1604 = vmul.f32 %v1602, %v163
    %v1605 = vadd.f32 %v1509, %v1514
    %v1606 = vadd.f32 %v1519, %v1524
    %v1607 = vadd.f32 %v1529, %v1534
    %v1608 = vadd.f32 %v1539, %v1544
    %v1609 = vadd.f32 %v1549, %v1554
    %v1610 = vadd.f32 %v1559, %v1564
    %v1611 = vadd.f32 %v1569, %v1574
    %v1612 = vadd.f32 %v1579, %v1584
    %v1613 = vadd.f32 %v1589, %v1594
    %v1614 = vadd.f32 %v1599, %v1604
    %v1615 = vadd.f32 %v1605, %v1606
    %v1616 = vadd.f32 %v1607, %v1608
    %v1617 = vadd.f32 %v1609, %v1610
    %v1618 = vadd.f32 %v1611, %v1612
    %v1619 = vadd.f32 %v1613, %v1614
    %v1620 = vadd.f32 %v1615, %v1616
    %v1621 = vadd.f32 %v1617, %v1618
    %v1622 = vadd.f32 %v1620, %v1621
    %v1623 = vadd.f32 %v1622, %v1619
    %v1624 = vadd.f32 %v1503, %v1623
    %v1625 = vxor.u32 %v1624, 2147483648
    %v1626 = vmul.f32 %v1625, 1.442695
    %v1627 = vpow.pop %v1626
    %v1628 = vadd.f32 %v1627, 1.0
    %v1629 = vrcp.pop %v1628
    %v1630 = vmul.f32 1.0, %v1629
    %v1631 = vtanh.pop %v1624
    %v1632 = vmul.f32 %v1630, %v1370
    %1634 = vrot.lane.b32.xlu0 %v1631, 88
    %v1635 = vpop.permute.xlu0 %1634
    %v1637 = vmul.f32 %v1630, %v1635
    %1639 = vrot.lane.b32.xlu0 %v1637, 20
    %v1640 = vpop.permute.xlu0 %1639
    %v1642 = vadd.f32 %v1632, %v1640
    %v1643 = vtanh.pop %v1642
    %1645 = vrot.lane.b32.xlu0 %v1643, 40
    %v1646 = vpop.permute.xlu0 %1645
    %v1648 = vmul.f32 %v1630, %v1646
    %1650 = vset.pattern.permute.xlu0 20
    %1651 = vperm.xlu0 %1650, %v1642
    %v1652 = vpop.permute.xlu0 %1651
    %v1654 = vmul.f32 %v1652, %v217
    %1655 = vset.pattern.permute.xlu0 21
    %1656 = vperm.xlu0 %1655, %v1642
    %v1657 = vpop.permute.xlu0 %1656
    %v1659 = vmul.f32 %v1657, %v226
    %1660 = vset.pattern.permute.xlu0 22
    %1661 = vperm.xlu0 %1660, %v1642
    %v1662 = vpop.permute.xlu0 %1661
    %v1664 = vmul.f32 %v1662, %v235
    %1665 = vset.pattern.permute.xlu0 23
    %1666 = vperm.xlu0 %1665, %v1642
    %v1667 = vpop.permute.xlu0 %1666
    %v1669 = vmul.f32 %v1667, %v244
    %1670 = vset.pattern.permute.xlu0 24
    %1671 = vperm.xlu0 %1670, %v1642
    %v1672 = vpop.permute.xlu0 %1671
    %v1674 = vmul.f32 %v1672, %v253
    %1675 = vset.pattern.permute.xlu0 25
    %1676 = vperm.xlu0 %1675, %v1642
    %v1677 = vpop.permute.xlu0 %1676
    %v1679 = vmul.f32 %v1677, %v262
    %1680 = vset.pattern.permute.xlu0 26
    %1681 = vperm.xlu0 %1680, %v1642
    %v1682 = vpop.permute.xlu0 %1681
    %v1684 = vmul.f32 %v1682, %v271
    %1685 = vset.pattern.permute.xlu0 27
    %1686 = vperm.xlu0 %1685, %v1642
    %v1687 = vpop.permute.xlu0 %1686
    %v1689 = vmul.f32 %v1687, %v280
    %1690 = vset.pattern.permute.xlu0 28
    %1691 = vperm.xlu0 %1690, %v1642
    %v1692 = vpop.permute.xlu0 %1691
    %v1694 = vmul.f32 %v1692, %v289
    %1695 = vset.pattern.permute.xlu0 29
    %1696 = vperm.xlu0 %1695, %v1642
    %v1697 = vpop.permute.xlu0 %1696
    %v1699 = vmul.f32 %v1697, %v298
    %1700 = vset.pattern.permute.xlu0 30
    %1701 = vperm.xlu0 %1700, %v1642
    %v1702 = vpop.permute.xlu0 %1701
    %v1704 = vmul.f32 %v1702, %v307
    %1705 = vset.pattern.permute.xlu0 31
    %1706 = vperm.xlu0 %1705, %v1642
    %v1707 = vpop.permute.xlu0 %1706
    %v1709 = vmul.f32 %v1707, %v316
    %1710 = vset.pattern.permute.xlu0 32
    %1711 = vperm.xlu0 %1710, %v1642
    %v1712 = vpop.permute.xlu0 %1711
    %v1714 = vmul.f32 %v1712, %v325
    %1715 = vset.pattern.permute.xlu0 33
    %1716 = vperm.xlu0 %1715, %v1642
    %v1717 = vpop.permute.xlu0 %1716
    %v1719 = vmul.f32 %v1717, %v334
    %1720 = vset.pattern.permute.xlu0 34
    %1721 = vperm.xlu0 %1720, %v1642
    %v1722 = vpop.permute.xlu0 %1721
    %v1724 = vmul.f32 %v1722, %v343
    %1725 = vset.pattern.permute.xlu0 35
    %1726 = vperm.xlu0 %1725, %v1642
    %v1727 = vpop.permute.xlu0 %1726
    %v1729 = vmul.f32 %v1727, %v352
    %1730 = vset.pattern.permute.xlu0 36
    %1731 = vperm.xlu0 %1730, %v1642
    %v1732 = vpop.permute.xlu0 %1731
    %v1734 = vmul.f32 %v1732, %v361
    %1735 = vset.pattern.permute.xlu0 37
    %1736 = vperm.xlu0 %1735, %v1642
    %v1737 = vpop.permute.xlu0 %1736
    %v1739 = vmul.f32 %v1737, %v370
    %1740 = vset.pattern.permute.xlu0 38
    %1741 = vperm.xlu0 %1740, %v1642
    %v1742 = vpop.permute.xlu0 %1741
    %v1744 = vmul.f32 %v1742, %v379
    %1745 = vset.pattern.permute.xlu0 39
    %1746 = vperm.xlu0 %1745, %v1642
    %v1747 = vpop.permute.xlu0 %1746
    %v1749 = vmul.f32 %v1747, %v388
    %v1750 = vadd.f32 %v1654, %v1659
    %v1751 = vadd.f32 %v1664, %v1669
    %v1752 = vadd.f32 %v1674, %v1679
    %v1753 = vadd.f32 %v1684, %v1689
    %v1754 = vadd.f32 %v1694, %v1699
    %v1755 = vadd.f32 %v1704, %v1709
    %v1756 = vadd.f32 %v1714, %v1719
    %v1757 = vadd.f32 %v1724, %v1729
    %v1758 = vadd.f32 %v1734, %v1739
    %v1759 = vadd.f32 %v1744, %v1749
    %v1760 = vadd.f32 %v1750, %v1751
    %v1761 = vadd.f32 %v1752, %v1753
    %v1762 = vadd.f32 %v1754, %v1755
    %v1763 = vadd.f32 %v1756, %v1757
    %v1764 = vadd.f32 %v1758, %v1759
    %v1765 = vadd.f32 %v1760, %v1761
    %v1766 = vadd.f32 %v1762, %v1763
    %v1767 = vadd.f32 %v1765, %v1766
    %v1768 = vadd.f32 %v1767, %v1764
    %v1769 = vadd.f32 %v1768, %v48
    %1770 = vset.pattern.permute.xlu0 6
    %1771 = vperm.xlu0 %1770, %v27
    %v1772 = vpop.permute.xlu0 %1771
    %v1774 = vmul.f32 %v1772, %v61
    %v1775 = vadd.f32 %v1774, %v41
    %1777 = vset.pattern.permute.xlu0 60
    %1778 = vperm.xlu0 %1777, %v1648
    %v1779 = vpop.permute.xlu0 %1778
    %v1781 = vmul.f32 %v1779, %v68
    %1782 = vset.pattern.permute.xlu0 61
    %1783 = vperm.xlu0 %1782, %v1648
    %v1784 = vpop.permute.xlu0 %1783
    %v1786 = vmul.f32 %v1784, %v73
    %1787 = vset.pattern.permute.xlu0 62
    %1788 = vperm.xlu0 %1787, %v1648
    %v1789 = vpop.permute.xlu0 %1788
    %v1791 = vmul.f32 %v1789, %v78
    %1792 = vset.pattern.permute.xlu0 63
    %1793 = vperm.xlu0 %1792, %v1648
    %v1794 = vpop.permute.xlu0 %1793
    %v1796 = vmul.f32 %v1794, %v83
    %1797 = vset.pattern.permute.xlu0 64
    %1798 = vperm.xlu0 %1797, %v1648
    %v1799 = vpop.permute.xlu0 %1798
    %v1801 = vmul.f32 %v1799, %v88
    %1802 = vset.pattern.permute.xlu0 65
    %1803 = vperm.xlu0 %1802, %v1648
    %v1804 = vpop.permute.xlu0 %1803
    %v1806 = vmul.f32 %v1804, %v93
    %1807 = vset.pattern.permute.xlu0 66
    %1808 = vperm.xlu0 %1807, %v1648
    %v1809 = vpop.permute.xlu0 %1808
    %v1811 = vmul.f32 %v1809, %v98
    %1812 = vset.pattern.permute.xlu0 67
    %1813 = vperm.xlu0 %1812, %v1648
    %v1814 = vpop.permute.xlu0 %1813
    %v1816 = vmul.f32 %v1814, %v103
    %1817 = vset.pattern.permute.xlu0 68
    %1818 = vperm.xlu0 %1817, %v1648
    %v1819 = vpop.permute.xlu0 %1818
    %v1821 = vmul.f32 %v1819, %v108
    %1822 = vset.pattern.permute.xlu0 69
    %1823 = vperm.xlu0 %1822, %v1648
    %v1824 = vpop.permute.xlu0 %1823
    %v1826 = vmul.f32 %v1824, %v113
    %1827 = vset.pattern.permute.xlu0 70
    %1828 = vperm.xlu0 %1827, %v1648
    %v1829 = vpop.permute.xlu0 %1828
    %v1831 = vmul.f32 %v1829, %v118
    %1832 = vset.pattern.permute.xlu0 71
    %1833 = vperm.xlu0 %1832, %v1648
    %v1834 = vpop.permute.xlu0 %1833
    %v1836 = vmul.f32 %v1834, %v123
    %1837 = vset.pattern.permute.xlu0 72
    %1838 = vperm.xlu0 %1837, %v1648
    %v1839 = vpop.permute.xlu0 %1838
    %v1841 = vmul.f32 %v1839, %v128
    %1842 = vset.pattern.permute.xlu0 73
    %1843 = vperm.xlu0 %1842, %v1648
    %v1844 = vpop.permute.xlu0 %1843
    %v1846 = vmul.f32 %v1844, %v133
    %1847 = vset.pattern.permute.xlu0 74
    %1848 = vperm.xlu0 %1847, %v1648
    %v1849 = vpop.permute.xlu0 %1848
    %v1851 = vmul.f32 %v1849, %v138
    %1852 = vset.pattern.permute.xlu0 75
    %1853 = vperm.xlu0 %1852, %v1648
    %v1854 = vpop.permute.xlu0 %1853
    %v1856 = vmul.f32 %v1854, %v143
    %1857 = vset.pattern.permute.xlu0 76
    %1858 = vperm.xlu0 %1857, %v1648
    %v1859 = vpop.permute.xlu0 %1858
    %v1861 = vmul.f32 %v1859, %v148
    %1862 = vset.pattern.permute.xlu0 77
    %1863 = vperm.xlu0 %1862, %v1648
    %v1864 = vpop.permute.xlu0 %1863
    %v1866 = vmul.f32 %v1864, %v153
    %1867 = vset.pattern.permute.xlu0 78
    %1868 = vperm.xlu0 %1867, %v1648
    %v1869 = vpop.permute.xlu0 %1868
    %v1871 = vmul.f32 %v1869, %v158
    %1872 = vset.pattern.permute.xlu0 79
    %1873 = vperm.xlu0 %1872, %v1648
    %v1874 = vpop.permute.xlu0 %1873
    %v1876 = vmul.f32 %v1874, %v163
    %v1877 = vadd.f32 %v1781, %v1786
    %v1878 = vadd.f32 %v1791, %v1796
    %v1879 = vadd.f32 %v1801, %v1806
    %v1880 = vadd.f32 %v1811, %v1816
    %v1881 = vadd.f32 %v1821, %v1826
    %v1882 = vadd.f32 %v1831, %v1836
    %v1883 = vadd.f32 %v1841, %v1846
    %v1884 = vadd.f32 %v1851, %v1856
    %v1885 = vadd.f32 %v1861, %v1866
    %v1886 = vadd.f32 %v1871, %v1876
    %v1887 = vadd.f32 %v1877, %v1878
    %v1888 = vadd.f32 %v1879, %v1880
    %v1889 = vadd.f32 %v1881, %v1882
    %v1890 = vadd.f32 %v1883, %v1884
    %v1891 = vadd.f32 %v1885, %v1886
    %v1892 = vadd.f32 %v1887, %v1888
    %v1893 = vadd.f32 %v1889, %v1890
    %v1894 = vadd.f32 %v1892, %v1893
    %v1895 = vadd.f32 %v1894, %v1891
    %v1896 = vadd.f32 %v1775, %v1895
    %v1897 = vxor.u32 %v1896, 2147483648
    %v1898 = vmul.f32 %v1897, 1.442695
    %v1899 = vpow.pop %v1898
    %v1900 = vadd.f32 %v1899, 1.0
    %v1901 = vrcp.pop %v1900
    %v1902 = vmul.f32 1.0, %v1901
    %v1903 = vtanh.pop %v1896
    %v1904 = vmul.f32 %v1902, %v1642
    %1906 = vrot.lane.b32.xlu0 %v1903, 88
    %v1907 = vpop.permute.xlu0 %1906
    %v1909 = vmul.f32 %v1902, %v1907
    %1911 = vrot.lane.b32.xlu0 %v1909, 20
    %v1912 = vpop.permute.xlu0 %1911
    %v1914 = vadd.f32 %v1904, %v1912
    %v1915 = vtanh.pop %v1914
    %1917 = vrot.lane.b32.xlu0 %v1915, 40
    %v1918 = vpop.permute.xlu0 %1917
    %v1920 = vmul.f32 %v1902, %v1918
    %1922 = vset.pattern.permute.xlu0 20
    %1923 = vperm.xlu0 %1922, %v1914
    %v1924 = vpop.permute.xlu0 %1923
    %v1926 = vmul.f32 %v1924, %v217
    %1927 = vset.pattern.permute.xlu0 21
    %1928 = vperm.xlu0 %1927, %v1914
    %v1929 = vpop.permute.xlu0 %1928
    %v1931 = vmul.f32 %v1929, %v226
    %1932 = vset.pattern.permute.xlu0 22
    %1933 = vperm.xlu0 %1932, %v1914
    %v1934 = vpop.permute.xlu0 %1933
    %v1936 = vmul.f32 %v1934, %v235
    %1937 = vset.pattern.permute.xlu0 23
    %1938 = vperm.xlu0 %1937, %v1914
    %v1939 = vpop.permute.xlu0 %1938
    %v1941 = vmul.f32 %v1939, %v244
    %1942 = vset.pattern.permute.xlu0 24
    %1943 = vperm.xlu0 %1942, %v1914
    %v1944 = vpop.permute.xlu0 %1943
    %v1946 = vmul.f32 %v1944, %v253
    %1947 = vset.pattern.permute.xlu0 25
    %1948 = vperm.xlu0 %1947, %v1914
    %v1949 = vpop.permute.xlu0 %1948
    %v1951 = vmul.f32 %v1949, %v262
    %1952 = vset.pattern.permute.xlu0 26
    %1953 = vperm.xlu0 %1952, %v1914
    %v1954 = vpop.permute.xlu0 %1953
    %v1956 = vmul.f32 %v1954, %v271
    %1957 = vset.pattern.permute.xlu0 27
    %1958 = vperm.xlu0 %1957, %v1914
    %v1959 = vpop.permute.xlu0 %1958
    %v1961 = vmul.f32 %v1959, %v280
    %1962 = vset.pattern.permute.xlu0 28
    %1963 = vperm.xlu0 %1962, %v1914
    %v1964 = vpop.permute.xlu0 %1963
    %v1966 = vmul.f32 %v1964, %v289
    %1967 = vset.pattern.permute.xlu0 29
    %1968 = vperm.xlu0 %1967, %v1914
    %v1969 = vpop.permute.xlu0 %1968
    %v1971 = vmul.f32 %v1969, %v298
    %1972 = vset.pattern.permute.xlu0 30
    %1973 = vperm.xlu0 %1972, %v1914
    %v1974 = vpop.permute.xlu0 %1973
    %v1976 = vmul.f32 %v1974, %v307
    %1977 = vset.pattern.permute.xlu0 31
    %1978 = vperm.xlu0 %1977, %v1914
    %v1979 = vpop.permute.xlu0 %1978
    %v1981 = vmul.f32 %v1979, %v316
    %1982 = vset.pattern.permute.xlu0 32
    %1983 = vperm.xlu0 %1982, %v1914
    %v1984 = vpop.permute.xlu0 %1983
    %v1986 = vmul.f32 %v1984, %v325
    %1987 = vset.pattern.permute.xlu0 33
    %1988 = vperm.xlu0 %1987, %v1914
    %v1989 = vpop.permute.xlu0 %1988
    %v1991 = vmul.f32 %v1989, %v334
    %1992 = vset.pattern.permute.xlu0 34
    %1993 = vperm.xlu0 %1992, %v1914
    %v1994 = vpop.permute.xlu0 %1993
    %v1996 = vmul.f32 %v1994, %v343
    %1997 = vset.pattern.permute.xlu0 35
    %1998 = vperm.xlu0 %1997, %v1914
    %v1999 = vpop.permute.xlu0 %1998
    %v2001 = vmul.f32 %v1999, %v352
    %2002 = vset.pattern.permute.xlu0 36
    %2003 = vperm.xlu0 %2002, %v1914
    %v2004 = vpop.permute.xlu0 %2003
    %v2006 = vmul.f32 %v2004, %v361
    %2007 = vset.pattern.permute.xlu0 37
    %2008 = vperm.xlu0 %2007, %v1914
    %v2009 = vpop.permute.xlu0 %2008
    %v2011 = vmul.f32 %v2009, %v370
    %2012 = vset.pattern.permute.xlu0 38
    %2013 = vperm.xlu0 %2012, %v1914
    %v2014 = vpop.permute.xlu0 %2013
    %v2016 = vmul.f32 %v2014, %v379
    %2017 = vset.pattern.permute.xlu0 39
    %2018 = vperm.xlu0 %2017, %v1914
    %v2019 = vpop.permute.xlu0 %2018
    %v2021 = vmul.f32 %v2019, %v388
    %v2022 = vadd.f32 %v1926, %v1931
    %v2023 = vadd.f32 %v1936, %v1941
    %v2024 = vadd.f32 %v1946, %v1951
    %v2025 = vadd.f32 %v1956, %v1961
    %v2026 = vadd.f32 %v1966, %v1971
    %v2027 = vadd.f32 %v1976, %v1981
    %v2028 = vadd.f32 %v1986, %v1991
    %v2029 = vadd.f32 %v1996, %v2001
    %v2030 = vadd.f32 %v2006, %v2011
    %v2031 = vadd.f32 %v2016, %v2021
    %v2032 = vadd.f32 %v2022, %v2023
    %v2033 = vadd.f32 %v2024, %v2025
    %v2034 = vadd.f32 %v2026, %v2027
    %v2035 = vadd.f32 %v2028, %v2029
    %v2036 = vadd.f32 %v2030, %v2031
    %v2037 = vadd.f32 %v2032, %v2033
    %v2038 = vadd.f32 %v2034, %v2035
    %v2039 = vadd.f32 %v2037, %v2038
    %v2040 = vadd.f32 %v2039, %v2036
    %v2041 = vadd.f32 %v2040, %v48
    %2042 = vset.pattern.permute.xlu0 7
    %2043 = vperm.xlu0 %2042, %v27
    %v2044 = vpop.permute.xlu0 %2043
    %v2046 = vmul.f32 %v2044, %v61
    %v2047 = vadd.f32 %v2046, %v41
    %2049 = vset.pattern.permute.xlu0 60
    %2050 = vperm.xlu0 %2049, %v1920
    %v2051 = vpop.permute.xlu0 %2050
    %v2053 = vmul.f32 %v2051, %v68
    %2054 = vset.pattern.permute.xlu0 61
    %2055 = vperm.xlu0 %2054, %v1920
    %v2056 = vpop.permute.xlu0 %2055
    %v2058 = vmul.f32 %v2056, %v73
    %2059 = vset.pattern.permute.xlu0 62
    %2060 = vperm.xlu0 %2059, %v1920
    %v2061 = vpop.permute.xlu0 %2060
    %v2063 = vmul.f32 %v2061, %v78
    %2064 = vset.pattern.permute.xlu0 63
    %2065 = vperm.xlu0 %2064, %v1920
    %v2066 = vpop.permute.xlu0 %2065
    %v2068 = vmul.f32 %v2066, %v83
    %2069 = vset.pattern.permute.xlu0 64
    %2070 = vperm.xlu0 %2069, %v1920
    %v2071 = vpop.permute.xlu0 %2070
    %v2073 = vmul.f32 %v2071, %v88
    %2074 = vset.pattern.permute.xlu0 65
    %2075 = vperm.xlu0 %2074, %v1920
    %v2076 = vpop.permute.xlu0 %2075
    %v2078 = vmul.f32 %v2076, %v93
    %2079 = vset.pattern.permute.xlu0 66
    %2080 = vperm.xlu0 %2079, %v1920
    %v2081 = vpop.permute.xlu0 %2080
    %v2083 = vmul.f32 %v2081, %v98
    %2084 = vset.pattern.permute.xlu0 67
    %2085 = vperm.xlu0 %2084, %v1920
    %v2086 = vpop.permute.xlu0 %2085
    %v2088 = vmul.f32 %v2086, %v103
    %2089 = vset.pattern.permute.xlu0 68
    %2090 = vperm.xlu0 %2089, %v1920
    %v2091 = vpop.permute.xlu0 %2090
    %v2093 = vmul.f32 %v2091, %v108
    %2094 = vset.pattern.permute.xlu0 69
    %2095 = vperm.xlu0 %2094, %v1920
    %v2096 = vpop.permute.xlu0 %2095
    %v2098 = vmul.f32 %v2096, %v113
    %2099 = vset.pattern.permute.xlu0 70
    %2100 = vperm.xlu0 %2099, %v1920
    %v2101 = vpop.permute.xlu0 %2100
    %v2103 = vmul.f32 %v2101, %v118
    %2104 = vset.pattern.permute.xlu0 71
    %2105 = vperm.xlu0 %2104, %v1920
    %v2106 = vpop.permute.xlu0 %2105
    %v2108 = vmul.f32 %v2106, %v123
    %2109 = vset.pattern.permute.xlu0 72
    %2110 = vperm.xlu0 %2109, %v1920
    %v2111 = vpop.permute.xlu0 %2110
    %v2113 = vmul.f32 %v2111, %v128
    %2114 = vset.pattern.permute.xlu0 73
    %2115 = vperm.xlu0 %2114, %v1920
    %v2116 = vpop.permute.xlu0 %2115
    %v2118 = vmul.f32 %v2116, %v133
    %2119 = vset.pattern.permute.xlu0 74
    %2120 = vperm.xlu0 %2119, %v1920
    %v2121 = vpop.permute.xlu0 %2120
    %v2123 = vmul.f32 %v2121, %v138
    %2124 = vset.pattern.permute.xlu0 75
    %2125 = vperm.xlu0 %2124, %v1920
    %v2126 = vpop.permute.xlu0 %2125
    %v2128 = vmul.f32 %v2126, %v143
    %2129 = vset.pattern.permute.xlu0 76
    %2130 = vperm.xlu0 %2129, %v1920
    %v2131 = vpop.permute.xlu0 %2130
    %v2133 = vmul.f32 %v2131, %v148
    %2134 = vset.pattern.permute.xlu0 77
    %2135 = vperm.xlu0 %2134, %v1920
    %v2136 = vpop.permute.xlu0 %2135
    %v2138 = vmul.f32 %v2136, %v153
    %2139 = vset.pattern.permute.xlu0 78
    %2140 = vperm.xlu0 %2139, %v1920
    %v2141 = vpop.permute.xlu0 %2140
    %v2143 = vmul.f32 %v2141, %v158
    %2144 = vset.pattern.permute.xlu0 79
    %2145 = vperm.xlu0 %2144, %v1920
    %v2146 = vpop.permute.xlu0 %2145
    %v2148 = vmul.f32 %v2146, %v163
    %v2149 = vadd.f32 %v2053, %v2058
    %v2150 = vadd.f32 %v2063, %v2068
    %v2151 = vadd.f32 %v2073, %v2078
    %v2152 = vadd.f32 %v2083, %v2088
    %v2153 = vadd.f32 %v2093, %v2098
    %v2154 = vadd.f32 %v2103, %v2108
    %v2155 = vadd.f32 %v2113, %v2118
    %v2156 = vadd.f32 %v2123, %v2128
    %v2157 = vadd.f32 %v2133, %v2138
    %v2158 = vadd.f32 %v2143, %v2148
    %v2159 = vadd.f32 %v2149, %v2150
    %v2160 = vadd.f32 %v2151, %v2152
    %v2161 = vadd.f32 %v2153, %v2154
    %v2162 = vadd.f32 %v2155, %v2156
    %v2163 = vadd.f32 %v2157, %v2158
    %v2164 = vadd.f32 %v2159, %v2160
    %v2165 = vadd.f32 %v2161, %v2162
    %v2166 = vadd.f32 %v2164, %v2165
    %v2167 = vadd.f32 %v2166, %v2163
    %v2168 = vadd.f32 %v2047, %v2167
    %v2169 = vxor.u32 %v2168, 2147483648
    %v2170 = vmul.f32 %v2169, 1.442695
    %v2171 = vpow.pop %v2170
    %v2172 = vadd.f32 %v2171, 1.0
    %v2173 = vrcp.pop %v2172
    %v2174 = vmul.f32 1.0, %v2173
    %v2175 = vtanh.pop %v2168
    %v2176 = vmul.f32 %v2174, %v1914
    %2178 = vrot.lane.b32.xlu0 %v2175, 88
    %v2179 = vpop.permute.xlu0 %2178
    %v2181 = vmul.f32 %v2174, %v2179
    %2183 = vrot.lane.b32.xlu0 %v2181, 20
    %v2184 = vpop.permute.xlu0 %2183
    %v2186 = vadd.f32 %v2176, %v2184
    %v2187 = vtanh.pop %v2186
    %2189 = vrot.lane.b32.xlu0 %v2187, 40
    %v2190 = vpop.permute.xlu0 %2189
    %v2192 = vmul.f32 %v2174, %v2190
    %2194 = vset.pattern.permute.xlu0 20
    %2195 = vperm.xlu0 %2194, %v2186
    %v2196 = vpop.permute.xlu0 %2195
    %v2198 = vmul.f32 %v2196, %v217
    %2199 = vset.pattern.permute.xlu0 21
    %2200 = vperm.xlu0 %2199, %v2186
    %v2201 = vpop.permute.xlu0 %2200
    %v2203 = vmul.f32 %v2201, %v226
    %2204 = vset.pattern.permute.xlu0 22
    %2205 = vperm.xlu0 %2204, %v2186
    %v2206 = vpop.permute.xlu0 %2205
    %v2208 = vmul.f32 %v2206, %v235
    %2209 = vset.pattern.permute.xlu0 23
    %2210 = vperm.xlu0 %2209, %v2186
    %v2211 = vpop.permute.xlu0 %2210
    %v2213 = vmul.f32 %v2211, %v244
    %2214 = vset.pattern.permute.xlu0 24
    %2215 = vperm.xlu0 %2214, %v2186
    %v2216 = vpop.permute.xlu0 %2215
    %v2218 = vmul.f32 %v2216, %v253
    %2219 = vset.pattern.permute.xlu0 25
    %2220 = vperm.xlu0 %2219, %v2186
    %v2221 = vpop.permute.xlu0 %2220
    %v2223 = vmul.f32 %v2221, %v262
    %2224 = vset.pattern.permute.xlu0 26
    %2225 = vperm.xlu0 %2224, %v2186
    %v2226 = vpop.permute.xlu0 %2225
    %v2228 = vmul.f32 %v2226, %v271
    %2229 = vset.pattern.permute.xlu0 27
    %2230 = vperm.xlu0 %2229, %v2186
    %v2231 = vpop.permute.xlu0 %2230
    %v2233 = vmul.f32 %v2231, %v280
    %2234 = vset.pattern.permute.xlu0 28
    %2235 = vperm.xlu0 %2234, %v2186
    %v2236 = vpop.permute.xlu0 %2235
    %v2238 = vmul.f32 %v2236, %v289
    %2239 = vset.pattern.permute.xlu0 29
    %2240 = vperm.xlu0 %2239, %v2186
    %v2241 = vpop.permute.xlu0 %2240
    %v2243 = vmul.f32 %v2241, %v298
    %2244 = vset.pattern.permute.xlu0 30
    %2245 = vperm.xlu0 %2244, %v2186
    %v2246 = vpop.permute.xlu0 %2245
    %v2248 = vmul.f32 %v2246, %v307
    %2249 = vset.pattern.permute.xlu0 31
    %2250 = vperm.xlu0 %2249, %v2186
    %v2251 = vpop.permute.xlu0 %2250
    %v2253 = vmul.f32 %v2251, %v316
    %2254 = vset.pattern.permute.xlu0 32
    %2255 = vperm.xlu0 %2254, %v2186
    %v2256 = vpop.permute.xlu0 %2255
    %v2258 = vmul.f32 %v2256, %v325
    %2259 = vset.pattern.permute.xlu0 33
    %2260 = vperm.xlu0 %2259, %v2186
    %v2261 = vpop.permute.xlu0 %2260
    %v2263 = vmul.f32 %v2261, %v334
    %2264 = vset.pattern.permute.xlu0 34
    %2265 = vperm.xlu0 %2264, %v2186
    %v2266 = vpop.permute.xlu0 %2265
    %v2268 = vmul.f32 %v2266, %v343
    %2269 = vset.pattern.permute.xlu0 35
    %2270 = vperm.xlu0 %2269, %v2186
    %v2271 = vpop.permute.xlu0 %2270
    %v2273 = vmul.f32 %v2271, %v352
    %2274 = vset.pattern.permute.xlu0 36
    %2275 = vperm.xlu0 %2274, %v2186
    %v2276 = vpop.permute.xlu0 %2275
    %v2278 = vmul.f32 %v2276, %v361
    %2279 = vset.pattern.permute.xlu0 37
    %2280 = vperm.xlu0 %2279, %v2186
    %v2281 = vpop.permute.xlu0 %2280
    %v2283 = vmul.f32 %v2281, %v370
    %2284 = vset.pattern.permute.xlu0 38
    %2285 = vperm.xlu0 %2284, %v2186
    %v2286 = vpop.permute.xlu0 %2285
    %v2288 = vmul.f32 %v2286, %v379
    %2289 = vset.pattern.permute.xlu0 39
    %2290 = vperm.xlu0 %2289, %v2186
    %v2291 = vpop.permute.xlu0 %2290
    %v2293 = vmul.f32 %v2291, %v388
    %v2294 = vadd.f32 %v2198, %v2203
    %v2295 = vadd.f32 %v2208, %v2213
    %v2296 = vadd.f32 %v2218, %v2223
    %v2297 = vadd.f32 %v2228, %v2233
    %v2298 = vadd.f32 %v2238, %v2243
    %v2299 = vadd.f32 %v2248, %v2253
    %v2300 = vadd.f32 %v2258, %v2263
    %v2301 = vadd.f32 %v2268, %v2273
    %v2302 = vadd.f32 %v2278, %v2283
    %v2303 = vadd.f32 %v2288, %v2293
    %v2304 = vadd.f32 %v2294, %v2295
    %v2305 = vadd.f32 %v2296, %v2297
    %v2306 = vadd.f32 %v2298, %v2299
    %v2307 = vadd.f32 %v2300, %v2301
    %v2308 = vadd.f32 %v2302, %v2303
    %v2309 = vadd.f32 %v2304, %v2305
    %v2310 = vadd.f32 %v2306, %v2307
    %v2311 = vadd.f32 %v2309, %v2310
    %v2312 = vadd.f32 %v2311, %v2308
    %v2313 = vadd.f32 %v2312, %v48
    %v2315 = vlaneseq
    %v2316 = vshrl.u32 %v2315, 7
    %v2317 = vsub.s32 0, %v2316
    %v2318 = vrot.slane %v35, %v2317
    %v2320 = vmul.f32 %v2318, 0.0
    %v2321 = vadd.f32 %v409, %v2320
    %v2322 = vxor.u32 %v2321, 2147483648
    %v2323 = vmul.f32 %v2322, 1.442695
    %v2324 = vpow.pop %v2323
    %v2325 = vadd.f32 %v2324, 1.0
    %v2326 = vrcp.pop %v2325
    %v2327 = vmul.f32 1.0, %v2326
    %v2328 = vtanh.pop %v2321
    %v2329 = vmul.f32 %v2327, 0.0
    %2331 = vrot.lane.b32.xlu0 %v2328, 126
    %v2332 = vpop.permute.xlu0 %2331
    %v2334 = vmul.f32 %v2327, %v2332
    %2336 = vrot.lane.b32.xlu0 %v2334, 1
    %v2337 = vpop.permute.xlu0 %2336
    %v2339 = vadd.f32 %v2329, %v2337
    %v2340 = vtanh.pop %v2339
    %2342 = vrot.lane.b32.xlu0 %v2340, 2
    %v2343 = vpop.permute.xlu0 %2342
    %v2345 = vmul.f32 %v2327, %v2343
    %vm2346 = vcmp.eq.s32.totalorder %v51, 0
    %2348 = vset.pattern.permute.xlu0 1
    %2349 = vperm.xlu0 %2348, %v2339
    %v2350 = vpop.permute.xlu0 %2349
    %v2352 = vsel %vm2346, %v2350, 0.0
    %2354 = vset.pattern.permute.xlu0 3
    %2355 = vperm.xlu0 %2354, %v2345
    %v2356 = vpop.permute.xlu0 %2355
    %v2358 = vmul.f32 %v2356, %v2318
    %v2359 = vadd.f32 %v681, %v2358
    %v2360 = vxor.u32 %v2359, 2147483648
    %v2361 = vmul.f32 %v2360, 1.442695
    %v2362 = vpow.pop %v2361
    %v2363 = vadd.f32 %v2362, 1.0
    %v2364 = vrcp.pop %v2363
    %v2365 = vmul.f32 1.0, %v2364
    %v2366 = vtanh.pop %v2359
    %v2367 = vmul.f32 %v2365, %v2339
    %2369 = vrot.lane.b32.xlu0 %v2366, 126
    %v2370 = vpop.permute.xlu0 %2369
    %v2372 = vmul.f32 %v2365, %v2370
    %2374 = vrot.lane.b32.xlu0 %v2372, 1
    %v2375 = vpop.permute.xlu0 %2374
    %v2377 = vadd.f32 %v2367, %v2375
    %v2378 = vtanh.pop %v2377
    %2380 = vrot.lane.b32.xlu0 %v2378, 2
    %v2381 = vpop.permute.xlu0 %2380
    %v2383 = vmul.f32 %v2365, %v2381
    %vm2384 = vcmp.eq.s32.totalorder %v51, 1
    %2386 = vset.pattern.permute.xlu0 1
    %2387 = vperm.xlu0 %2386, %v2377
    %v2388 = vpop.permute.xlu0 %2387
    %v2390 = vsel %vm2384, %v2388, %v2352
    %2392 = vset.pattern.permute.xlu0 3
    %2393 = vperm.xlu0 %2392, %v2383
    %v2394 = vpop.permute.xlu0 %2393
    %v2396 = vmul.f32 %v2394, %v2318
    %v2397 = vadd.f32 %v953, %v2396
    %v2398 = vxor.u32 %v2397, 2147483648
    %v2399 = vmul.f32 %v2398, 1.442695
    %v2400 = vpow.pop %v2399
    %v2401 = vadd.f32 %v2400, 1.0
    %v2402 = vrcp.pop %v2401
    %v2403 = vmul.f32 1.0, %v2402
    %v2404 = vtanh.pop %v2397
    %v2405 = vmul.f32 %v2403, %v2377
    %2407 = vrot.lane.b32.xlu0 %v2404, 126
    %v2408 = vpop.permute.xlu0 %2407
    %v2410 = vmul.f32 %v2403, %v2408
    %2412 = vrot.lane.b32.xlu0 %v2410, 1
    %v2413 = vpop.permute.xlu0 %2412
    %v2415 = vadd.f32 %v2405, %v2413
    %v2416 = vtanh.pop %v2415
    %2418 = vrot.lane.b32.xlu0 %v2416, 2
    %v2419 = vpop.permute.xlu0 %2418
    %v2421 = vmul.f32 %v2403, %v2419
    %vm2422 = vcmp.eq.s32.totalorder %v51, 2
    %2424 = vset.pattern.permute.xlu0 1
    %2425 = vperm.xlu0 %2424, %v2415
    %v2426 = vpop.permute.xlu0 %2425
    %v2428 = vsel %vm2422, %v2426, %v2390
    %2430 = vset.pattern.permute.xlu0 3
    %2431 = vperm.xlu0 %2430, %v2421
    %v2432 = vpop.permute.xlu0 %2431
    %v2434 = vmul.f32 %v2432, %v2318
    %v2435 = vadd.f32 %v1225, %v2434
    %v2436 = vxor.u32 %v2435, 2147483648
    %v2437 = vmul.f32 %v2436, 1.442695
    %v2438 = vpow.pop %v2437
    %v2439 = vadd.f32 %v2438, 1.0
    %v2440 = vrcp.pop %v2439
    %v2441 = vmul.f32 1.0, %v2440
    %v2442 = vtanh.pop %v2435
    %v2443 = vmul.f32 %v2441, %v2415
    %2445 = vrot.lane.b32.xlu0 %v2442, 126
    %v2446 = vpop.permute.xlu0 %2445
    %v2448 = vmul.f32 %v2441, %v2446
    %2450 = vrot.lane.b32.xlu0 %v2448, 1
    %v2451 = vpop.permute.xlu0 %2450
    %v2453 = vadd.f32 %v2443, %v2451
    %v2454 = vtanh.pop %v2453
    %2456 = vrot.lane.b32.xlu0 %v2454, 2
    %v2457 = vpop.permute.xlu0 %2456
    %v2459 = vmul.f32 %v2441, %v2457
    %vm2460 = vcmp.eq.s32.totalorder %v51, 3
    %2462 = vset.pattern.permute.xlu0 1
    %2463 = vperm.xlu0 %2462, %v2453
    %v2464 = vpop.permute.xlu0 %2463
    %v2466 = vsel %vm2460, %v2464, %v2428
    %2468 = vset.pattern.permute.xlu0 3
    %2469 = vperm.xlu0 %2468, %v2459
    %v2470 = vpop.permute.xlu0 %2469
    %v2472 = vmul.f32 %v2470, %v2318
    %v2473 = vadd.f32 %v1497, %v2472
    %v2474 = vxor.u32 %v2473, 2147483648
    %v2475 = vmul.f32 %v2474, 1.442695
    %v2476 = vpow.pop %v2475
    %v2477 = vadd.f32 %v2476, 1.0
    %v2478 = vrcp.pop %v2477
    %v2479 = vmul.f32 1.0, %v2478
    %v2480 = vtanh.pop %v2473
    %v2481 = vmul.f32 %v2479, %v2453
    %2483 = vrot.lane.b32.xlu0 %v2480, 126
    %v2484 = vpop.permute.xlu0 %2483
    %v2486 = vmul.f32 %v2479, %v2484
    %2488 = vrot.lane.b32.xlu0 %v2486, 1
    %v2489 = vpop.permute.xlu0 %2488
    %v2491 = vadd.f32 %v2481, %v2489
    %v2492 = vtanh.pop %v2491
    %2494 = vrot.lane.b32.xlu0 %v2492, 2
    %v2495 = vpop.permute.xlu0 %2494
    %v2497 = vmul.f32 %v2479, %v2495
    %vm2498 = vcmp.eq.s32.totalorder %v51, 4
    %2500 = vset.pattern.permute.xlu0 1
    %2501 = vperm.xlu0 %2500, %v2491
    %v2502 = vpop.permute.xlu0 %2501
    %v2504 = vsel %vm2498, %v2502, %v2466
    %2506 = vset.pattern.permute.xlu0 3
    %2507 = vperm.xlu0 %2506, %v2497
    %v2508 = vpop.permute.xlu0 %2507
    %v2510 = vmul.f32 %v2508, %v2318
    %v2511 = vadd.f32 %v1769, %v2510
    %v2512 = vxor.u32 %v2511, 2147483648
    %v2513 = vmul.f32 %v2512, 1.442695
    %v2514 = vpow.pop %v2513
    %v2515 = vadd.f32 %v2514, 1.0
    %v2516 = vrcp.pop %v2515
    %v2517 = vmul.f32 1.0, %v2516
    %v2518 = vtanh.pop %v2511
    %v2519 = vmul.f32 %v2517, %v2491
    %2521 = vrot.lane.b32.xlu0 %v2518, 126
    %v2522 = vpop.permute.xlu0 %2521
    %v2524 = vmul.f32 %v2517, %v2522
    %2526 = vrot.lane.b32.xlu0 %v2524, 1
    %v2527 = vpop.permute.xlu0 %2526
    %v2529 = vadd.f32 %v2519, %v2527
    %v2530 = vtanh.pop %v2529
    %2532 = vrot.lane.b32.xlu0 %v2530, 2
    %v2533 = vpop.permute.xlu0 %2532
    %v2535 = vmul.f32 %v2517, %v2533
    %vm2536 = vcmp.eq.s32.totalorder %v51, 5
    %2538 = vset.pattern.permute.xlu0 1
    %2539 = vperm.xlu0 %2538, %v2529
    %v2540 = vpop.permute.xlu0 %2539
    %v2542 = vsel %vm2536, %v2540, %v2504
    %2544 = vset.pattern.permute.xlu0 3
    %2545 = vperm.xlu0 %2544, %v2535
    %v2546 = vpop.permute.xlu0 %2545
    %v2548 = vmul.f32 %v2546, %v2318
    %v2549 = vadd.f32 %v2041, %v2548
    %v2550 = vxor.u32 %v2549, 2147483648
    %v2551 = vmul.f32 %v2550, 1.442695
    %v2552 = vpow.pop %v2551
    %v2553 = vadd.f32 %v2552, 1.0
    %v2554 = vrcp.pop %v2553
    %v2555 = vmul.f32 1.0, %v2554
    %v2556 = vtanh.pop %v2549
    %v2557 = vmul.f32 %v2555, %v2529
    %2559 = vrot.lane.b32.xlu0 %v2556, 126
    %v2560 = vpop.permute.xlu0 %2559
    %v2562 = vmul.f32 %v2555, %v2560
    %2564 = vrot.lane.b32.xlu0 %v2562, 1
    %v2565 = vpop.permute.xlu0 %2564
    %v2567 = vadd.f32 %v2557, %v2565
    %v2568 = vtanh.pop %v2567
    %2570 = vrot.lane.b32.xlu0 %v2568, 2
    %v2571 = vpop.permute.xlu0 %2570
    %v2573 = vmul.f32 %v2555, %v2571
    %vm2574 = vcmp.eq.s32.totalorder %v51, 6
    %2576 = vset.pattern.permute.xlu0 1
    %2577 = vperm.xlu0 %2576, %v2567
    %v2578 = vpop.permute.xlu0 %2577
    %v2580 = vsel %vm2574, %v2578, %v2542
    %2582 = vset.pattern.permute.xlu0 3
    %2583 = vperm.xlu0 %2582, %v2573
    %v2584 = vpop.permute.xlu0 %2583
    %v2586 = vmul.f32 %v2584, %v2318
    %v2587 = vadd.f32 %v2313, %v2586
    %v2588 = vxor.u32 %v2587, 2147483648
    %v2589 = vmul.f32 %v2588, 1.442695
    %v2590 = vpow.pop %v2589
    %v2591 = vadd.f32 %v2590, 1.0
    %v2592 = vrcp.pop %v2591
    %v2593 = vmul.f32 1.0, %v2592
    %v2594 = vtanh.pop %v2587
    %v2595 = vmul.f32 %v2593, %v2567
    %2597 = vrot.lane.b32.xlu0 %v2594, 126
    %v2598 = vpop.permute.xlu0 %2597
    %v2600 = vmul.f32 %v2593, %v2598
    %2602 = vrot.lane.b32.xlu0 %v2600, 1
    %v2603 = vpop.permute.xlu0 %2602
    %v2605 = vadd.f32 %v2595, %v2603
    %v2606 = vtanh.pop %v2605
    %2608 = vrot.lane.b32.xlu0 %v2606, 2
    %v2609 = vpop.permute.xlu0 %2608
    %v2611 = vmul.f32 %v2593, %v2609
    %vm2612 = vcmp.eq.s32.totalorder %v51, 7
    %2614 = vset.pattern.permute.xlu0 1
    %2615 = vperm.xlu0 %2614, %v2605
    %v2616 = vpop.permute.xlu0 %2615
    %v2618 = vsel %vm2612, %v2616, %v2580
    %v2619 = vmul.f32 %v2616, %v61
    %v2620 = vadd.f32 %v2619, %v41
    %2622 = vset.pattern.permute.xlu0 60
    %2623 = vperm.xlu0 %2622, %v2192
    %v2624 = vpop.permute.xlu0 %2623
    %v2626 = vmul.f32 %v2624, %v68
    %2627 = vset.pattern.permute.xlu0 61
    %2628 = vperm.xlu0 %2627, %v2192
    %v2629 = vpop.permute.xlu0 %2628
    %v2631 = vmul.f32 %v2629, %v73
    %2632 = vset.pattern.permute.xlu0 62
    %2633 = vperm.xlu0 %2632, %v2192
    %v2634 = vpop.permute.xlu0 %2633
    %v2636 = vmul.f32 %v2634, %v78
    %2637 = vset.pattern.permute.xlu0 63
    %2638 = vperm.xlu0 %2637, %v2192
    %v2639 = vpop.permute.xlu0 %2638
    %v2641 = vmul.f32 %v2639, %v83
    %2642 = vset.pattern.permute.xlu0 64
    %2643 = vperm.xlu0 %2642, %v2192
    %v2644 = vpop.permute.xlu0 %2643
    %v2646 = vmul.f32 %v2644, %v88
    %2647 = vset.pattern.permute.xlu0 65
    %2648 = vperm.xlu0 %2647, %v2192
    %v2649 = vpop.permute.xlu0 %2648
    %v2651 = vmul.f32 %v2649, %v93
    %2652 = vset.pattern.permute.xlu0 66
    %2653 = vperm.xlu0 %2652, %v2192
    %v2654 = vpop.permute.xlu0 %2653
    %v2656 = vmul.f32 %v2654, %v98
    %2657 = vset.pattern.permute.xlu0 67
    %2658 = vperm.xlu0 %2657, %v2192
    %v2659 = vpop.permute.xlu0 %2658
    %v2661 = vmul.f32 %v2659, %v103
    %2662 = vset.pattern.permute.xlu0 68
    %2663 = vperm.xlu0 %2662, %v2192
    %v2664 = vpop.permute.xlu0 %2663
    %v2666 = vmul.f32 %v2664, %v108
    %2667 = vset.pattern.permute.xlu0 69
    %2668 = vperm.xlu0 %2667, %v2192
    %v2669 = vpop.permute.xlu0 %2668
    %v2671 = vmul.f32 %v2669, %v113
    %2672 = vset.pattern.permute.xlu0 70
    %2673 = vperm.xlu0 %2672, %v2192
    %v2674 = vpop.permute.xlu0 %2673
    %v2676 = vmul.f32 %v2674, %v118
    %2677 = vset.pattern.permute.xlu0 71
    %2678 = vperm.xlu0 %2677, %v2192
    %v2679 = vpop.permute.xlu0 %2678
    %v2681 = vmul.f32 %v2679, %v123
    %2682 = vset.pattern.permute.xlu0 72
    %2683 = vperm.xlu0 %2682, %v2192
    %v2684 = vpop.permute.xlu0 %2683
    %v2686 = vmul.f32 %v2684, %v128
    %2687 = vset.pattern.permute.xlu0 73
    %2688 = vperm.xlu0 %2687, %v2192
    %v2689 = vpop.permute.xlu0 %2688
    %v2691 = vmul.f32 %v2689, %v133
    %2692 = vset.pattern.permute.xlu0 74
    %2693 = vperm.xlu0 %2692, %v2192
    %v2694 = vpop.permute.xlu0 %2693
    %v2696 = vmul.f32 %v2694, %v138
    %2697 = vset.pattern.permute.xlu0 75
    %2698 = vperm.xlu0 %2697, %v2192
    %v2699 = vpop.permute.xlu0 %2698
    %v2701 = vmul.f32 %v2699, %v143
    %2702 = vset.pattern.permute.xlu0 76
    %2703 = vperm.xlu0 %2702, %v2192
    %v2704 = vpop.permute.xlu0 %2703
    %v2706 = vmul.f32 %v2704, %v148
    %2707 = vset.pattern.permute.xlu0 77
    %2708 = vperm.xlu0 %2707, %v2192
    %v2709 = vpop.permute.xlu0 %2708
    %v2711 = vmul.f32 %v2709, %v153
    %2712 = vset.pattern.permute.xlu0 78
    %2713 = vperm.xlu0 %2712, %v2192
    %v2714 = vpop.permute.xlu0 %2713
    %v2716 = vmul.f32 %v2714, %v158
    %2717 = vset.pattern.permute.xlu0 79
    %2718 = vperm.xlu0 %2717, %v2192
    %v2719 = vpop.permute.xlu0 %2718
    %v2721 = vmul.f32 %v2719, %v163
    %v2722 = vadd.f32 %v2626, %v2631
    %v2723 = vadd.f32 %v2636, %v2641
    %v2724 = vadd.f32 %v2646, %v2651
    %v2725 = vadd.f32 %v2656, %v2661
    %v2726 = vadd.f32 %v2666, %v2671
    %v2727 = vadd.f32 %v2676, %v2681
    %v2728 = vadd.f32 %v2686, %v2691
    %v2729 = vadd.f32 %v2696, %v2701
    %v2730 = vadd.f32 %v2706, %v2711
    %v2731 = vadd.f32 %v2716, %v2721
    %v2732 = vadd.f32 %v2722, %v2723
    %v2733 = vadd.f32 %v2724, %v2725
    %v2734 = vadd.f32 %v2726, %v2727
    %v2735 = vadd.f32 %v2728, %v2729
    %v2736 = vadd.f32 %v2730, %v2731
    %v2737 = vadd.f32 %v2732, %v2733
    %v2738 = vadd.f32 %v2734, %v2735
    %v2739 = vadd.f32 %v2737, %v2738
    %v2740 = vadd.f32 %v2739, %v2736
    %v2741 = vadd.f32 %v2620, %v2740
    %v2742 = vxor.u32 %v2741, 2147483648
    %v2743 = vmul.f32 %v2742, 1.442695
    %v2744 = vpow.pop %v2743
    %v2745 = vadd.f32 %v2744, 1.0
    %v2746 = vrcp.pop %v2745
    %v2747 = vmul.f32 1.0, %v2746
    %v2748 = vtanh.pop %v2741
    %v2749 = vmul.f32 %v2747, %v2186
    %2751 = vrot.lane.b32.xlu0 %v2748, 88
    %v2752 = vpop.permute.xlu0 %2751
    %v2754 = vmul.f32 %v2747, %v2752
    %2756 = vrot.lane.b32.xlu0 %v2754, 20
    %v2757 = vpop.permute.xlu0 %2756
    %v2759 = vadd.f32 %v2749, %v2757
    %v2760 = vtanh.pop %v2759
    %2762 = vrot.lane.b32.xlu0 %v2760, 40
    %v2763 = vpop.permute.xlu0 %2762
    %v2765 = vmul.f32 %v2747, %v2763
    %2767 = vset.pattern.permute.xlu0 20
    %2768 = vperm.xlu0 %2767, %v2759
    %v2769 = vpop.permute.xlu0 %2768
    %v2771 = vmul.f32 %v2769, %v217
    %2772 = vset.pattern.permute.xlu0 21
    %2773 = vperm.xlu0 %2772, %v2759
    %v2774 = vpop.permute.xlu0 %2773
    %v2776 = vmul.f32 %v2774, %v226
    %2777 = vset.pattern.permute.xlu0 22
    %2778 = vperm.xlu0 %2777, %v2759
    %v2779 = vpop.permute.xlu0 %2778
    %v2781 = vmul.f32 %v2779, %v235
    %2782 = vset.pattern.permute.xlu0 23
    %2783 = vperm.xlu0 %2782, %v2759
    %v2784 = vpop.permute.xlu0 %2783
    %v2786 = vmul.f32 %v2784, %v244
    %2787 = vset.pattern.permute.xlu0 24
    %2788 = vperm.xlu0 %2787, %v2759
    %v2789 = vpop.permute.xlu0 %2788
    %v2791 = vmul.f32 %v2789, %v253
    %2792 = vset.pattern.permute.xlu0 25
    %2793 = vperm.xlu0 %2792, %v2759
    %v2794 = vpop.permute.xlu0 %2793
    %v2796 = vmul.f32 %v2794, %v262
    %2797 = vset.pattern.permute.xlu0 26
    %2798 = vperm.xlu0 %2797, %v2759
    %v2799 = vpop.permute.xlu0 %2798
    %v2801 = vmul.f32 %v2799, %v271
    %2802 = vset.pattern.permute.xlu0 27
    %2803 = vperm.xlu0 %2802, %v2759
    %v2804 = vpop.permute.xlu0 %2803
    %v2806 = vmul.f32 %v2804, %v280
    %2807 = vset.pattern.permute.xlu0 28
    %2808 = vperm.xlu0 %2807, %v2759
    %v2809 = vpop.permute.xlu0 %2808
    %v2811 = vmul.f32 %v2809, %v289
    %2812 = vset.pattern.permute.xlu0 29
    %2813 = vperm.xlu0 %2812, %v2759
    %v2814 = vpop.permute.xlu0 %2813
    %v2816 = vmul.f32 %v2814, %v298
    %2817 = vset.pattern.permute.xlu0 30
    %2818 = vperm.xlu0 %2817, %v2759
    %v2819 = vpop.permute.xlu0 %2818
    %v2821 = vmul.f32 %v2819, %v307
    %2822 = vset.pattern.permute.xlu0 31
    %2823 = vperm.xlu0 %2822, %v2759
    %v2824 = vpop.permute.xlu0 %2823
    %v2826 = vmul.f32 %v2824, %v316
    %2827 = vset.pattern.permute.xlu0 32
    %2828 = vperm.xlu0 %2827, %v2759
    %v2829 = vpop.permute.xlu0 %2828
    %v2831 = vmul.f32 %v2829, %v325
    %2832 = vset.pattern.permute.xlu0 33
    %2833 = vperm.xlu0 %2832, %v2759
    %v2834 = vpop.permute.xlu0 %2833
    %v2836 = vmul.f32 %v2834, %v334
    %2837 = vset.pattern.permute.xlu0 34
    %2838 = vperm.xlu0 %2837, %v2759
    %v2839 = vpop.permute.xlu0 %2838
    %v2841 = vmul.f32 %v2839, %v343
    %2842 = vset.pattern.permute.xlu0 35
    %2843 = vperm.xlu0 %2842, %v2759
    %v2844 = vpop.permute.xlu0 %2843
    %v2846 = vmul.f32 %v2844, %v352
    %2847 = vset.pattern.permute.xlu0 36
    %2848 = vperm.xlu0 %2847, %v2759
    %v2849 = vpop.permute.xlu0 %2848
    %v2851 = vmul.f32 %v2849, %v361
    %2852 = vset.pattern.permute.xlu0 37
    %2853 = vperm.xlu0 %2852, %v2759
    %v2854 = vpop.permute.xlu0 %2853
    %v2856 = vmul.f32 %v2854, %v370
    %2857 = vset.pattern.permute.xlu0 38
    %2858 = vperm.xlu0 %2857, %v2759
    %v2859 = vpop.permute.xlu0 %2858
    %v2861 = vmul.f32 %v2859, %v379
    %2862 = vset.pattern.permute.xlu0 39
    %2863 = vperm.xlu0 %2862, %v2759
    %v2864 = vpop.permute.xlu0 %2863
    %v2866 = vmul.f32 %v2864, %v388
    %v2867 = vadd.f32 %v2771, %v2776
    %v2868 = vadd.f32 %v2781, %v2786
    %v2869 = vadd.f32 %v2791, %v2796
    %v2870 = vadd.f32 %v2801, %v2806
    %v2871 = vadd.f32 %v2811, %v2816
    %v2872 = vadd.f32 %v2821, %v2826
    %v2873 = vadd.f32 %v2831, %v2836
    %v2874 = vadd.f32 %v2841, %v2846
    %v2875 = vadd.f32 %v2851, %v2856
    %v2876 = vadd.f32 %v2861, %v2866
    %v2877 = vadd.f32 %v2867, %v2868
    %v2878 = vadd.f32 %v2869, %v2870
    %v2879 = vadd.f32 %v2871, %v2872
    %v2880 = vadd.f32 %v2873, %v2874
    %v2881 = vadd.f32 %v2875, %v2876
    %v2882 = vadd.f32 %v2877, %v2878
    %v2883 = vadd.f32 %v2879, %v2880
    %v2884 = vadd.f32 %v2882, %v2883
    %v2885 = vadd.f32 %v2884, %v2881
    %v2886 = vadd.f32 %v2885, %v48
    %2888 = vset.pattern.permute.xlu0 3
    %2889 = vperm.xlu0 %2888, %v2611
    %v2890 = vpop.permute.xlu0 %2889
    %v2892 = vmul.f32 %v2890, %v2318
    %v2893 = vadd.f32 %v2886, %v2892
    %v2894 = vxor.u32 %v2893, 2147483648
    %v2895 = vmul.f32 %v2894, 1.442695
    %v2896 = vpow.pop %v2895
    %v2897 = vadd.f32 %v2896, 1.0
    %v2898 = vrcp.pop %v2897
    %v2899 = vmul.f32 1.0, %v2898
    %v2900 = vtanh.pop %v2893
    %v2901 = vmul.f32 %v2899, %v2605
    %2903 = vrot.lane.b32.xlu0 %v2900, 126
    %v2904 = vpop.permute.xlu0 %2903
    %v2906 = vmul.f32 %v2899, %v2904
    %2908 = vrot.lane.b32.xlu0 %v2906, 1
    %v2909 = vpop.permute.xlu0 %2908
    %v2911 = vadd.f32 %v2901, %v2909
    %v2912 = vtanh.pop %v2911
    %2914 = vrot.lane.b32.xlu0 %v2912, 2
    %v2915 = vpop.permute.xlu0 %2914
    %v2917 = vmul.f32 %v2899, %v2915
    %vm2918 = vcmp.eq.s32.totalorder %v51, 8
    %2920 = vset.pattern.permute.xlu0 1
    %2921 = vperm.xlu0 %2920, %v2911
    %v2922 = vpop.permute.xlu0 %2921
    %v2924 = vsel %vm2918, %v2922, %v2618
    %v2925 = vmul.f32 %v2922, %v61
    %v2926 = vadd.f32 %v2925, %v41
    %2928 = vset.pattern.permute.xlu0 60
    %2929 = vperm.xlu0 %2928, %v2765
    %v2930 = vpop.permute.xlu0 %2929
    %v2932 = vmul.f32 %v2930, %v68
    %2933 = vset.pattern.permute.xlu0 61
    %2934 = vperm.xlu0 %2933, %v2765
    %v2935 = vpop.permute.xlu0 %2934
    %v2937 = vmul.f32 %v2935, %v73
    %2938 = vset.pattern.permute.xlu0 62
    %2939 = vperm.xlu0 %2938, %v2765
    %v2940 = vpop.permute.xlu0 %2939
    %v2942 = vmul.f32 %v2940, %v78
    %2943 = vset.pattern.permute.xlu0 63
    %2944 = vperm.xlu0 %2943, %v2765
    %v2945 = vpop.permute.xlu0 %2944
    %v2947 = vmul.f32 %v2945, %v83
    %2948 = vset.pattern.permute.xlu0 64
    %2949 = vperm.xlu0 %2948, %v2765
    %v2950 = vpop.permute.xlu0 %2949
    %v2952 = vmul.f32 %v2950, %v88
    %2953 = vset.pattern.permute.xlu0 65
    %2954 = vperm.xlu0 %2953, %v2765
    %v2955 = vpop.permute.xlu0 %2954
    %v2957 = vmul.f32 %v2955, %v93
    %2958 = vset.pattern.permute.xlu0 66
    %2959 = vperm.xlu0 %2958, %v2765
    %v2960 = vpop.permute.xlu0 %2959
    %v2962 = vmul.f32 %v2960, %v98
    %2963 = vset.pattern.permute.xlu0 67
    %2964 = vperm.xlu0 %2963, %v2765
    %v2965 = vpop.permute.xlu0 %2964
    %v2967 = vmul.f32 %v2965, %v103
    %2968 = vset.pattern.permute.xlu0 68
    %2969 = vperm.xlu0 %2968, %v2765
    %v2970 = vpop.permute.xlu0 %2969
    %v2972 = vmul.f32 %v2970, %v108
    %2973 = vset.pattern.permute.xlu0 69
    %2974 = vperm.xlu0 %2973, %v2765
    %v2975 = vpop.permute.xlu0 %2974
    %v2977 = vmul.f32 %v2975, %v113
    %2978 = vset.pattern.permute.xlu0 70
    %2979 = vperm.xlu0 %2978, %v2765
    %v2980 = vpop.permute.xlu0 %2979
    %v2982 = vmul.f32 %v2980, %v118
    %2983 = vset.pattern.permute.xlu0 71
    %2984 = vperm.xlu0 %2983, %v2765
    %v2985 = vpop.permute.xlu0 %2984
    %v2987 = vmul.f32 %v2985, %v123
    %2988 = vset.pattern.permute.xlu0 72
    %2989 = vperm.xlu0 %2988, %v2765
    %v2990 = vpop.permute.xlu0 %2989
    %v2992 = vmul.f32 %v2990, %v128
    %2993 = vset.pattern.permute.xlu0 73
    %2994 = vperm.xlu0 %2993, %v2765
    %v2995 = vpop.permute.xlu0 %2994
    %v2997 = vmul.f32 %v2995, %v133
    %2998 = vset.pattern.permute.xlu0 74
    %2999 = vperm.xlu0 %2998, %v2765
    %v3000 = vpop.permute.xlu0 %2999
    %v3002 = vmul.f32 %v3000, %v138
    %3003 = vset.pattern.permute.xlu0 75
    %3004 = vperm.xlu0 %3003, %v2765
    %v3005 = vpop.permute.xlu0 %3004
    %v3007 = vmul.f32 %v3005, %v143
    %3008 = vset.pattern.permute.xlu0 76
    %3009 = vperm.xlu0 %3008, %v2765
    %v3010 = vpop.permute.xlu0 %3009
    %v3012 = vmul.f32 %v3010, %v148
    %3013 = vset.pattern.permute.xlu0 77
    %3014 = vperm.xlu0 %3013, %v2765
    %v3015 = vpop.permute.xlu0 %3014
    %v3017 = vmul.f32 %v3015, %v153
    %3018 = vset.pattern.permute.xlu0 78
    %3019 = vperm.xlu0 %3018, %v2765
    %v3020 = vpop.permute.xlu0 %3019
    %v3022 = vmul.f32 %v3020, %v158
    %3023 = vset.pattern.permute.xlu0 79
    %3024 = vperm.xlu0 %3023, %v2765
    %v3025 = vpop.permute.xlu0 %3024
    %v3027 = vmul.f32 %v3025, %v163
    %v3028 = vadd.f32 %v2932, %v2937
    %v3029 = vadd.f32 %v2942, %v2947
    %v3030 = vadd.f32 %v2952, %v2957
    %v3031 = vadd.f32 %v2962, %v2967
    %v3032 = vadd.f32 %v2972, %v2977
    %v3033 = vadd.f32 %v2982, %v2987
    %v3034 = vadd.f32 %v2992, %v2997
    %v3035 = vadd.f32 %v3002, %v3007
    %v3036 = vadd.f32 %v3012, %v3017
    %v3037 = vadd.f32 %v3022, %v3027
    %v3038 = vadd.f32 %v3028, %v3029
    %v3039 = vadd.f32 %v3030, %v3031
    %v3040 = vadd.f32 %v3032, %v3033
    %v3041 = vadd.f32 %v3034, %v3035
    %v3042 = vadd.f32 %v3036, %v3037
    %v3043 = vadd.f32 %v3038, %v3039
    %v3044 = vadd.f32 %v3040, %v3041
    %v3045 = vadd.f32 %v3043, %v3044
    %v3046 = vadd.f32 %v3045, %v3042
    %v3047 = vadd.f32 %v2926, %v3046
    %v3048 = vxor.u32 %v3047, 2147483648
    %v3049 = vmul.f32 %v3048, 1.442695
    %v3050 = vpow.pop %v3049
    %v3051 = vadd.f32 %v3050, 1.0
    %v3052 = vrcp.pop %v3051
    %v3053 = vmul.f32 1.0, %v3052
    %v3054 = vtanh.pop %v3047
    %v3055 = vmul.f32 %v3053, %v2759
    %3057 = vrot.lane.b32.xlu0 %v3054, 88
    %v3058 = vpop.permute.xlu0 %3057
    %v3060 = vmul.f32 %v3053, %v3058
    %3062 = vrot.lane.b32.xlu0 %v3060, 20
    %v3063 = vpop.permute.xlu0 %3062
    %v3065 = vadd.f32 %v3055, %v3063
    %v3066 = vtanh.pop %v3065
    %3068 = vrot.lane.b32.xlu0 %v3066, 40
    %v3069 = vpop.permute.xlu0 %3068
    %v3071 = vmul.f32 %v3053, %v3069
    %3073 = vset.pattern.permute.xlu0 20
    %3074 = vperm.xlu0 %3073, %v3065
    %v3075 = vpop.permute.xlu0 %3074
    %v3077 = vmul.f32 %v3075, %v217
    %3078 = vset.pattern.permute.xlu0 21
    %3079 = vperm.xlu0 %3078, %v3065
    %v3080 = vpop.permute.xlu0 %3079
    %v3082 = vmul.f32 %v3080, %v226
    %3083 = vset.pattern.permute.xlu0 22
    %3084 = vperm.xlu0 %3083, %v3065
    %v3085 = vpop.permute.xlu0 %3084
    %v3087 = vmul.f32 %v3085, %v235
    %3088 = vset.pattern.permute.xlu0 23
    %3089 = vperm.xlu0 %3088, %v3065
    %v3090 = vpop.permute.xlu0 %3089
    %v3092 = vmul.f32 %v3090, %v244
    %3093 = vset.pattern.permute.xlu0 24
    %3094 = vperm.xlu0 %3093, %v3065
    %v3095 = vpop.permute.xlu0 %3094
    %v3097 = vmul.f32 %v3095, %v253
    %3098 = vset.pattern.permute.xlu0 25
    %3099 = vperm.xlu0 %3098, %v3065
    %v3100 = vpop.permute.xlu0 %3099
    %v3102 = vmul.f32 %v3100, %v262
    %3103 = vset.pattern.permute.xlu0 26
    %3104 = vperm.xlu0 %3103, %v3065
    %v3105 = vpop.permute.xlu0 %3104
    %v3107 = vmul.f32 %v3105, %v271
    %3108 = vset.pattern.permute.xlu0 27
    %3109 = vperm.xlu0 %3108, %v3065
    %v3110 = vpop.permute.xlu0 %3109
    %v3112 = vmul.f32 %v3110, %v280
    %3113 = vset.pattern.permute.xlu0 28
    %3114 = vperm.xlu0 %3113, %v3065
    %v3115 = vpop.permute.xlu0 %3114
    %v3117 = vmul.f32 %v3115, %v289
    %3118 = vset.pattern.permute.xlu0 29
    %3119 = vperm.xlu0 %3118, %v3065
    %v3120 = vpop.permute.xlu0 %3119
    %v3122 = vmul.f32 %v3120, %v298
    %3123 = vset.pattern.permute.xlu0 30
    %3124 = vperm.xlu0 %3123, %v3065
    %v3125 = vpop.permute.xlu0 %3124
    %v3127 = vmul.f32 %v3125, %v307
    %3128 = vset.pattern.permute.xlu0 31
    %3129 = vperm.xlu0 %3128, %v3065
    %v3130 = vpop.permute.xlu0 %3129
    %v3132 = vmul.f32 %v3130, %v316
    %3133 = vset.pattern.permute.xlu0 32
    %3134 = vperm.xlu0 %3133, %v3065
    %v3135 = vpop.permute.xlu0 %3134
    %v3137 = vmul.f32 %v3135, %v325
    %3138 = vset.pattern.permute.xlu0 33
    %3139 = vperm.xlu0 %3138, %v3065
    %v3140 = vpop.permute.xlu0 %3139
    %v3142 = vmul.f32 %v3140, %v334
    %3143 = vset.pattern.permute.xlu0 34
    %3144 = vperm.xlu0 %3143, %v3065
    %v3145 = vpop.permute.xlu0 %3144
    %v3147 = vmul.f32 %v3145, %v343
    %3148 = vset.pattern.permute.xlu0 35
    %3149 = vperm.xlu0 %3148, %v3065
    %v3150 = vpop.permute.xlu0 %3149
    %v3152 = vmul.f32 %v3150, %v352
    %3153 = vset.pattern.permute.xlu0 36
    %3154 = vperm.xlu0 %3153, %v3065
    %v3155 = vpop.permute.xlu0 %3154
    %v3157 = vmul.f32 %v3155, %v361
    %3158 = vset.pattern.permute.xlu0 37
    %3159 = vperm.xlu0 %3158, %v3065
    %v3160 = vpop.permute.xlu0 %3159
    %v3162 = vmul.f32 %v3160, %v370
    %3163 = vset.pattern.permute.xlu0 38
    %3164 = vperm.xlu0 %3163, %v3065
    %v3165 = vpop.permute.xlu0 %3164
    %v3167 = vmul.f32 %v3165, %v379
    %3168 = vset.pattern.permute.xlu0 39
    %3169 = vperm.xlu0 %3168, %v3065
    %v3170 = vpop.permute.xlu0 %3169
    %v3172 = vmul.f32 %v3170, %v388
    %v3173 = vadd.f32 %v3077, %v3082
    %v3174 = vadd.f32 %v3087, %v3092
    %v3175 = vadd.f32 %v3097, %v3102
    %v3176 = vadd.f32 %v3107, %v3112
    %v3177 = vadd.f32 %v3117, %v3122
    %v3178 = vadd.f32 %v3127, %v3132
    %v3179 = vadd.f32 %v3137, %v3142
    %v3180 = vadd.f32 %v3147, %v3152
    %v3181 = vadd.f32 %v3157, %v3162
    %v3182 = vadd.f32 %v3167, %v3172
    %v3183 = vadd.f32 %v3173, %v3174
    %v3184 = vadd.f32 %v3175, %v3176
    %v3185 = vadd.f32 %v3177, %v3178
    %v3186 = vadd.f32 %v3179, %v3180
    %v3187 = vadd.f32 %v3181, %v3182
    %v3188 = vadd.f32 %v3183, %v3184
    %v3189 = vadd.f32 %v3185, %v3186
    %v3190 = vadd.f32 %v3188, %v3189
    %v3191 = vadd.f32 %v3190, %v3187
    %v3192 = vadd.f32 %v3191, %v48
    %3194 = vset.pattern.permute.xlu0 3
    %3195 = vperm.xlu0 %3194, %v2917
    %v3196 = vpop.permute.xlu0 %3195
    %v3198 = vmul.f32 %v3196, %v2318
    %v3199 = vadd.f32 %v3192, %v3198
    %v3200 = vxor.u32 %v3199, 2147483648
    %v3201 = vmul.f32 %v3200, 1.442695
    %v3202 = vpow.pop %v3201
    %v3203 = vadd.f32 %v3202, 1.0
    %v3204 = vrcp.pop %v3203
    %v3205 = vmul.f32 1.0, %v3204
    %v3206 = vtanh.pop %v3199
    %v3207 = vmul.f32 %v3205, %v2911
    %3209 = vrot.lane.b32.xlu0 %v3206, 126
    %v3210 = vpop.permute.xlu0 %3209
    %v3212 = vmul.f32 %v3205, %v3210
    %3214 = vrot.lane.b32.xlu0 %v3212, 1
    %v3215 = vpop.permute.xlu0 %3214
    %v3217 = vadd.f32 %v3207, %v3215
    %v3218 = vtanh.pop %v3217
    %3220 = vrot.lane.b32.xlu0 %v3218, 2
    %v3221 = vpop.permute.xlu0 %3220
    %v3223 = vmul.f32 %v3205, %v3221
    %vm3224 = vcmp.eq.s32.totalorder %v51, 9
    %3226 = vset.pattern.permute.xlu0 1
    %3227 = vperm.xlu0 %3226, %v3217
    %v3228 = vpop.permute.xlu0 %3227
    %v3230 = vsel %vm3224, %v3228, %v2924
    %v3231 = vmul.f32 %v3228, %v61
    %v3232 = vadd.f32 %v3231, %v41
    %3234 = vset.pattern.permute.xlu0 60
    %3235 = vperm.xlu0 %3234, %v3071
    %v3236 = vpop.permute.xlu0 %3235
    %v3238 = vmul.f32 %v3236, %v68
    %3239 = vset.pattern.permute.xlu0 61
    %3240 = vperm.xlu0 %3239, %v3071
    %v3241 = vpop.permute.xlu0 %3240
    %v3243 = vmul.f32 %v3241, %v73
    %3244 = vset.pattern.permute.xlu0 62
    %3245 = vperm.xlu0 %3244, %v3071
    %v3246 = vpop.permute.xlu0 %3245
    %v3248 = vmul.f32 %v3246, %v78
    %3249 = vset.pattern.permute.xlu0 63
    %3250 = vperm.xlu0 %3249, %v3071
    %v3251 = vpop.permute.xlu0 %3250
    %v3253 = vmul.f32 %v3251, %v83
    %3254 = vset.pattern.permute.xlu0 64
    %3255 = vperm.xlu0 %3254, %v3071
    %v3256 = vpop.permute.xlu0 %3255
    %v3258 = vmul.f32 %v3256, %v88
    %3259 = vset.pattern.permute.xlu0 65
    %3260 = vperm.xlu0 %3259, %v3071
    %v3261 = vpop.permute.xlu0 %3260
    %v3263 = vmul.f32 %v3261, %v93
    %3264 = vset.pattern.permute.xlu0 66
    %3265 = vperm.xlu0 %3264, %v3071
    %v3266 = vpop.permute.xlu0 %3265
    %v3268 = vmul.f32 %v3266, %v98
    %3269 = vset.pattern.permute.xlu0 67
    %3270 = vperm.xlu0 %3269, %v3071
    %v3271 = vpop.permute.xlu0 %3270
    %v3273 = vmul.f32 %v3271, %v103
    %3274 = vset.pattern.permute.xlu0 68
    %3275 = vperm.xlu0 %3274, %v3071
    %v3276 = vpop.permute.xlu0 %3275
    %v3278 = vmul.f32 %v3276, %v108
    %3279 = vset.pattern.permute.xlu0 69
    %3280 = vperm.xlu0 %3279, %v3071
    %v3281 = vpop.permute.xlu0 %3280
    %v3283 = vmul.f32 %v3281, %v113
    %3284 = vset.pattern.permute.xlu0 70
    %3285 = vperm.xlu0 %3284, %v3071
    %v3286 = vpop.permute.xlu0 %3285
    %v3288 = vmul.f32 %v3286, %v118
    %3289 = vset.pattern.permute.xlu0 71
    %3290 = vperm.xlu0 %3289, %v3071
    %v3291 = vpop.permute.xlu0 %3290
    %v3293 = vmul.f32 %v3291, %v123
    %3294 = vset.pattern.permute.xlu0 72
    %3295 = vperm.xlu0 %3294, %v3071
    %v3296 = vpop.permute.xlu0 %3295
    %v3298 = vmul.f32 %v3296, %v128
    %3299 = vset.pattern.permute.xlu0 73
    %3300 = vperm.xlu0 %3299, %v3071
    %v3301 = vpop.permute.xlu0 %3300
    %v3303 = vmul.f32 %v3301, %v133
    %3304 = vset.pattern.permute.xlu0 74
    %3305 = vperm.xlu0 %3304, %v3071
    %v3306 = vpop.permute.xlu0 %3305
    %v3308 = vmul.f32 %v3306, %v138
    %3309 = vset.pattern.permute.xlu0 75
    %3310 = vperm.xlu0 %3309, %v3071
    %v3311 = vpop.permute.xlu0 %3310
    %v3313 = vmul.f32 %v3311, %v143
    %3314 = vset.pattern.permute.xlu0 76
    %3315 = vperm.xlu0 %3314, %v3071
    %v3316 = vpop.permute.xlu0 %3315
    %v3318 = vmul.f32 %v3316, %v148
    %3319 = vset.pattern.permute.xlu0 77
    %3320 = vperm.xlu0 %3319, %v3071
    %v3321 = vpop.permute.xlu0 %3320
    %v3323 = vmul.f32 %v3321, %v153
    %3324 = vset.pattern.permute.xlu0 78
    %3325 = vperm.xlu0 %3324, %v3071
    %v3326 = vpop.permute.xlu0 %3325
    %v3328 = vmul.f32 %v3326, %v158
    %3329 = vset.pattern.permute.xlu0 79
    %3330 = vperm.xlu0 %3329, %v3071
    %v3331 = vpop.permute.xlu0 %3330
    %v3333 = vmul.f32 %v3331, %v163
    %v3334 = vadd.f32 %v3238, %v3243
    %v3335 = vadd.f32 %v3248, %v3253
    %v3336 = vadd.f32 %v3258, %v3263
    %v3337 = vadd.f32 %v3268, %v3273
    %v3338 = vadd.f32 %v3278, %v3283
    %v3339 = vadd.f32 %v3288, %v3293
    %v3340 = vadd.f32 %v3298, %v3303
    %v3341 = vadd.f32 %v3308, %v3313
    %v3342 = vadd.f32 %v3318, %v3323
    %v3343 = vadd.f32 %v3328, %v3333
    %v3344 = vadd.f32 %v3334, %v3335
    %v3345 = vadd.f32 %v3336, %v3337
    %v3346 = vadd.f32 %v3338, %v3339
    %v3347 = vadd.f32 %v3340, %v3341
    %v3348 = vadd.f32 %v3342, %v3343
    %v3349 = vadd.f32 %v3344, %v3345
    %v3350 = vadd.f32 %v3346, %v3347
    %v3351 = vadd.f32 %v3349, %v3350
    %v3352 = vadd.f32 %v3351, %v3348
    %v3353 = vadd.f32 %v3232, %v3352
    %v3354 = vxor.u32 %v3353, 2147483648
    %v3355 = vmul.f32 %v3354, 1.442695
    %v3356 = vpow.pop %v3355
    %v3357 = vadd.f32 %v3356, 1.0
    %v3358 = vrcp.pop %v3357
    %v3359 = vmul.f32 1.0, %v3358
    %v3360 = vtanh.pop %v3353
    %v3361 = vmul.f32 %v3359, %v3065
    %3363 = vrot.lane.b32.xlu0 %v3360, 88
    %v3364 = vpop.permute.xlu0 %3363
    %v3366 = vmul.f32 %v3359, %v3364
    %3368 = vrot.lane.b32.xlu0 %v3366, 20
    %v3369 = vpop.permute.xlu0 %3368
    %v3371 = vadd.f32 %v3361, %v3369
    %v3372 = vtanh.pop %v3371
    %3374 = vrot.lane.b32.xlu0 %v3372, 40
    %v3375 = vpop.permute.xlu0 %3374
    %v3377 = vmul.f32 %v3359, %v3375
    %3379 = vset.pattern.permute.xlu0 20
    %3380 = vperm.xlu0 %3379, %v3371
    %v3381 = vpop.permute.xlu0 %3380
    %v3383 = vmul.f32 %v3381, %v217
    %3384 = vset.pattern.permute.xlu0 21
    %3385 = vperm.xlu0 %3384, %v3371
    %v3386 = vpop.permute.xlu0 %3385
    %v3388 = vmul.f32 %v3386, %v226
    %3389 = vset.pattern.permute.xlu0 22
    %3390 = vperm.xlu0 %3389, %v3371
    %v3391 = vpop.permute.xlu0 %3390
    %v3393 = vmul.f32 %v3391, %v235
    %3394 = vset.pattern.permute.xlu0 23
    %3395 = vperm.xlu0 %3394, %v3371
    %v3396 = vpop.permute.xlu0 %3395
    %v3398 = vmul.f32 %v3396, %v244
    %3399 = vset.pattern.permute.xlu0 24
    %3400 = vperm.xlu0 %3399, %v3371
    %v3401 = vpop.permute.xlu0 %3400
    %v3403 = vmul.f32 %v3401, %v253
    %3404 = vset.pattern.permute.xlu0 25
    %3405 = vperm.xlu0 %3404, %v3371
    %v3406 = vpop.permute.xlu0 %3405
    %v3408 = vmul.f32 %v3406, %v262
    %3409 = vset.pattern.permute.xlu0 26
    %3410 = vperm.xlu0 %3409, %v3371
    %v3411 = vpop.permute.xlu0 %3410
    %v3413 = vmul.f32 %v3411, %v271
    %3414 = vset.pattern.permute.xlu0 27
    %3415 = vperm.xlu0 %3414, %v3371
    %v3416 = vpop.permute.xlu0 %3415
    %v3418 = vmul.f32 %v3416, %v280
    %3419 = vset.pattern.permute.xlu0 28
    %3420 = vperm.xlu0 %3419, %v3371
    %v3421 = vpop.permute.xlu0 %3420
    %v3423 = vmul.f32 %v3421, %v289
    %3424 = vset.pattern.permute.xlu0 29
    %3425 = vperm.xlu0 %3424, %v3371
    %v3426 = vpop.permute.xlu0 %3425
    %v3428 = vmul.f32 %v3426, %v298
    %3429 = vset.pattern.permute.xlu0 30
    %3430 = vperm.xlu0 %3429, %v3371
    %v3431 = vpop.permute.xlu0 %3430
    %v3433 = vmul.f32 %v3431, %v307
    %3434 = vset.pattern.permute.xlu0 31
    %3435 = vperm.xlu0 %3434, %v3371
    %v3436 = vpop.permute.xlu0 %3435
    %v3438 = vmul.f32 %v3436, %v316
    %3439 = vset.pattern.permute.xlu0 32
    %3440 = vperm.xlu0 %3439, %v3371
    %v3441 = vpop.permute.xlu0 %3440
    %v3443 = vmul.f32 %v3441, %v325
    %3444 = vset.pattern.permute.xlu0 33
    %3445 = vperm.xlu0 %3444, %v3371
    %v3446 = vpop.permute.xlu0 %3445
    %v3448 = vmul.f32 %v3446, %v334
    %3449 = vset.pattern.permute.xlu0 34
    %3450 = vperm.xlu0 %3449, %v3371
    %v3451 = vpop.permute.xlu0 %3450
    %v3453 = vmul.f32 %v3451, %v343
    %3454 = vset.pattern.permute.xlu0 35
    %3455 = vperm.xlu0 %3454, %v3371
    %v3456 = vpop.permute.xlu0 %3455
    %v3458 = vmul.f32 %v3456, %v352
    %3459 = vset.pattern.permute.xlu0 36
    %3460 = vperm.xlu0 %3459, %v3371
    %v3461 = vpop.permute.xlu0 %3460
    %v3463 = vmul.f32 %v3461, %v361
    %3464 = vset.pattern.permute.xlu0 37
    %3465 = vperm.xlu0 %3464, %v3371
    %v3466 = vpop.permute.xlu0 %3465
    %v3468 = vmul.f32 %v3466, %v370
    %3469 = vset.pattern.permute.xlu0 38
    %3470 = vperm.xlu0 %3469, %v3371
    %v3471 = vpop.permute.xlu0 %3470
    %v3473 = vmul.f32 %v3471, %v379
    %3474 = vset.pattern.permute.xlu0 39
    %3475 = vperm.xlu0 %3474, %v3371
    %v3476 = vpop.permute.xlu0 %3475
    %v3478 = vmul.f32 %v3476, %v388
    %v3479 = vadd.f32 %v3383, %v3388
    %v3480 = vadd.f32 %v3393, %v3398
    %v3481 = vadd.f32 %v3403, %v3408
    %v3482 = vadd.f32 %v3413, %v3418
    %v3483 = vadd.f32 %v3423, %v3428
    %v3484 = vadd.f32 %v3433, %v3438
    %v3485 = vadd.f32 %v3443, %v3448
    %v3486 = vadd.f32 %v3453, %v3458
    %v3487 = vadd.f32 %v3463, %v3468
    %v3488 = vadd.f32 %v3473, %v3478
    %v3489 = vadd.f32 %v3479, %v3480
    %v3490 = vadd.f32 %v3481, %v3482
    %v3491 = vadd.f32 %v3483, %v3484
    %v3492 = vadd.f32 %v3485, %v3486
    %v3493 = vadd.f32 %v3487, %v3488
    %v3494 = vadd.f32 %v3489, %v3490
    %v3495 = vadd.f32 %v3491, %v3492
    %v3496 = vadd.f32 %v3494, %v3495
    %v3497 = vadd.f32 %v3496, %v3493
    %v3498 = vadd.f32 %v3497, %v48
    %3500 = vset.pattern.permute.xlu0 3
    %3501 = vperm.xlu0 %3500, %v3223
    %v3502 = vpop.permute.xlu0 %3501
    %v3504 = vmul.f32 %v3502, %v2318
    %v3505 = vadd.f32 %v3498, %v3504
    %v3506 = vxor.u32 %v3505, 2147483648
    %v3507 = vmul.f32 %v3506, 1.442695
    %v3508 = vpow.pop %v3507
    %v3509 = vadd.f32 %v3508, 1.0
    %v3510 = vrcp.pop %v3509
    %v3511 = vmul.f32 1.0, %v3510
    %v3512 = vtanh.pop %v3505
    %v3513 = vmul.f32 %v3511, %v3217
    %3515 = vrot.lane.b32.xlu0 %v3512, 126
    %v3516 = vpop.permute.xlu0 %3515
    %v3518 = vmul.f32 %v3511, %v3516
    %3520 = vrot.lane.b32.xlu0 %v3518, 1
    %v3521 = vpop.permute.xlu0 %3520
    %v3523 = vadd.f32 %v3513, %v3521
    %v3524 = vtanh.pop %v3523
    %3526 = vrot.lane.b32.xlu0 %v3524, 2
    %v3527 = vpop.permute.xlu0 %3526
    %v3529 = vmul.f32 %v3511, %v3527
    %vm3530 = vcmp.eq.s32.totalorder %v51, 10
    %3532 = vset.pattern.permute.xlu0 1
    %3533 = vperm.xlu0 %3532, %v3523
    %v3534 = vpop.permute.xlu0 %3533
    %v3536 = vsel %vm3530, %v3534, %v3230
    %v3537 = vmul.f32 %v3534, %v61
    %v3538 = vadd.f32 %v3537, %v41
    %3540 = vset.pattern.permute.xlu0 60
    %3541 = vperm.xlu0 %3540, %v3377
    %v3542 = vpop.permute.xlu0 %3541
    %v3544 = vmul.f32 %v3542, %v68
    %3545 = vset.pattern.permute.xlu0 61
    %3546 = vperm.xlu0 %3545, %v3377
    %v3547 = vpop.permute.xlu0 %3546
    %v3549 = vmul.f32 %v3547, %v73
    %3550 = vset.pattern.permute.xlu0 62
    %3551 = vperm.xlu0 %3550, %v3377
    %v3552 = vpop.permute.xlu0 %3551
    %v3554 = vmul.f32 %v3552, %v78
    %3555 = vset.pattern.permute.xlu0 63
    %3556 = vperm.xlu0 %3555, %v3377
    %v3557 = vpop.permute.xlu0 %3556
    %v3559 = vmul.f32 %v3557, %v83
    %3560 = vset.pattern.permute.xlu0 64
    %3561 = vperm.xlu0 %3560, %v3377
    %v3562 = vpop.permute.xlu0 %3561
    %v3564 = vmul.f32 %v3562, %v88
    %3565 = vset.pattern.permute.xlu0 65
    %3566 = vperm.xlu0 %3565, %v3377
    %v3567 = vpop.permute.xlu0 %3566
    %v3569 = vmul.f32 %v3567, %v93
    %3570 = vset.pattern.permute.xlu0 66
    %3571 = vperm.xlu0 %3570, %v3377
    %v3572 = vpop.permute.xlu0 %3571
    %v3574 = vmul.f32 %v3572, %v98
    %3575 = vset.pattern.permute.xlu0 67
    %3576 = vperm.xlu0 %3575, %v3377
    %v3577 = vpop.permute.xlu0 %3576
    %v3579 = vmul.f32 %v3577, %v103
    %3580 = vset.pattern.permute.xlu0 68
    %3581 = vperm.xlu0 %3580, %v3377
    %v3582 = vpop.permute.xlu0 %3581
    %v3584 = vmul.f32 %v3582, %v108
    %3585 = vset.pattern.permute.xlu0 69
    %3586 = vperm.xlu0 %3585, %v3377
    %v3587 = vpop.permute.xlu0 %3586
    %v3589 = vmul.f32 %v3587, %v113
    %3590 = vset.pattern.permute.xlu0 70
    %3591 = vperm.xlu0 %3590, %v3377
    %v3592 = vpop.permute.xlu0 %3591
    %v3594 = vmul.f32 %v3592, %v118
    %3595 = vset.pattern.permute.xlu0 71
    %3596 = vperm.xlu0 %3595, %v3377
    %v3597 = vpop.permute.xlu0 %3596
    %v3599 = vmul.f32 %v3597, %v123
    %3600 = vset.pattern.permute.xlu0 72
    %3601 = vperm.xlu0 %3600, %v3377
    %v3602 = vpop.permute.xlu0 %3601
    %v3604 = vmul.f32 %v3602, %v128
    %3605 = vset.pattern.permute.xlu0 73
    %3606 = vperm.xlu0 %3605, %v3377
    %v3607 = vpop.permute.xlu0 %3606
    %v3609 = vmul.f32 %v3607, %v133
    %3610 = vset.pattern.permute.xlu0 74
    %3611 = vperm.xlu0 %3610, %v3377
    %v3612 = vpop.permute.xlu0 %3611
    %v3614 = vmul.f32 %v3612, %v138
    %3615 = vset.pattern.permute.xlu0 75
    %3616 = vperm.xlu0 %3615, %v3377
    %v3617 = vpop.permute.xlu0 %3616
    %v3619 = vmul.f32 %v3617, %v143
    %3620 = vset.pattern.permute.xlu0 76
    %3621 = vperm.xlu0 %3620, %v3377
    %v3622 = vpop.permute.xlu0 %3621
    %v3624 = vmul.f32 %v3622, %v148
    %3625 = vset.pattern.permute.xlu0 77
    %3626 = vperm.xlu0 %3625, %v3377
    %v3627 = vpop.permute.xlu0 %3626
    %v3629 = vmul.f32 %v3627, %v153
    %3630 = vset.pattern.permute.xlu0 78
    %3631 = vperm.xlu0 %3630, %v3377
    %v3632 = vpop.permute.xlu0 %3631
    %v3634 = vmul.f32 %v3632, %v158
    %3635 = vset.pattern.permute.xlu0 79
    %3636 = vperm.xlu0 %3635, %v3377
    %v3637 = vpop.permute.xlu0 %3636
    %v3639 = vmul.f32 %v3637, %v163
    %v3640 = vadd.f32 %v3544, %v3549
    %v3641 = vadd.f32 %v3554, %v3559
    %v3642 = vadd.f32 %v3564, %v3569
    %v3643 = vadd.f32 %v3574, %v3579
    %v3644 = vadd.f32 %v3584, %v3589
    %v3645 = vadd.f32 %v3594, %v3599
    %v3646 = vadd.f32 %v3604, %v3609
    %v3647 = vadd.f32 %v3614, %v3619
    %v3648 = vadd.f32 %v3624, %v3629
    %v3649 = vadd.f32 %v3634, %v3639
    %v3650 = vadd.f32 %v3640, %v3641
    %v3651 = vadd.f32 %v3642, %v3643
    %v3652 = vadd.f32 %v3644, %v3645
    %v3653 = vadd.f32 %v3646, %v3647
    %v3654 = vadd.f32 %v3648, %v3649
    %v3655 = vadd.f32 %v3650, %v3651
    %v3656 = vadd.f32 %v3652, %v3653
    %v3657 = vadd.f32 %v3655, %v3656
    %v3658 = vadd.f32 %v3657, %v3654
    %v3659 = vadd.f32 %v3538, %v3658
    %v3660 = vxor.u32 %v3659, 2147483648
    %v3661 = vmul.f32 %v3660, 1.442695
    %v3662 = vpow.pop %v3661
    %v3663 = vadd.f32 %v3662, 1.0
    %v3664 = vrcp.pop %v3663
    %v3665 = vmul.f32 1.0, %v3664
    %v3666 = vtanh.pop %v3659
    %v3667 = vmul.f32 %v3665, %v3371
    %3669 = vrot.lane.b32.xlu0 %v3666, 88
    %v3670 = vpop.permute.xlu0 %3669
    %v3672 = vmul.f32 %v3665, %v3670
    %3674 = vrot.lane.b32.xlu0 %v3672, 20
    %v3675 = vpop.permute.xlu0 %3674
    %v3677 = vadd.f32 %v3667, %v3675
    %3679 = vset.pattern.permute.xlu0 20
    %3680 = vperm.xlu0 %3679, %v3677
    %v3681 = vpop.permute.xlu0 %3680
    %v3683 = vmul.f32 %v3681, %v217
    %3684 = vset.pattern.permute.xlu0 21
    %3685 = vperm.xlu0 %3684, %v3677
    %v3686 = vpop.permute.xlu0 %3685
    %v3688 = vmul.f32 %v3686, %v226
    %3689 = vset.pattern.permute.xlu0 22
    %3690 = vperm.xlu0 %3689, %v3677
    %v3691 = vpop.permute.xlu0 %3690
    %v3693 = vmul.f32 %v3691, %v235
    %3694 = vset.pattern.permute.xlu0 23
    %3695 = vperm.xlu0 %3694, %v3677
    %v3696 = vpop.permute.xlu0 %3695
    %v3698 = vmul.f32 %v3696, %v244
    %3699 = vset.pattern.permute.xlu0 24
    %3700 = vperm.xlu0 %3699, %v3677
    %v3701 = vpop.permute.xlu0 %3700
    %v3703 = vmul.f32 %v3701, %v253
    %3704 = vset.pattern.permute.xlu0 25
    %3705 = vperm.xlu0 %3704, %v3677
    %v3706 = vpop.permute.xlu0 %3705
    %v3708 = vmul.f32 %v3706, %v262
    %3709 = vset.pattern.permute.xlu0 26
    %3710 = vperm.xlu0 %3709, %v3677
    %v3711 = vpop.permute.xlu0 %3710
    %v3713 = vmul.f32 %v3711, %v271
    %3714 = vset.pattern.permute.xlu0 27
    %3715 = vperm.xlu0 %3714, %v3677
    %v3716 = vpop.permute.xlu0 %3715
    %v3718 = vmul.f32 %v3716, %v280
    %3719 = vset.pattern.permute.xlu0 28
    %3720 = vperm.xlu0 %3719, %v3677
    %v3721 = vpop.permute.xlu0 %3720
    %v3723 = vmul.f32 %v3721, %v289
    %3724 = vset.pattern.permute.xlu0 29
    %3725 = vperm.xlu0 %3724, %v3677
    %v3726 = vpop.permute.xlu0 %3725
    %v3728 = vmul.f32 %v3726, %v298
    %3729 = vset.pattern.permute.xlu0 30
    %3730 = vperm.xlu0 %3729, %v3677
    %v3731 = vpop.permute.xlu0 %3730
    %v3733 = vmul.f32 %v3731, %v307
    %3734 = vset.pattern.permute.xlu0 31
    %3735 = vperm.xlu0 %3734, %v3677
    %v3736 = vpop.permute.xlu0 %3735
    %v3738 = vmul.f32 %v3736, %v316
    %3739 = vset.pattern.permute.xlu0 32
    %3740 = vperm.xlu0 %3739, %v3677
    %v3741 = vpop.permute.xlu0 %3740
    %v3743 = vmul.f32 %v3741, %v325
    %3744 = vset.pattern.permute.xlu0 33
    %3745 = vperm.xlu0 %3744, %v3677
    %v3746 = vpop.permute.xlu0 %3745
    %v3748 = vmul.f32 %v3746, %v334
    %3749 = vset.pattern.permute.xlu0 34
    %3750 = vperm.xlu0 %3749, %v3677
    %v3751 = vpop.permute.xlu0 %3750
    %v3753 = vmul.f32 %v3751, %v343
    %3754 = vset.pattern.permute.xlu0 35
    %3755 = vperm.xlu0 %3754, %v3677
    %v3756 = vpop.permute.xlu0 %3755
    %v3758 = vmul.f32 %v3756, %v352
    %3759 = vset.pattern.permute.xlu0 36
    %3760 = vperm.xlu0 %3759, %v3677
    %v3761 = vpop.permute.xlu0 %3760
    %v3763 = vmul.f32 %v3761, %v361
    %3764 = vset.pattern.permute.xlu0 37
    %3765 = vperm.xlu0 %3764, %v3677
    %v3766 = vpop.permute.xlu0 %3765
    %v3768 = vmul.f32 %v3766, %v370
    %3769 = vset.pattern.permute.xlu0 38
    %3770 = vperm.xlu0 %3769, %v3677
    %v3771 = vpop.permute.xlu0 %3770
    %v3773 = vmul.f32 %v3771, %v379
    %3774 = vset.pattern.permute.xlu0 39
    %3775 = vperm.xlu0 %3774, %v3677
    %v3776 = vpop.permute.xlu0 %3775
    %v3778 = vmul.f32 %v3776, %v388
    %v3779 = vadd.f32 %v3683, %v3688
    %v3780 = vadd.f32 %v3693, %v3698
    %v3781 = vadd.f32 %v3703, %v3708
    %v3782 = vadd.f32 %v3713, %v3718
    %v3783 = vadd.f32 %v3723, %v3728
    %v3784 = vadd.f32 %v3733, %v3738
    %v3785 = vadd.f32 %v3743, %v3748
    %v3786 = vadd.f32 %v3753, %v3758
    %v3787 = vadd.f32 %v3763, %v3768
    %v3788 = vadd.f32 %v3773, %v3778
    %v3789 = vadd.f32 %v3779, %v3780
    %v3790 = vadd.f32 %v3781, %v3782
    %v3791 = vadd.f32 %v3783, %v3784
    %v3792 = vadd.f32 %v3785, %v3786
    %v3793 = vadd.f32 %v3787, %v3788
    %v3794 = vadd.f32 %v3789, %v3790
    %v3795 = vadd.f32 %v3791, %v3792
    %v3796 = vadd.f32 %v3794, %v3795
    %v3797 = vadd.f32 %v3796, %v3793
    %v3798 = vadd.f32 %v3797, %v48
    %3800 = vset.pattern.permute.xlu0 3
    %3801 = vperm.xlu0 %3800, %v3529
    %v3802 = vpop.permute.xlu0 %3801
    %v3804 = vmul.f32 %v3802, %v2318
    %v3805 = vadd.f32 %v3798, %v3804
    %v3806 = vxor.u32 %v3805, 2147483648
    %v3807 = vmul.f32 %v3806, 1.442695
    %v3808 = vpow.pop %v3807
    %v3809 = vadd.f32 %v3808, 1.0
    %v3810 = vrcp.pop %v3809
    %v3811 = vmul.f32 1.0, %v3810
    %v3812 = vtanh.pop %v3805
    %v3813 = vmul.f32 %v3811, %v3523
    %3815 = vrot.lane.b32.xlu0 %v3812, 126
    %v3816 = vpop.permute.xlu0 %3815
    %v3818 = vmul.f32 %v3811, %v3816
    %3820 = vrot.lane.b32.xlu0 %v3818, 1
    %v3821 = vpop.permute.xlu0 %3820
    %v3823 = vadd.f32 %v3813, %v3821
    %vm3824 = vcmp.eq.s32.totalorder %v51, 11
    %3826 = vset.pattern.permute.xlu0 1
    %3827 = vperm.xlu0 %3826, %v3823
    %v3828 = vpop.permute.xlu0 %3827
    %v3830 = vsel %vm3824, %v3828, %v3536
    %vm3831 = vcmask 93184
    %3832 = vst.msk [vmem:[#allocation2] sm:$0xf] %vm3831, %v3830
    // Predicated region
    $region30: #{tpu_custom_call.1} parent=1 // pred_check
      _
    $region31: #{tpu_custom_call.1} parent=1 // pred_check_branch
      %3834 = sbr.rel (0) target = $region33
    $region32: #{tpu_custom_call.1} parent=1 // pred_region
      %s3836 = ssub.s32 64, 64
      %3837 = vsyncadd [#allocation3], %s3836
      %s3839 = sshll.u32 [#allocation2], 4
      %s3840 = int_to_ptr.vmem [resolvable:$true] %s3839
      %3842 = dma.vmem_to_hbm [thread:$0]  %s3840, 64, %s7, [#allocation3]
    $region33: #{tpu_custom_call.1} parent=1 // pred_fallthru
      _
    // Predicated region
    $region34: #{tpu_custom_call.1} parent=1 // pred_check
      _
    $region35: #{tpu_custom_call.1} parent=1 // pred_check_branch
      %3844 = sbr.rel (0) target = $region37
    $region36: #{tpu_custom_call.1} parent=1 // pred_region
      %3845 = dma.done [#allocation3], 64
    $region37: #{tpu_custom_call.1} parent=1 // pred_fallthru
      _
    %3846 = vsyncpa [#allocation3], 1

</llo_original>
